<compile_context>
chip_gen: v6e
topology: v6e:2x2x1
jax: 0.10.0
libtpu: 0.0.40
codegen_flags: <defaults>
</compile_context>

<pallas_src>
import functools
import math

import jax
import jax.numpy as jnp
from jax.experimental import pallas as pl
from jax.experimental.pallas import tpu as pltpu

LANE = 128      # lane tile (last dim)
SUBLANE = 8     # f32 sublane tile (second-to-last dim)
# Max timesteps per pipelined chunk.  Per-chunk VMEM ~= 2 dirs * 2 bufs *
# Tc*B*(4H + H)*4B + weights; at Tc=8, B=8, Hp=128 this is well under 1 MiB,
# and it scales linearly in Tc/B/Hp — keep it comfortably inside the scoped
# VMEM default on every chip (incl. v7x's 64 MiB physical VMEM).
CHUNK_CAP = 8


def _round_up(x, m):
    return ((x + m - 1) // m) * m


def _largest_divisor_leq(n, cap):
    for c in range(min(n, cap), 0, -1):
        if n % c == 0:
            return c
    return 1


# ---------------------------------------------------------------------------
# Pallas recurrent core: one bidirectional LSTM layer, both directions
# interleaved, time axis chunked over the grid.
# ---------------------------------------------------------------------------
def _lstm_cell(gates, c_prev, H):
    # PyTorch gate order: [i | f | g | o]; slices are whole lane tiles (H%128==0).
    i = jax.nn.sigmoid(gates[:, 0 * H:1 * H])
    f = jax.nn.sigmoid(gates[:, 1 * H:2 * H])
    g = jnp.tanh(gates[:, 2 * H:3 * H])
    o = jax.nn.sigmoid(gates[:, 3 * H:4 * H])
    c = f * c_prev + i * g
    h = o * jnp.tanh(c)
    return h, c


def _make_bilstm_kernel(Tc, Hp, nchunks, last_layer):
    """grid = (nchunks,); one grid step processes one Tc-long time chunk of
    BOTH directions (forward streams chunks 0..n-1, backward streams them in
    reverse via its index_map and walks the chunk with static reversed
    offsets).  (h, c) carries persist in VMEM scratch across chunks."""

    def run(gxf_ref, gxb_ref, whh_ref, out_refs, hf_ref, cf_ref, hb_ref, cb_ref):
        k = pl.program_id(0)

        @pl.when(k == 0)
        def _init():
            hf_ref[...] = jnp.zeros_like(hf_ref)
            cf_ref[...] = jnp.zeros_like(cf_ref)
            hb_ref[...] = jnp.zeros_like(hb_ref)
            cb_ref[...] = jnp.zeros_like(cb_ref)

        whh_f = whh_ref[0]          # (Hp, 4Hp) — loaded once per chunk
        whh_b = whh_ref[1]

        h_f, c_f = hf_ref[...], cf_ref[...]
        h_b, c_b = hb_ref[...], cb_ref[...]

        # Static (Python-unrolled, Tc small) loop: all gx loads and sequence
        # stores use static, aligned offsets; fwd & bwd steps are issued back
        # to back so their independent chains overlap on the MXU/VPU/EUP.
        for t in range(Tc):
            tb = Tc - 1 - t
            g_f = gxf_ref[t] + jnp.dot(h_f, whh_f,
                                       preferred_element_type=jnp.float32)
            h_f, c_f = _lstm_cell(g_f, c_f, Hp)
            g_b = gxb_ref[tb] + jnp.dot(h_b, whh_b,
                                        preferred_element_type=jnp.float32)
            h_b, c_b = _lstm_cell(g_b, c_b, Hp)
            if not last_layer:
                seqf_ref, seqb_ref = out_refs
                seqf_ref[t] = h_f.astype(seqf_ref.dtype)
                seqb_ref[tb] = h_b.astype(seqb_ref.dtype)

        hf_ref[...] = h_f
        cf_ref[...] = c_f
        hb_ref[...] = h_b
        cb_ref[...] = c_b

        if last_layer:
            (out_ref,) = out_refs

            @pl.when(k == nchunks - 1)
            def _final():
                # fwd final (time T-1) and bwd final (time 0) are both ready
                # at the last grid step; single lane-dense (Bp, 2Hp) store.
                out_ref[:, 0:Hp] = h_f.astype(out_ref.dtype)
                out_ref[:, Hp:2 * Hp] = h_b.astype(out_ref.dtype)

    if last_layer:
        def kernel(gxf, gxb, whh, out, hf, cf, hb, cb):
            run(gxf, gxb, whh, (out,), hf, cf, hb, cb)
    else:
        def kernel(gxf, gxb, whh, seqf, seqb, hf, cf, hb, cb):
            run(gxf, gxb, whh, (seqf, seqb), hf, cf, hb, cb)
    return kernel


def bilstm_layer(gx_f, gx_b, whh, *, Tc, last_layer):
    """Run one bidirectional LSTM layer.

    gx_f, gx_b: (T, Bp, 4Hp) precomputed input gates per direction (real time
                order; the kernel handles the backward reversal).
    whh:        (2, Hp, 4Hp) transposed hidden weights.
    Returns (seq_f, seq_b) each (T, Bp, Hp) if not last layer, else (Bp, 2Hp).
    """
    T, Bp, G = gx_f.shape
    Hp = whh.shape[1]
    assert G == 4 * Hp and T % Tc == 0
    nchunks = T // Tc

    gxf_spec = pl.BlockSpec((Tc, Bp, G), lambda k: (k, 0, 0))
    gxb_spec = pl.BlockSpec((Tc, Bp, G), lambda k: (nchunks - 1 - k, 0, 0))
    whh_spec = pl.BlockSpec((2, Hp, G), lambda k: (0, 0, 0))

    if last_layer:
        out_shape = jax.ShapeDtypeStruct((Bp, 2 * Hp), jnp.float32)
        out_specs = pl.BlockSpec((Bp, 2 * Hp), lambda k: (0, 0))
    else:
        out_shape = (jax.ShapeDtypeStruct((T, Bp, Hp), jnp.float32),
                     jax.ShapeDtypeStruct((T, Bp, Hp), jnp.float32))
        out_specs = (pl.BlockSpec((Tc, Bp, Hp), lambda k: (k, 0, 0)),
                     pl.BlockSpec((Tc, Bp, Hp),
                                  lambda k: (nchunks - 1 - k, 0, 0)))

    kernel = _make_bilstm_kernel(Tc, Hp, nchunks, last_layer)

    return pl.pallas_call(
        kernel,
        out_shape=out_shape,
        grid_spec=pltpu.PrefetchScalarGridSpec(
            num_scalar_prefetch=0,
            grid=(nchunks,),
            in_specs=[gxf_spec, gxb_spec, whh_spec],
            out_specs=out_specs,
            scratch_shapes=[pltpu.VMEM((Bp, Hp), jnp.float32)] * 4,
        ),
        compiler_params=pltpu.CompilerParams(
            dimension_semantics=("arbitrary",)),   # sequential recurrence
    )(gx_f, gx_b, whh)


# ---------------------------------------------------------------------------
# Parameters: raw PyTorch-layout init + kernel-ready (padded/transposed) prep.
# ---------------------------------------------------------------------------
def init_lstm_params(key, ninp, nhid, nlayers):
    """nn.LSTM(bidirectional=True)-shaped raw params (unpadded)."""
    params = []
    bound = 1.0 / math.sqrt(nhid)
    for layer in range(nlayers):
        d_in = ninp if layer == 0 else 2 * nhid
        dirs = []
        for _ in range(2):                     # forward, backward
            key, k1, k2, k3, k4 = jax.random.split(key, 5)
            dirs.append({
                "w_ih": jax.random.uniform(k1, (4 * nhid, d_in), jnp.float32,
                                           -bound, bound),
                "w_hh": jax.random.uniform(k2, (4 * nhid, nhid), jnp.float32,
                                           -bound, bound),
                "b_ih": jax.random.uniform(k3, (4 * nhid,), jnp.float32,
                                           -bound, bound),
                "b_hh": jax.random.uniform(k4, (4 * nhid,), jnp.float32,
                                           -bound, bound),
            })
        params.append(dirs)
    return params


def _pad_gate_cols(w, nhid, Hp):
    """(..., 4*nhid) -> (..., 4*Hp), zero-padding each of the 4 gate blocks."""
    lead = w.shape[:-1]
    w4 = w.reshape(*lead, 4, nhid)
    pad = [(0, 0)] * len(lead) + [(0, 0), (0, Hp - nhid)]
    return jnp.pad(w4, pad).reshape(*lead, 4 * Hp)


def prepare_kernel_params(raw_params, nhid):
    """Transpose + pad to lane/sublane-dense layouts (padded units stay 0)."""
    Hp = _round_up(nhid, LANE)
    out = []
    for li, layer in enumerate(raw_params):
        wih_dirs, whh_dirs, b_dirs = [], [], []
        for p in layer:
            w_ih_t = _pad_gate_cols(p["w_ih"].T, nhid, Hp)       # (d_in, 4Hp)
            w_hh_t = _pad_gate_cols(p["w_hh"].T, nhid, Hp)       # (nhid, 4Hp)
            w_hh_t = jnp.pad(w_hh_t, ((0, Hp - nhid), (0, 0)))   # (Hp, 4Hp)
            b = _pad_gate_cols(p["b_ih"] + p["b_hh"], nhid, Hp)  # (4Hp,)
            if li == 0:
                wih_parts = w_ih_t[None]                         # (1, ninp, 4Hp)
            else:
                parts = w_ih_t.reshape(2, nhid, 4 * Hp)          # fwd/bwd parts
                wih_parts = jnp.pad(parts, ((0, 0), (0, Hp - nhid), (0, 0)))
            wih_dirs.append(wih_parts)
            whh_dirs.append(w_hh_t)
            b_dirs.append(b)
        out.append({
            "wih": jnp.stack(wih_dirs, 0),   # (2, E, dp, 4Hp)
            "whh": jnp.stack(whh_dirs, 0),   # (2, Hp, 4Hp)
            "b":   jnp.stack(b_dirs, 0),     # (2, 4Hp)
        })
    return out


# ---------------------------------------------------------------------------
# Forward pass (seq_to_emb with model_type_list = ['LSTM']).
# ---------------------------------------------------------------------------
def _layer_gates(parts, wih_d, b_d):
    """Hoisted input projection for one direction: sum_e parts[e] @ wih[e] + b."""
    gx = None
    for e, xp in enumerate(parts):
        term = jnp.einsum("tbd,dg->tbg", xp, wih_d[e],
                          preferred_element_type=jnp.float32)
        gx = term if gx is None else gx + term
    return gx + b_d


def seq_to_emb_forward(emb, kernel_params, *, nhid, chunk_cap=CHUNK_CAP):
    """emb: (T, B, ninp) -> (B, 2*nhid)."""
    T, B, _ = emb.shape
    Bp = _round_up(B, SUBLANE)
    Hp = kernel_params[0]["whh"].shape[1]
    Tc = _largest_divisor_leq(T, chunk_cap)
    nlayers = len(kernel_params)

    x = emb if Bp == B else jnp.pad(emb, ((0, 0), (0, Bp - B), (0, 0)))
    parts = (x,)                                  # per-feature-part inputs
    for li, p in enumerate(kernel_params):
        last = (li == nlayers - 1)
        gx_f = _layer_gates(parts, p["wih"][0], p["b"][0])   # (T, Bp, 4Hp)
        gx_b = _layer_gates(parts, p["wih"][1], p["b"][1])
        out = bilstm_layer(gx_f, gx_b, p["whh"], Tc=Tc, last_layer=last)
        if last:
            # RNN_pooler: cat(fwd hidden @ last step, bwd hidden @ first step).
            return jnp.concatenate(
                [out[:B, :nhid], out[:B, Hp:Hp + nhid]], axis=-1)
        parts = out                               # (seq_f, seq_b) feed next layer
    raise AssertionError("nlayers must be >= 1")


# ---------------------------------------------------------------------------
# Pure-JAX reference (unpadded, no Pallas) for correctness checking.
# ---------------------------------------------------------------------------
def _ref_bilstm_layer(x, layer_params):
    T, B, _ = x.shape
    nhid = layer_params[0]["w_hh"].shape[1]
    seqs, finals = [], []
    for d, p in enumerate(layer_params):
        b = p["b_ih"] + p["b_hh"]
        h = jnp.zeros((B, nhid), jnp.float32)
        c = jnp.zeros((B, nhid), jnp.float32)
        hs = [None] * T
        order = range(T) if d == 0 else range(T - 1, -1, -1)
        for t in order:
            gates = x[t] @ p["w_ih"].T + h @ p["w_hh"].T + b
            i = jax.nn.sigmoid(gates[:, :nhid])
            f = jax.nn.sigmoid(gates[:, nhid:2 * nhid])
            g = jnp.tanh(gates[:, 2 * nhid:3 * nhid])
            o = jax.nn.sigmoid(gates[:, 3 * nhid:])
            c = f * c + i * g
            h = o * jnp.tanh(c)
            hs[t] = h
        seqs.append(jnp.stack(hs, 0))
        finals.append(h)
    return jnp.concatenate(seqs, axis=-1), finals


def seq_to_emb_reference(emb, raw_params):
    x = emb
    for li, layer in enumerate(raw_params):
        seq, finals = _ref_bilstm_layer(x, layer)
        if li == len(raw_params) - 1:
            return jnp.concatenate([finals[0], finals[1]], axis=-1)
        x = seq
    raise AssertionError("nlayers must be >= 1")


if __name__ == "__main__":
    # Small shapes; T=16 with CHUNK_CAP=8 exercises the chunked pipeline
    # (2 chunks -> scratch carry across grid steps) and nlayers=2 exercises
    # both the sequence-emitting and finals-only kernel variants.
    seq_len, bsz, ninp, nhid, nlayers = 16, 4, 32, 32, 2

    key = jax.random.PRNGKey(0)
    key, k_emb = jax.random.split(key)
    emb = jax.random.normal(k_emb, (seq_len, bsz, ninp), jnp.float32)

    raw_params = init_lstm_params(key, ninp, nhid, nlayers)
    kernel_params = prepare_kernel_params(raw_params, nhid)

    fwd = jax.jit(functools.partial(seq_to_emb_forward, nhid=nhid))
    out = fwd(emb, kernel_params)
    out = jax.block_until_ready(out)

    assert out.shape == (bsz, 2 * nhid), out.shape
    assert bool(jnp.all(jnp.isfinite(out)))

    ref = seq_to_emb_reference(emb, raw_params)
    err = float(jnp.max(jnp.abs(out - ref)))
    assert err < 2e-3, err

    print("KERNEL_OK")
</pallas_src>

<mosaic_0001>
module attributes {stable_mosaic.version = 11 : i64} {
  func.func @kernel(%arg0: i32, %arg1: memref<8x8x512xf32, #tpu.memory_space<vmem>>, %arg2: memref<8x8x512xf32, #tpu.memory_space<vmem>>, %arg3: memref<2x128x512xf32, #tpu.memory_space<vmem>>, %arg4: memref<8x8x128xf32, #tpu.memory_space<vmem>>, %arg5: memref<8x8x128xf32, #tpu.memory_space<vmem>>, %arg6: memref<8x128xf32, #tpu.memory_space<vmem>>, %arg7: memref<8x128xf32, #tpu.memory_space<vmem>>, %arg8: memref<8x128xf32, #tpu.memory_space<vmem>>, %arg9: memref<8x128xf32, #tpu.memory_space<vmem>>) attributes {dimension_semantics = [#tpu.dimension_semantics<arbitrary>], iteration_bounds = array<i64: 2>, scalar_prefetch = 0 : i64, scratch_operands = 4 : i64, tpu.core_type = #tpu.core_type<tc>, window_params = [{transform_indices = @transform_0, window_bounds = array<i64: 8, 8, 512>}, {transform_indices = @transform_1, window_bounds = array<i64: 8, 8, 512>}, {pipeline_mode = #tpu.pipeline_mode<synchronous>, transform_indices = @transform_2, window_bounds = array<i64: 2, 128, 512>}, {transform_indices = @transform_3, window_bounds = array<i64: 8, 8, 128>}, {transform_indices = @transform_4, window_bounds = array<i64: 8, 8, 128>}]} {
    %c0_i32 = arith.constant 0 : i32
    %0 = arith.cmpi eq, %arg0, %c0_i32 : i32
    %1 = arith.extui %0 : i1 to i32
    %c0_i32_0 = arith.constant 0 : i32
    %2 = arith.cmpi ne, %1, %c0_i32_0 : i32
    scf.if %2 {
      %cst_174 = arith.constant 0.000000e+00 : f32
      %527 = vector.broadcast %cst_174 : f32 to vector<8x128xf32>
      %c0_175 = arith.constant 0 : index
      %c0_176 = arith.constant 0 : index
      %528 = vector.load %arg6[%c0_175, %c0_176] : memref<8x128xf32, #tpu.memory_space<vmem>>, vector<8x128xf32>
      tpu.vector_store %arg6[%c0_175, %c0_176], %527 {strides = array<i32>} : memref<8x128xf32, #tpu.memory_space<vmem>>, vector<8x128xf32>,
      %cst_177 = arith.constant 0.000000e+00 : f32
      %529 = vector.broadcast %cst_177 : f32 to vector<8x128xf32>
      %c0_178 = arith.constant 0 : index
      %c0_179 = arith.constant 0 : index
      %530 = vector.load %arg7[%c0_178, %c0_179] : memref<8x128xf32, #tpu.memory_space<vmem>>, vector<8x128xf32>
      tpu.vector_store %arg7[%c0_178, %c0_179], %529 {strides = array<i32>} : memref<8x128xf32, #tpu.memory_space<vmem>>, vector<8x128xf32>,
      %cst_180 = arith.constant 0.000000e+00 : f32
      %531 = vector.broadcast %cst_180 : f32 to vector<8x128xf32>
      %c0_181 = arith.constant 0 : index
      %c0_182 = arith.constant 0 : index
      %532 = vector.load %arg8[%c0_181, %c0_182] : memref<8x128xf32, #tpu.memory_space<vmem>>, vector<8x128xf32>
      tpu.vector_store %arg8[%c0_181, %c0_182], %531 {strides = array<i32>} : memref<8x128xf32, #tpu.memory_space<vmem>>, vector<8x128xf32>,
      %cst_183 = arith.constant 0.000000e+00 : f32
      %533 = vector.broadcast %cst_183 : f32 to vector<8x128xf32>
      %c0_184 = arith.constant 0 : index
      %c0_185 = arith.constant 0 : index
      %534 = vector.load %arg9[%c0_184, %c0_185] : memref<8x128xf32, #tpu.memory_space<vmem>>, vector<8x128xf32>
      tpu.vector_store %arg9[%c0_184, %c0_185], %533 {strides = array<i32>} : memref<8x128xf32, #tpu.memory_space<vmem>>, vector<8x128xf32>,
    } else {
    }
    %c0 = arith.constant 0 : index
    %c0_1 = arith.constant 0 : index
    %c0_2 = arith.constant 0 : index
    %3 = vector.load %arg3[%c0, %c0_1, %c0_2] : memref<2x128x512xf32, #tpu.memory_space<vmem>>, vector<1x128x512xf32>
    %4 = vector.shape_cast %3 : vector<1x128x512xf32> to vector<128x512xf32>
    %c1 = arith.constant 1 : index
    %c0_3 = arith.constant 0 : index
    %c0_4 = arith.constant 0 : index
    %5 = vector.load %arg3[%c1, %c0_3, %c0_4] : memref<2x128x512xf32, #tpu.memory_space<vmem>>, vector<1x128x512xf32>
    %6 = vector.shape_cast %5 : vector<1x128x512xf32> to vector<128x512xf32>
    %c0_5 = arith.constant 0 : index
    %c0_6 = arith.constant 0 : index
    %7 = vector.load %arg6[%c0_5, %c0_6] : memref<8x128xf32, #tpu.memory_space<vmem>>, vector<8x128xf32>
    %c0_7 = arith.constant 0 : index
    %c0_8 = arith.constant 0 : index
    %8 = vector.load %arg7[%c0_7, %c0_8] : memref<8x128xf32, #tpu.memory_space<vmem>>, vector<8x128xf32>
    %c0_9 = arith.constant 0 : index
    %c0_10 = arith.constant 0 : index
    %9 = vector.load %arg8[%c0_9, %c0_10] : memref<8x128xf32, #tpu.memory_space<vmem>>, vector<8x128xf32>
    %c0_11 = arith.constant 0 : index
    %c0_12 = arith.constant 0 : index
    %10 = vector.load %arg9[%c0_11, %c0_12] : memref<8x128xf32, #tpu.memory_space<vmem>>, vector<8x128xf32>
    %c0_13 = arith.constant 0 : index
    %c0_14 = arith.constant 0 : index
    %c0_15 = arith.constant 0 : index
    %11 = vector.load %arg1[%c0_13, %c0_14, %c0_15] : memref<8x8x512xf32, #tpu.memory_space<vmem>>, vector<1x8x512xf32>
    %12 = vector.shape_cast %11 : vector<1x8x512xf32> to vector<8x512xf32>
    %cst = arith.constant dense<0.000000e+00> : vector<8x512xf32>
    %13 = tpu.matmul %7, %4, %cst {dimension_numbers = #tpu.dot_dimension_numbers<[1], [0], [0], [1], [0, 0, 1, 1], [], []>} : vector<8x128xf32>, vector<128x512xf32>, vector<8x512xf32> -> vector<8x512xf32>
    %14 = arith.addf %12, %13 : vector<8x512xf32>
    %15 = vector.extract_strided_slice %14 {offsets = [0, 0], sizes = [8, 128], strides = [1, 1]} : vector<8x512xf32> to vector<8x128xf32>
    %16 = arith.negf %15 : vector<8x128xf32>
    %17 = math.exp %16 : vector<8x128xf32>
    %cst_16 = arith.constant 1.000000e+00 : f32
    %18 = vector.broadcast %cst_16 : f32 to vector<8x128xf32>
    %19 = arith.addf %18, %17 : vector<8x128xf32>
    %20 = arith.divf %18, %19 : vector<8x128xf32>
    %21 = vector.extract_strided_slice %14 {offsets = [0, 128], sizes = [8, 128], strides = [1, 1]} : vector<8x512xf32> to vector<8x128xf32>
    %22 = arith.negf %21 : vector<8x128xf32>
    %23 = math.exp %22 : vector<8x128xf32>
    %cst_17 = arith.constant 1.000000e+00 : f32
    %24 = vector.broadcast %cst_17 : f32 to vector<8x128xf32>
    %25 = arith.addf %24, %23 : vector<8x128xf32>
    %26 = arith.divf %24, %25 : vector<8x128xf32>
    %27 = vector.extract_strided_slice %14 {offsets = [0, 256], sizes = [8, 128], strides = [1, 1]} : vector<8x512xf32> to vector<8x128xf32>
    %28 = math.tanh %27 : vector<8x128xf32>
    %29 = vector.extract_strided_slice %14 {offsets = [0, 384], sizes = [8, 128], strides = [1, 1]} : vector<8x512xf32> to vector<8x128xf32>
    %30 = arith.negf %29 : vector<8x128xf32>
    %31 = math.exp %30 : vector<8x128xf32>
    %cst_18 = arith.constant 1.000000e+00 : f32
    %32 = vector.broadcast %cst_18 : f32 to vector<8x128xf32>
    %33 = arith.addf %32, %31 : vector<8x128xf32>
    %34 = arith.divf %32, %33 : vector<8x128xf32>
    %35 = arith.mulf %26, %8 : vector<8x128xf32>
    %36 = arith.mulf %20, %28 : vector<8x128xf32>
    %37 = arith.addf %35, %36 : vector<8x128xf32>
    %38 = math.tanh %37 : vector<8x128xf32>
    %39 = arith.mulf %34, %38 : vector<8x128xf32>
    %c7 = arith.constant 7 : index
    %c0_19 = arith.constant 0 : index
    %c0_20 = arith.constant 0 : index
    %40 = vector.load %arg2[%c7, %c0_19, %c0_20] : memref<8x8x512xf32, #tpu.memory_space<vmem>>, vector<1x8x512xf32>
    %41 = vector.shape_cast %40 : vector<1x8x512xf32> to vector<8x512xf32>
    %cst_21 = arith.constant dense<0.000000e+00> : vector<8x512xf32>
    %42 = tpu.matmul %9, %6, %cst_21 {dimension_numbers = #tpu.dot_dimension_numbers<[1], [0], [0], [1], [0, 0, 1, 1], [], []>} : vector<8x128xf32>, vector<128x512xf32>, vector<8x512xf32> -> vector<8x512xf32>
    %43 = arith.addf %41, %42 : vector<8x512xf32>
    %44 = vector.extract_strided_slice %43 {offsets = [0, 0], sizes = [8, 128], strides = [1, 1]} : vector<8x512xf32> to vector<8x128xf32>
    %45 = arith.negf %44 : vector<8x128xf32>
    %46 = math.exp %45 : vector<8x128xf32>
    %cst_22 = arith.constant 1.000000e+00 : f32
    %47 = vector.broadcast %cst_22 : f32 to vector<8x128xf32>
    %48 = arith.addf %47, %46 : vector<8x128xf32>
    %49 = arith.divf %47, %48 : vector<8x128xf32>
    %50 = vector.extract_strided_slice %43 {offsets = [0, 128], sizes = [8, 128], strides = [1, 1]} : vector<8x512xf32> to vector<8x128xf32>
    %51 = arith.negf %50 : vector<8x128xf32>
    %52 = math.exp %51 : vector<8x128xf32>
    %cst_23 = arith.constant 1.000000e+00 : f32
    %53 = vector.broadcast %cst_23 : f32 to vector<8x128xf32>
    %54 = arith.addf %53, %52 : vector<8x128xf32>
    %55 = arith.divf %53, %54 : vector<8x128xf32>
    %56 = vector.extract_strided_slice %43 {offsets = [0, 256], sizes = [8, 128], strides = [1, 1]} : vector<8x512xf32> to vector<8x128xf32>
    %57 = math.tanh %56 : vector<8x128xf32>
    %58 = vector.extract_strided_slice %43 {offsets = [0, 384], sizes = [8, 128], strides = [1, 1]} : vector<8x512xf32> to vector<8x128xf32>
    %59 = arith.negf %58 : vector<8x128xf32>
    %60 = math.exp %59 : vector<8x128xf32>
    %cst_24 = arith.constant 1.000000e+00 : f32
    %61 = vector.broadcast %cst_24 : f32 to vector<8x128xf32>
    %62 = arith.addf %61, %60 : vector<8x128xf32>
    %63 = arith.divf %61, %62 : vector<8x128xf32>
    %64 = arith.mulf %55, %10 : vector<8x128xf32>
    %65 = arith.mulf %49, %57 : vector<8x128xf32>
    %66 = arith.addf %64, %65 : vector<8x128xf32>
    %67 = math.tanh %66 : vector<8x128xf32>
    %68 = arith.mulf %63, %67 : vector<8x128xf32>
    %c0_25 = arith.constant 0 : index
    %c0_26 = arith.constant 0 : index
    %c0_27 = arith.constant 0 : index
    %69 = vector.load %arg4[%c0_25, %c0_26, %c0_27] : memref<8x8x128xf32, #tpu.memory_space<vmem>>, vector<1x8x128xf32>
    %70 = vector.shape_cast %69 : vector<1x8x128xf32> to vector<8x128xf32>
    %71 = vector.shape_cast %39 : vector<8x128xf32> to vector<1x8x128xf32>
    tpu.vector_store %arg4[%c0_25, %c0_26, %c0_27], %71 {strides = array<i32>} : memref<8x8x128xf32, #tpu.memory_space<vmem>>, vector<1x8x128xf32>,
    %c7_28 = arith.constant 7 : index
    %c0_29 = arith.constant 0 : index
    %c0_30 = arith.constant 0 : index
    %72 = vector.load %arg5[%c7_28, %c0_29, %c0_30] : memref<8x8x128xf32, #tpu.memory_space<vmem>>, vector<1x8x128xf32>
    %73 = vector.shape_cast %72 : vector<1x8x128xf32> to vector<8x128xf32>
    %74 = vector.shape_cast %68 : vector<8x128xf32> to vector<1x8x128xf32>
    tpu.vector_store %arg5[%c7_28, %c0_29, %c0_30], %74 {strides = array<i32>} : memref<8x8x128xf32, #tpu.memory_space<vmem>>, vector<1x8x128xf32>,
    %c1_31 = arith.constant 1 : index
    %c0_32 = arith.constant 0 : index
    %c0_33 = arith.constant 0 : index
    %75 = vector.load %arg1[%c1_31, %c0_32, %c0_33] : memref<8x8x512xf32, #tpu.memory_space<vmem>>, vector<1x8x512xf32>
    %76 = vector.shape_cast %75 : vector<1x8x512xf32> to vector<8x512xf32>
    %cst_34 = arith.constant dense<0.000000e+00> : vector<8x512xf32>
    %77 = tpu.matmul %39, %4, %cst_34 {dimension_numbers = #tpu.dot_dimension_numbers<[1], [0], [0], [1], [0, 0, 1, 1], [], []>} : vector<8x128xf32>, vector<128x512xf32>, vector<8x512xf32> -> vector<8x512xf32>
    %78 = arith.addf %76, %77 : vector<8x512xf32>
    %79 = vector.extract_strided_slice %78 {offsets = [0, 0], sizes = [8, 128], strides = [1, 1]} : vector<8x512xf32> to vector<8x128xf32>
    %80 = arith.negf %79 : vector<8x128xf32>
    %81 = math.exp %80 : vector<8x128xf32>
    %cst_35 = arith.constant 1.000000e+00 : f32
    %82 = vector.broadcast %cst_35 : f32 to vector<8x128xf32>
    %83 = arith.addf %82, %81 : vector<8x128xf32>
    %84 = arith.divf %82, %83 : vector<8x128xf32>
    %85 = vector.extract_strided_slice %78 {offsets = [0, 128], sizes = [8, 128], strides = [1, 1]} : vector<8x512xf32> to vector<8x128xf32>
    %86 = arith.negf %85 : vector<8x128xf32>
    %87 = math.exp %86 : vector<8x128xf32>
    %cst_36 = arith.constant 1.000000e+00 : f32
    %88 = vector.broadcast %cst_36 : f32 to vector<8x128xf32>
    %89 = arith.addf %88, %87 : vector<8x128xf32>
    %90 = arith.divf %88, %89 : vector<8x128xf32>
    %91 = vector.extract_strided_slice %78 {offsets = [0, 256], sizes = [8, 128], strides = [1, 1]} : vector<8x512xf32> to vector<8x128xf32>
    %92 = math.tanh %91 : vector<8x128xf32>
    %93 = vector.extract_strided_slice %78 {offsets = [0, 384], sizes = [8, 128], strides = [1, 1]} : vector<8x512xf32> to vector<8x128xf32>
    %94 = arith.negf %93 : vector<8x128xf32>
    %95 = math.exp %94 : vector<8x128xf32>
    %cst_37 = arith.constant 1.000000e+00 : f32
    %96 = vector.broadcast %cst_37 : f32 to vector<8x128xf32>
    %97 = arith.addf %96, %95 : vector<8x128xf32>
    %98 = arith.divf %96, %97 : vector<8x128xf32>
    %99 = arith.mulf %90, %37 : vector<8x128xf32>
    %100 = arith.mulf %84, %92 : vector<8x128xf32>
    %101 = arith.addf %99, %100 : vector<8x128xf32>
    %102 = math.tanh %101 : vector<8x128xf32>
    %103 = arith.mulf %98, %102 : vector<8x128xf32>
    %c6 = arith.constant 6 : index
    %c0_38 = arith.constant 0 : index
    %c0_39 = arith.constant 0 : index
    %104 = vector.load %arg2[%c6, %c0_38, %c0_39] : memref<8x8x512xf32, #tpu.memory_space<vmem>>, vector<1x8x512xf32>
    %105 = vector.shape_cast %104 : vector<1x8x512xf32> to vector<8x512xf32>
    %cst_40 = arith.constant dense<0.000000e+00> : vector<8x512xf32>
    %106 = tpu.matmul %68, %6, %cst_40 {dimension_numbers = #tpu.dot_dimension_numbers<[1], [0], [0], [1], [0, 0, 1, 1], [], []>} : vector<8x128xf32>, vector<128x512xf32>, vector<8x512xf32> -> vector<8x512xf32>
    %107 = arith.addf %105, %106 : vector<8x512xf32>
    %108 = vector.extract_strided_slice %107 {offsets = [0, 0], sizes = [8, 128], strides = [1, 1]} : vector<8x512xf32> to vector<8x128xf32>
    %109 = arith.negf %108 : vector<8x128xf32>
    %110 = math.exp %109 : vector<8x128xf32>
    %cst_41 = arith.constant 1.000000e+00 : f32
    %111 = vector.broadcast %cst_41 : f32 to vector<8x128xf32>
    %112 = arith.addf %111, %110 : vector<8x128xf32>
    %113 = arith.divf %111, %112 : vector<8x128xf32>
    %114 = vector.extract_strided_slice %107 {offsets = [0, 128], sizes = [8, 128], strides = [1, 1]} : vector<8x512xf32> to vector<8x128xf32>
    %115 = arith.negf %114 : vector<8x128xf32>
    %116 = math.exp %115 : vector<8x128xf32>
    %cst_42 = arith.constant 1.000000e+00 : f32
    %117 = vector.broadcast %cst_42 : f32 to vector<8x128xf32>
    %118 = arith.addf %117, %116 : vector<8x128xf32>
    %119 = arith.divf %117, %118 : vector<8x128xf32>
    %120 = vector.extract_strided_slice %107 {offsets = [0, 256], sizes = [8, 128], strides = [1, 1]} : vector<8x512xf32> to vector<8x128xf32>
    %121 = math.tanh %120 : vector<8x128xf32>
    %122 = vector.extract_strided_slice %107 {offsets = [0, 384], sizes = [8, 128], strides = [1, 1]} : vector<8x512xf32> to vector<8x128xf32>
    %123 = arith.negf %122 : vector<8x128xf32>
    %124 = math.exp %123 : vector<8x128xf32>
    %cst_43 = arith.constant 1.000000e+00 : f32
    %125 = vector.broadcast %cst_43 : f32 to vector<8x128xf32>
    %126 = arith.addf %125, %124 : vector<8x128xf32>
    %127 = arith.divf %125, %126 : vector<8x128xf32>
    %128 = arith.mulf %119, %66 : vector<8x128xf32>
    %129 = arith.mulf %113, %121 : vector<8x128xf32>
    %130 = arith.addf %128, %129 : vector<8x128xf32>
    %131 = math.tanh %130 : vector<8x128xf32>
    %132 = arith.mulf %127, %131 : vector<8x128xf32>
    %c1_44 = arith.constant 1 : index
    %c0_45 = arith.constant 0 : index
    %c0_46 = arith.constant 0 : index
    %133 = vector.load %arg4[%c1_44, %c0_45, %c0_46] : memref<8x8x128xf32, #tpu.memory_space<vmem>>, vector<1x8x128xf32>
    %134 = vector.shape_cast %133 : vector<1x8x128xf32> to vector<8x128xf32>
    %135 = vector.shape_cast %103 : vector<8x128xf32> to vector<1x8x128xf32>
    tpu.vector_store %arg4[%c1_44, %c0_45, %c0_46], %135 {strides = array<i32>} : memref<8x8x128xf32, #tpu.memory_space<vmem>>, vector<1x8x128xf32>,
    %c6_47 = arith.constant 6 : index
    %c0_48 = arith.constant 0 : index
    %c0_49 = arith.constant 0 : index
    %136 = vector.load %arg5[%c6_47, %c0_48, %c0_49] : memref<8x8x128xf32, #tpu.memory_space<vmem>>, vector<1x8x128xf32>
    %137 = vector.shape_cast %136 : vector<1x8x128xf32> to vector<8x128xf32>
    %138 = vector.shape_cast %132 : vector<8x128xf32> to vector<1x8x128xf32>
    tpu.vector_store %arg5[%c6_47, %c0_48, %c0_49], %138 {strides = array<i32>} : memref<8x8x128xf32, #tpu.memory_space<vmem>>, vector<1x8x128xf32>,
    %c2 = arith.constant 2 : index
    %c0_50 = arith.constant 0 : index
    %c0_51 = arith.constant 0 : index
    %139 = vector.load %arg1[%c2, %c0_50, %c0_51] : memref<8x8x512xf32, #tpu.memory_space<vmem>>, vector<1x8x512xf32>
    %140 = vector.shape_cast %139 : vector<1x8x512xf32> to vector<8x512xf32>
    %cst_52 = arith.constant dense<0.000000e+00> : vector<8x512xf32>
    %141 = tpu.matmul %103, %4, %cst_52 {dimension_numbers = #tpu.dot_dimension_numbers<[1], [0], [0], [1], [0, 0, 1, 1], [], []>} : vector<8x128xf32>, vector<128x512xf32>, vector<8x512xf32> -> vector<8x512xf32>
    %142 = arith.addf %140, %141 : vector<8x512xf32>
    %143 = vector.extract_strided_slice %142 {offsets = [0, 0], sizes = [8, 128], strides = [1, 1]} : vector<8x512xf32> to vector<8x128xf32>
    %144 = arith.negf %143 : vector<8x128xf32>
    %145 = math.exp %144 : vector<8x128xf32>
    %cst_53 = arith.constant 1.000000e+00 : f32
    %146 = vector.broadcast %cst_53 : f32 to vector<8x128xf32>
    %147 = arith.addf %146, %145 : vector<8x128xf32>
    %148 = arith.divf %146, %147 : vector<8x128xf32>
    %149 = vector.extract_strided_slice %142 {offsets = [0, 128], sizes = [8, 128], strides = [1, 1]} : vector<8x512xf32> to vector<8x128xf32>
    %150 = arith.negf %149 : vector<8x128xf32>
    %151 = math.exp %150 : vector<8x128xf32>
    %cst_54 = arith.constant 1.000000e+00 : f32
    %152 = vector.broadcast %cst_54 : f32 to vector<8x128xf32>
    %153 = arith.addf %152, %151 : vector<8x128xf32>
    %154 = arith.divf %152, %153 : vector<8x128xf32>
    %155 = vector.extract_strided_slice %142 {offsets = [0, 256], sizes = [8, 128], strides = [1, 1]} : vector<8x512xf32> to vector<8x128xf32>
    %156 = math.tanh %155 : vector<8x128xf32>
    %157 = vector.extract_strided_slice %142 {offsets = [0, 384], sizes = [8, 128], strides = [1, 1]} : vector<8x512xf32> to vector<8x128xf32>
    %158 = arith.negf %157 : vector<8x128xf32>
    %159 = math.exp %158 : vector<8x128xf32>
    %cst_55 = arith.constant 1.000000e+00 : f32
    %160 = vector.broadcast %cst_55 : f32 to vector<8x128xf32>
    %161 = arith.addf %160, %159 : vector<8x128xf32>
    %162 = arith.divf %160, %161 : vector<8x128xf32>
    %163 = arith.mulf %154, %101 : vector<8x128xf32>
    %164 = arith.mulf %148, %156 : vector<8x128xf32>
    %165 = arith.addf %163, %164 : vector<8x128xf32>
    %166 = math.tanh %165 : vector<8x128xf32>
    %167 = arith.mulf %162, %166 : vector<8x128xf32>
    %c5 = arith.constant 5 : index
    %c0_56 = arith.constant 0 : index
    %c0_57 = arith.constant 0 : index
    %168 = vector.load %arg2[%c5, %c0_56, %c0_57] : memref<8x8x512xf32, #tpu.memory_space<vmem>>, vector<1x8x512xf32>
    %169 = vector.shape_cast %168 : vector<1x8x512xf32> to vector<8x512xf32>
    %cst_58 = arith.constant dense<0.000000e+00> : vector<8x512xf32>
    %170 = tpu.matmul %132, %6, %cst_58 {dimension_numbers = #tpu.dot_dimension_numbers<[1], [0], [0], [1], [0, 0, 1, 1], [], []>} : vector<8x128xf32>, vector<128x512xf32>, vector<8x512xf32> -> vector<8x512xf32>
    %171 = arith.addf %169, %170 : vector<8x512xf32>
    %172 = vector.extract_strided_slice %171 {offsets = [0, 0], sizes = [8, 128], strides = [1, 1]} : vector<8x512xf32> to vector<8x128xf32>
    %173 = arith.negf %172 : vector<8x128xf32>
    %174 = math.exp %173 : vector<8x128xf32>
    %cst_59 = arith.constant 1.000000e+00 : f32
    %175 = vector.broadcast %cst_59 : f32 to vector<8x128xf32>
    %176 = arith.addf %175, %174 : vector<8x128xf32>
    %177 = arith.divf %175, %176 : vector<8x128xf32>
    %178 = vector.extract_strided_slice %171 {offsets = [0, 128], sizes = [8, 128], strides = [1, 1]} : vector<8x512xf32> to vector<8x128xf32>
    %179 = arith.negf %178 : vector<8x128xf32>
    %180 = math.exp %179 : vector<8x128xf32>
    %cst_60 = arith.constant 1.000000e+00 : f32
    %181 = vector.broadcast %cst_60 : f32 to vector<8x128xf32>
    %182 = arith.addf %181, %180 : vector<8x128xf32>
    %183 = arith.divf %181, %182 : vector<8x128xf32>
    %184 = vector.extract_strided_slice %171 {offsets = [0, 256], sizes = [8, 128], strides = [1, 1]} : vector<8x512xf32> to vector<8x128xf32>
    %185 = math.tanh %184 : vector<8x128xf32>
    %186 = vector.extract_strided_slice %171 {offsets = [0, 384], sizes = [8, 128], strides = [1, 1]} : vector<8x512xf32> to vector<8x128xf32>
    %187 = arith.negf %186 : vector<8x128xf32>
    %188 = math.exp %187 : vector<8x128xf32>
    %cst_61 = arith.constant 1.000000e+00 : f32
    %189 = vector.broadcast %cst_61 : f32 to vector<8x128xf32>
    %190 = arith.addf %189, %188 : vector<8x128xf32>
    %191 = arith.divf %189, %190 : vector<8x128xf32>
    %192 = arith.mulf %183, %130 : vector<8x128xf32>
    %193 = arith.mulf %177, %185 : vector<8x128xf32>
    %194 = arith.addf %192, %193 : vector<8x128xf32>
    %195 = math.tanh %194 : vector<8x128xf32>
    %196 = arith.mulf %191, %195 : vector<8x128xf32>
    %c2_62 = arith.constant 2 : index
    %c0_63 = arith.constant 0 : index
    %c0_64 = arith.constant 0 : index
    %197 = vector.load %arg4[%c2_62, %c0_63, %c0_64] : memref<8x8x128xf32, #tpu.memory_space<vmem>>, vector<1x8x128xf32>
    %198 = vector.shape_cast %197 : vector<1x8x128xf32> to vector<8x128xf32>
    %199 = vector.shape_cast %167 : vector<8x128xf32> to vector<1x8x128xf32>
    tpu.vector_store %arg4[%c2_62, %c0_63, %c0_64], %199 {strides = array<i32>} : memref<8x8x128xf32, #tpu.memory_space<vmem>>, vector<1x8x128xf32>,
    %c5_65 = arith.constant 5 : index
    %c0_66 = arith.constant 0 : index
    %c0_67 = arith.constant 0 : index
    %200 = vector.load %arg5[%c5_65, %c0_66, %c0_67] : memref<8x8x128xf32, #tpu.memory_space<vmem>>, vector<1x8x128xf32>
    %201 = vector.shape_cast %200 : vector<1x8x128xf32> to vector<8x128xf32>
    %202 = vector.shape_cast %196 : vector<8x128xf32> to vector<1x8x128xf32>
    tpu.vector_store %arg5[%c5_65, %c0_66, %c0_67], %202 {strides = array<i32>} : memref<8x8x128xf32, #tpu.memory_space<vmem>>, vector<1x8x128xf32>,
    %c3 = arith.constant 3 : index
    %c0_68 = arith.constant 0 : index
    %c0_69 = arith.constant 0 : index
    %203 = vector.load %arg1[%c3, %c0_68, %c0_69] : memref<8x8x512xf32, #tpu.memory_space<vmem>>, vector<1x8x512xf32>
    %204 = vector.shape_cast %203 : vector<1x8x512xf32> to vector<8x512xf32>
    %cst_70 = arith.constant dense<0.000000e+00> : vector<8x512xf32>
    %205 = tpu.matmul %167, %4, %cst_70 {dimension_numbers = #tpu.dot_dimension_numbers<[1], [0], [0], [1], [0, 0, 1, 1], [], []>} : vector<8x128xf32>, vector<128x512xf32>, vector<8x512xf32> -> vector<8x512xf32>
    %206 = arith.addf %204, %205 : vector<8x512xf32>
    %207 = vector.extract_strided_slice %206 {offsets = [0, 0], sizes = [8, 128], strides = [1, 1]} : vector<8x512xf32> to vector<8x128xf32>
    %208 = arith.negf %207 : vector<8x128xf32>
    %209 = math.exp %208 : vector<8x128xf32>
    %cst_71 = arith.constant 1.000000e+00 : f32
    %210 = vector.broadcast %cst_71 : f32 to vector<8x128xf32>
    %211 = arith.addf %210, %209 : vector<8x128xf32>
    %212 = arith.divf %210, %211 : vector<8x128xf32>
    %213 = vector.extract_strided_slice %206 {offsets = [0, 128], sizes = [8, 128], strides = [1, 1]} : vector<8x512xf32> to vector<8x128xf32>
    %214 = arith.negf %213 : vector<8x128xf32>
    %215 = math.exp %214 : vector<8x128xf32>
    %cst_72 = arith.constant 1.000000e+00 : f32
    %216 = vector.broadcast %cst_72 : f32 to vector<8x128xf32>
    %217 = arith.addf %216, %215 : vector<8x128xf32>
    %218 = arith.divf %216, %217 : vector<8x128xf32>
    %219 = vector.extract_strided_slice %206 {offsets = [0, 256], sizes = [8, 128], strides = [1, 1]} : vector<8x512xf32> to vector<8x128xf32>
    %220 = math.tanh %219 : vector<8x128xf32>
    %221 = vector.extract_strided_slice %206 {offsets = [0, 384], sizes = [8, 128], strides = [1, 1]} : vector<8x512xf32> to vector<8x128xf32>
    %222 = arith.negf %221 : vector<8x128xf32>
    %223 = math.exp %222 : vector<8x128xf32>
    %cst_73 = arith.constant 1.000000e+00 : f32
    %224 = vector.broadcast %cst_73 : f32 to vector<8x128xf32>
    %225 = arith.addf %224, %223 : vector<8x128xf32>
    %226 = arith.divf %224, %225 : vector<8x128xf32>
    %227 = arith.mulf %218, %165 : vector<8x128xf32>
    %228 = arith.mulf %212, %220 : vector<8x128xf32>
    %229 = arith.addf %227, %228 : vector<8x128xf32>
    %230 = math.tanh %229 : vector<8x128xf32>
    %231 = arith.mulf %226, %230 : vector<8x128xf32>
    %c4 = arith.constant 4 : index
    %c0_74 = arith.constant 0 : index
    %c0_75 = arith.constant 0 : index
    %232 = vector.load %arg2[%c4, %c0_74, %c0_75] : memref<8x8x512xf32, #tpu.memory_space<vmem>>, vector<1x8x512xf32>
    %233 = vector.shape_cast %232 : vector<1x8x512xf32> to vector<8x512xf32>
    %cst_76 = arith.constant dense<0.000000e+00> : vector<8x512xf32>
    %234 = tpu.matmul %196, %6, %cst_76 {dimension_numbers = #tpu.dot_dimension_numbers<[1], [0], [0], [1], [0, 0, 1, 1], [], []>} : vector<8x128xf32>, vector<128x512xf32>, vector<8x512xf32> -> vector<8x512xf32>
    %235 = arith.addf %233, %234 : vector<8x512xf32>
    %236 = vector.extract_strided_slice %235 {offsets = [0, 0], sizes = [8, 128], strides = [1, 1]} : vector<8x512xf32> to vector<8x128xf32>
    %237 = arith.negf %236 : vector<8x128xf32>
    %238 = math.exp %237 : vector<8x128xf32>
    %cst_77 = arith.constant 1.000000e+00 : f32
    %239 = vector.broadcast %cst_77 : f32 to vector<8x128xf32>
    %240 = arith.addf %239, %238 : vector<8x128xf32>
    %241 = arith.divf %239, %240 : vector<8x128xf32>
    %242 = vector.extract_strided_slice %235 {offsets = [0, 128], sizes = [8, 128], strides = [1, 1]} : vector<8x512xf32> to vector<8x128xf32>
    %243 = arith.negf %242 : vector<8x128xf32>
    %244 = math.exp %243 : vector<8x128xf32>
    %cst_78 = arith.constant 1.000000e+00 : f32
    %245 = vector.broadcast %cst_78 : f32 to vector<8x128xf32>
    %246 = arith.addf %245, %244 : vector<8x128xf32>
    %247 = arith.divf %245, %246 : vector<8x128xf32>
    %248 = vector.extract_strided_slice %235 {offsets = [0, 256], sizes = [8, 128], strides = [1, 1]} : vector<8x512xf32> to vector<8x128xf32>
    %249 = math.tanh %248 : vector<8x128xf32>
    %250 = vector.extract_strided_slice %235 {offsets = [0, 384], sizes = [8, 128], strides = [1, 1]} : vector<8x512xf32> to vector<8x128xf32>
    %251 = arith.negf %250 : vector<8x128xf32>
    %252 = math.exp %251 : vector<8x128xf32>
    %cst_79 = arith.constant 1.000000e+00 : f32
    %253 = vector.broadcast %cst_79 : f32 to vector<8x128xf32>
    %254 = arith.addf %253, %252 : vector<8x128xf32>
    %255 = arith.divf %253, %254 : vector<8x128xf32>
    %256 = arith.mulf %247, %194 : vector<8x128xf32>
    %257 = arith.mulf %241, %249 : vector<8x128xf32>
    %258 = arith.addf %256, %257 : vector<8x128xf32>
    %259 = math.tanh %258 : vector<8x128xf32>
    %260 = arith.mulf %255, %259 : vector<8x128xf32>
    %c3_80 = arith.constant 3 : index
    %c0_81 = arith.constant 0 : index
    %c0_82 = arith.constant 0 : index
    %261 = vector.load %arg4[%c3_80, %c0_81, %c0_82] : memref<8x8x128xf32, #tpu.memory_space<vmem>>, vector<1x8x128xf32>
    %262 = vector.shape_cast %261 : vector<1x8x128xf32> to vector<8x128xf32>
    %263 = vector.shape_cast %231 : vector<8x128xf32> to vector<1x8x128xf32>
    tpu.vector_store %arg4[%c3_80, %c0_81, %c0_82], %263 {strides = array<i32>} : memref<8x8x128xf32, #tpu.memory_space<vmem>>, vector<1x8x128xf32>,
    %c4_83 = arith.constant 4 : index
    %c0_84 = arith.constant 0 : index
    %c0_85 = arith.constant 0 : index
    %264 = vector.load %arg5[%c4_83, %c0_84, %c0_85] : memref<8x8x128xf32, #tpu.memory_space<vmem>>, vector<1x8x128xf32>
    %265 = vector.shape_cast %264 : vector<1x8x128xf32> to vector<8x128xf32>
    %266 = vector.shape_cast %260 : vector<8x128xf32> to vector<1x8x128xf32>
    tpu.vector_store %arg5[%c4_83, %c0_84, %c0_85], %266 {strides = array<i32>} : memref<8x8x128xf32, #tpu.memory_space<vmem>>, vector<1x8x128xf32>,
    %c4_86 = arith.constant 4 : index
    %c0_87 = arith.constant 0 : index
    %c0_88 = arith.constant 0 : index
    %267 = vector.load %arg1[%c4_86, %c0_87, %c0_88] : memref<8x8x512xf32, #tpu.memory_space<vmem>>, vector<1x8x512xf32>
    %268 = vector.shape_cast %267 : vector<1x8x512xf32> to vector<8x512xf32>
    %cst_89 = arith.constant dense<0.000000e+00> : vector<8x512xf32>
    %269 = tpu.matmul %231, %4, %cst_89 {dimension_numbers = #tpu.dot_dimension_numbers<[1], [0], [0], [1], [0, 0, 1, 1], [], []>} : vector<8x128xf32>, vector<128x512xf32>, vector<8x512xf32> -> vector<8x512xf32>
    %270 = arith.addf %268, %269 : vector<8x512xf32>
    %271 = vector.extract_strided_slice %270 {offsets = [0, 0], sizes = [8, 128], strides = [1, 1]} : vector<8x512xf32> to vector<8x128xf32>
    %272 = arith.negf %271 : vector<8x128xf32>
    %273 = math.exp %272 : vector<8x128xf32>
    %cst_90 = arith.constant 1.000000e+00 : f32
    %274 = vector.broadcast %cst_90 : f32 to vector<8x128xf32>
    %275 = arith.addf %274, %273 : vector<8x128xf32>
    %276 = arith.divf %274, %275 : vector<8x128xf32>
    %277 = vector.extract_strided_slice %270 {offsets = [0, 128], sizes = [8, 128], strides = [1, 1]} : vector<8x512xf32> to vector<8x128xf32>
    %278 = arith.negf %277 : vector<8x128xf32>
    %279 = math.exp %278 : vector<8x128xf32>
    %cst_91 = arith.constant 1.000000e+00 : f32
    %280 = vector.broadcast %cst_91 : f32 to vector<8x128xf32>
    %281 = arith.addf %280, %279 : vector<8x128xf32>
    %282 = arith.divf %280, %281 : vector<8x128xf32>
    %283 = vector.extract_strided_slice %270 {offsets = [0, 256], sizes = [8, 128], strides = [1, 1]} : vector<8x512xf32> to vector<8x128xf32>
    %284 = math.tanh %283 : vector<8x128xf32>
    %285 = vector.extract_strided_slice %270 {offsets = [0, 384], sizes = [8, 128], strides = [1, 1]} : vector<8x512xf32> to vector<8x128xf32>
    %286 = arith.negf %285 : vector<8x128xf32>
    %287 = math.exp %286 : vector<8x128xf32>
    %cst_92 = arith.constant 1.000000e+00 : f32
    %288 = vector.broadcast %cst_92 : f32 to vector<8x128xf32>
    %289 = arith.addf %288, %287 : vector<8x128xf32>
    %290 = arith.divf %288, %289 : vector<8x128xf32>
    %291 = arith.mulf %282, %229 : vector<8x128xf32>
    %292 = arith.mulf %276, %284 : vector<8x128xf32>
    %293 = arith.addf %291, %292 : vector<8x128xf32>
    %294 = math.tanh %293 : vector<8x128xf32>
    %295 = arith.mulf %290, %294 : vector<8x128xf32>
    %c3_93 = arith.constant 3 : index
    %c0_94 = arith.constant 0 : index
    %c0_95 = arith.constant 0 : index
    %296 = vector.load %arg2[%c3_93, %c0_94, %c0_95] : memref<8x8x512xf32, #tpu.memory_space<vmem>>, vector<1x8x512xf32>
    %297 = vector.shape_cast %296 : vector<1x8x512xf32> to vector<8x512xf32>
    %cst_96 = arith.constant dense<0.000000e+00> : vector<8x512xf32>
    %298 = tpu.matmul %260, %6, %cst_96 {dimension_numbers = #tpu.dot_dimension_numbers<[1], [0], [0], [1], [0, 0, 1, 1], [], []>} : vector<8x128xf32>, vector<128x512xf32>, vector<8x512xf32> -> vector<8x512xf32>
    %299 = arith.addf %297, %298 : vector<8x512xf32>
    %300 = vector.extract_strided_slice %299 {offsets = [0, 0], sizes = [8, 128], strides = [1, 1]} : vector<8x512xf32> to vector<8x128xf32>
    %301 = arith.negf %300 : vector<8x128xf32>
    %302 = math.exp %301 : vector<8x128xf32>
    %cst_97 = arith.constant 1.000000e+00 : f32
    %303 = vector.broadcast %cst_97 : f32 to vector<8x128xf32>
    %304 = arith.addf %303, %302 : vector<8x128xf32>
    %305 = arith.divf %303, %304 : vector<8x128xf32>
    %306 = vector.extract_strided_slice %299 {offsets = [0, 128], sizes = [8, 128], strides = [1, 1]} : vector<8x512xf32> to vector<8x128xf32>
    %307 = arith.negf %306 : vector<8x128xf32>
    %308 = math.exp %307 : vector<8x128xf32>
    %cst_98 = arith.constant 1.000000e+00 : f32
    %309 = vector.broadcast %cst_98 : f32 to vector<8x128xf32>
    %310 = arith.addf %309, %308 : vector<8x128xf32>
    %311 = arith.divf %309, %310 : vector<8x128xf32>
    %312 = vector.extract_strided_slice %299 {offsets = [0, 256], sizes = [8, 128], strides = [1, 1]} : vector<8x512xf32> to vector<8x128xf32>
    %313 = math.tanh %312 : vector<8x128xf32>
    %314 = vector.extract_strided_slice %299 {offsets = [0, 384], sizes = [8, 128], strides = [1, 1]} : vector<8x512xf32> to vector<8x128xf32>
    %315 = arith.negf %314 : vector<8x128xf32>
    %316 = math.exp %315 : vector<8x128xf32>
    %cst_99 = arith.constant 1.000000e+00 : f32
    %317 = vector.broadcast %cst_99 : f32 to vector<8x128xf32>
    %318 = arith.addf %317, %316 : vector<8x128xf32>
    %319 = arith.divf %317, %318 : vector<8x128xf32>
    %320 = arith.mulf %311, %258 : vector<8x128xf32>
    %321 = arith.mulf %305, %313 : vector<8x128xf32>
    %322 = arith.addf %320, %321 : vector<8x128xf32>
    %323 = math.tanh %322 : vector<8x128xf32>
    %324 = arith.mulf %319, %323 : vector<8x128xf32>
    %c4_100 = arith.constant 4 : index
    %c0_101 = arith.constant 0 : index
    %c0_102 = arith.constant 0 : index
    %325 = vector.load %arg4[%c4_100, %c0_101, %c0_102] : memref<8x8x128xf32, #tpu.memory_space<vmem>>, vector<1x8x128xf32>
    %326 = vector.shape_cast %325 : vector<1x8x128xf32> to vector<8x128xf32>
    %327 = vector.shape_cast %295 : vector<8x128xf32> to vector<1x8x128xf32>
    tpu.vector_store %arg4[%c4_100, %c0_101, %c0_102], %327 {strides = array<i32>} : memref<8x8x128xf32, #tpu.memory_space<vmem>>, vector<1x8x128xf32>,
    %c3_103 = arith.constant 3 : index
    %c0_104 = arith.constant 0 : index
    %c0_105 = arith.constant 0 : index
    %328 = vector.load %arg5[%c3_103, %c0_104, %c0_105] : memref<8x8x128xf32, #tpu.memory_space<vmem>>, vector<1x8x128xf32>
    %329 = vector.shape_cast %328 : vector<1x8x128xf32> to vector<8x128xf32>
    %330 = vector.shape_cast %324 : vector<8x128xf32> to vector<1x8x128xf32>
    tpu.vector_store %arg5[%c3_103, %c0_104, %c0_105], %330 {strides = array<i32>} : memref<8x8x128xf32, #tpu.memory_space<vmem>>, vector<1x8x128xf32>,
    %c5_106 = arith.constant 5 : index
    %c0_107 = arith.constant 0 : index
    %c0_108 = arith.constant 0 : index
    %331 = vector.load %arg1[%c5_106, %c0_107, %c0_108] : memref<8x8x512xf32, #tpu.memory_space<vmem>>, vector<1x8x512xf32>
    %332 = vector.shape_cast %331 : vector<1x8x512xf32> to vector<8x512xf32>
    %cst_109 = arith.constant dense<0.000000e+00> : vector<8x512xf32>
    %333 = tpu.matmul %295, %4, %cst_109 {dimension_numbers = #tpu.dot_dimension_numbers<[1], [0], [0], [1], [0, 0, 1, 1], [], []>} : vector<8x128xf32>, vector<128x512xf32>, vector<8x512xf32> -> vector<8x512xf32>
    %334 = arith.addf %332, %333 : vector<8x512xf32>
    %335 = vector.extract_strided_slice %334 {offsets = [0, 0], sizes = [8, 128], strides = [1, 1]} : vector<8x512xf32> to vector<8x128xf32>
    %336 = arith.negf %335 : vector<8x128xf32>
    %337 = math.exp %336 : vector<8x128xf32>
    %cst_110 = arith.constant 1.000000e+00 : f32
    %338 = vector.broadcast %cst_110 : f32 to vector<8x128xf32>
    %339 = arith.addf %338, %337 : vector<8x128xf32>
    %340 = arith.divf %338, %339 : vector<8x128xf32>
    %341 = vector.extract_strided_slice %334 {offsets = [0, 128], sizes = [8, 128], strides = [1, 1]} : vector<8x512xf32> to vector<8x128xf32>
    %342 = arith.negf %341 : vector<8x128xf32>
    %343 = math.exp %342 : vector<8x128xf32>
    %cst_111 = arith.constant 1.000000e+00 : f32
    %344 = vector.broadcast %cst_111 : f32 to vector<8x128xf32>
    %345 = arith.addf %344, %343 : vector<8x128xf32>
    %346 = arith.divf %344, %345 : vector<8x128xf32>
    %347 = vector.extract_strided_slice %334 {offsets = [0, 256], sizes = [8, 128], strides = [1, 1]} : vector<8x512xf32> to vector<8x128xf32>
    %348 = math.tanh %347 : vector<8x128xf32>
    %349 = vector.extract_strided_slice %334 {offsets = [0, 384], sizes = [8, 128], strides = [1, 1]} : vector<8x512xf32> to vector<8x128xf32>
    %350 = arith.negf %349 : vector<8x128xf32>
    %351 = math.exp %350 : vector<8x128xf32>
    %cst_112 = arith.constant 1.000000e+00 : f32
    %352 = vector.broadcast %cst_112 : f32 to vector<8x128xf32>
    %353 = arith.addf %352, %351 : vector<8x128xf32>
    %354 = arith.divf %352, %353 : vector<8x128xf32>
    %355 = arith.mulf %346, %293 : vector<8x128xf32>
    %356 = arith.mulf %340, %348 : vector<8x128xf32>
    %357 = arith.addf %355, %356 : vector<8x128xf32>
    %358 = math.tanh %357 : vector<8x128xf32>
    %359 = arith.mulf %354, %358 : vector<8x128xf32>
    %c2_113 = arith.constant 2 : index
    %c0_114 = arith.constant 0 : index
    %c0_115 = arith.constant 0 : index
    %360 = vector.load %arg2[%c2_113, %c0_114, %c0_115] : memref<8x8x512xf32, #tpu.memory_space<vmem>>, vector<1x8x512xf32>
    %361 = vector.shape_cast %360 : vector<1x8x512xf32> to vector<8x512xf32>
    %cst_116 = arith.constant dense<0.000000e+00> : vector<8x512xf32>
    %362 = tpu.matmul %324, %6, %cst_116 {dimension_numbers = #tpu.dot_dimension_numbers<[1], [0], [0], [1], [0, 0, 1, 1], [], []>} : vector<8x128xf32>, vector<128x512xf32>, vector<8x512xf32> -> vector<8x512xf32>
    %363 = arith.addf %361, %362 : vector<8x512xf32>
    %364 = vector.extract_strided_slice %363 {offsets = [0, 0], sizes = [8, 128], strides = [1, 1]} : vector<8x512xf32> to vector<8x128xf32>
    %365 = arith.negf %364 : vector<8x128xf32>
    %366 = math.exp %365 : vector<8x128xf32>
    %cst_117 = arith.constant 1.000000e+00 : f32
    %367 = vector.broadcast %cst_117 : f32 to vector<8x128xf32>
    %368 = arith.addf %367, %366 : vector<8x128xf32>
    %369 = arith.divf %367, %368 : vector<8x128xf32>
    %370 = vector.extract_strided_slice %363 {offsets = [0, 128], sizes = [8, 128], strides = [1, 1]} : vector<8x512xf32> to vector<8x128xf32>
    %371 = arith.negf %370 : vector<8x128xf32>
    %372 = math.exp %371 : vector<8x128xf32>
    %cst_118 = arith.constant 1.000000e+00 : f32
    %373 = vector.broadcast %cst_118 : f32 to vector<8x128xf32>
    %374 = arith.addf %373, %372 : vector<8x128xf32>
    %375 = arith.divf %373, %374 : vector<8x128xf32>
    %376 = vector.extract_strided_slice %363 {offsets = [0, 256], sizes = [8, 128], strides = [1, 1]} : vector<8x512xf32> to vector<8x128xf32>
    %377 = math.tanh %376 : vector<8x128xf32>
    %378 = vector.extract_strided_slice %363 {offsets = [0, 384], sizes = [8, 128], strides = [1, 1]} : vector<8x512xf32> to vector<8x128xf32>
    %379 = arith.negf %378 : vector<8x128xf32>
    %380 = math.exp %379 : vector<8x128xf32>
    %cst_119 = arith.constant 1.000000e+00 : f32
    %381 = vector.broadcast %cst_119 : f32 to vector<8x128xf32>
    %382 = arith.addf %381, %380 : vector<8x128xf32>
    %383 = arith.divf %381, %382 : vector<8x128xf32>
    %384 = arith.mulf %375, %322 : vector<8x128xf32>
    %385 = arith.mulf %369, %377 : vector<8x128xf32>
    %386 = arith.addf %384, %385 : vector<8x128xf32>
    %387 = math.tanh %386 : vector<8x128xf32>
    %388 = arith.mulf %383, %387 : vector<8x128xf32>
    %c5_120 = arith.constant 5 : index
    %c0_121 = arith.constant 0 : index
    %c0_122 = arith.constant 0 : index
    %389 = vector.load %arg4[%c5_120, %c0_121, %c0_122] : memref<8x8x128xf32, #tpu.memory_space<vmem>>, vector<1x8x128xf32>
    %390 = vector.shape_cast %389 : vector<1x8x128xf32> to vector<8x128xf32>
    %391 = vector.shape_cast %359 : vector<8x128xf32> to vector<1x8x128xf32>
    tpu.vector_store %arg4[%c5_120, %c0_121, %c0_122], %391 {strides = array<i32>} : memref<8x8x128xf32, #tpu.memory_space<vmem>>, vector<1x8x128xf32>,
    %c2_123 = arith.constant 2 : index
    %c0_124 = arith.constant 0 : index
    %c0_125 = arith.constant 0 : index
    %392 = vector.load %arg5[%c2_123, %c0_124, %c0_125] : memref<8x8x128xf32, #tpu.memory_space<vmem>>, vector<1x8x128xf32>
    %393 = vector.shape_cast %392 : vector<1x8x128xf32> to vector<8x128xf32>
    %394 = vector.shape_cast %388 : vector<8x128xf32> to vector<1x8x128xf32>
    tpu.vector_store %arg5[%c2_123, %c0_124, %c0_125], %394 {strides = array<i32>} : memref<8x8x128xf32, #tpu.memory_space<vmem>>, vector<1x8x128xf32>,
    %c6_126 = arith.constant 6 : index
    %c0_127 = arith.constant 0 : index
    %c0_128 = arith.constant 0 : index
    %395 = vector.load %arg1[%c6_126, %c0_127, %c0_128] : memref<8x8x512xf32, #tpu.memory_space<vmem>>, vector<1x8x512xf32>
    %396 = vector.shape_cast %395 : vector<1x8x512xf32> to vector<8x512xf32>
    %cst_129 = arith.constant dense<0.000000e+00> : vector<8x512xf32>
    %397 = tpu.matmul %359, %4, %cst_129 {dimension_numbers = #tpu.dot_dimension_numbers<[1], [0], [0], [1], [0, 0, 1, 1], [], []>} : vector<8x128xf32>, vector<128x512xf32>, vector<8x512xf32> -> vector<8x512xf32>
    %398 = arith.addf %396, %397 : vector<8x512xf32>
    %399 = vector.extract_strided_slice %398 {offsets = [0, 0], sizes = [8, 128], strides = [1, 1]} : vector<8x512xf32> to vector<8x128xf32>
    %400 = arith.negf %399 : vector<8x128xf32>
    %401 = math.exp %400 : vector<8x128xf32>
    %cst_130 = arith.constant 1.000000e+00 : f32
    %402 = vector.broadcast %cst_130 : f32 to vector<8x128xf32>
    %403 = arith.addf %402, %401 : vector<8x128xf32>
    %404 = arith.divf %402, %403 : vector<8x128xf32>
    %405 = vector.extract_strided_slice %398 {offsets = [0, 128], sizes = [8, 128], strides = [1, 1]} : vector<8x512xf32> to vector<8x128xf32>
    %406 = arith.negf %405 : vector<8x128xf32>
    %407 = math.exp %406 : vector<8x128xf32>
    %cst_131 = arith.constant 1.000000e+00 : f32
    %408 = vector.broadcast %cst_131 : f32 to vector<8x128xf32>
    %409 = arith.addf %408, %407 : vector<8x128xf32>
    %410 = arith.divf %408, %409 : vector<8x128xf32>
    %411 = vector.extract_strided_slice %398 {offsets = [0, 256], sizes = [8, 128], strides = [1, 1]} : vector<8x512xf32> to vector<8x128xf32>
    %412 = math.tanh %411 : vector<8x128xf32>
    %413 = vector.extract_strided_slice %398 {offsets = [0, 384], sizes = [8, 128], strides = [1, 1]} : vector<8x512xf32> to vector<8x128xf32>
    %414 = arith.negf %413 : vector<8x128xf32>
    %415 = math.exp %414 : vector<8x128xf32>
    %cst_132 = arith.constant 1.000000e+00 : f32
    %416 = vector.broadcast %cst_132 : f32 to vector<8x128xf32>
    %417 = arith.addf %416, %415 : vector<8x128xf32>
    %418 = arith.divf %416, %417 : vector<8x128xf32>
    %419 = arith.mulf %410, %357 : vector<8x128xf32>
    %420 = arith.mulf %404, %412 : vector<8x128xf32>
    %421 = arith.addf %419, %420 : vector<8x128xf32>
    %422 = math.tanh %421 : vector<8x128xf32>
    %423 = arith.mulf %418, %422 : vector<8x128xf32>
    %c1_133 = arith.constant 1 : index
    %c0_134 = arith.constant 0 : index
    %c0_135 = arith.constant 0 : index
    %424 = vector.load %arg2[%c1_133, %c0_134, %c0_135] : memref<8x8x512xf32, #tpu.memory_space<vmem>>, vector<1x8x512xf32>
    %425 = vector.shape_cast %424 : vector<1x8x512xf32> to vector<8x512xf32>
    %cst_136 = arith.constant dense<0.000000e+00> : vector<8x512xf32>
    %426 = tpu.matmul %388, %6, %cst_136 {dimension_numbers = #tpu.dot_dimension_numbers<[1], [0], [0], [1], [0, 0, 1, 1], [], []>} : vector<8x128xf32>, vector<128x512xf32>, vector<8x512xf32> -> vector<8x512xf32>
    %427 = arith.addf %425, %426 : vector<8x512xf32>
    %428 = vector.extract_strided_slice %427 {offsets = [0, 0], sizes = [8, 128], strides = [1, 1]} : vector<8x512xf32> to vector<8x128xf32>
    %429 = arith.negf %428 : vector<8x128xf32>
    %430 = math.exp %429 : vector<8x128xf32>
    %cst_137 = arith.constant 1.000000e+00 : f32
    %431 = vector.broadcast %cst_137 : f32 to vector<8x128xf32>
    %432 = arith.addf %431, %430 : vector<8x128xf32>
    %433 = arith.divf %431, %432 : vector<8x128xf32>
    %434 = vector.extract_strided_slice %427 {offsets = [0, 128], sizes = [8, 128], strides = [1, 1]} : vector<8x512xf32> to vector<8x128xf32>
    %435 = arith.negf %434 : vector<8x128xf32>
    %436 = math.exp %435 : vector<8x128xf32>
    %cst_138 = arith.constant 1.000000e+00 : f32
    %437 = vector.broadcast %cst_138 : f32 to vector<8x128xf32>
    %438 = arith.addf %437, %436 : vector<8x128xf32>
    %439 = arith.divf %437, %438 : vector<8x128xf32>
    %440 = vector.extract_strided_slice %427 {offsets = [0, 256], sizes = [8, 128], strides = [1, 1]} : vector<8x512xf32> to vector<8x128xf32>
    %441 = math.tanh %440 : vector<8x128xf32>
    %442 = vector.extract_strided_slice %427 {offsets = [0, 384], sizes = [8, 128], strides = [1, 1]} : vector<8x512xf32> to vector<8x128xf32>
    %443 = arith.negf %442 : vector<8x128xf32>
    %444 = math.exp %443 : vector<8x128xf32>
    %cst_139 = arith.constant 1.000000e+00 : f32
    %445 = vector.broadcast %cst_139 : f32 to vector<8x128xf32>
    %446 = arith.addf %445, %444 : vector<8x128xf32>
    %447 = arith.divf %445, %446 : vector<8x128xf32>
    %448 = arith.mulf %439, %386 : vector<8x128xf32>
    %449 = arith.mulf %433, %441 : vector<8x128xf32>
    %450 = arith.addf %448, %449 : vector<8x128xf32>
    %451 = math.tanh %450 : vector<8x128xf32>
    %452 = arith.mulf %447, %451 : vector<8x128xf32>
    %c6_140 = arith.constant 6 : index
    %c0_141 = arith.constant 0 : index
    %c0_142 = arith.constant 0 : index
    %453 = vector.load %arg4[%c6_140, %c0_141, %c0_142] : memref<8x8x128xf32, #tpu.memory_space<vmem>>, vector<1x8x128xf32>
    %454 = vector.shape_cast %453 : vector<1x8x128xf32> to vector<8x128xf32>
    %455 = vector.shape_cast %423 : vector<8x128xf32> to vector<1x8x128xf32>
    tpu.vector_store %arg4[%c6_140, %c0_141, %c0_142], %455 {strides = array<i32>} : memref<8x8x128xf32, #tpu.memory_space<vmem>>, vector<1x8x128xf32>,
    %c1_143 = arith.constant 1 : index
    %c0_144 = arith.constant 0 : index
    %c0_145 = arith.constant 0 : index
    %456 = vector.load %arg5[%c1_143, %c0_144, %c0_145] : memref<8x8x128xf32, #tpu.memory_space<vmem>>, vector<1x8x128xf32>
    %457 = vector.shape_cast %456 : vector<1x8x128xf32> to vector<8x128xf32>
    %458 = vector.shape_cast %452 : vector<8x128xf32> to vector<1x8x128xf32>
    tpu.vector_store %arg5[%c1_143, %c0_144, %c0_145], %458 {strides = array<i32>} : memref<8x8x128xf32, #tpu.memory_space<vmem>>, vector<1x8x128xf32>,
    %c7_146 = arith.constant 7 : index
    %c0_147 = arith.constant 0 : index
    %c0_148 = arith.constant 0 : index
    %459 = vector.load %arg1[%c7_146, %c0_147, %c0_148] : memref<8x8x512xf32, #tpu.memory_space<vmem>>, vector<1x8x512xf32>
    %460 = vector.shape_cast %459 : vector<1x8x512xf32> to vector<8x512xf32>
    %cst_149 = arith.constant dense<0.000000e+00> : vector<8x512xf32>
    %461 = tpu.matmul %423, %4, %cst_149 {dimension_numbers = #tpu.dot_dimension_numbers<[1], [0], [0], [1], [0, 0, 1, 1], [], []>} : vector<8x128xf32>, vector<128x512xf32>, vector<8x512xf32> -> vector<8x512xf32>
    %462 = arith.addf %460, %461 : vector<8x512xf32>
    %463 = vector.extract_strided_slice %462 {offsets = [0, 0], sizes = [8, 128], strides = [1, 1]} : vector<8x512xf32> to vector<8x128xf32>
    %464 = arith.negf %463 : vector<8x128xf32>
    %465 = math.exp %464 : vector<8x128xf32>
    %cst_150 = arith.constant 1.000000e+00 : f32
    %466 = vector.broadcast %cst_150 : f32 to vector<8x128xf32>
    %467 = arith.addf %466, %465 : vector<8x128xf32>
    %468 = arith.divf %466, %467 : vector<8x128xf32>
    %469 = vector.extract_strided_slice %462 {offsets = [0, 128], sizes = [8, 128], strides = [1, 1]} : vector<8x512xf32> to vector<8x128xf32>
    %470 = arith.negf %469 : vector<8x128xf32>
    %471 = math.exp %470 : vector<8x128xf32>
    %cst_151 = arith.constant 1.000000e+00 : f32
    %472 = vector.broadcast %cst_151 : f32 to vector<8x128xf32>
    %473 = arith.addf %472, %471 : vector<8x128xf32>
    %474 = arith.divf %472, %473 : vector<8x128xf32>
    %475 = vector.extract_strided_slice %462 {offsets = [0, 256], sizes = [8, 128], strides = [1, 1]} : vector<8x512xf32> to vector<8x128xf32>
    %476 = math.tanh %475 : vector<8x128xf32>
    %477 = vector.extract_strided_slice %462 {offsets = [0, 384], sizes = [8, 128], strides = [1, 1]} : vector<8x512xf32> to vector<8x128xf32>
    %478 = arith.negf %477 : vector<8x128xf32>
    %479 = math.exp %478 : vector<8x128xf32>
    %cst_152 = arith.constant 1.000000e+00 : f32
    %480 = vector.broadcast %cst_152 : f32 to vector<8x128xf32>
    %481 = arith.addf %480, %479 : vector<8x128xf32>
    %482 = arith.divf %480, %481 : vector<8x128xf32>
    %483 = arith.mulf %474, %421 : vector<8x128xf32>
    %484 = arith.mulf %468, %476 : vector<8x128xf32>
    %485 = arith.addf %483, %484 : vector<8x128xf32>
    %486 = math.tanh %485 : vector<8x128xf32>
    %487 = arith.mulf %482, %486 : vector<8x128xf32>
    %c0_153 = arith.constant 0 : index
    %c0_154 = arith.constant 0 : index
    %c0_155 = arith.constant 0 : index
    %488 = vector.load %arg2[%c0_153, %c0_154, %c0_155] : memref<8x8x512xf32, #tpu.memory_space<vmem>>, vector<1x8x512xf32>
    %489 = vector.shape_cast %488 : vector<1x8x512xf32> to vector<8x512xf32>
    %cst_156 = arith.constant dense<0.000000e+00> : vector<8x512xf32>
    %490 = tpu.matmul %452, %6, %cst_156 {dimension_numbers = #tpu.dot_dimension_numbers<[1], [0], [0], [1], [0, 0, 1, 1], [], []>} : vector<8x128xf32>, vector<128x512xf32>, vector<8x512xf32> -> vector<8x512xf32>
    %491 = arith.addf %489, %490 : vector<8x512xf32>
    %492 = vector.extract_strided_slice %491 {offsets = [0, 0], sizes = [8, 128], strides = [1, 1]} : vector<8x512xf32> to vector<8x128xf32>
    %493 = arith.negf %492 : vector<8x128xf32>
    %494 = math.exp %493 : vector<8x128xf32>
    %cst_157 = arith.constant 1.000000e+00 : f32
    %495 = vector.broadcast %cst_157 : f32 to vector<8x128xf32>
    %496 = arith.addf %495, %494 : vector<8x128xf32>
    %497 = arith.divf %495, %496 : vector<8x128xf32>
    %498 = vector.extract_strided_slice %491 {offsets = [0, 128], sizes = [8, 128], strides = [1, 1]} : vector<8x512xf32> to vector<8x128xf32>
    %499 = arith.negf %498 : vector<8x128xf32>
    %500 = math.exp %499 : vector<8x128xf32>
    %cst_158 = arith.constant 1.000000e+00 : f32
    %501 = vector.broadcast %cst_158 : f32 to vector<8x128xf32>
    %502 = arith.addf %501, %500 : vector<8x128xf32>
    %503 = arith.divf %501, %502 : vector<8x128xf32>
    %504 = vector.extract_strided_slice %491 {offsets = [0, 256], sizes = [8, 128], strides = [1, 1]} : vector<8x512xf32> to vector<8x128xf32>
    %505 = math.tanh %504 : vector<8x128xf32>
    %506 = vector.extract_strided_slice %491 {offsets = [0, 384], sizes = [8, 128], strides = [1, 1]} : vector<8x512xf32> to vector<8x128xf32>
    %507 = arith.negf %506 : vector<8x128xf32>
    %508 = math.exp %507 : vector<8x128xf32>
    %cst_159 = arith.constant 1.000000e+00 : f32
    %509 = vector.broadcast %cst_159 : f32 to vector<8x128xf32>
    %510 = arith.addf %509, %508 : vector<8x128xf32>
    %511 = arith.divf %509, %510 : vector<8x128xf32>
    %512 = arith.mulf %503, %450 : vector<8x128xf32>
    %513 = arith.mulf %497, %505 : vector<8x128xf32>
    %514 = arith.addf %512, %513 : vector<8x128xf32>
    %515 = math.tanh %514 : vector<8x128xf32>
    %516 = arith.mulf %511, %515 : vector<8x128xf32>
    %c7_160 = arith.constant 7 : index
    %c0_161 = arith.constant 0 : index
    %c0_162 = arith.constant 0 : index
    %517 = vector.load %arg4[%c7_160, %c0_161, %c0_162] : memref<8x8x128xf32, #tpu.memory_space<vmem>>, vector<1x8x128xf32>
    %518 = vector.shape_cast %517 : vector<1x8x128xf32> to vector<8x128xf32>
    %519 = vector.shape_cast %487 : vector<8x128xf32> to vector<1x8x128xf32>
    tpu.vector_store %arg4[%c7_160, %c0_161, %c0_162], %519 {strides = array<i32>} : memref<8x8x128xf32, #tpu.memory_space<vmem>>, vector<1x8x128xf32>,
    %c0_163 = arith.constant 0 : index
    %c0_164 = arith.constant 0 : index
    %c0_165 = arith.constant 0 : index
    %520 = vector.load %arg5[%c0_163, %c0_164, %c0_165] : memref<8x8x128xf32, #tpu.memory_space<vmem>>, vector<1x8x128xf32>
    %521 = vector.shape_cast %520 : vector<1x8x128xf32> to vector<8x128xf32>
    %522 = vector.shape_cast %516 : vector<8x128xf32> to vector<1x8x128xf32>
    tpu.vector_store %arg5[%c0_163, %c0_164, %c0_165], %522 {strides = array<i32>} : memref<8x8x128xf32, #tpu.memory_space<vmem>>, vector<1x8x128xf32>,
    %c0_166 = arith.constant 0 : index
    %c0_167 = arith.constant 0 : index
    %523 = vector.load %arg6[%c0_166, %c0_167] : memref<8x128xf32, #tpu.memory_space<vmem>>, vector<8x128xf32>
    tpu.vector_store %arg6[%c0_166, %c0_167], %487 {strides = array<i32>} : memref<8x128xf32, #tpu.memory_space<vmem>>, vector<8x128xf32>,
    %c0_168 = arith.constant 0 : index
    %c0_169 = arith.constant 0 : index
    %524 = vector.load %arg7[%c0_168, %c0_169] : memref<8x128xf32, #tpu.memory_space<vmem>>, vector<8x128xf32>
    tpu.vector_store %arg7[%c0_168, %c0_169], %485 {strides = array<i32>} : memref<8x128xf32, #tpu.memory_space<vmem>>, vector<8x128xf32>,
    %c0_170 = arith.constant 0 : index
    %c0_171 = arith.constant 0 : index
    %525 = vector.load %arg8[%c0_170, %c0_171] : memref<8x128xf32, #tpu.memory_space<vmem>>, vector<8x128xf32>
    tpu.vector_store %arg8[%c0_170, %c0_171], %516 {strides = array<i32>} : memref<8x128xf32, #tpu.memory_space<vmem>>, vector<8x128xf32>,
    %c0_172 = arith.constant 0 : index
    %c0_173 = arith.constant 0 : index
    %526 = vector.load %arg9[%c0_172, %c0_173] : memref<8x128xf32, #tpu.memory_space<vmem>>, vector<8x128xf32>
    tpu.vector_store %arg9[%c0_172, %c0_173], %514 {strides = array<i32>} : memref<8x128xf32, #tpu.memory_space<vmem>>, vector<8x128xf32>,
    return
  }
  func.func @transform_0(%arg0: i32) -> (i32, i32, i32) {
    %c0_i32 = arith.constant 0 : i32
    %c0_i32_0 = arith.constant 0 : i32
    %c0_i32_1 = arith.constant 0 : i32
    return %arg0, %c0_i32, %c0_i32_0 : i32, i32, i32
  }
  func.func @transform_1(%arg0: i32) -> (i32, i32, i32) {
    %c1_i32 = arith.constant 1 : i32
    %0 = arith.subi %c1_i32, %arg0 : i32
    %c0_i32 = arith.constant 0 : i32
    %c0_i32_0 = arith.constant 0 : i32
    %c0_i32_1 = arith.constant 0 : i32
    return %0, %c0_i32, %c0_i32_0 : i32, i32, i32
  }
  func.func @transform_2(%arg0: i32) -> (i32, i32, i32) {
    %c0_i32 = arith.constant 0 : i32
    %c0_i32_0 = arith.constant 0 : i32
    %c0_i32_1 = arith.constant 0 : i32
    %c0_i32_2 = arith.constant 0 : i32
    return %c0_i32, %c0_i32_0, %c0_i32_1 : i32, i32, i32
  }
  func.func @transform_3(%arg0: i32) -> (i32, i32, i32) {
    %c0_i32 = arith.constant 0 : i32
    %c0_i32_0 = arith.constant 0 : i32
    %c0_i32_1 = arith.constant 0 : i32
    return %arg0, %c0_i32, %c0_i32_0 : i32, i32, i32
  }
  func.func @transform_4(%arg0: i32) -> (i32, i32, i32) {
    %c1_i32 = arith.constant 1 : i32
    %0 = arith.subi %c1_i32, %arg0 : i32
    %c0_i32 = arith.constant 0 : i32
    %c0_i32_0 = arith.constant 0 : i32
    %c0_i32_1 = arith.constant 0 : i32
    return %0, %c0_i32, %c0_i32_0 : i32, i32, i32
  }
}

module attributes {stable_mosaic.version = 11 : i64} {
  func.func @kernel(%arg0: i32, %arg1: memref<8x8x512xf32, #tpu.memory_space<vmem>>, %arg2: memref<8x8x512xf32, #tpu.memory_space<vmem>>, %arg3: memref<2x128x512xf32, #tpu.memory_space<vmem>>, %arg4: memref<8x256xf32, #tpu.memory_space<vmem>>, %arg5: memref<8x128xf32, #tpu.memory_space<vmem>>, %arg6: memref<8x128xf32, #tpu.memory_space<vmem>>, %arg7: memref<8x128xf32, #tpu.memory_space<vmem>>, %arg8: memref<8x128xf32, #tpu.memory_space<vmem>>) attributes {dimension_semantics = [#tpu.dimension_semantics<arbitrary>], iteration_bounds = array<i64: 2>, scalar_prefetch = 0 : i64, scratch_operands = 4 : i64, tpu.core_type = #tpu.core_type<tc>, window_params = [{transform_indices = @transform_0, window_bounds = array<i64: 8, 8, 512>}, {transform_indices = @transform_1, window_bounds = array<i64: 8, 8, 512>}, {pipeline_mode = #tpu.pipeline_mode<synchronous>, transform_indices = @transform_2, window_bounds = array<i64: 2, 128, 512>}, {pipeline_mode = #tpu.pipeline_mode<synchronous>, transform_indices = @transform_3, window_bounds = array<i64: 8, 256>}]} {
    %c0_i32 = arith.constant 0 : i32
    %0 = arith.cmpi eq, %arg0, %c0_i32 : i32
    %1 = arith.extui %0 : i1 to i32
    %c0_i32_0 = arith.constant 0 : i32
    %2 = arith.cmpi ne, %1, %c0_i32_0 : i32
    scf.if %2 {
      %cst_127 = arith.constant 0.000000e+00 : f32
      %482 = vector.broadcast %cst_127 : f32 to vector<8x128xf32>
      %c0_128 = arith.constant 0 : index
      %c0_129 = arith.constant 0 : index
      %483 = vector.load %arg5[%c0_128, %c0_129] : memref<8x128xf32, #tpu.memory_space<vmem>>, vector<8x128xf32>
      tpu.vector_store %arg5[%c0_128, %c0_129], %482 {strides = array<i32>} : memref<8x128xf32, #tpu.memory_space<vmem>>, vector<8x128xf32>,
      %cst_130 = arith.constant 0.000000e+00 : f32
      %484 = vector.broadcast %cst_130 : f32 to vector<8x128xf32>
      %c0_131 = arith.constant 0 : index
      %c0_132 = arith.constant 0 : index
      %485 = vector.load %arg6[%c0_131, %c0_132] : memref<8x128xf32, #tpu.memory_space<vmem>>, vector<8x128xf32>
      tpu.vector_store %arg6[%c0_131, %c0_132], %484 {strides = array<i32>} : memref<8x128xf32, #tpu.memory_space<vmem>>, vector<8x128xf32>,
      %cst_133 = arith.constant 0.000000e+00 : f32
      %486 = vector.broadcast %cst_133 : f32 to vector<8x128xf32>
      %c0_134 = arith.constant 0 : index
      %c0_135 = arith.constant 0 : index
      %487 = vector.load %arg7[%c0_134, %c0_135] : memref<8x128xf32, #tpu.memory_space<vmem>>, vector<8x128xf32>
      tpu.vector_store %arg7[%c0_134, %c0_135], %486 {strides = array<i32>} : memref<8x128xf32, #tpu.memory_space<vmem>>, vector<8x128xf32>,
      %cst_136 = arith.constant 0.000000e+00 : f32
      %488 = vector.broadcast %cst_136 : f32 to vector<8x128xf32>
      %c0_137 = arith.constant 0 : index
      %c0_138 = arith.constant 0 : index
      %489 = vector.load %arg8[%c0_137, %c0_138] : memref<8x128xf32, #tpu.memory_space<vmem>>, vector<8x128xf32>
      tpu.vector_store %arg8[%c0_137, %c0_138], %488 {strides = array<i32>} : memref<8x128xf32, #tpu.memory_space<vmem>>, vector<8x128xf32>,
    } else {
    }
    %c0 = arith.constant 0 : index
    %c0_1 = arith.constant 0 : index
    %c0_2 = arith.constant 0 : index
    %3 = vector.load %arg3[%c0, %c0_1, %c0_2] : memref<2x128x512xf32, #tpu.memory_space<vmem>>, vector<1x128x512xf32>
    %4 = vector.shape_cast %3 : vector<1x128x512xf32> to vector<128x512xf32>
    %c1 = arith.constant 1 : index
    %c0_3 = arith.constant 0 : index
    %c0_4 = arith.constant 0 : index
    %5 = vector.load %arg3[%c1, %c0_3, %c0_4] : memref<2x128x512xf32, #tpu.memory_space<vmem>>, vector<1x128x512xf32>
    %6 = vector.shape_cast %5 : vector<1x128x512xf32> to vector<128x512xf32>
    %c0_5 = arith.constant 0 : index
    %c0_6 = arith.constant 0 : index
    %7 = vector.load %arg5[%c0_5, %c0_6] : memref<8x128xf32, #tpu.memory_space<vmem>>, vector<8x128xf32>
    %c0_7 = arith.constant 0 : index
    %c0_8 = arith.constant 0 : index
    %8 = vector.load %arg6[%c0_7, %c0_8] : memref<8x128xf32, #tpu.memory_space<vmem>>, vector<8x128xf32>
    %c0_9 = arith.constant 0 : index
    %c0_10 = arith.constant 0 : index
    %9 = vector.load %arg7[%c0_9, %c0_10] : memref<8x128xf32, #tpu.memory_space<vmem>>, vector<8x128xf32>
    %c0_11 = arith.constant 0 : index
    %c0_12 = arith.constant 0 : index
    %10 = vector.load %arg8[%c0_11, %c0_12] : memref<8x128xf32, #tpu.memory_space<vmem>>, vector<8x128xf32>
    %c0_13 = arith.constant 0 : index
    %c0_14 = arith.constant 0 : index
    %c0_15 = arith.constant 0 : index
    %11 = vector.load %arg1[%c0_13, %c0_14, %c0_15] : memref<8x8x512xf32, #tpu.memory_space<vmem>>, vector<1x8x512xf32>
    %12 = vector.shape_cast %11 : vector<1x8x512xf32> to vector<8x512xf32>
    %cst = arith.constant dense<0.000000e+00> : vector<8x512xf32>
    %13 = tpu.matmul %7, %4, %cst {dimension_numbers = #tpu.dot_dimension_numbers<[1], [0], [0], [1], [0, 0, 1, 1], [], []>} : vector<8x128xf32>, vector<128x512xf32>, vector<8x512xf32> -> vector<8x512xf32>
    %14 = arith.addf %12, %13 : vector<8x512xf32>
    %15 = vector.extract_strided_slice %14 {offsets = [0, 0], sizes = [8, 128], strides = [1, 1]} : vector<8x512xf32> to vector<8x128xf32>
    %16 = arith.negf %15 : vector<8x128xf32>
    %17 = math.exp %16 : vector<8x128xf32>
    %cst_16 = arith.constant 1.000000e+00 : f32
    %18 = vector.broadcast %cst_16 : f32 to vector<8x128xf32>
    %19 = arith.addf %18, %17 : vector<8x128xf32>
    %20 = arith.divf %18, %19 : vector<8x128xf32>
    %21 = vector.extract_strided_slice %14 {offsets = [0, 128], sizes = [8, 128], strides = [1, 1]} : vector<8x512xf32> to vector<8x128xf32>
    %22 = arith.negf %21 : vector<8x128xf32>
    %23 = math.exp %22 : vector<8x128xf32>
    %cst_17 = arith.constant 1.000000e+00 : f32
    %24 = vector.broadcast %cst_17 : f32 to vector<8x128xf32>
    %25 = arith.addf %24, %23 : vector<8x128xf32>
    %26 = arith.divf %24, %25 : vector<8x128xf32>
    %27 = vector.extract_strided_slice %14 {offsets = [0, 256], sizes = [8, 128], strides = [1, 1]} : vector<8x512xf32> to vector<8x128xf32>
    %28 = math.tanh %27 : vector<8x128xf32>
    %29 = vector.extract_strided_slice %14 {offsets = [0, 384], sizes = [8, 128], strides = [1, 1]} : vector<8x512xf32> to vector<8x128xf32>
    %30 = arith.negf %29 : vector<8x128xf32>
    %31 = math.exp %30 : vector<8x128xf32>
    %cst_18 = arith.constant 1.000000e+00 : f32
    %32 = vector.broadcast %cst_18 : f32 to vector<8x128xf32>
    %33 = arith.addf %32, %31 : vector<8x128xf32>
    %34 = arith.divf %32, %33 : vector<8x128xf32>
    %35 = arith.mulf %26, %8 : vector<8x128xf32>
    %36 = arith.mulf %20, %28 : vector<8x128xf32>
    %37 = arith.addf %35, %36 : vector<8x128xf32>
    %38 = math.tanh %37 : vector<8x128xf32>
    %39 = arith.mulf %34, %38 : vector<8x128xf32>
    %c7 = arith.constant 7 : index
    %c0_19 = arith.constant 0 : index
    %c0_20 = arith.constant 0 : index
    %40 = vector.load %arg2[%c7, %c0_19, %c0_20] : memref<8x8x512xf32, #tpu.memory_space<vmem>>, vector<1x8x512xf32>
    %41 = vector.shape_cast %40 : vector<1x8x512xf32> to vector<8x512xf32>
    %cst_21 = arith.constant dense<0.000000e+00> : vector<8x512xf32>
    %42 = tpu.matmul %9, %6, %cst_21 {dimension_numbers = #tpu.dot_dimension_numbers<[1], [0], [0], [1], [0, 0, 1, 1], [], []>} : vector<8x128xf32>, vector<128x512xf32>, vector<8x512xf32> -> vector<8x512xf32>
    %43 = arith.addf %41, %42 : vector<8x512xf32>
    %44 = vector.extract_strided_slice %43 {offsets = [0, 0], sizes = [8, 128], strides = [1, 1]} : vector<8x512xf32> to vector<8x128xf32>
    %45 = arith.negf %44 : vector<8x128xf32>
    %46 = math.exp %45 : vector<8x128xf32>
    %cst_22 = arith.constant 1.000000e+00 : f32
    %47 = vector.broadcast %cst_22 : f32 to vector<8x128xf32>
    %48 = arith.addf %47, %46 : vector<8x128xf32>
    %49 = arith.divf %47, %48 : vector<8x128xf32>
    %50 = vector.extract_strided_slice %43 {offsets = [0, 128], sizes = [8, 128], strides = [1, 1]} : vector<8x512xf32> to vector<8x128xf32>
    %51 = arith.negf %50 : vector<8x128xf32>
    %52 = math.exp %51 : vector<8x128xf32>
    %cst_23 = arith.constant 1.000000e+00 : f32
    %53 = vector.broadcast %cst_23 : f32 to vector<8x128xf32>
    %54 = arith.addf %53, %52 : vector<8x128xf32>
    %55 = arith.divf %53, %54 : vector<8x128xf32>
    %56 = vector.extract_strided_slice %43 {offsets = [0, 256], sizes = [8, 128], strides = [1, 1]} : vector<8x512xf32> to vector<8x128xf32>
    %57 = math.tanh %56 : vector<8x128xf32>
    %58 = vector.extract_strided_slice %43 {offsets = [0, 384], sizes = [8, 128], strides = [1, 1]} : vector<8x512xf32> to vector<8x128xf32>
    %59 = arith.negf %58 : vector<8x128xf32>
    %60 = math.exp %59 : vector<8x128xf32>
    %cst_24 = arith.constant 1.000000e+00 : f32
    %61 = vector.broadcast %cst_24 : f32 to vector<8x128xf32>
    %62 = arith.addf %61, %60 : vector<8x128xf32>
    %63 = arith.divf %61, %62 : vector<8x128xf32>
    %64 = arith.mulf %55, %10 : vector<8x128xf32>
    %65 = arith.mulf %49, %57 : vector<8x128xf32>
    %66 = arith.addf %64, %65 : vector<8x128xf32>
    %67 = math.tanh %66 : vector<8x128xf32>
    %68 = arith.mulf %63, %67 : vector<8x128xf32>
    %c1_25 = arith.constant 1 : index
    %c0_26 = arith.constant 0 : index
    %c0_27 = arith.constant 0 : index
    %69 = vector.load %arg1[%c1_25, %c0_26, %c0_27] : memref<8x8x512xf32, #tpu.memory_space<vmem>>, vector<1x8x512xf32>
    %70 = vector.shape_cast %69 : vector<1x8x512xf32> to vector<8x512xf32>
    %cst_28 = arith.constant dense<0.000000e+00> : vector<8x512xf32>
    %71 = tpu.matmul %39, %4, %cst_28 {dimension_numbers = #tpu.dot_dimension_numbers<[1], [0], [0], [1], [0, 0, 1, 1], [], []>} : vector<8x128xf32>, vector<128x512xf32>, vector<8x512xf32> -> vector<8x512xf32>
    %72 = arith.addf %70, %71 : vector<8x512xf32>
    %73 = vector.extract_strided_slice %72 {offsets = [0, 0], sizes = [8, 128], strides = [1, 1]} : vector<8x512xf32> to vector<8x128xf32>
    %74 = arith.negf %73 : vector<8x128xf32>
    %75 = math.exp %74 : vector<8x128xf32>
    %cst_29 = arith.constant 1.000000e+00 : f32
    %76 = vector.broadcast %cst_29 : f32 to vector<8x128xf32>
    %77 = arith.addf %76, %75 : vector<8x128xf32>
    %78 = arith.divf %76, %77 : vector<8x128xf32>
    %79 = vector.extract_strided_slice %72 {offsets = [0, 128], sizes = [8, 128], strides = [1, 1]} : vector<8x512xf32> to vector<8x128xf32>
    %80 = arith.negf %79 : vector<8x128xf32>
    %81 = math.exp %80 : vector<8x128xf32>
    %cst_30 = arith.constant 1.000000e+00 : f32
    %82 = vector.broadcast %cst_30 : f32 to vector<8x128xf32>
    %83 = arith.addf %82, %81 : vector<8x128xf32>
    %84 = arith.divf %82, %83 : vector<8x128xf32>
    %85 = vector.extract_strided_slice %72 {offsets = [0, 256], sizes = [8, 128], strides = [1, 1]} : vector<8x512xf32> to vector<8x128xf32>
    %86 = math.tanh %85 : vector<8x128xf32>
    %87 = vector.extract_strided_slice %72 {offsets = [0, 384], sizes = [8, 128], strides = [1, 1]} : vector<8x512xf32> to vector<8x128xf32>
    %88 = arith.negf %87 : vector<8x128xf32>
    %89 = math.exp %88 : vector<8x128xf32>
    %cst_31 = arith.constant 1.000000e+00 : f32
    %90 = vector.broadcast %cst_31 : f32 to vector<8x128xf32>
    %91 = arith.addf %90, %89 : vector<8x128xf32>
    %92 = arith.divf %90, %91 : vector<8x128xf32>
    %93 = arith.mulf %84, %37 : vector<8x128xf32>
    %94 = arith.mulf %78, %86 : vector<8x128xf32>
    %95 = arith.addf %93, %94 : vector<8x128xf32>
    %96 = math.tanh %95 : vector<8x128xf32>
    %97 = arith.mulf %92, %96 : vector<8x128xf32>
    %c6 = arith.constant 6 : index
    %c0_32 = arith.constant 0 : index
    %c0_33 = arith.constant 0 : index
    %98 = vector.load %arg2[%c6, %c0_32, %c0_33] : memref<8x8x512xf32, #tpu.memory_space<vmem>>, vector<1x8x512xf32>
    %99 = vector.shape_cast %98 : vector<1x8x512xf32> to vector<8x512xf32>
    %cst_34 = arith.constant dense<0.000000e+00> : vector<8x512xf32>
    %100 = tpu.matmul %68, %6, %cst_34 {dimension_numbers = #tpu.dot_dimension_numbers<[1], [0], [0], [1], [0, 0, 1, 1], [], []>} : vector<8x128xf32>, vector<128x512xf32>, vector<8x512xf32> -> vector<8x512xf32>
    %101 = arith.addf %99, %100 : vector<8x512xf32>
    %102 = vector.extract_strided_slice %101 {offsets = [0, 0], sizes = [8, 128], strides = [1, 1]} : vector<8x512xf32> to vector<8x128xf32>
    %103 = arith.negf %102 : vector<8x128xf32>
    %104 = math.exp %103 : vector<8x128xf32>
    %cst_35 = arith.constant 1.000000e+00 : f32
    %105 = vector.broadcast %cst_35 : f32 to vector<8x128xf32>
    %106 = arith.addf %105, %104 : vector<8x128xf32>
    %107 = arith.divf %105, %106 : vector<8x128xf32>
    %108 = vector.extract_strided_slice %101 {offsets = [0, 128], sizes = [8, 128], strides = [1, 1]} : vector<8x512xf32> to vector<8x128xf32>
    %109 = arith.negf %108 : vector<8x128xf32>
    %110 = math.exp %109 : vector<8x128xf32>
    %cst_36 = arith.constant 1.000000e+00 : f32
    %111 = vector.broadcast %cst_36 : f32 to vector<8x128xf32>
    %112 = arith.addf %111, %110 : vector<8x128xf32>
    %113 = arith.divf %111, %112 : vector<8x128xf32>
    %114 = vector.extract_strided_slice %101 {offsets = [0, 256], sizes = [8, 128], strides = [1, 1]} : vector<8x512xf32> to vector<8x128xf32>
    %115 = math.tanh %114 : vector<8x128xf32>
    %116 = vector.extract_strided_slice %101 {offsets = [0, 384], sizes = [8, 128], strides = [1, 1]} : vector<8x512xf32> to vector<8x128xf32>
    %117 = arith.negf %116 : vector<8x128xf32>
    %118 = math.exp %117 : vector<8x128xf32>
    %cst_37 = arith.constant 1.000000e+00 : f32
    %119 = vector.broadcast %cst_37 : f32 to vector<8x128xf32>
    %120 = arith.addf %119, %118 : vector<8x128xf32>
    %121 = arith.divf %119, %120 : vector<8x128xf32>
    %122 = arith.mulf %113, %66 : vector<8x128xf32>
    %123 = arith.mulf %107, %115 : vector<8x128xf32>
    %124 = arith.addf %122, %123 : vector<8x128xf32>
    %125 = math.tanh %124 : vector<8x128xf32>
    %126 = arith.mulf %121, %125 : vector<8x128xf32>
    %c2 = arith.constant 2 : index
    %c0_38 = arith.constant 0 : index
    %c0_39 = arith.constant 0 : index
    %127 = vector.load %arg1[%c2, %c0_38, %c0_39] : memref<8x8x512xf32, #tpu.memory_space<vmem>>, vector<1x8x512xf32>
    %128 = vector.shape_cast %127 : vector<1x8x512xf32> to vector<8x512xf32>
    %cst_40 = arith.constant dense<0.000000e+00> : vector<8x512xf32>
    %129 = tpu.matmul %97, %4, %cst_40 {dimension_numbers = #tpu.dot_dimension_numbers<[1], [0], [0], [1], [0, 0, 1, 1], [], []>} : vector<8x128xf32>, vector<128x512xf32>, vector<8x512xf32> -> vector<8x512xf32>
    %130 = arith.addf %128, %129 : vector<8x512xf32>
    %131 = vector.extract_strided_slice %130 {offsets = [0, 0], sizes = [8, 128], strides = [1, 1]} : vector<8x512xf32> to vector<8x128xf32>
    %132 = arith.negf %131 : vector<8x128xf32>
    %133 = math.exp %132 : vector<8x128xf32>
    %cst_41 = arith.constant 1.000000e+00 : f32
    %134 = vector.broadcast %cst_41 : f32 to vector<8x128xf32>
    %135 = arith.addf %134, %133 : vector<8x128xf32>
    %136 = arith.divf %134, %135 : vector<8x128xf32>
    %137 = vector.extract_strided_slice %130 {offsets = [0, 128], sizes = [8, 128], strides = [1, 1]} : vector<8x512xf32> to vector<8x128xf32>
    %138 = arith.negf %137 : vector<8x128xf32>
    %139 = math.exp %138 : vector<8x128xf32>
    %cst_42 = arith.constant 1.000000e+00 : f32
    %140 = vector.broadcast %cst_42 : f32 to vector<8x128xf32>
    %141 = arith.addf %140, %139 : vector<8x128xf32>
    %142 = arith.divf %140, %141 : vector<8x128xf32>
    %143 = vector.extract_strided_slice %130 {offsets = [0, 256], sizes = [8, 128], strides = [1, 1]} : vector<8x512xf32> to vector<8x128xf32>
    %144 = math.tanh %143 : vector<8x128xf32>
    %145 = vector.extract_strided_slice %130 {offsets = [0, 384], sizes = [8, 128], strides = [1, 1]} : vector<8x512xf32> to vector<8x128xf32>
    %146 = arith.negf %145 : vector<8x128xf32>
    %147 = math.exp %146 : vector<8x128xf32>
    %cst_43 = arith.constant 1.000000e+00 : f32
    %148 = vector.broadcast %cst_43 : f32 to vector<8x128xf32>
    %149 = arith.addf %148, %147 : vector<8x128xf32>
    %150 = arith.divf %148, %149 : vector<8x128xf32>
    %151 = arith.mulf %142, %95 : vector<8x128xf32>
    %152 = arith.mulf %136, %144 : vector<8x128xf32>
    %153 = arith.addf %151, %152 : vector<8x128xf32>
    %154 = math.tanh %153 : vector<8x128xf32>
    %155 = arith.mulf %150, %154 : vector<8x128xf32>
    %c5 = arith.constant 5 : index
    %c0_44 = arith.constant 0 : index
    %c0_45 = arith.constant 0 : index
    %156 = vector.load %arg2[%c5, %c0_44, %c0_45] : memref<8x8x512xf32, #tpu.memory_space<vmem>>, vector<1x8x512xf32>
    %157 = vector.shape_cast %156 : vector<1x8x512xf32> to vector<8x512xf32>
    %cst_46 = arith.constant dense<0.000000e+00> : vector<8x512xf32>
    %158 = tpu.matmul %126, %6, %cst_46 {dimension_numbers = #tpu.dot_dimension_numbers<[1], [0], [0], [1], [0, 0, 1, 1], [], []>} : vector<8x128xf32>, vector<128x512xf32>, vector<8x512xf32> -> vector<8x512xf32>
    %159 = arith.addf %157, %158 : vector<8x512xf32>
    %160 = vector.extract_strided_slice %159 {offsets = [0, 0], sizes = [8, 128], strides = [1, 1]} : vector<8x512xf32> to vector<8x128xf32>
    %161 = arith.negf %160 : vector<8x128xf32>
    %162 = math.exp %161 : vector<8x128xf32>
    %cst_47 = arith.constant 1.000000e+00 : f32
    %163 = vector.broadcast %cst_47 : f32 to vector<8x128xf32>
    %164 = arith.addf %163, %162 : vector<8x128xf32>
    %165 = arith.divf %163, %164 : vector<8x128xf32>
    %166 = vector.extract_strided_slice %159 {offsets = [0, 128], sizes = [8, 128], strides = [1, 1]} : vector<8x512xf32> to vector<8x128xf32>
    %167 = arith.negf %166 : vector<8x128xf32>
    %168 = math.exp %167 : vector<8x128xf32>
    %cst_48 = arith.constant 1.000000e+00 : f32
    %169 = vector.broadcast %cst_48 : f32 to vector<8x128xf32>
    %170 = arith.addf %169, %168 : vector<8x128xf32>
    %171 = arith.divf %169, %170 : vector<8x128xf32>
    %172 = vector.extract_strided_slice %159 {offsets = [0, 256], sizes = [8, 128], strides = [1, 1]} : vector<8x512xf32> to vector<8x128xf32>
    %173 = math.tanh %172 : vector<8x128xf32>
    %174 = vector.extract_strided_slice %159 {offsets = [0, 384], sizes = [8, 128], strides = [1, 1]} : vector<8x512xf32> to vector<8x128xf32>
    %175 = arith.negf %174 : vector<8x128xf32>
    %176 = math.exp %175 : vector<8x128xf32>
    %cst_49 = arith.constant 1.000000e+00 : f32
    %177 = vector.broadcast %cst_49 : f32 to vector<8x128xf32>
    %178 = arith.addf %177, %176 : vector<8x128xf32>
    %179 = arith.divf %177, %178 : vector<8x128xf32>
    %180 = arith.mulf %171, %124 : vector<8x128xf32>
    %181 = arith.mulf %165, %173 : vector<8x128xf32>
    %182 = arith.addf %180, %181 : vector<8x128xf32>
    %183 = math.tanh %182 : vector<8x128xf32>
    %184 = arith.mulf %179, %183 : vector<8x128xf32>
    %c3 = arith.constant 3 : index
    %c0_50 = arith.constant 0 : index
    %c0_51 = arith.constant 0 : index
    %185 = vector.load %arg1[%c3, %c0_50, %c0_51] : memref<8x8x512xf32, #tpu.memory_space<vmem>>, vector<1x8x512xf32>
    %186 = vector.shape_cast %185 : vector<1x8x512xf32> to vector<8x512xf32>
    %cst_52 = arith.constant dense<0.000000e+00> : vector<8x512xf32>
    %187 = tpu.matmul %155, %4, %cst_52 {dimension_numbers = #tpu.dot_dimension_numbers<[1], [0], [0], [1], [0, 0, 1, 1], [], []>} : vector<8x128xf32>, vector<128x512xf32>, vector<8x512xf32> -> vector<8x512xf32>
    %188 = arith.addf %186, %187 : vector<8x512xf32>
    %189 = vector.extract_strided_slice %188 {offsets = [0, 0], sizes = [8, 128], strides = [1, 1]} : vector<8x512xf32> to vector<8x128xf32>
    %190 = arith.negf %189 : vector<8x128xf32>
    %191 = math.exp %190 : vector<8x128xf32>
    %cst_53 = arith.constant 1.000000e+00 : f32
    %192 = vector.broadcast %cst_53 : f32 to vector<8x128xf32>
    %193 = arith.addf %192, %191 : vector<8x128xf32>
    %194 = arith.divf %192, %193 : vector<8x128xf32>
    %195 = vector.extract_strided_slice %188 {offsets = [0, 128], sizes = [8, 128], strides = [1, 1]} : vector<8x512xf32> to vector<8x128xf32>
    %196 = arith.negf %195 : vector<8x128xf32>
    %197 = math.exp %196 : vector<8x128xf32>
    %cst_54 = arith.constant 1.000000e+00 : f32
    %198 = vector.broadcast %cst_54 : f32 to vector<8x128xf32>
    %199 = arith.addf %198, %197 : vector<8x128xf32>
    %200 = arith.divf %198, %199 : vector<8x128xf32>
    %201 = vector.extract_strided_slice %188 {offsets = [0, 256], sizes = [8, 128], strides = [1, 1]} : vector<8x512xf32> to vector<8x128xf32>
    %202 = math.tanh %201 : vector<8x128xf32>
    %203 = vector.extract_strided_slice %188 {offsets = [0, 384], sizes = [8, 128], strides = [1, 1]} : vector<8x512xf32> to vector<8x128xf32>
    %204 = arith.negf %203 : vector<8x128xf32>
    %205 = math.exp %204 : vector<8x128xf32>
    %cst_55 = arith.constant 1.000000e+00 : f32
    %206 = vector.broadcast %cst_55 : f32 to vector<8x128xf32>
    %207 = arith.addf %206, %205 : vector<8x128xf32>
    %208 = arith.divf %206, %207 : vector<8x128xf32>
    %209 = arith.mulf %200, %153 : vector<8x128xf32>
    %210 = arith.mulf %194, %202 : vector<8x128xf32>
    %211 = arith.addf %209, %210 : vector<8x128xf32>
    %212 = math.tanh %211 : vector<8x128xf32>
    %213 = arith.mulf %208, %212 : vector<8x128xf32>
    %c4 = arith.constant 4 : index
    %c0_56 = arith.constant 0 : index
    %c0_57 = arith.constant 0 : index
    %214 = vector.load %arg2[%c4, %c0_56, %c0_57] : memref<8x8x512xf32, #tpu.memory_space<vmem>>, vector<1x8x512xf32>
    %215 = vector.shape_cast %214 : vector<1x8x512xf32> to vector<8x512xf32>
    %cst_58 = arith.constant dense<0.000000e+00> : vector<8x512xf32>
    %216 = tpu.matmul %184, %6, %cst_58 {dimension_numbers = #tpu.dot_dimension_numbers<[1], [0], [0], [1], [0, 0, 1, 1], [], []>} : vector<8x128xf32>, vector<128x512xf32>, vector<8x512xf32> -> vector<8x512xf32>
    %217 = arith.addf %215, %216 : vector<8x512xf32>
    %218 = vector.extract_strided_slice %217 {offsets = [0, 0], sizes = [8, 128], strides = [1, 1]} : vector<8x512xf32> to vector<8x128xf32>
    %219 = arith.negf %218 : vector<8x128xf32>
    %220 = math.exp %219 : vector<8x128xf32>
    %cst_59 = arith.constant 1.000000e+00 : f32
    %221 = vector.broadcast %cst_59 : f32 to vector<8x128xf32>
    %222 = arith.addf %221, %220 : vector<8x128xf32>
    %223 = arith.divf %221, %222 : vector<8x128xf32>
    %224 = vector.extract_strided_slice %217 {offsets = [0, 128], sizes = [8, 128], strides = [1, 1]} : vector<8x512xf32> to vector<8x128xf32>
    %225 = arith.negf %224 : vector<8x128xf32>
    %226 = math.exp %225 : vector<8x128xf32>
    %cst_60 = arith.constant 1.000000e+00 : f32
    %227 = vector.broadcast %cst_60 : f32 to vector<8x128xf32>
    %228 = arith.addf %227, %226 : vector<8x128xf32>
    %229 = arith.divf %227, %228 : vector<8x128xf32>
    %230 = vector.extract_strided_slice %217 {offsets = [0, 256], sizes = [8, 128], strides = [1, 1]} : vector<8x512xf32> to vector<8x128xf32>
    %231 = math.tanh %230 : vector<8x128xf32>
    %232 = vector.extract_strided_slice %217 {offsets = [0, 384], sizes = [8, 128], strides = [1, 1]} : vector<8x512xf32> to vector<8x128xf32>
    %233 = arith.negf %232 : vector<8x128xf32>
    %234 = math.exp %233 : vector<8x128xf32>
    %cst_61 = arith.constant 1.000000e+00 : f32
    %235 = vector.broadcast %cst_61 : f32 to vector<8x128xf32>
    %236 = arith.addf %235, %234 : vector<8x128xf32>
    %237 = arith.divf %235, %236 : vector<8x128xf32>
    %238 = arith.mulf %229, %182 : vector<8x128xf32>
    %239 = arith.mulf %223, %231 : vector<8x128xf32>
    %240 = arith.addf %238, %239 : vector<8x128xf32>
    %241 = math.tanh %240 : vector<8x128xf32>
    %242 = arith.mulf %237, %241 : vector<8x128xf32>
    %c4_62 = arith.constant 4 : index
    %c0_63 = arith.constant 0 : index
    %c0_64 = arith.constant 0 : index
    %243 = vector.load %arg1[%c4_62, %c0_63, %c0_64] : memref<8x8x512xf32, #tpu.memory_space<vmem>>, vector<1x8x512xf32>
    %244 = vector.shape_cast %243 : vector<1x8x512xf32> to vector<8x512xf32>
    %cst_65 = arith.constant dense<0.000000e+00> : vector<8x512xf32>
    %245 = tpu.matmul %213, %4, %cst_65 {dimension_numbers = #tpu.dot_dimension_numbers<[1], [0], [0], [1], [0, 0, 1, 1], [], []>} : vector<8x128xf32>, vector<128x512xf32>, vector<8x512xf32> -> vector<8x512xf32>
    %246 = arith.addf %244, %245 : vector<8x512xf32>
    %247 = vector.extract_strided_slice %246 {offsets = [0, 0], sizes = [8, 128], strides = [1, 1]} : vector<8x512xf32> to vector<8x128xf32>
    %248 = arith.negf %247 : vector<8x128xf32>
    %249 = math.exp %248 : vector<8x128xf32>
    %cst_66 = arith.constant 1.000000e+00 : f32
    %250 = vector.broadcast %cst_66 : f32 to vector<8x128xf32>
    %251 = arith.addf %250, %249 : vector<8x128xf32>
    %252 = arith.divf %250, %251 : vector<8x128xf32>
    %253 = vector.extract_strided_slice %246 {offsets = [0, 128], sizes = [8, 128], strides = [1, 1]} : vector<8x512xf32> to vector<8x128xf32>
    %254 = arith.negf %253 : vector<8x128xf32>
    %255 = math.exp %254 : vector<8x128xf32>
    %cst_67 = arith.constant 1.000000e+00 : f32
    %256 = vector.broadcast %cst_67 : f32 to vector<8x128xf32>
    %257 = arith.addf %256, %255 : vector<8x128xf32>
    %258 = arith.divf %256, %257 : vector<8x128xf32>
    %259 = vector.extract_strided_slice %246 {offsets = [0, 256], sizes = [8, 128], strides = [1, 1]} : vector<8x512xf32> to vector<8x128xf32>
    %260 = math.tanh %259 : vector<8x128xf32>
    %261 = vector.extract_strided_slice %246 {offsets = [0, 384], sizes = [8, 128], strides = [1, 1]} : vector<8x512xf32> to vector<8x128xf32>
    %262 = arith.negf %261 : vector<8x128xf32>
    %263 = math.exp %262 : vector<8x128xf32>
    %cst_68 = arith.constant 1.000000e+00 : f32
    %264 = vector.broadcast %cst_68 : f32 to vector<8x128xf32>
    %265 = arith.addf %264, %263 : vector<8x128xf32>
    %266 = arith.divf %264, %265 : vector<8x128xf32>
    %267 = arith.mulf %258, %211 : vector<8x128xf32>
    %268 = arith.mulf %252, %260 : vector<8x128xf32>
    %269 = arith.addf %267, %268 : vector<8x128xf32>
    %270 = math.tanh %269 : vector<8x128xf32>
    %271 = arith.mulf %266, %270 : vector<8x128xf32>
    %c3_69 = arith.constant 3 : index
    %c0_70 = arith.constant 0 : index
    %c0_71 = arith.constant 0 : index
    %272 = vector.load %arg2[%c3_69, %c0_70, %c0_71] : memref<8x8x512xf32, #tpu.memory_space<vmem>>, vector<1x8x512xf32>
    %273 = vector.shape_cast %272 : vector<1x8x512xf32> to vector<8x512xf32>
    %cst_72 = arith.constant dense<0.000000e+00> : vector<8x512xf32>
    %274 = tpu.matmul %242, %6, %cst_72 {dimension_numbers = #tpu.dot_dimension_numbers<[1], [0], [0], [1], [0, 0, 1, 1], [], []>} : vector<8x128xf32>, vector<128x512xf32>, vector<8x512xf32> -> vector<8x512xf32>
    %275 = arith.addf %273, %274 : vector<8x512xf32>
    %276 = vector.extract_strided_slice %275 {offsets = [0, 0], sizes = [8, 128], strides = [1, 1]} : vector<8x512xf32> to vector<8x128xf32>
    %277 = arith.negf %276 : vector<8x128xf32>
    %278 = math.exp %277 : vector<8x128xf32>
    %cst_73 = arith.constant 1.000000e+00 : f32
    %279 = vector.broadcast %cst_73 : f32 to vector<8x128xf32>
    %280 = arith.addf %279, %278 : vector<8x128xf32>
    %281 = arith.divf %279, %280 : vector<8x128xf32>
    %282 = vector.extract_strided_slice %275 {offsets = [0, 128], sizes = [8, 128], strides = [1, 1]} : vector<8x512xf32> to vector<8x128xf32>
    %283 = arith.negf %282 : vector<8x128xf32>
    %284 = math.exp %283 : vector<8x128xf32>
    %cst_74 = arith.constant 1.000000e+00 : f32
    %285 = vector.broadcast %cst_74 : f32 to vector<8x128xf32>
    %286 = arith.addf %285, %284 : vector<8x128xf32>
    %287 = arith.divf %285, %286 : vector<8x128xf32>
    %288 = vector.extract_strided_slice %275 {offsets = [0, 256], sizes = [8, 128], strides = [1, 1]} : vector<8x512xf32> to vector<8x128xf32>
    %289 = math.tanh %288 : vector<8x128xf32>
    %290 = vector.extract_strided_slice %275 {offsets = [0, 384], sizes = [8, 128], strides = [1, 1]} : vector<8x512xf32> to vector<8x128xf32>
    %291 = arith.negf %290 : vector<8x128xf32>
    %292 = math.exp %291 : vector<8x128xf32>
    %cst_75 = arith.constant 1.000000e+00 : f32
    %293 = vector.broadcast %cst_75 : f32 to vector<8x128xf32>
    %294 = arith.addf %293, %292 : vector<8x128xf32>
    %295 = arith.divf %293, %294 : vector<8x128xf32>
    %296 = arith.mulf %287, %240 : vector<8x128xf32>
    %297 = arith.mulf %281, %289 : vector<8x128xf32>
    %298 = arith.addf %296, %297 : vector<8x128xf32>
    %299 = math.tanh %298 : vector<8x128xf32>
    %300 = arith.mulf %295, %299 : vector<8x128xf32>
    %c5_76 = arith.constant 5 : index
    %c0_77 = arith.constant 0 : index
    %c0_78 = arith.constant 0 : index
    %301 = vector.load %arg1[%c5_76, %c0_77, %c0_78] : memref<8x8x512xf32, #tpu.memory_space<vmem>>, vector<1x8x512xf32>
    %302 = vector.shape_cast %301 : vector<1x8x512xf32> to vector<8x512xf32>
    %cst_79 = arith.constant dense<0.000000e+00> : vector<8x512xf32>
    %303 = tpu.matmul %271, %4, %cst_79 {dimension_numbers = #tpu.dot_dimension_numbers<[1], [0], [0], [1], [0, 0, 1, 1], [], []>} : vector<8x128xf32>, vector<128x512xf32>, vector<8x512xf32> -> vector<8x512xf32>
    %304 = arith.addf %302, %303 : vector<8x512xf32>
    %305 = vector.extract_strided_slice %304 {offsets = [0, 0], sizes = [8, 128], strides = [1, 1]} : vector<8x512xf32> to vector<8x128xf32>
    %306 = arith.negf %305 : vector<8x128xf32>
    %307 = math.exp %306 : vector<8x128xf32>
    %cst_80 = arith.constant 1.000000e+00 : f32
    %308 = vector.broadcast %cst_80 : f32 to vector<8x128xf32>
    %309 = arith.addf %308, %307 : vector<8x128xf32>
    %310 = arith.divf %308, %309 : vector<8x128xf32>
    %311 = vector.extract_strided_slice %304 {offsets = [0, 128], sizes = [8, 128], strides = [1, 1]} : vector<8x512xf32> to vector<8x128xf32>
    %312 = arith.negf %311 : vector<8x128xf32>
    %313 = math.exp %312 : vector<8x128xf32>
    %cst_81 = arith.constant 1.000000e+00 : f32
    %314 = vector.broadcast %cst_81 : f32 to vector<8x128xf32>
    %315 = arith.addf %314, %313 : vector<8x128xf32>
    %316 = arith.divf %314, %315 : vector<8x128xf32>
    %317 = vector.extract_strided_slice %304 {offsets = [0, 256], sizes = [8, 128], strides = [1, 1]} : vector<8x512xf32> to vector<8x128xf32>
    %318 = math.tanh %317 : vector<8x128xf32>
    %319 = vector.extract_strided_slice %304 {offsets = [0, 384], sizes = [8, 128], strides = [1, 1]} : vector<8x512xf32> to vector<8x128xf32>
    %320 = arith.negf %319 : vector<8x128xf32>
    %321 = math.exp %320 : vector<8x128xf32>
    %cst_82 = arith.constant 1.000000e+00 : f32
    %322 = vector.broadcast %cst_82 : f32 to vector<8x128xf32>
    %323 = arith.addf %322, %321 : vector<8x128xf32>
    %324 = arith.divf %322, %323 : vector<8x128xf32>
    %325 = arith.mulf %316, %269 : vector<8x128xf32>
    %326 = arith.mulf %310, %318 : vector<8x128xf32>
    %327 = arith.addf %325, %326 : vector<8x128xf32>
    %328 = math.tanh %327 : vector<8x128xf32>
    %329 = arith.mulf %324, %328 : vector<8x128xf32>
    %c2_83 = arith.constant 2 : index
    %c0_84 = arith.constant 0 : index
    %c0_85 = arith.constant 0 : index
    %330 = vector.load %arg2[%c2_83, %c0_84, %c0_85] : memref<8x8x512xf32, #tpu.memory_space<vmem>>, vector<1x8x512xf32>
    %331 = vector.shape_cast %330 : vector<1x8x512xf32> to vector<8x512xf32>
    %cst_86 = arith.constant dense<0.000000e+00> : vector<8x512xf32>
    %332 = tpu.matmul %300, %6, %cst_86 {dimension_numbers = #tpu.dot_dimension_numbers<[1], [0], [0], [1], [0, 0, 1, 1], [], []>} : vector<8x128xf32>, vector<128x512xf32>, vector<8x512xf32> -> vector<8x512xf32>
    %333 = arith.addf %331, %332 : vector<8x512xf32>
    %334 = vector.extract_strided_slice %333 {offsets = [0, 0], sizes = [8, 128], strides = [1, 1]} : vector<8x512xf32> to vector<8x128xf32>
    %335 = arith.negf %334 : vector<8x128xf32>
    %336 = math.exp %335 : vector<8x128xf32>
    %cst_87 = arith.constant 1.000000e+00 : f32
    %337 = vector.broadcast %cst_87 : f32 to vector<8x128xf32>
    %338 = arith.addf %337, %336 : vector<8x128xf32>
    %339 = arith.divf %337, %338 : vector<8x128xf32>
    %340 = vector.extract_strided_slice %333 {offsets = [0, 128], sizes = [8, 128], strides = [1, 1]} : vector<8x512xf32> to vector<8x128xf32>
    %341 = arith.negf %340 : vector<8x128xf32>
    %342 = math.exp %341 : vector<8x128xf32>
    %cst_88 = arith.constant 1.000000e+00 : f32
    %343 = vector.broadcast %cst_88 : f32 to vector<8x128xf32>
    %344 = arith.addf %343, %342 : vector<8x128xf32>
    %345 = arith.divf %343, %344 : vector<8x128xf32>
    %346 = vector.extract_strided_slice %333 {offsets = [0, 256], sizes = [8, 128], strides = [1, 1]} : vector<8x512xf32> to vector<8x128xf32>
    %347 = math.tanh %346 : vector<8x128xf32>
    %348 = vector.extract_strided_slice %333 {offsets = [0, 384], sizes = [8, 128], strides = [1, 1]} : vector<8x512xf32> to vector<8x128xf32>
    %349 = arith.negf %348 : vector<8x128xf32>
    %350 = math.exp %349 : vector<8x128xf32>
    %cst_89 = arith.constant 1.000000e+00 : f32
    %351 = vector.broadcast %cst_89 : f32 to vector<8x128xf32>
    %352 = arith.addf %351, %350 : vector<8x128xf32>
    %353 = arith.divf %351, %352 : vector<8x128xf32>
    %354 = arith.mulf %345, %298 : vector<8x128xf32>
    %355 = arith.mulf %339, %347 : vector<8x128xf32>
    %356 = arith.addf %354, %355 : vector<8x128xf32>
    %357 = math.tanh %356 : vector<8x128xf32>
    %358 = arith.mulf %353, %357 : vector<8x128xf32>
    %c6_90 = arith.constant 6 : index
    %c0_91 = arith.constant 0 : index
    %c0_92 = arith.constant 0 : index
    %359 = vector.load %arg1[%c6_90, %c0_91, %c0_92] : memref<8x8x512xf32, #tpu.memory_space<vmem>>, vector<1x8x512xf32>
    %360 = vector.shape_cast %359 : vector<1x8x512xf32> to vector<8x512xf32>
    %cst_93 = arith.constant dense<0.000000e+00> : vector<8x512xf32>
    %361 = tpu.matmul %329, %4, %cst_93 {dimension_numbers = #tpu.dot_dimension_numbers<[1], [0], [0], [1], [0, 0, 1, 1], [], []>} : vector<8x128xf32>, vector<128x512xf32>, vector<8x512xf32> -> vector<8x512xf32>
    %362 = arith.addf %360, %361 : vector<8x512xf32>
    %363 = vector.extract_strided_slice %362 {offsets = [0, 0], sizes = [8, 128], strides = [1, 1]} : vector<8x512xf32> to vector<8x128xf32>
    %364 = arith.negf %363 : vector<8x128xf32>
    %365 = math.exp %364 : vector<8x128xf32>
    %cst_94 = arith.constant 1.000000e+00 : f32
    %366 = vector.broadcast %cst_94 : f32 to vector<8x128xf32>
    %367 = arith.addf %366, %365 : vector<8x128xf32>
    %368 = arith.divf %366, %367 : vector<8x128xf32>
    %369 = vector.extract_strided_slice %362 {offsets = [0, 128], sizes = [8, 128], strides = [1, 1]} : vector<8x512xf32> to vector<8x128xf32>
    %370 = arith.negf %369 : vector<8x128xf32>
    %371 = math.exp %370 : vector<8x128xf32>
    %cst_95 = arith.constant 1.000000e+00 : f32
    %372 = vector.broadcast %cst_95 : f32 to vector<8x128xf32>
    %373 = arith.addf %372, %371 : vector<8x128xf32>
    %374 = arith.divf %372, %373 : vector<8x128xf32>
    %375 = vector.extract_strided_slice %362 {offsets = [0, 256], sizes = [8, 128], strides = [1, 1]} : vector<8x512xf32> to vector<8x128xf32>
    %376 = math.tanh %375 : vector<8x128xf32>
    %377 = vector.extract_strided_slice %362 {offsets = [0, 384], sizes = [8, 128], strides = [1, 1]} : vector<8x512xf32> to vector<8x128xf32>
    %378 = arith.negf %377 : vector<8x128xf32>
    %379 = math.exp %378 : vector<8x128xf32>
    %cst_96 = arith.constant 1.000000e+00 : f32
    %380 = vector.broadcast %cst_96 : f32 to vector<8x128xf32>
    %381 = arith.addf %380, %379 : vector<8x128xf32>
    %382 = arith.divf %380, %381 : vector<8x128xf32>
    %383 = arith.mulf %374, %327 : vector<8x128xf32>
    %384 = arith.mulf %368, %376 : vector<8x128xf32>
    %385 = arith.addf %383, %384 : vector<8x128xf32>
    %386 = math.tanh %385 : vector<8x128xf32>
    %387 = arith.mulf %382, %386 : vector<8x128xf32>
    %c1_97 = arith.constant 1 : index
    %c0_98 = arith.constant 0 : index
    %c0_99 = arith.constant 0 : index
    %388 = vector.load %arg2[%c1_97, %c0_98, %c0_99] : memref<8x8x512xf32, #tpu.memory_space<vmem>>, vector<1x8x512xf32>
    %389 = vector.shape_cast %388 : vector<1x8x512xf32> to vector<8x512xf32>
    %cst_100 = arith.constant dense<0.000000e+00> : vector<8x512xf32>
    %390 = tpu.matmul %358, %6, %cst_100 {dimension_numbers = #tpu.dot_dimension_numbers<[1], [0], [0], [1], [0, 0, 1, 1], [], []>} : vector<8x128xf32>, vector<128x512xf32>, vector<8x512xf32> -> vector<8x512xf32>
    %391 = arith.addf %389, %390 : vector<8x512xf32>
    %392 = vector.extract_strided_slice %391 {offsets = [0, 0], sizes = [8, 128], strides = [1, 1]} : vector<8x512xf32> to vector<8x128xf32>
    %393 = arith.negf %392 : vector<8x128xf32>
    %394 = math.exp %393 : vector<8x128xf32>
    %cst_101 = arith.constant 1.000000e+00 : f32
    %395 = vector.broadcast %cst_101 : f32 to vector<8x128xf32>
    %396 = arith.addf %395, %394 : vector<8x128xf32>
    %397 = arith.divf %395, %396 : vector<8x128xf32>
    %398 = vector.extract_strided_slice %391 {offsets = [0, 128], sizes = [8, 128], strides = [1, 1]} : vector<8x512xf32> to vector<8x128xf32>
    %399 = arith.negf %398 : vector<8x128xf32>
    %400 = math.exp %399 : vector<8x128xf32>
    %cst_102 = arith.constant 1.000000e+00 : f32
    %401 = vector.broadcast %cst_102 : f32 to vector<8x128xf32>
    %402 = arith.addf %401, %400 : vector<8x128xf32>
    %403 = arith.divf %401, %402 : vector<8x128xf32>
    %404 = vector.extract_strided_slice %391 {offsets = [0, 256], sizes = [8, 128], strides = [1, 1]} : vector<8x512xf32> to vector<8x128xf32>
    %405 = math.tanh %404 : vector<8x128xf32>
    %406 = vector.extract_strided_slice %391 {offsets = [0, 384], sizes = [8, 128], strides = [1, 1]} : vector<8x512xf32> to vector<8x128xf32>
    %407 = arith.negf %406 : vector<8x128xf32>
    %408 = math.exp %407 : vector<8x128xf32>
    %cst_103 = arith.constant 1.000000e+00 : f32
    %409 = vector.broadcast %cst_103 : f32 to vector<8x128xf32>
    %410 = arith.addf %409, %408 : vector<8x128xf32>
    %411 = arith.divf %409, %410 : vector<8x128xf32>
    %412 = arith.mulf %403, %356 : vector<8x128xf32>
    %413 = arith.mulf %397, %405 : vector<8x128xf32>
    %414 = arith.addf %412, %413 : vector<8x128xf32>
    %415 = math.tanh %414 : vector<8x128xf32>
    %416 = arith.mulf %411, %415 : vector<8x128xf32>
    %c7_104 = arith.constant 7 : index
    %c0_105 = arith.constant 0 : index
    %c0_106 = arith.constant 0 : index
    %417 = vector.load %arg1[%c7_104, %c0_105, %c0_106] : memref<8x8x512xf32, #tpu.memory_space<vmem>>, vector<1x8x512xf32>
    %418 = vector.shape_cast %417 : vector<1x8x512xf32> to vector<8x512xf32>
    %cst_107 = arith.constant dense<0.000000e+00> : vector<8x512xf32>
    %419 = tpu.matmul %387, %4, %cst_107 {dimension_numbers = #tpu.dot_dimension_numbers<[1], [0], [0], [1], [0, 0, 1, 1], [], []>} : vector<8x128xf32>, vector<128x512xf32>, vector<8x512xf32> -> vector<8x512xf32>
    %420 = arith.addf %418, %419 : vector<8x512xf32>
    %421 = vector.extract_strided_slice %420 {offsets = [0, 0], sizes = [8, 128], strides = [1, 1]} : vector<8x512xf32> to vector<8x128xf32>
    %422 = arith.negf %421 : vector<8x128xf32>
    %423 = math.exp %422 : vector<8x128xf32>
    %cst_108 = arith.constant 1.000000e+00 : f32
    %424 = vector.broadcast %cst_108 : f32 to vector<8x128xf32>
    %425 = arith.addf %424, %423 : vector<8x128xf32>
    %426 = arith.divf %424, %425 : vector<8x128xf32>
    %427 = vector.extract_strided_slice %420 {offsets = [0, 128], sizes = [8, 128], strides = [1, 1]} : vector<8x512xf32> to vector<8x128xf32>
    %428 = arith.negf %427 : vector<8x128xf32>
    %429 = math.exp %428 : vector<8x128xf32>
    %cst_109 = arith.constant 1.000000e+00 : f32
    %430 = vector.broadcast %cst_109 : f32 to vector<8x128xf32>
    %431 = arith.addf %430, %429 : vector<8x128xf32>
    %432 = arith.divf %430, %431 : vector<8x128xf32>
    %433 = vector.extract_strided_slice %420 {offsets = [0, 256], sizes = [8, 128], strides = [1, 1]} : vector<8x512xf32> to vector<8x128xf32>
    %434 = math.tanh %433 : vector<8x128xf32>
    %435 = vector.extract_strided_slice %420 {offsets = [0, 384], sizes = [8, 128], strides = [1, 1]} : vector<8x512xf32> to vector<8x128xf32>
    %436 = arith.negf %435 : vector<8x128xf32>
    %437 = math.exp %436 : vector<8x128xf32>
    %cst_110 = arith.constant 1.000000e+00 : f32
    %438 = vector.broadcast %cst_110 : f32 to vector<8x128xf32>
    %439 = arith.addf %438, %437 : vector<8x128xf32>
    %440 = arith.divf %438, %439 : vector<8x128xf32>
    %441 = arith.mulf %432, %385 : vector<8x128xf32>
    %442 = arith.mulf %426, %434 : vector<8x128xf32>
    %443 = arith.addf %441, %442 : vector<8x128xf32>
    %444 = math.tanh %443 : vector<8x128xf32>
    %445 = arith.mulf %440, %444 : vector<8x128xf32>
    %c0_111 = arith.constant 0 : index
    %c0_112 = arith.constant 0 : index
    %c0_113 = arith.constant 0 : index
    %446 = vector.load %arg2[%c0_111, %c0_112, %c0_113] : memref<8x8x512xf32, #tpu.memory_space<vmem>>, vector<1x8x512xf32>
    %447 = vector.shape_cast %446 : vector<1x8x512xf32> to vector<8x512xf32>
    %cst_114 = arith.constant dense<0.000000e+00> : vector<8x512xf32>
    %448 = tpu.matmul %416, %6, %cst_114 {dimension_numbers = #tpu.dot_dimension_numbers<[1], [0], [0], [1], [0, 0, 1, 1], [], []>} : vector<8x128xf32>, vector<128x512xf32>, vector<8x512xf32> -> vector<8x512xf32>
    %449 = arith.addf %447, %448 : vector<8x512xf32>
    %450 = vector.extract_strided_slice %449 {offsets = [0, 0], sizes = [8, 128], strides = [1, 1]} : vector<8x512xf32> to vector<8x128xf32>
    %451 = arith.negf %450 : vector<8x128xf32>
    %452 = math.exp %451 : vector<8x128xf32>
    %cst_115 = arith.constant 1.000000e+00 : f32
    %453 = vector.broadcast %cst_115 : f32 to vector<8x128xf32>
    %454 = arith.addf %453, %452 : vector<8x128xf32>
    %455 = arith.divf %453, %454 : vector<8x128xf32>
    %456 = vector.extract_strided_slice %449 {offsets = [0, 128], sizes = [8, 128], strides = [1, 1]} : vector<8x512xf32> to vector<8x128xf32>
    %457 = arith.negf %456 : vector<8x128xf32>
    %458 = math.exp %457 : vector<8x128xf32>
    %cst_116 = arith.constant 1.000000e+00 : f32
    %459 = vector.broadcast %cst_116 : f32 to vector<8x128xf32>
    %460 = arith.addf %459, %458 : vector<8x128xf32>
    %461 = arith.divf %459, %460 : vector<8x128xf32>
    %462 = vector.extract_strided_slice %449 {offsets = [0, 256], sizes = [8, 128], strides = [1, 1]} : vector<8x512xf32> to vector<8x128xf32>
    %463 = math.tanh %462 : vector<8x128xf32>
    %464 = vector.extract_strided_slice %449 {offsets = [0, 384], sizes = [8, 128], strides = [1, 1]} : vector<8x512xf32> to vector<8x128xf32>
    %465 = arith.negf %464 : vector<8x128xf32>
    %466 = math.exp %465 : vector<8x128xf32>
    %cst_117 = arith.constant 1.000000e+00 : f32
    %467 = vector.broadcast %cst_117 : f32 to vector<8x128xf32>
    %468 = arith.addf %467, %466 : vector<8x128xf32>
    %469 = arith.divf %467, %468 : vector<8x128xf32>
    %470 = arith.mulf %461, %414 : vector<8x128xf32>
    %471 = arith.mulf %455, %463 : vector<8x128xf32>
    %472 = arith.addf %470, %471 : vector<8x128xf32>
    %473 = math.tanh %472 : vector<8x128xf32>
    %474 = arith.mulf %469, %473 : vector<8x128xf32>
    %c0_118 = arith.constant 0 : index
    %c0_119 = arith.constant 0 : index
    %475 = vector.load %arg5[%c0_118, %c0_119] : memref<8x128xf32, #tpu.memory_space<vmem>>, vector<8x128xf32>
    tpu.vector_store %arg5[%c0_118, %c0_119], %445 {strides = array<i32>} : memref<8x128xf32, #tpu.memory_space<vmem>>, vector<8x128xf32>,
    %c0_120 = arith.constant 0 : index
    %c0_121 = arith.constant 0 : index
    %476 = vector.load %arg6[%c0_120, %c0_121] : memref<8x128xf32, #tpu.memory_space<vmem>>, vector<8x128xf32>
    tpu.vector_store %arg6[%c0_120, %c0_121], %443 {strides = array<i32>} : memref<8x128xf32, #tpu.memory_space<vmem>>, vector<8x128xf32>,
    %c0_122 = arith.constant 0 : index
    %c0_123 = arith.constant 0 : index
    %477 = vector.load %arg7[%c0_122, %c0_123] : memref<8x128xf32, #tpu.memory_space<vmem>>, vector<8x128xf32>
    tpu.vector_store %arg7[%c0_122, %c0_123], %474 {strides = array<i32>} : memref<8x128xf32, #tpu.memory_space<vmem>>, vector<8x128xf32>,
    %c0_124 = arith.constant 0 : index
    %c0_125 = arith.constant 0 : index
    %478 = vector.load %arg8[%c0_124, %c0_125] : memref<8x128xf32, #tpu.memory_space<vmem>>, vector<8x128xf32>
    tpu.vector_store %arg8[%c0_124, %c0_125], %472 {strides = array<i32>} : memref<8x128xf32, #tpu.memory_space<vmem>>, vector<8x128xf32>,
    %c1_i32 = arith.constant 1 : i32
    %479 = arith.cmpi eq, %arg0, %c1_i32 : i32
    %480 = arith.extui %479 : i1 to i32
    %c0_i32_126 = arith.constant 0 : i32
    %481 = arith.cmpi ne, %480, %c0_i32_126 : i32
    scf.if %481 {
      %c0_127 = arith.constant 0 : index
      %c0_128 = arith.constant 0 : index
      %482 = vector.load %arg4[%c0_127, %c0_128] : memref<8x256xf32, #tpu.memory_space<vmem>>, vector<8x128xf32>
      tpu.vector_store %arg4[%c0_127, %c0_128], %445 {strides = array<i32>} : memref<8x256xf32, #tpu.memory_space<vmem>>, vector<8x128xf32>,
      %c0_129 = arith.constant 0 : index
      %c128 = arith.constant 128 : index
      %483 = vector.load %arg4[%c0_129, %c128] : memref<8x256xf32, #tpu.memory_space<vmem>>, vector<8x128xf32>
      tpu.vector_store %arg4[%c0_129, %c128], %474 {strides = array<i32>} : memref<8x256xf32, #tpu.memory_space<vmem>>, vector<8x128xf32>,
    } else {
    }
    return
  }
  func.func @transform_0(%arg0: i32) -> (i32, i32, i32) {
    %c0_i32 = arith.constant 0 : i32
    %c0_i32_0 = arith.constant 0 : i32
    %c0_i32_1 = arith.constant 0 : i32
    return %arg0, %c0_i32, %c0_i32_0 : i32, i32, i32
  }
  func.func @transform_1(%arg0: i32) -> (i32, i32, i32) {
    %c1_i32 = arith.constant 1 : i32
    %0 = arith.subi %c1_i32, %arg0 : i32
    %c0_i32 = arith.constant 0 : i32
    %c0_i32_0 = arith.constant 0 : i32
    %c0_i32_1 = arith.constant 0 : i32
    return %0, %c0_i32, %c0_i32_0 : i32, i32, i32
  }
  func.func @transform_2(%arg0: i32) -> (i32, i32, i32) {
    %c0_i32 = arith.constant 0 : i32
    %c0_i32_0 = arith.constant 0 : i32
    %c0_i32_1 = arith.constant 0 : i32
    %c0_i32_2 = arith.constant 0 : i32
    return %c0_i32, %c0_i32_0, %c0_i32_1 : i32, i32, i32
  }
  func.func @transform_3(%arg0: i32) -> (i32, i32) {
    %c0_i32 = arith.constant 0 : i32
    %c0_i32_0 = arith.constant 0 : i32
    %c0_i32_1 = arith.constant 0 : i32
    return %c0_i32, %c0_i32_0 : i32, i32
  }
}

</mosaic_0001>

<llo_original>
// kernel: seq_to_emb_forward.2
$region0: #{seq_to_emb_forward.2}
  #allocation0 [shape = 'u32[]', space=smem, size = 0x4, offset = 0x4, fixed_abs, tag = 'smem constant byte address 0x4 - core index']
  #allocation1 [shape = 'u32[144,128]{1,0:T(1,128)}', space=vmem, size = 0x12000, scoped, tag = 'internal scratch']
  #allocation2 [shape = 'f32[8,128]{1,0:T(8,128)}', space=vmem, size = 0x1000, scoped, tag = 'scratch operand']
  #allocation3 [shape = 'f32[8,128]{1,0:T(8,128)}', space=vmem, size = 0x1000, scoped, tag = 'scratch operand']
  #allocation4 [shape = 'f32[8,128]{1,0:T(8,128)}', space=vmem, size = 0x1000, scoped, tag = 'scratch operand']
  #allocation5 [shape = 'f32[8,128]{1,0:T(8,128)}', space=vmem, size = 0x1000, scoped, tag = 'scratch operand']
  %s0 = inlined_call_operand.vmem [shape: f32[16,8,512], index: 0, kind: input, shape index: {}]
  %s1 = inlined_call_operand.vmem [shape: f32[16,8,512], index: 1, kind: input, shape index: {}]
  %s2 = inlined_call_operand.vmem [shape: f32[2,128,512], index: 2, kind: input, shape index: {}]
  %s3 = inlined_call_operand.vmem [shape: f32[16,8,128], index: 3, kind: output, shape index: {0}]
  %s4 = inlined_call_operand.vmem [shape: f32[16,8,128], index: 4, kind: output, shape index: {1}]
  %5 = xla_tuple %s3, %s4
  %s6 = sld [smem:[#allocation0]]
  $region57: #{seq_to_emb_forward.2} parent=0
    _
  %s8 = ssub.s32 1, %s6
  %s9 = scalar_select 0, %s8, %s6
  loop: start=0, step=1, limit=4
  $region2: #{seq_to_emb_forward.2} parent=0 // loop_pre_header
    _
  $region3: #{seq_to_emb_forward.2} parent=0 // loop_header
    %s11 = sphi 0, %s15
    %p12 = scmp.ge.s32.totalorder %s11, 4
    %s21 = sphi 0, %s23
    %s24 = sphi 0, %s21
    %s25 = sphi 0, %s24
    %s41 = sphi 0, %s25
    %s49 = sphi 0, %s51
    %s52 = sphi 0, %s49
    %s53 = sphi 0, %s52
    %s69 = sphi 0, %s53
    %s73 = sphi 0, %s73
    %s75 = sphi 0, %s73
    %s76 = sphi 0, %s75
    %s90 = sphi 0, %s76
    %s96 = sphi 0, %s98
    %s99 = sphi 0, %s96
    %s100 = sphi 0, %s99
    %s116 = sphi 0, %s100
    %s124 = sphi 0, %s126
    %s127 = sphi 0, %s124
    %s128 = sphi 0, %s127
    %s144 = sphi 0, %s128
  $region4: #{seq_to_emb_forward.2} parent=0 // loop_header_branch
    %14 = sbr.rel (%p12) target = $region8
  $region5: #{seq_to_emb_forward.2} parent=0 // loop_body
    %s16 = ssub.s32 %s11, 1
    %s17 = ssub.s32 %s11, 2
    %s18 = sadd.s32 %s11, 1
    %s19 = ssub.s32 %s11, %s18
    %p20 = scmp.eq.s32.totalorder %s19, 0
    %s22 = sadd.s32 %s21, 1
    %s23 = scalar_select %p20, %s21, %s22
    %p26 = pneg %p20
    %p27 = scmp.eq.s32.totalorder %s11, 1
    %p28 = por %p26, %p27
    %p29 = scmp.ne.s32.totalorder %s21, %s24
    %p30 = scmp.eq.s32.totalorder %s11, 0
    %p31 = por %p29, %p30
    %p32 = scmp.ne.s32.totalorder %s21, %s24
    %p33 = scmp.eq.s32.totalorder %s16, 1
    %p34 = por %p32, %p33
    %p35 = scmp.ne.s32.totalorder %s24, %s25
    %p36 = scmp.eq.s32.totalorder %s16, 0
    %p37 = por %p35, %p36
    %p38 = scmp.ne.s32.totalorder %s24, %s25
    %p39 = scmp.eq.s32.totalorder %s17, 1
    %p40 = por %p38, %p39
    %p42 = scmp.ne.s32.totalorder %s25, %s41
    %p43 = scmp.eq.s32.totalorder %s17, 0
    %p44 = por %p42, %p43
    %s45 = ssub.s32 1, %s11
    %s46 = ssub.s32 1, %s18
    %s47 = ssub.s32 %s45, %s46
    %p48 = scmp.eq.s32.totalorder %s47, 0
    %s50 = sadd.s32 %s49, 1
    %s51 = scalar_select %p48, %s49, %s50
    %p54 = pneg %p48
    %p55 = scmp.eq.s32.totalorder %s11, 1
    %p56 = por %p54, %p55
    %p57 = scmp.ne.s32.totalorder %s49, %s52
    %p58 = scmp.eq.s32.totalorder %s11, 0
    %p59 = por %p57, %p58
    %p60 = scmp.ne.s32.totalorder %s49, %s52
    %p61 = scmp.eq.s32.totalorder %s16, 1
    %p62 = por %p60, %p61
    %p63 = scmp.ne.s32.totalorder %s52, %s53
    %p64 = scmp.eq.s32.totalorder %s16, 0
    %p65 = por %p63, %p64
    %p66 = scmp.ne.s32.totalorder %s52, %s53
    %p67 = scmp.eq.s32.totalorder %s17, 1
    %p68 = por %p66, %p67
    %p70 = scmp.ne.s32.totalorder %s53, %s69
    %p71 = scmp.eq.s32.totalorder %s17, 0
    %p72 = por %p70, %p71
    %s74 = sadd.s32 %s73, 1
    %p77 = scmp.eq.s32.totalorder %s11, 1
    %p78 = scmp.ne.s32.totalorder %s73, %s75
    %p79 = scmp.eq.s32.totalorder %s11, 0
    %p80 = por %p78, %p79
    %p81 = scmp.ne.s32.totalorder %s73, %s75
    %p82 = scmp.eq.s32.totalorder %s16, 1
    %p83 = por %p81, %p82
    %p84 = scmp.ne.s32.totalorder %s75, %s76
    %p85 = scmp.eq.s32.totalorder %s16, 0
    %p86 = por %p84, %p85
    %p87 = scmp.ne.s32.totalorder %s75, %s76
    %p88 = scmp.eq.s32.totalorder %s17, 1
    %p89 = por %p87, %p88
    %p91 = scmp.ne.s32.totalorder %s76, %s90
    %p92 = scmp.eq.s32.totalorder %s17, 0
    %p93 = por %p91, %p92
    %s94 = ssub.s32 %s11, %s18
    %p95 = scmp.eq.s32.totalorder %s94, 0
    %s97 = sadd.s32 %s96, 1
    %s98 = scalar_select %p95, %s96, %s97
    %p101 = pneg %p95
    %p102 = scmp.eq.s32.totalorder %s11, 1
    %p103 = por %p101, %p102
    %p104 = scmp.ne.s32.totalorder %s96, %s99
    %p105 = scmp.eq.s32.totalorder %s11, 0
    %p106 = por %p104, %p105
    %p107 = scmp.ne.s32.totalorder %s96, %s99
    %p108 = scmp.eq.s32.totalorder %s16, 1
    %p109 = por %p107, %p108
    %p110 = scmp.ne.s32.totalorder %s99, %s100
    %p111 = scmp.eq.s32.totalorder %s16, 0
    %p112 = por %p110, %p111
    %p113 = scmp.ne.s32.totalorder %s99, %s100
    %p114 = scmp.eq.s32.totalorder %s17, 1
    %p115 = por %p113, %p114
    %p117 = scmp.ne.s32.totalorder %s100, %s116
    %p118 = scmp.eq.s32.totalorder %s17, 0
    %p119 = por %p117, %p118
    %s120 = ssub.s32 1, %s11
    %s121 = ssub.s32 1, %s18
    %s122 = ssub.s32 %s120, %s121
    %p123 = scmp.eq.s32.totalorder %s122, 0
    %s125 = sadd.s32 %s124, 1
    %s126 = scalar_select %p123, %s124, %s125
    %p129 = pneg %p123
    %p130 = scmp.eq.s32.totalorder %s11, 1
    %p131 = por %p129, %p130
    %p132 = scmp.ne.s32.totalorder %s124, %s127
    %p133 = scmp.eq.s32.totalorder %s11, 0
    %p134 = por %p132, %p133
    %p135 = scmp.ne.s32.totalorder %s124, %s127
    %p136 = scmp.eq.s32.totalorder %s16, 1
    %p137 = por %p135, %p136
    %p138 = scmp.ne.s32.totalorder %s127, %s128
    %p139 = scmp.eq.s32.totalorder %s16, 0
    %p140 = por %p138, %p139
    %p141 = scmp.ne.s32.totalorder %s127, %s128
    %p142 = scmp.eq.s32.totalorder %s17, 1
    %p143 = por %p141, %p142
    %p145 = scmp.ne.s32.totalorder %s128, %s144
    %p146 = scmp.eq.s32.totalorder %s17, 0
    %p147 = por %p145, %p146
    %p148 = scmp.le.s32.totalorder 1, %s11
    %p149 = scmp.lt.s32.totalorder %s11, 3
    %p150 = pnand %p148, %p149
    %p151 = pneg %p150
    // Predicated region
    $region9: #{seq_to_emb_forward.2} parent=5 // pred_check
      _
    $region10: #{seq_to_emb_forward.2} parent=5 // pred_check_branch
      %153 = sbr.rel (%p150) target = $region12
    $region11: #{seq_to_emb_forward.2} parent=5 // pred_region
      %s154 = ssub.s32 %s11, 1
      // Predicated region
      $region13: #{seq_to_emb_forward.2} parent=11 // pred_check
        %p155 = pneg %p86
      $region14: #{seq_to_emb_forward.2} parent=11 // pred_check_branch
        %157 = sbr.rel (%p155) target = $region16
      $region15: #{seq_to_emb_forward.2} parent=11 // pred_region
        _
      $region16: #{seq_to_emb_forward.2} parent=11 // pred_fallthru
        _
    $region12: #{seq_to_emb_forward.2} parent=5 // pred_fallthru
      _
    %p158 = scmp.lt.s32.totalorder %s11, 2
    // Predicated region
    $region17: #{seq_to_emb_forward.2} parent=5 // pred_check
      %p159 = pneg %p158
    $region18: #{seq_to_emb_forward.2} parent=5 // pred_check_branch
      %161 = sbr.rel (%p159) target = $region20
    $region19: #{seq_to_emb_forward.2} parent=5 // pred_region
      // Predicated region
      $region21: #{seq_to_emb_forward.2} parent=19 // pred_check
        %p162 = pneg %p31
      $region22: #{seq_to_emb_forward.2} parent=19 // pred_check_branch
        %164 = sbr.rel (%p162) target = $region24
      $region23: #{seq_to_emb_forward.2} parent=19 // pred_region
        %s165 = smul.u32 8, %s11
        %p166 = scmp.lt.s32.totalorder %s165, 15
        %s167 = scalar_select %p166, %s165, 15
        %s168 = smul.addr %s167, 4
        %s169 = smul.addr %s168, 8
        %s170 = scalar_lea.vmem %s0, %s169
        %s171 = smul.u32 8, %s11
      $region24: #{seq_to_emb_forward.2} parent=19 // pred_fallthru
        _
      // Predicated region
      $region25: #{seq_to_emb_forward.2} parent=19 // pred_check
        %p172 = pneg %p59
      $region26: #{seq_to_emb_forward.2} parent=19 // pred_check_branch
        %174 = sbr.rel (%p172) target = $region28
      $region27: #{seq_to_emb_forward.2} parent=19 // pred_region
        %s175 = ssub.s32 1, %s11
        %s176 = smul.u32 8, %s175
        %p177 = scmp.lt.s32.totalorder %s176, 15
        %s178 = scalar_select %p177, %s176, 15
        %s179 = smul.addr %s178, 4
        %s180 = smul.addr %s179, 8
        %s181 = scalar_lea.vmem %s1, %s180
        %s182 = ssub.s32 1, %s11
        %s183 = smul.u32 8, %s182
      $region28: #{seq_to_emb_forward.2} parent=19 // pred_fallthru
        _
    $region20: #{seq_to_emb_forward.2} parent=5 // pred_fallthru
      _
    %p184 = scmp.le.s32.totalorder 1, %s11
    %p185 = scmp.lt.s32.totalorder %s11, 3
    %p186 = pnand %p184, %p185
    %p187 = pneg %p186
    // Predicated region
    $region29: #{seq_to_emb_forward.2} parent=5 // pred_check
      _
    $region30: #{seq_to_emb_forward.2} parent=5 // pred_check_branch
      %189 = sbr.rel (%p186) target = $region32
    $region31: #{seq_to_emb_forward.2} parent=5 // pred_region
      %s190 = ssub.s32 %s11, 1
      %s191 = smul.u32 8, %s16
      %p192 = scmp.lt.s32.totalorder %s191, 15
      %s193 = scalar_select %p192, %s191, 15
      %s194 = smul.addr %s193, 4
      %s195 = smul.addr %s194, 8
      %s196 = scalar_lea.vmem %s0, %s195
      %p197 = pneg %p37
      %p198 = pneg %p34
      %s199 = ssub.s32 1, %s16
      %s200 = smul.u32 8, %s199
      %p201 = scmp.lt.s32.totalorder %s200, 15
      %s202 = scalar_select %p201, %s200, 15
      %s203 = smul.addr %s202, 4
      %s204 = smul.addr %s203, 8
      %s205 = scalar_lea.vmem %s1, %s204
      %p206 = pneg %p65
      %p207 = pneg %p62
      %p208 = pneg %p86
      %p209 = pneg %p83
      %p210 = pneg %p112
      %p211 = pneg %p109
      %s212 = smul.u32 8, %s16
      %p213 = scmp.lt.s32.totalorder %s212, 15
      %s214 = scalar_select %p213, %s212, 15
      %s215 = smul.addr %s214, 8
      %s216 = scalar_lea.vmem %s3, %s215
      %p217 = pneg %p140
      %p218 = pneg %p137
      %s219 = ssub.s32 1, %s16
      %s220 = smul.u32 8, %s219
      %p221 = scmp.lt.s32.totalorder %s220, 15
      %s222 = scalar_select %p221, %s220, 15
      %s223 = smul.addr %s222, 8
      %s224 = scalar_lea.vmem %s4, %s223
      %s225 = smul.u32 8, %s16
      %p226 = scmp.lt.s32.totalorder %s225, 15
      %s227 = scalar_select %p226, %s225, 15
      %s228 = smul.addr %s227, 4
      %s229 = smul.addr %s228, 8
      %s230 = scalar_lea.vmem %s0, %s229
      %s231 = smul.u32 8, %s16
      %s232 = ssub.s32 1, %s16
      %s233 = smul.u32 8, %s232
      %p234 = scmp.lt.s32.totalorder %s233, 15
      %s235 = scalar_select %p234, %s233, 15
      %s236 = smul.addr %s235, 4
      %s237 = smul.addr %s236, 8
      %s238 = scalar_lea.vmem %s1, %s237
      %s239 = ssub.s32 1, %s16
      %s240 = smul.u32 8, %s239
      %s241 = smul.u32 8, %s16
      %p242 = scmp.lt.s32.totalorder %s241, 15
      %s243 = scalar_select %p242, %s241, 15
      %s244 = smul.addr %s243, 8
      %s245 = scalar_lea.vmem %s3, %s244
      %s246 = smul.u32 8, %s16
      %s247 = ssub.s32 1, %s16
      %s248 = smul.u32 8, %s247
      %p249 = scmp.lt.s32.totalorder %s248, 15
      %s250 = scalar_select %p249, %s248, 15
      %s251 = smul.addr %s250, 8
      %s252 = scalar_lea.vmem %s4, %s251
      %s253 = ssub.s32 1, %s16
      %s254 = smul.u32 8, %s253
      %p255 = scmp.eq.s32.totalorder %s16, 0
      // Predicated region
      $region33: #{seq_to_emb_forward.2} parent=31 // pred_check
        %p256 = pneg %p255
      $region34: #{seq_to_emb_forward.2} parent=31 // pred_check_branch
        %258 = sbr.rel (%p256) target = $region36
      $region35: #{seq_to_emb_forward.2} parent=31 // pred_region
        %259 = vst [vmem:[#allocation2] sm:$0xff] 0.0
        %260 = vst [vmem:[#allocation3] sm:$0xff] 0.0
        %261 = vst [vmem:[#allocation4] sm:$0xff] 0.0
        %262 = vst [vmem:[#allocation5] sm:$0xff] 0.0
      $region36: #{seq_to_emb_forward.2} parent=31 // pred_fallthru
        _
      %v263 = vld [vmem:[%s2] sm:$0xff]
      %v264 = vld [vmem:[%s2 + $0x8] sm:$0xff]
      %v265 = vld [vmem:[%s2 + $0x10] sm:$0xff]
      %v266 = vld [vmem:[%s2 + $0x18] sm:$0xff]
      %v267 = vld [vmem:[%s2 + $0x20] sm:$0xff]
      %v268 = vld [vmem:[%s2 + $0x28] sm:$0xff]
      %v269 = vld [vmem:[%s2 + $0x30] sm:$0xff]
      %v270 = vld [vmem:[%s2 + $0x38] sm:$0xff]
      %v271 = vld [vmem:[%s2 + $0x40] sm:$0xff]
      %v272 = vld [vmem:[%s2 + $0x48] sm:$0xff]
      %v273 = vld [vmem:[%s2 + $0x50] sm:$0xff]
      %v274 = vld [vmem:[%s2 + $0x58] sm:$0xff]
      %v275 = vld [vmem:[%s2 + $0x60] sm:$0xff]
      %v276 = vld [vmem:[%s2 + $0x68] sm:$0xff]
      %v277 = vld [vmem:[%s2 + $0x70] sm:$0xff]
      %v278 = vld [vmem:[%s2 + $0x78] sm:$0xff]
      %v279 = vld [vmem:[%s2 + $0x80] sm:$0xff]
      %v280 = vld [vmem:[%s2 + $0x88] sm:$0xff]
      %v281 = vld [vmem:[%s2 + $0x90] sm:$0xff]
      %v282 = vld [vmem:[%s2 + $0x98] sm:$0xff]
      %v283 = vld [vmem:[%s2 + $0xa0] sm:$0xff]
      %v284 = vld [vmem:[%s2 + $0xa8] sm:$0xff]
      %v285 = vld [vmem:[%s2 + $0xb0] sm:$0xff]
      %v286 = vld [vmem:[%s2 + $0xb8] sm:$0xff]
      %v287 = vld [vmem:[%s2 + $0xc0] sm:$0xff]
      %v288 = vld [vmem:[%s2 + $0xc8] sm:$0xff]
      %v289 = vld [vmem:[%s2 + $0xd0] sm:$0xff]
      %v290 = vld [vmem:[%s2 + $0xd8] sm:$0xff]
      %v291 = vld [vmem:[%s2 + $0xe0] sm:$0xff]
      %v292 = vld [vmem:[%s2 + $0xe8] sm:$0xff]
      %v293 = vld [vmem:[%s2 + $0xf0] sm:$0xff]
      %v294 = vld [vmem:[%s2 + $0xf8] sm:$0xff]
      %v295 = vld [vmem:[%s2 + $0x100] sm:$0xff]
      %v296 = vld [vmem:[%s2 + $0x108] sm:$0xff]
      %v297 = vld [vmem:[%s2 + $0x110] sm:$0xff]
      %v298 = vld [vmem:[%s2 + $0x118] sm:$0xff]
      %v299 = vld [vmem:[%s2 + $0x120] sm:$0xff]
      %v300 = vld [vmem:[%s2 + $0x128] sm:$0xff]
      %v301 = vld [vmem:[%s2 + $0x130] sm:$0xff]
      %v302 = vld [vmem:[%s2 + $0x138] sm:$0xff]
      %v303 = vld [vmem:[%s2 + $0x140] sm:$0xff]
      %v304 = vld [vmem:[%s2 + $0x148] sm:$0xff]
      %v305 = vld [vmem:[%s2 + $0x150] sm:$0xff]
      %v306 = vld [vmem:[%s2 + $0x158] sm:$0xff]
      %v307 = vld [vmem:[%s2 + $0x160] sm:$0xff]
      %v308 = vld [vmem:[%s2 + $0x168] sm:$0xff]
      %v309 = vld [vmem:[%s2 + $0x170] sm:$0xff]
      %v310 = vld [vmem:[%s2 + $0x178] sm:$0xff]
      %v311 = vld [vmem:[%s2 + $0x180] sm:$0xff]
      %v312 = vld [vmem:[%s2 + $0x188] sm:$0xff]
      %v313 = vld [vmem:[%s2 + $0x190] sm:$0xff]
      %v314 = vld [vmem:[%s2 + $0x198] sm:$0xff]
      %v315 = vld [vmem:[%s2 + $0x1a0] sm:$0xff]
      %v316 = vld [vmem:[%s2 + $0x1a8] sm:$0xff]
      %v317 = vld [vmem:[%s2 + $0x1b0] sm:$0xff]
      %v318 = vld [vmem:[%s2 + $0x1b8] sm:$0xff]
      %v319 = vld [vmem:[%s2 + $0x1c0] sm:$0xff]
      %v320 = vld [vmem:[%s2 + $0x1c8] sm:$0xff]
      %v321 = vld [vmem:[%s2 + $0x1d0] sm:$0xff]
      %v322 = vld [vmem:[%s2 + $0x1d8] sm:$0xff]
      %v323 = vld [vmem:[%s2 + $0x1e0] sm:$0xff]
      %v324 = vld [vmem:[%s2 + $0x1e8] sm:$0xff]
      %v325 = vld [vmem:[%s2 + $0x1f0] sm:$0xff]
      %v326 = vld [vmem:[%s2 + $0x1f8] sm:$0xff]
      %s327 = scalar_lea.vmem %s2, 512
      %v328 = vld [vmem:[%s327] sm:$0xff]
      %v329 = vld [vmem:[%s327 + $0x8] sm:$0xff]
      %v330 = vld [vmem:[%s327 + $0x10] sm:$0xff]
      %v331 = vld [vmem:[%s327 + $0x18] sm:$0xff]
      %v332 = vld [vmem:[%s327 + $0x20] sm:$0xff]
      %v333 = vld [vmem:[%s327 + $0x28] sm:$0xff]
      %v334 = vld [vmem:[%s327 + $0x30] sm:$0xff]
      %v335 = vld [vmem:[%s327 + $0x38] sm:$0xff]
      %v336 = vld [vmem:[%s327 + $0x40] sm:$0xff]
      %v337 = vld [vmem:[%s327 + $0x48] sm:$0xff]
      %v338 = vld [vmem:[%s327 + $0x50] sm:$0xff]
      %v339 = vld [vmem:[%s327 + $0x58] sm:$0xff]
      %v340 = vld [vmem:[%s327 + $0x60] sm:$0xff]
      %v341 = vld [vmem:[%s327 + $0x68] sm:$0xff]
      %v342 = vld [vmem:[%s327 + $0x70] sm:$0xff]
      %v343 = vld [vmem:[%s327 + $0x78] sm:$0xff]
      %v344 = vld [vmem:[%s327 + $0x80] sm:$0xff]
      %v345 = vld [vmem:[%s327 + $0x88] sm:$0xff]
      %v346 = vld [vmem:[%s327 + $0x90] sm:$0xff]
      %v347 = vld [vmem:[%s327 + $0x98] sm:$0xff]
      %v348 = vld [vmem:[%s327 + $0xa0] sm:$0xff]
      %v349 = vld [vmem:[%s327 + $0xa8] sm:$0xff]
      %v350 = vld [vmem:[%s327 + $0xb0] sm:$0xff]
      %v351 = vld [vmem:[%s327 + $0xb8] sm:$0xff]
      %v352 = vld [vmem:[%s327 + $0xc0] sm:$0xff]
      %v353 = vld [vmem:[%s327 + $0xc8] sm:$0xff]
      %v354 = vld [vmem:[%s327 + $0xd0] sm:$0xff]
      %v355 = vld [vmem:[%s327 + $0xd8] sm:$0xff]
      %v356 = vld [vmem:[%s327 + $0xe0] sm:$0xff]
      %v357 = vld [vmem:[%s327 + $0xe8] sm:$0xff]
      %v358 = vld [vmem:[%s327 + $0xf0] sm:$0xff]
      %v359 = vld [vmem:[%s327 + $0xf8] sm:$0xff]
      %v360 = vld [vmem:[%s327 + $0x100] sm:$0xff]
      %v361 = vld [vmem:[%s327 + $0x108] sm:$0xff]
      %v362 = vld [vmem:[%s327 + $0x110] sm:$0xff]
      %v363 = vld [vmem:[%s327 + $0x118] sm:$0xff]
      %v364 = vld [vmem:[%s327 + $0x120] sm:$0xff]
      %v365 = vld [vmem:[%s327 + $0x128] sm:$0xff]
      %v366 = vld [vmem:[%s327 + $0x130] sm:$0xff]
      %v367 = vld [vmem:[%s327 + $0x138] sm:$0xff]
      %v368 = vld [vmem:[%s327 + $0x140] sm:$0xff]
      %v369 = vld [vmem:[%s327 + $0x148] sm:$0xff]
      %v370 = vld [vmem:[%s327 + $0x150] sm:$0xff]
      %v371 = vld [vmem:[%s327 + $0x158] sm:$0xff]
      %v372 = vld [vmem:[%s327 + $0x160] sm:$0xff]
      %v373 = vld [vmem:[%s327 + $0x168] sm:$0xff]
      %v374 = vld [vmem:[%s327 + $0x170] sm:$0xff]
      %v375 = vld [vmem:[%s327 + $0x178] sm:$0xff]
      %v376 = vld [vmem:[%s327 + $0x180] sm:$0xff]
      %v377 = vld [vmem:[%s327 + $0x188] sm:$0xff]
      %v378 = vld [vmem:[%s327 + $0x190] sm:$0xff]
      %v379 = vld [vmem:[%s327 + $0x198] sm:$0xff]
      %v380 = vld [vmem:[%s327 + $0x1a0] sm:$0xff]
      %v381 = vld [vmem:[%s327 + $0x1a8] sm:$0xff]
      %v382 = vld [vmem:[%s327 + $0x1b0] sm:$0xff]
      %v383 = vld [vmem:[%s327 + $0x1b8] sm:$0xff]
      %v384 = vld [vmem:[%s327 + $0x1c0] sm:$0xff]
      %v385 = vld [vmem:[%s327 + $0x1c8] sm:$0xff]
      %v386 = vld [vmem:[%s327 + $0x1d0] sm:$0xff]
      %v387 = vld [vmem:[%s327 + $0x1d8] sm:$0xff]
      %v388 = vld [vmem:[%s327 + $0x1e0] sm:$0xff]
      %v389 = vld [vmem:[%s327 + $0x1e8] sm:$0xff]
      %v390 = vld [vmem:[%s327 + $0x1f0] sm:$0xff]
      %v391 = vld [vmem:[%s327 + $0x1f8] sm:$0xff]
      %v392 = vld [vmem:[#allocation2] sm:$0xff]
      %v393 = vld [vmem:[#allocation3] sm:$0xff]
      %v394 = vld [vmem:[#allocation4] sm:$0xff]
      %v395 = vld [vmem:[#allocation5] sm:$0xff]
      %v396 = vld [vmem:[%s230] sm:$0xff]
      %v397 = vld [vmem:[%s230 + $0x8] sm:$0xff]
      %v398 = vld [vmem:[%s230 + $0x10] sm:$0xff]
      %v399 = vld [vmem:[%s230 + $0x18] sm:$0xff]
      %400 = vmatprep.subr.mxu0 %v324
      %401 = vmatpush1.msra.mxu0 %v323
      %402 = vmatprep.subr.mxu0 %v320
      %403 = vmatpush1.msra.mxu0 %v319
      %404 = vmatprep.subr.mxu0 %v316
      %405 = vmatpush1.msra.mxu0 %v315
      %406 = vmatprep.subr.mxu0 %v312
      %407 = vmatpush1.msra.mxu0 %v311
      %408 = vmatprep.subr.mxu0 %v308
      %409 = vmatpush1.msra.mxu0 %v307
      %410 = vmatprep.subr.mxu0 %v304
      %411 = vmatpush1.msra.mxu0 %v303
      %412 = vmatprep.subr.mxu0 %v300
      %413 = vmatpush1.msra.mxu0 %v299
      %414 = vmatprep.subr.mxu0 %v296
      %415 = vmatpush1.msra.mxu0 %v295
      %416 = vmatprep.subr.mxu0 %v292
      %417 = vmatpush1.msra.mxu0 %v291
      %418 = vmatprep.subr.mxu0 %v288
      %419 = vmatpush1.msra.mxu0 %v287
      %420 = vmatprep.subr.mxu0 %v284
      %421 = vmatpush1.msra.mxu0 %v283
      %422 = vmatprep.subr.mxu0 %v280
      %423 = vmatpush1.msra.mxu0 %v279
      %424 = vmatprep.subr.mxu0 %v276
      %425 = vmatpush1.msra.mxu0 %v275
      %426 = vmatprep.subr.mxu0 %v272
      %427 = vmatpush1.msra.mxu0 %v271
      %428 = vmatprep.subr.mxu0 %v268
      %429 = vmatpush1.msra.mxu0 %v267
      %430 = vmatprep.subr.mxu0 %v264
      %431 = vmatpush1.msra.mxu0 %v263
      %432 = vmatprep.subr.mxu0 0.0
      %433 = vmatpush2.msra.mxu0 0.0
      %434 = vmatprep.subr.mxu0 0.0
      %435 = vmatpush2.msra.mxu0 0.0
      %436 = vmatprep.subr.mxu0 0.0
      %437 = vmatpush2.msra.mxu0 0.0
      %438 = vmatprep.subr.mxu0 0.0
      %439 = vmatpush2.msra.mxu0 0.0
      %440 = vmatprep.subr.mxu0 0.0
      %441 = vmatpush2.msra.mxu0 0.0
      %442 = vmatprep.subr.mxu0 0.0
      %443 = vmatpush2.msra.mxu0 0.0
      %444 = vmatprep.subr.mxu0 0.0
      %445 = vmatpush2.msra.mxu0 0.0
      %446 = vmatprep.subr.mxu0 0.0
      %447 = vmatpush2.msra.mxu0 0.0
      %448 = vmatprep.subr.mxu0 0.0
      %449 = vmatpush2.msra.mxu0 0.0
      %450 = vmatprep.subr.mxu0 0.0
      %451 = vmatpush2.msra.mxu0 0.0
      %452 = vmatprep.subr.mxu0 0.0
      %453 = vmatpush2.msra.mxu0 0.0
      %454 = vmatprep.subr.mxu0 0.0
      %455 = vmatpush2.msra.mxu0 0.0
      %456 = vmatprep.subr.mxu0 0.0
      %457 = vmatpush2.msra.mxu0 0.0
      %458 = vmatprep.subr.mxu0 0.0
      %459 = vmatpush2.msra.mxu0 0.0
      %460 = vmatprep.subr.mxu0 0.0
      %461 = vmatpush2.msra.mxu0 0.0
      %462 = vmatprep.subr.mxu0 0.0
      %463 = vmatpush2.msra.mxu0 0.0
      %464 = vmatprep.mubr.f32.mxu0 0.0
      %465 = vmatmul.mubr.f32.gmra.mxu0 %v392
      %v466 = vpop.f32.mrf.mxu0
      %v467 = vadd.f32 0.0, %v466
      %v468 = vpop.f32.mrf.mxu0
      %v469 = vadd.f32 0.0, %v468
      %470 = vdwg.mxu0
      %471 = vmatprep.subr.mxu0 %v326
      %472 = vmatpush1.msra.mxu0 %v325
      %473 = vmatprep.subr.mxu0 %v322
      %474 = vmatpush1.msra.mxu0 %v321
      %475 = vmatprep.subr.mxu0 %v318
      %476 = vmatpush1.msra.mxu0 %v317
      %477 = vmatprep.subr.mxu0 %v314
      %478 = vmatpush1.msra.mxu0 %v313
      %479 = vmatprep.subr.mxu0 %v310
      %480 = vmatpush1.msra.mxu0 %v309
      %481 = vmatprep.subr.mxu0 %v306
      %482 = vmatpush1.msra.mxu0 %v305
      %483 = vmatprep.subr.mxu0 %v302
      %484 = vmatpush1.msra.mxu0 %v301
      %485 = vmatprep.subr.mxu0 %v298
      %486 = vmatpush1.msra.mxu0 %v297
      %487 = vmatprep.subr.mxu0 %v294
      %488 = vmatpush1.msra.mxu0 %v293
      %489 = vmatprep.subr.mxu0 %v290
      %490 = vmatpush1.msra.mxu0 %v289
      %491 = vmatprep.subr.mxu0 %v286
      %492 = vmatpush1.msra.mxu0 %v285
      %493 = vmatprep.subr.mxu0 %v282
      %494 = vmatpush1.msra.mxu0 %v281
      %495 = vmatprep.subr.mxu0 %v278
      %496 = vmatpush1.msra.mxu0 %v277
      %497 = vmatprep.subr.mxu0 %v274
      %498 = vmatpush1.msra.mxu0 %v273
      %499 = vmatprep.subr.mxu0 %v270
      %500 = vmatpush1.msra.mxu0 %v269
      %501 = vmatprep.subr.mxu0 %v266
      %502 = vmatpush1.msra.mxu0 %v265
      %503 = vmatprep.subr.mxu0 0.0
      %504 = vmatpush2.msra.mxu0 0.0
      %505 = vmatprep.subr.mxu0 0.0
      %506 = vmatpush2.msra.mxu0 0.0
      %507 = vmatprep.subr.mxu0 0.0
      %508 = vmatpush2.msra.mxu0 0.0
      %509 = vmatprep.subr.mxu0 0.0
      %510 = vmatpush2.msra.mxu0 0.0
      %511 = vmatprep.subr.mxu0 0.0
      %512 = vmatpush2.msra.mxu0 0.0
      %513 = vmatprep.subr.mxu0 0.0
      %514 = vmatpush2.msra.mxu0 0.0
      %515 = vmatprep.subr.mxu0 0.0
      %516 = vmatpush2.msra.mxu0 0.0
      %517 = vmatprep.subr.mxu0 0.0
      %518 = vmatpush2.msra.mxu0 0.0
      %519 = vmatprep.subr.mxu0 0.0
      %520 = vmatpush2.msra.mxu0 0.0
      %521 = vmatprep.subr.mxu0 0.0
      %522 = vmatpush2.msra.mxu0 0.0
      %523 = vmatprep.subr.mxu0 0.0
      %524 = vmatpush2.msra.mxu0 0.0
      %525 = vmatprep.subr.mxu0 0.0
      %526 = vmatpush2.msra.mxu0 0.0
      %527 = vmatprep.subr.mxu0 0.0
      %528 = vmatpush2.msra.mxu0 0.0
      %529 = vmatprep.subr.mxu0 0.0
      %530 = vmatpush2.msra.mxu0 0.0
      %531 = vmatprep.subr.mxu0 0.0
      %532 = vmatpush2.msra.mxu0 0.0
      %533 = vmatprep.subr.mxu0 0.0
      %534 = vmatpush2.msra.mxu0 0.0
      %535 = vmatprep.mubr.f32.mxu0 0.0
      %536 = vmatmul.mubr.f32.gmra.mxu0 %v392
      %v537 = vpop.f32.mrf.mxu0
      %v538 = vadd.f32 0.0, %v537
      %v539 = vpop.f32.mrf.mxu0
      %v540 = vadd.f32 0.0, %v539
      %541 = vdwg.mxu0
      %v542 = vadd.f32 %v396, %v467
      %v543 = vadd.f32 %v397, %v469
      %v544 = vadd.f32 %v398, %v538
      %v545 = vadd.f32 %v399, %v540
      %v546 = vxor.u32 %v542, 2147483648
      %v547 = vmul.f32 %v546, 1.442695
      %v548 = vpow.pop %v547
      %v549 = vadd.f32 %v548, 1.0
      %v550 = vrcp.pop %v549
      %v551 = vmul.f32 1.0, %v550
      %v552 = vxor.u32 %v543, 2147483648
      %v553 = vmul.f32 %v552, 1.442695
      %v554 = vpow.pop %v553
      %v555 = vadd.f32 %v554, 1.0
      %v556 = vrcp.pop %v555
      %v557 = vmul.f32 1.0, %v556
      %v558 = vtanh.pop %v544
      %v559 = vxor.u32 %v545, 2147483648
      %v560 = vmul.f32 %v559, 1.442695
      %v561 = vpow.pop %v560
      %v562 = vadd.f32 %v561, 1.0
      %v563 = vrcp.pop %v562
      %v564 = vmul.f32 1.0, %v563
      %v565 = vmul.f32 %v557, %v393
      %v566 = vmul.f32 %v551, %v558
      %v567 = vadd.f32 %v565, %v566
      %v568 = vtanh.pop %v567
      %v569 = vmul.f32 %v564, %v568
      %s570 = scalar_lea.vmem %s238, 224
      %v571 = vld [vmem:[%s570] sm:$0xff]
      %v572 = vld [vmem:[%s570 + $0x8] sm:$0xff]
      %v573 = vld [vmem:[%s570 + $0x10] sm:$0xff]
      %v574 = vld [vmem:[%s570 + $0x18] sm:$0xff]
      %575 = vmatprep.subr.mxu0 %v389
      %576 = vmatpush1.msra.mxu0 %v388
      %577 = vmatprep.subr.mxu0 %v385
      %578 = vmatpush1.msra.mxu0 %v384
      %579 = vmatprep.subr.mxu0 %v381
      %580 = vmatpush1.msra.mxu0 %v380
      %581 = vmatprep.subr.mxu0 %v377
      %582 = vmatpush1.msra.mxu0 %v376
      %583 = vmatprep.subr.mxu0 %v373
      %584 = vmatpush1.msra.mxu0 %v372
      %585 = vmatprep.subr.mxu0 %v369
      %586 = vmatpush1.msra.mxu0 %v368
      %587 = vmatprep.subr.mxu0 %v365
      %588 = vmatpush1.msra.mxu0 %v364
      %589 = vmatprep.subr.mxu0 %v361
      %590 = vmatpush1.msra.mxu0 %v360
      %591 = vmatprep.subr.mxu0 %v357
      %592 = vmatpush1.msra.mxu0 %v356
      %593 = vmatprep.subr.mxu0 %v353
      %594 = vmatpush1.msra.mxu0 %v352
      %595 = vmatprep.subr.mxu0 %v349
      %596 = vmatpush1.msra.mxu0 %v348
      %597 = vmatprep.subr.mxu0 %v345
      %598 = vmatpush1.msra.mxu0 %v344
      %599 = vmatprep.subr.mxu0 %v341
      %600 = vmatpush1.msra.mxu0 %v340
      %601 = vmatprep.subr.mxu0 %v337
      %602 = vmatpush1.msra.mxu0 %v336
      %603 = vmatprep.subr.mxu0 %v333
      %604 = vmatpush1.msra.mxu0 %v332
      %605 = vmatprep.subr.mxu0 %v329
      %606 = vmatpush1.msra.mxu0 %v328
      %607 = vmatprep.subr.mxu0 0.0
      %608 = vmatpush2.msra.mxu0 0.0
      %609 = vmatprep.subr.mxu0 0.0
      %610 = vmatpush2.msra.mxu0 0.0
      %611 = vmatprep.subr.mxu0 0.0
      %612 = vmatpush2.msra.mxu0 0.0
      %613 = vmatprep.subr.mxu0 0.0
      %614 = vmatpush2.msra.mxu0 0.0
      %615 = vmatprep.subr.mxu0 0.0
      %616 = vmatpush2.msra.mxu0 0.0
      %617 = vmatprep.subr.mxu0 0.0
      %618 = vmatpush2.msra.mxu0 0.0
      %619 = vmatprep.subr.mxu0 0.0
      %620 = vmatpush2.msra.mxu0 0.0
      %621 = vmatprep.subr.mxu0 0.0
      %622 = vmatpush2.msra.mxu0 0.0
      %623 = vmatprep.subr.mxu0 0.0
      %624 = vmatpush2.msra.mxu0 0.0
      %625 = vmatprep.subr.mxu0 0.0
      %626 = vmatpush2.msra.mxu0 0.0
      %627 = vmatprep.subr.mxu0 0.0
      %628 = vmatpush2.msra.mxu0 0.0
      %629 = vmatprep.subr.mxu0 0.0
      %630 = vmatpush2.msra.mxu0 0.0
      %631 = vmatprep.subr.mxu0 0.0
      %632 = vmatpush2.msra.mxu0 0.0
      %633 = vmatprep.subr.mxu0 0.0
      %634 = vmatpush2.msra.mxu0 0.0
      %635 = vmatprep.subr.mxu0 0.0
      %636 = vmatpush2.msra.mxu0 0.0
      %637 = vmatprep.subr.mxu0 0.0
      %638 = vmatpush2.msra.mxu0 0.0
      %639 = vmatprep.mubr.f32.mxu0 0.0
      %640 = vmatmul.mubr.f32.gmra.mxu0 %v394
      %v641 = vpop.f32.mrf.mxu0
      %v642 = vadd.f32 0.0, %v641
      %v643 = vpop.f32.mrf.mxu0
      %v644 = vadd.f32 0.0, %v643
      %645 = vdwg.mxu0
      %646 = vmatprep.subr.mxu0 %v391
      %647 = vmatpush1.msra.mxu0 %v390
      %648 = vmatprep.subr.mxu0 %v387
      %649 = vmatpush1.msra.mxu0 %v386
      %650 = vmatprep.subr.mxu0 %v383
      %651 = vmatpush1.msra.mxu0 %v382
      %652 = vmatprep.subr.mxu0 %v379
      %653 = vmatpush1.msra.mxu0 %v378
      %654 = vmatprep.subr.mxu0 %v375
      %655 = vmatpush1.msra.mxu0 %v374
      %656 = vmatprep.subr.mxu0 %v371
      %657 = vmatpush1.msra.mxu0 %v370
      %658 = vmatprep.subr.mxu0 %v367
      %659 = vmatpush1.msra.mxu0 %v366
      %660 = vmatprep.subr.mxu0 %v363
      %661 = vmatpush1.msra.mxu0 %v362
      %662 = vmatprep.subr.mxu0 %v359
      %663 = vmatpush1.msra.mxu0 %v358
      %664 = vmatprep.subr.mxu0 %v355
      %665 = vmatpush1.msra.mxu0 %v354
      %666 = vmatprep.subr.mxu0 %v351
      %667 = vmatpush1.msra.mxu0 %v350
      %668 = vmatprep.subr.mxu0 %v347
      %669 = vmatpush1.msra.mxu0 %v346
      %670 = vmatprep.subr.mxu0 %v343
      %671 = vmatpush1.msra.mxu0 %v342
      %672 = vmatprep.subr.mxu0 %v339
      %673 = vmatpush1.msra.mxu0 %v338
      %674 = vmatprep.subr.mxu0 %v335
      %675 = vmatpush1.msra.mxu0 %v334
      %676 = vmatprep.subr.mxu0 %v331
      %677 = vmatpush1.msra.mxu0 %v330
      %678 = vmatprep.subr.mxu0 0.0
      %679 = vmatpush2.msra.mxu0 0.0
      %680 = vmatprep.subr.mxu0 0.0
      %681 = vmatpush2.msra.mxu0 0.0
      %682 = vmatprep.subr.mxu0 0.0
      %683 = vmatpush2.msra.mxu0 0.0
      %684 = vmatprep.subr.mxu0 0.0
      %685 = vmatpush2.msra.mxu0 0.0
      %686 = vmatprep.subr.mxu0 0.0
      %687 = vmatpush2.msra.mxu0 0.0
      %688 = vmatprep.subr.mxu0 0.0
      %689 = vmatpush2.msra.mxu0 0.0
      %690 = vmatprep.subr.mxu0 0.0
      %691 = vmatpush2.msra.mxu0 0.0
      %692 = vmatprep.subr.mxu0 0.0
      %693 = vmatpush2.msra.mxu0 0.0
      %694 = vmatprep.subr.mxu0 0.0
      %695 = vmatpush2.msra.mxu0 0.0
      %696 = vmatprep.subr.mxu0 0.0
      %697 = vmatpush2.msra.mxu0 0.0
      %698 = vmatprep.subr.mxu0 0.0
      %699 = vmatpush2.msra.mxu0 0.0
      %700 = vmatprep.subr.mxu0 0.0
      %701 = vmatpush2.msra.mxu0 0.0
      %702 = vmatprep.subr.mxu0 0.0
      %703 = vmatpush2.msra.mxu0 0.0
      %704 = vmatprep.subr.mxu0 0.0
      %705 = vmatpush2.msra.mxu0 0.0
      %706 = vmatprep.subr.mxu0 0.0
      %707 = vmatpush2.msra.mxu0 0.0
      %708 = vmatprep.subr.mxu0 0.0
      %709 = vmatpush2.msra.mxu0 0.0
      %710 = vmatprep.mubr.f32.mxu0 0.0
      %711 = vmatmul.mubr.f32.gmra.mxu0 %v394
      %v712 = vpop.f32.mrf.mxu0
      %v713 = vadd.f32 0.0, %v712
      %v714 = vpop.f32.mrf.mxu0
      %v715 = vadd.f32 0.0, %v714
      %716 = vdwg.mxu0
      %v717 = vadd.f32 %v571, %v642
      %v718 = vadd.f32 %v572, %v644
      %v719 = vadd.f32 %v573, %v713
      %v720 = vadd.f32 %v574, %v715
      %v721 = vxor.u32 %v717, 2147483648
      %v722 = vmul.f32 %v721, 1.442695
      %v723 = vpow.pop %v722
      %v724 = vadd.f32 %v723, 1.0
      %v725 = vrcp.pop %v724
      %v726 = vmul.f32 1.0, %v725
      %v727 = vxor.u32 %v718, 2147483648
      %v728 = vmul.f32 %v727, 1.442695
      %v729 = vpow.pop %v728
      %v730 = vadd.f32 %v729, 1.0
      %v731 = vrcp.pop %v730
      %v732 = vmul.f32 1.0, %v731
      %v733 = vtanh.pop %v719
      %v734 = vxor.u32 %v720, 2147483648
      %v735 = vmul.f32 %v734, 1.442695
      %v736 = vpow.pop %v735
      %v737 = vadd.f32 %v736, 1.0
      %v738 = vrcp.pop %v737
      %v739 = vmul.f32 1.0, %v738
      %v740 = vmul.f32 %v732, %v395
      %v741 = vmul.f32 %v726, %v733
      %v742 = vadd.f32 %v740, %v741
      %v743 = vtanh.pop %v742
      %v744 = vmul.f32 %v739, %v743
      %745 = vst [vmem:[%s245] sm:$0xff] %v569
      %s746 = scalar_lea.vmem %s252, 56
      %747 = vst [vmem:[%s746] sm:$0xff] %v744
      %s748 = scalar_lea.vmem %s230, 32
      %v749 = vld [vmem:[%s748] sm:$0xff]
      %v750 = vld [vmem:[%s748 + $0x8] sm:$0xff]
      %v751 = vld [vmem:[%s748 + $0x10] sm:$0xff]
      %v752 = vld [vmem:[%s748 + $0x18] sm:$0xff]
      %753 = vmatprep.subr.mxu0 %v324
      %754 = vmatpush1.msra.mxu0 %v323
      %755 = vmatprep.subr.mxu0 %v320
      %756 = vmatpush1.msra.mxu0 %v319
      %757 = vmatprep.subr.mxu0 %v316
      %758 = vmatpush1.msra.mxu0 %v315
      %759 = vmatprep.subr.mxu0 %v312
      %760 = vmatpush1.msra.mxu0 %v311
      %761 = vmatprep.subr.mxu0 %v308
      %762 = vmatpush1.msra.mxu0 %v307
      %763 = vmatprep.subr.mxu0 %v304
      %764 = vmatpush1.msra.mxu0 %v303
      %765 = vmatprep.subr.mxu0 %v300
      %766 = vmatpush1.msra.mxu0 %v299
      %767 = vmatprep.subr.mxu0 %v296
      %768 = vmatpush1.msra.mxu0 %v295
      %769 = vmatprep.subr.mxu0 %v292
      %770 = vmatpush1.msra.mxu0 %v291
      %771 = vmatprep.subr.mxu0 %v288
      %772 = vmatpush1.msra.mxu0 %v287
      %773 = vmatprep.subr.mxu0 %v284
      %774 = vmatpush1.msra.mxu0 %v283
      %775 = vmatprep.subr.mxu0 %v280
      %776 = vmatpush1.msra.mxu0 %v279
      %777 = vmatprep.subr.mxu0 %v276
      %778 = vmatpush1.msra.mxu0 %v275
      %779 = vmatprep.subr.mxu0 %v272
      %780 = vmatpush1.msra.mxu0 %v271
      %781 = vmatprep.subr.mxu0 %v268
      %782 = vmatpush1.msra.mxu0 %v267
      %783 = vmatprep.subr.mxu0 %v264
      %784 = vmatpush1.msra.mxu0 %v263
      %785 = vmatprep.subr.mxu0 0.0
      %786 = vmatpush2.msra.mxu0 0.0
      %787 = vmatprep.subr.mxu0 0.0
      %788 = vmatpush2.msra.mxu0 0.0
      %789 = vmatprep.subr.mxu0 0.0
      %790 = vmatpush2.msra.mxu0 0.0
      %791 = vmatprep.subr.mxu0 0.0
      %792 = vmatpush2.msra.mxu0 0.0
      %793 = vmatprep.subr.mxu0 0.0
      %794 = vmatpush2.msra.mxu0 0.0
      %795 = vmatprep.subr.mxu0 0.0
      %796 = vmatpush2.msra.mxu0 0.0
      %797 = vmatprep.subr.mxu0 0.0
      %798 = vmatpush2.msra.mxu0 0.0
      %799 = vmatprep.subr.mxu0 0.0
      %800 = vmatpush2.msra.mxu0 0.0
      %801 = vmatprep.subr.mxu0 0.0
      %802 = vmatpush2.msra.mxu0 0.0
      %803 = vmatprep.subr.mxu0 0.0
      %804 = vmatpush2.msra.mxu0 0.0
      %805 = vmatprep.subr.mxu0 0.0
      %806 = vmatpush2.msra.mxu0 0.0
      %807 = vmatprep.subr.mxu0 0.0
      %808 = vmatpush2.msra.mxu0 0.0
      %809 = vmatprep.subr.mxu0 0.0
      %810 = vmatpush2.msra.mxu0 0.0
      %811 = vmatprep.subr.mxu0 0.0
      %812 = vmatpush2.msra.mxu0 0.0
      %813 = vmatprep.subr.mxu0 0.0
      %814 = vmatpush2.msra.mxu0 0.0
      %815 = vmatprep.subr.mxu0 0.0
      %816 = vmatpush2.msra.mxu0 0.0
      %817 = vmatprep.mubr.f32.mxu0 0.0
      %818 = vmatmul.mubr.f32.gmra.mxu0 %v569
      %v819 = vpop.f32.mrf.mxu0
      %v820 = vadd.f32 0.0, %v819
      %v821 = vpop.f32.mrf.mxu0
      %v822 = vadd.f32 0.0, %v821
      %823 = vdwg.mxu0
      %824 = vmatprep.subr.mxu0 %v326
      %825 = vmatpush1.msra.mxu0 %v325
      %826 = vmatprep.subr.mxu0 %v322
      %827 = vmatpush1.msra.mxu0 %v321
      %828 = vmatprep.subr.mxu0 %v318
      %829 = vmatpush1.msra.mxu0 %v317
      %830 = vmatprep.subr.mxu0 %v314
      %831 = vmatpush1.msra.mxu0 %v313
      %832 = vmatprep.subr.mxu0 %v310
      %833 = vmatpush1.msra.mxu0 %v309
      %834 = vmatprep.subr.mxu0 %v306
      %835 = vmatpush1.msra.mxu0 %v305
      %836 = vmatprep.subr.mxu0 %v302
      %837 = vmatpush1.msra.mxu0 %v301
      %838 = vmatprep.subr.mxu0 %v298
      %839 = vmatpush1.msra.mxu0 %v297
      %840 = vmatprep.subr.mxu0 %v294
      %841 = vmatpush1.msra.mxu0 %v293
      %842 = vmatprep.subr.mxu0 %v290
      %843 = vmatpush1.msra.mxu0 %v289
      %844 = vmatprep.subr.mxu0 %v286
      %845 = vmatpush1.msra.mxu0 %v285
      %846 = vmatprep.subr.mxu0 %v282
      %847 = vmatpush1.msra.mxu0 %v281
      %848 = vmatprep.subr.mxu0 %v278
      %849 = vmatpush1.msra.mxu0 %v277
      %850 = vmatprep.subr.mxu0 %v274
      %851 = vmatpush1.msra.mxu0 %v273
      %852 = vmatprep.subr.mxu0 %v270
      %853 = vmatpush1.msra.mxu0 %v269
      %854 = vmatprep.subr.mxu0 %v266
      %855 = vmatpush1.msra.mxu0 %v265
      %856 = vmatprep.subr.mxu0 0.0
      %857 = vmatpush2.msra.mxu0 0.0
      %858 = vmatprep.subr.mxu0 0.0
      %859 = vmatpush2.msra.mxu0 0.0
      %860 = vmatprep.subr.mxu0 0.0
      %861 = vmatpush2.msra.mxu0 0.0
      %862 = vmatprep.subr.mxu0 0.0
      %863 = vmatpush2.msra.mxu0 0.0
      %864 = vmatprep.subr.mxu0 0.0
      %865 = vmatpush2.msra.mxu0 0.0
      %866 = vmatprep.subr.mxu0 0.0
      %867 = vmatpush2.msra.mxu0 0.0
      %868 = vmatprep.subr.mxu0 0.0
      %869 = vmatpush2.msra.mxu0 0.0
      %870 = vmatprep.subr.mxu0 0.0
      %871 = vmatpush2.msra.mxu0 0.0
      %872 = vmatprep.subr.mxu0 0.0
      %873 = vmatpush2.msra.mxu0 0.0
      %874 = vmatprep.subr.mxu0 0.0
      %875 = vmatpush2.msra.mxu0 0.0
      %876 = vmatprep.subr.mxu0 0.0
      %877 = vmatpush2.msra.mxu0 0.0
      %878 = vmatprep.subr.mxu0 0.0
      %879 = vmatpush2.msra.mxu0 0.0
      %880 = vmatprep.subr.mxu0 0.0
      %881 = vmatpush2.msra.mxu0 0.0
      %882 = vmatprep.subr.mxu0 0.0
      %883 = vmatpush2.msra.mxu0 0.0
      %884 = vmatprep.subr.mxu0 0.0
      %885 = vmatpush2.msra.mxu0 0.0
      %886 = vmatprep.subr.mxu0 0.0
      %887 = vmatpush2.msra.mxu0 0.0
      %888 = vmatprep.mubr.f32.mxu0 0.0
      %889 = vmatmul.mubr.f32.gmra.mxu0 %v569
      %v890 = vpop.f32.mrf.mxu0
      %v891 = vadd.f32 0.0, %v890
      %v892 = vpop.f32.mrf.mxu0
      %v893 = vadd.f32 0.0, %v892
      %894 = vdwg.mxu0
      %v895 = vadd.f32 %v749, %v820
      %v896 = vadd.f32 %v750, %v822
      %v897 = vadd.f32 %v751, %v891
      %v898 = vadd.f32 %v752, %v893
      %v899 = vxor.u32 %v895, 2147483648
      %v900 = vmul.f32 %v899, 1.442695
      %v901 = vpow.pop %v900
      %v902 = vadd.f32 %v901, 1.0
      %v903 = vrcp.pop %v902
      %v904 = vmul.f32 1.0, %v903
      %v905 = vxor.u32 %v896, 2147483648
      %v906 = vmul.f32 %v905, 1.442695
      %v907 = vpow.pop %v906
      %v908 = vadd.f32 %v907, 1.0
      %v909 = vrcp.pop %v908
      %v910 = vmul.f32 1.0, %v909
      %v911 = vtanh.pop %v897
      %v912 = vxor.u32 %v898, 2147483648
      %v913 = vmul.f32 %v912, 1.442695
      %v914 = vpow.pop %v913
      %v915 = vadd.f32 %v914, 1.0
      %v916 = vrcp.pop %v915
      %v917 = vmul.f32 1.0, %v916
      %v918 = vmul.f32 %v910, %v567
      %v919 = vmul.f32 %v904, %v911
      %v920 = vadd.f32 %v918, %v919
      %v921 = vtanh.pop %v920
      %v922 = vmul.f32 %v917, %v921
      %s923 = scalar_lea.vmem %s238, 192
      %v924 = vld [vmem:[%s923] sm:$0xff]
      %v925 = vld [vmem:[%s923 + $0x8] sm:$0xff]
      %v926 = vld [vmem:[%s923 + $0x10] sm:$0xff]
      %v927 = vld [vmem:[%s923 + $0x18] sm:$0xff]
      %928 = vmatprep.subr.mxu0 %v389
      %929 = vmatpush1.msra.mxu0 %v388
      %930 = vmatprep.subr.mxu0 %v385
      %931 = vmatpush1.msra.mxu0 %v384
      %932 = vmatprep.subr.mxu0 %v381
      %933 = vmatpush1.msra.mxu0 %v380
      %934 = vmatprep.subr.mxu0 %v377
      %935 = vmatpush1.msra.mxu0 %v376
      %936 = vmatprep.subr.mxu0 %v373
      %937 = vmatpush1.msra.mxu0 %v372
      %938 = vmatprep.subr.mxu0 %v369
      %939 = vmatpush1.msra.mxu0 %v368
      %940 = vmatprep.subr.mxu0 %v365
      %941 = vmatpush1.msra.mxu0 %v364
      %942 = vmatprep.subr.mxu0 %v361
      %943 = vmatpush1.msra.mxu0 %v360
      %944 = vmatprep.subr.mxu0 %v357
      %945 = vmatpush1.msra.mxu0 %v356
      %946 = vmatprep.subr.mxu0 %v353
      %947 = vmatpush1.msra.mxu0 %v352
      %948 = vmatprep.subr.mxu0 %v349
      %949 = vmatpush1.msra.mxu0 %v348
      %950 = vmatprep.subr.mxu0 %v345
      %951 = vmatpush1.msra.mxu0 %v344
      %952 = vmatprep.subr.mxu0 %v341
      %953 = vmatpush1.msra.mxu0 %v340
      %954 = vmatprep.subr.mxu0 %v337
      %955 = vmatpush1.msra.mxu0 %v336
      %956 = vmatprep.subr.mxu0 %v333
      %957 = vmatpush1.msra.mxu0 %v332
      %958 = vmatprep.subr.mxu0 %v329
      %959 = vmatpush1.msra.mxu0 %v328
      %960 = vmatprep.subr.mxu0 0.0
      %961 = vmatpush2.msra.mxu0 0.0
      %962 = vmatprep.subr.mxu0 0.0
      %963 = vmatpush2.msra.mxu0 0.0
      %964 = vmatprep.subr.mxu0 0.0
      %965 = vmatpush2.msra.mxu0 0.0
      %966 = vmatprep.subr.mxu0 0.0
      %967 = vmatpush2.msra.mxu0 0.0
      %968 = vmatprep.subr.mxu0 0.0
      %969 = vmatpush2.msra.mxu0 0.0
      %970 = vmatprep.subr.mxu0 0.0
      %971 = vmatpush2.msra.mxu0 0.0
      %972 = vmatprep.subr.mxu0 0.0
      %973 = vmatpush2.msra.mxu0 0.0
      %974 = vmatprep.subr.mxu0 0.0
      %975 = vmatpush2.msra.mxu0 0.0
      %976 = vmatprep.subr.mxu0 0.0
      %977 = vmatpush2.msra.mxu0 0.0
      %978 = vmatprep.subr.mxu0 0.0
      %979 = vmatpush2.msra.mxu0 0.0
      %980 = vmatprep.subr.mxu0 0.0
      %981 = vmatpush2.msra.mxu0 0.0
      %982 = vmatprep.subr.mxu0 0.0
      %983 = vmatpush2.msra.mxu0 0.0
      %984 = vmatprep.subr.mxu0 0.0
      %985 = vmatpush2.msra.mxu0 0.0
      %986 = vmatprep.subr.mxu0 0.0
      %987 = vmatpush2.msra.mxu0 0.0
      %988 = vmatprep.subr.mxu0 0.0
      %989 = vmatpush2.msra.mxu0 0.0
      %990 = vmatprep.subr.mxu0 0.0
      %991 = vmatpush2.msra.mxu0 0.0
      %992 = vmatprep.mubr.f32.mxu0 0.0
      %993 = vmatmul.mubr.f32.gmra.mxu0 %v744
      %v994 = vpop.f32.mrf.mxu0
      %v995 = vadd.f32 0.0, %v994
      %v996 = vpop.f32.mrf.mxu0
      %v997 = vadd.f32 0.0, %v996
      %998 = vdwg.mxu0
      %999 = vmatprep.subr.mxu0 %v391
      %1000 = vmatpush1.msra.mxu0 %v390
      %1001 = vmatprep.subr.mxu0 %v387
      %1002 = vmatpush1.msra.mxu0 %v386
      %1003 = vmatprep.subr.mxu0 %v383
      %1004 = vmatpush1.msra.mxu0 %v382
      %1005 = vmatprep.subr.mxu0 %v379
      %1006 = vmatpush1.msra.mxu0 %v378
      %1007 = vmatprep.subr.mxu0 %v375
      %1008 = vmatpush1.msra.mxu0 %v374
      %1009 = vmatprep.subr.mxu0 %v371
      %1010 = vmatpush1.msra.mxu0 %v370
      %1011 = vmatprep.subr.mxu0 %v367
      %1012 = vmatpush1.msra.mxu0 %v366
      %1013 = vmatprep.subr.mxu0 %v363
      %1014 = vmatpush1.msra.mxu0 %v362
      %1015 = vmatprep.subr.mxu0 %v359
      %1016 = vmatpush1.msra.mxu0 %v358
      %1017 = vmatprep.subr.mxu0 %v355
      %1018 = vmatpush1.msra.mxu0 %v354
      %1019 = vmatprep.subr.mxu0 %v351
      %1020 = vmatpush1.msra.mxu0 %v350
      %1021 = vmatprep.subr.mxu0 %v347
      %1022 = vmatpush1.msra.mxu0 %v346
      %1023 = vmatprep.subr.mxu0 %v343
      %1024 = vmatpush1.msra.mxu0 %v342
      %1025 = vmatprep.subr.mxu0 %v339
      %1026 = vmatpush1.msra.mxu0 %v338
      %1027 = vmatprep.subr.mxu0 %v335
      %1028 = vmatpush1.msra.mxu0 %v334
      %1029 = vmatprep.subr.mxu0 %v331
      %1030 = vmatpush1.msra.mxu0 %v330
      %1031 = vmatprep.subr.mxu0 0.0
      %1032 = vmatpush2.msra.mxu0 0.0
      %1033 = vmatprep.subr.mxu0 0.0
      %1034 = vmatpush2.msra.mxu0 0.0
      %1035 = vmatprep.subr.mxu0 0.0
      %1036 = vmatpush2.msra.mxu0 0.0
      %1037 = vmatprep.subr.mxu0 0.0
      %1038 = vmatpush2.msra.mxu0 0.0
      %1039 = vmatprep.subr.mxu0 0.0
      %1040 = vmatpush2.msra.mxu0 0.0
      %1041 = vmatprep.subr.mxu0 0.0
      %1042 = vmatpush2.msra.mxu0 0.0
      %1043 = vmatprep.subr.mxu0 0.0
      %1044 = vmatpush2.msra.mxu0 0.0
      %1045 = vmatprep.subr.mxu0 0.0
      %1046 = vmatpush2.msra.mxu0 0.0
      %1047 = vmatprep.subr.mxu0 0.0
      %1048 = vmatpush2.msra.mxu0 0.0
      %1049 = vmatprep.subr.mxu0 0.0
      %1050 = vmatpush2.msra.mxu0 0.0
      %1051 = vmatprep.subr.mxu0 0.0
      %1052 = vmatpush2.msra.mxu0 0.0
      %1053 = vmatprep.subr.mxu0 0.0
      %1054 = vmatpush2.msra.mxu0 0.0
      %1055 = vmatprep.subr.mxu0 0.0
      %1056 = vmatpush2.msra.mxu0 0.0
      %1057 = vmatprep.subr.mxu0 0.0
      %1058 = vmatpush2.msra.mxu0 0.0
      %1059 = vmatprep.subr.mxu0 0.0
      %1060 = vmatpush2.msra.mxu0 0.0
      %1061 = vmatprep.subr.mxu0 0.0
      %1062 = vmatpush2.msra.mxu0 0.0
      %1063 = vmatprep.mubr.f32.mxu0 0.0
      %1064 = vmatmul.mubr.f32.gmra.mxu0 %v744
      %v1065 = vpop.f32.mrf.mxu0
      %v1066 = vadd.f32 0.0, %v1065
      %v1067 = vpop.f32.mrf.mxu0
      %v1068 = vadd.f32 0.0, %v1067
      %1069 = vdwg.mxu0
      %v1070 = vadd.f32 %v924, %v995
      %v1071 = vadd.f32 %v925, %v997
      %v1072 = vadd.f32 %v926, %v1066
      %v1073 = vadd.f32 %v927, %v1068
      %v1074 = vxor.u32 %v1070, 2147483648
      %v1075 = vmul.f32 %v1074, 1.442695
      %v1076 = vpow.pop %v1075
      %v1077 = vadd.f32 %v1076, 1.0
      %v1078 = vrcp.pop %v1077
      %v1079 = vmul.f32 1.0, %v1078
      %v1080 = vxor.u32 %v1071, 2147483648
      %v1081 = vmul.f32 %v1080, 1.442695
      %v1082 = vpow.pop %v1081
      %v1083 = vadd.f32 %v1082, 1.0
      %v1084 = vrcp.pop %v1083
      %v1085 = vmul.f32 1.0, %v1084
      %v1086 = vtanh.pop %v1072
      %v1087 = vxor.u32 %v1073, 2147483648
      %v1088 = vmul.f32 %v1087, 1.442695
      %v1089 = vpow.pop %v1088
      %v1090 = vadd.f32 %v1089, 1.0
      %v1091 = vrcp.pop %v1090
      %v1092 = vmul.f32 1.0, %v1091
      %v1093 = vmul.f32 %v1085, %v742
      %v1094 = vmul.f32 %v1079, %v1086
      %v1095 = vadd.f32 %v1093, %v1094
      %v1096 = vtanh.pop %v1095
      %v1097 = vmul.f32 %v1092, %v1096
      %s1098 = scalar_lea.vmem %s245, 8
      %1099 = vst [vmem:[%s1098] sm:$0xff] %v922
      %s1100 = scalar_lea.vmem %s252, 48
      %1101 = vst [vmem:[%s1100] sm:$0xff] %v1097
      %s1102 = scalar_lea.vmem %s230, 64
      %v1103 = vld [vmem:[%s1102] sm:$0xff]
      %v1104 = vld [vmem:[%s1102 + $0x8] sm:$0xff]
      %v1105 = vld [vmem:[%s1102 + $0x10] sm:$0xff]
      %v1106 = vld [vmem:[%s1102 + $0x18] sm:$0xff]
      %1107 = vmatprep.subr.mxu0 %v324
      %1108 = vmatpush1.msra.mxu0 %v323
      %1109 = vmatprep.subr.mxu0 %v320
      %1110 = vmatpush1.msra.mxu0 %v319
      %1111 = vmatprep.subr.mxu0 %v316
      %1112 = vmatpush1.msra.mxu0 %v315
      %1113 = vmatprep.subr.mxu0 %v312
      %1114 = vmatpush1.msra.mxu0 %v311
      %1115 = vmatprep.subr.mxu0 %v308
      %1116 = vmatpush1.msra.mxu0 %v307
      %1117 = vmatprep.subr.mxu0 %v304
      %1118 = vmatpush1.msra.mxu0 %v303
      %1119 = vmatprep.subr.mxu0 %v300
      %1120 = vmatpush1.msra.mxu0 %v299
      %1121 = vmatprep.subr.mxu0 %v296
      %1122 = vmatpush1.msra.mxu0 %v295
      %1123 = vmatprep.subr.mxu0 %v292
      %1124 = vmatpush1.msra.mxu0 %v291
      %1125 = vmatprep.subr.mxu0 %v288
      %1126 = vmatpush1.msra.mxu0 %v287
      %1127 = vmatprep.subr.mxu0 %v284
      %1128 = vmatpush1.msra.mxu0 %v283
      %1129 = vmatprep.subr.mxu0 %v280
      %1130 = vmatpush1.msra.mxu0 %v279
      %1131 = vmatprep.subr.mxu0 %v276
      %1132 = vmatpush1.msra.mxu0 %v275
      %1133 = vmatprep.subr.mxu0 %v272
      %1134 = vmatpush1.msra.mxu0 %v271
      %1135 = vmatprep.subr.mxu0 %v268
      %1136 = vmatpush1.msra.mxu0 %v267
      %1137 = vmatprep.subr.mxu0 %v264
      %1138 = vmatpush1.msra.mxu0 %v263
      %1139 = vmatprep.subr.mxu0 0.0
      %1140 = vmatpush2.msra.mxu0 0.0
      %1141 = vmatprep.subr.mxu0 0.0
      %1142 = vmatpush2.msra.mxu0 0.0
      %1143 = vmatprep.subr.mxu0 0.0
      %1144 = vmatpush2.msra.mxu0 0.0
      %1145 = vmatprep.subr.mxu0 0.0
      %1146 = vmatpush2.msra.mxu0 0.0
      %1147 = vmatprep.subr.mxu0 0.0
      %1148 = vmatpush2.msra.mxu0 0.0
      %1149 = vmatprep.subr.mxu0 0.0
      %1150 = vmatpush2.msra.mxu0 0.0
      %1151 = vmatprep.subr.mxu0 0.0
      %1152 = vmatpush2.msra.mxu0 0.0
      %1153 = vmatprep.subr.mxu0 0.0
      %1154 = vmatpush2.msra.mxu0 0.0
      %1155 = vmatprep.subr.mxu0 0.0
      %1156 = vmatpush2.msra.mxu0 0.0
      %1157 = vmatprep.subr.mxu0 0.0
      %1158 = vmatpush2.msra.mxu0 0.0
      %1159 = vmatprep.subr.mxu0 0.0
      %1160 = vmatpush2.msra.mxu0 0.0
      %1161 = vmatprep.subr.mxu0 0.0
      %1162 = vmatpush2.msra.mxu0 0.0
      %1163 = vmatprep.subr.mxu0 0.0
      %1164 = vmatpush2.msra.mxu0 0.0
      %1165 = vmatprep.subr.mxu0 0.0
      %1166 = vmatpush2.msra.mxu0 0.0
      %1167 = vmatprep.subr.mxu0 0.0
      %1168 = vmatpush2.msra.mxu0 0.0
      %1169 = vmatprep.subr.mxu0 0.0
      %1170 = vmatpush2.msra.mxu0 0.0
      %1171 = vmatprep.mubr.f32.mxu0 0.0
      %1172 = vmatmul.mubr.f32.gmra.mxu0 %v922
      %v1173 = vpop.f32.mrf.mxu0
      %v1174 = vadd.f32 0.0, %v1173
      %v1175 = vpop.f32.mrf.mxu0
      %v1176 = vadd.f32 0.0, %v1175
      %1177 = vdwg.mxu0
      %1178 = vmatprep.subr.mxu0 %v326
      %1179 = vmatpush1.msra.mxu0 %v325
      %1180 = vmatprep.subr.mxu0 %v322
      %1181 = vmatpush1.msra.mxu0 %v321
      %1182 = vmatprep.subr.mxu0 %v318
      %1183 = vmatpush1.msra.mxu0 %v317
      %1184 = vmatprep.subr.mxu0 %v314
      %1185 = vmatpush1.msra.mxu0 %v313
      %1186 = vmatprep.subr.mxu0 %v310
      %1187 = vmatpush1.msra.mxu0 %v309
      %1188 = vmatprep.subr.mxu0 %v306
      %1189 = vmatpush1.msra.mxu0 %v305
      %1190 = vmatprep.subr.mxu0 %v302
      %1191 = vmatpush1.msra.mxu0 %v301
      %1192 = vmatprep.subr.mxu0 %v298
      %1193 = vmatpush1.msra.mxu0 %v297
      %1194 = vmatprep.subr.mxu0 %v294
      %1195 = vmatpush1.msra.mxu0 %v293
      %1196 = vmatprep.subr.mxu0 %v290
      %1197 = vmatpush1.msra.mxu0 %v289
      %1198 = vmatprep.subr.mxu0 %v286
      %1199 = vmatpush1.msra.mxu0 %v285
      %1200 = vmatprep.subr.mxu0 %v282
      %1201 = vmatpush1.msra.mxu0 %v281
      %1202 = vmatprep.subr.mxu0 %v278
      %1203 = vmatpush1.msra.mxu0 %v277
      %1204 = vmatprep.subr.mxu0 %v274
      %1205 = vmatpush1.msra.mxu0 %v273
      %1206 = vmatprep.subr.mxu0 %v270
      %1207 = vmatpush1.msra.mxu0 %v269
      %1208 = vmatprep.subr.mxu0 %v266
      %1209 = vmatpush1.msra.mxu0 %v265
      %1210 = vmatprep.subr.mxu0 0.0
      %1211 = vmatpush2.msra.mxu0 0.0
      %1212 = vmatprep.subr.mxu0 0.0
      %1213 = vmatpush2.msra.mxu0 0.0
      %1214 = vmatprep.subr.mxu0 0.0
      %1215 = vmatpush2.msra.mxu0 0.0
      %1216 = vmatprep.subr.mxu0 0.0
      %1217 = vmatpush2.msra.mxu0 0.0
      %1218 = vmatprep.subr.mxu0 0.0
      %1219 = vmatpush2.msra.mxu0 0.0
      %1220 = vmatprep.subr.mxu0 0.0
      %1221 = vmatpush2.msra.mxu0 0.0
      %1222 = vmatprep.subr.mxu0 0.0
      %1223 = vmatpush2.msra.mxu0 0.0
      %1224 = vmatprep.subr.mxu0 0.0
      %1225 = vmatpush2.msra.mxu0 0.0
      %1226 = vmatprep.subr.mxu0 0.0
      %1227 = vmatpush2.msra.mxu0 0.0
      %1228 = vmatprep.subr.mxu0 0.0
      %1229 = vmatpush2.msra.mxu0 0.0
      %1230 = vmatprep.subr.mxu0 0.0
      %1231 = vmatpush2.msra.mxu0 0.0
      %1232 = vmatprep.subr.mxu0 0.0
      %1233 = vmatpush2.msra.mxu0 0.0
      %1234 = vmatprep.subr.mxu0 0.0
      %1235 = vmatpush2.msra.mxu0 0.0
      %1236 = vmatprep.subr.mxu0 0.0
      %1237 = vmatpush2.msra.mxu0 0.0
      %1238 = vmatprep.subr.mxu0 0.0
      %1239 = vmatpush2.msra.mxu0 0.0
      %1240 = vmatprep.subr.mxu0 0.0
      %1241 = vmatpush2.msra.mxu0 0.0
      %1242 = vmatprep.mubr.f32.mxu0 0.0
      %1243 = vmatmul.mubr.f32.gmra.mxu0 %v922
      %v1244 = vpop.f32.mrf.mxu0
      %v1245 = vadd.f32 0.0, %v1244
      %v1246 = vpop.f32.mrf.mxu0
      %v1247 = vadd.f32 0.0, %v1246
      %1248 = vdwg.mxu0
      %v1249 = vadd.f32 %v1103, %v1174
      %v1250 = vadd.f32 %v1104, %v1176
      %v1251 = vadd.f32 %v1105, %v1245
      %v1252 = vadd.f32 %v1106, %v1247
      %v1253 = vxor.u32 %v1249, 2147483648
      %v1254 = vmul.f32 %v1253, 1.442695
      %v1255 = vpow.pop %v1254
      %v1256 = vadd.f32 %v1255, 1.0
      %v1257 = vrcp.pop %v1256
      %v1258 = vmul.f32 1.0, %v1257
      %v1259 = vxor.u32 %v1250, 2147483648
      %v1260 = vmul.f32 %v1259, 1.442695
      %v1261 = vpow.pop %v1260
      %v1262 = vadd.f32 %v1261, 1.0
      %v1263 = vrcp.pop %v1262
      %v1264 = vmul.f32 1.0, %v1263
      %v1265 = vtanh.pop %v1251
      %v1266 = vxor.u32 %v1252, 2147483648
      %v1267 = vmul.f32 %v1266, 1.442695
      %v1268 = vpow.pop %v1267
      %v1269 = vadd.f32 %v1268, 1.0
      %v1270 = vrcp.pop %v1269
      %v1271 = vmul.f32 1.0, %v1270
      %v1272 = vmul.f32 %v1264, %v920
      %v1273 = vmul.f32 %v1258, %v1265
      %v1274 = vadd.f32 %v1272, %v1273
      %v1275 = vtanh.pop %v1274
      %v1276 = vmul.f32 %v1271, %v1275
      %s1277 = scalar_lea.vmem %s238, 160
      %v1278 = vld [vmem:[%s1277] sm:$0xff]
      %v1279 = vld [vmem:[%s1277 + $0x8] sm:$0xff]
      %v1280 = vld [vmem:[%s1277 + $0x10] sm:$0xff]
      %v1281 = vld [vmem:[%s1277 + $0x18] sm:$0xff]
      %1282 = vmatprep.subr.mxu0 %v389
      %1283 = vmatpush1.msra.mxu0 %v388
      %1284 = vmatprep.subr.mxu0 %v385
      %1285 = vmatpush1.msra.mxu0 %v384
      %1286 = vmatprep.subr.mxu0 %v381
      %1287 = vmatpush1.msra.mxu0 %v380
      %1288 = vmatprep.subr.mxu0 %v377
      %1289 = vmatpush1.msra.mxu0 %v376
      %1290 = vmatprep.subr.mxu0 %v373
      %1291 = vmatpush1.msra.mxu0 %v372
      %1292 = vmatprep.subr.mxu0 %v369
      %1293 = vmatpush1.msra.mxu0 %v368
      %1294 = vmatprep.subr.mxu0 %v365
      %1295 = vmatpush1.msra.mxu0 %v364
      %1296 = vmatprep.subr.mxu0 %v361
      %1297 = vmatpush1.msra.mxu0 %v360
      %1298 = vmatprep.subr.mxu0 %v357
      %1299 = vmatpush1.msra.mxu0 %v356
      %1300 = vmatprep.subr.mxu0 %v353
      %1301 = vmatpush1.msra.mxu0 %v352
      %1302 = vmatprep.subr.mxu0 %v349
      %1303 = vmatpush1.msra.mxu0 %v348
      %1304 = vmatprep.subr.mxu0 %v345
      %1305 = vmatpush1.msra.mxu0 %v344
      %1306 = vmatprep.subr.mxu0 %v341
      %1307 = vmatpush1.msra.mxu0 %v340
      %1308 = vmatprep.subr.mxu0 %v337
      %1309 = vmatpush1.msra.mxu0 %v336
      %1310 = vmatprep.subr.mxu0 %v333
      %1311 = vmatpush1.msra.mxu0 %v332
      %1312 = vmatprep.subr.mxu0 %v329
      %1313 = vmatpush1.msra.mxu0 %v328
      %1314 = vmatprep.subr.mxu0 0.0
      %1315 = vmatpush2.msra.mxu0 0.0
      %1316 = vmatprep.subr.mxu0 0.0
      %1317 = vmatpush2.msra.mxu0 0.0
      %1318 = vmatprep.subr.mxu0 0.0
      %1319 = vmatpush2.msra.mxu0 0.0
      %1320 = vmatprep.subr.mxu0 0.0
      %1321 = vmatpush2.msra.mxu0 0.0
      %1322 = vmatprep.subr.mxu0 0.0
      %1323 = vmatpush2.msra.mxu0 0.0
      %1324 = vmatprep.subr.mxu0 0.0
      %1325 = vmatpush2.msra.mxu0 0.0
      %1326 = vmatprep.subr.mxu0 0.0
      %1327 = vmatpush2.msra.mxu0 0.0
      %1328 = vmatprep.subr.mxu0 0.0
      %1329 = vmatpush2.msra.mxu0 0.0
      %1330 = vmatprep.subr.mxu0 0.0
      %1331 = vmatpush2.msra.mxu0 0.0
      %1332 = vmatprep.subr.mxu0 0.0
      %1333 = vmatpush2.msra.mxu0 0.0
      %1334 = vmatprep.subr.mxu0 0.0
      %1335 = vmatpush2.msra.mxu0 0.0
      %1336 = vmatprep.subr.mxu0 0.0
      %1337 = vmatpush2.msra.mxu0 0.0
      %1338 = vmatprep.subr.mxu0 0.0
      %1339 = vmatpush2.msra.mxu0 0.0
      %1340 = vmatprep.subr.mxu0 0.0
      %1341 = vmatpush2.msra.mxu0 0.0
      %1342 = vmatprep.subr.mxu0 0.0
      %1343 = vmatpush2.msra.mxu0 0.0
      %1344 = vmatprep.subr.mxu0 0.0
      %1345 = vmatpush2.msra.mxu0 0.0
      %1346 = vmatprep.mubr.f32.mxu0 0.0
      %1347 = vmatmul.mubr.f32.gmra.mxu0 %v1097
      %v1348 = vpop.f32.mrf.mxu0
      %v1349 = vadd.f32 0.0, %v1348
      %v1350 = vpop.f32.mrf.mxu0
      %v1351 = vadd.f32 0.0, %v1350
      %1352 = vdwg.mxu0
      %1353 = vmatprep.subr.mxu0 %v391
      %1354 = vmatpush1.msra.mxu0 %v390
      %1355 = vmatprep.subr.mxu0 %v387
      %1356 = vmatpush1.msra.mxu0 %v386
      %1357 = vmatprep.subr.mxu0 %v383
      %1358 = vmatpush1.msra.mxu0 %v382
      %1359 = vmatprep.subr.mxu0 %v379
      %1360 = vmatpush1.msra.mxu0 %v378
      %1361 = vmatprep.subr.mxu0 %v375
      %1362 = vmatpush1.msra.mxu0 %v374
      %1363 = vmatprep.subr.mxu0 %v371
      %1364 = vmatpush1.msra.mxu0 %v370
      %1365 = vmatprep.subr.mxu0 %v367
      %1366 = vmatpush1.msra.mxu0 %v366
      %1367 = vmatprep.subr.mxu0 %v363
      %1368 = vmatpush1.msra.mxu0 %v362
      %1369 = vmatprep.subr.mxu0 %v359
      %1370 = vmatpush1.msra.mxu0 %v358
      %1371 = vmatprep.subr.mxu0 %v355
      %1372 = vmatpush1.msra.mxu0 %v354
      %1373 = vmatprep.subr.mxu0 %v351
      %1374 = vmatpush1.msra.mxu0 %v350
      %1375 = vmatprep.subr.mxu0 %v347
      %1376 = vmatpush1.msra.mxu0 %v346
      %1377 = vmatprep.subr.mxu0 %v343
      %1378 = vmatpush1.msra.mxu0 %v342
      %1379 = vmatprep.subr.mxu0 %v339
      %1380 = vmatpush1.msra.mxu0 %v338
      %1381 = vmatprep.subr.mxu0 %v335
      %1382 = vmatpush1.msra.mxu0 %v334
      %1383 = vmatprep.subr.mxu0 %v331
      %1384 = vmatpush1.msra.mxu0 %v330
      %1385 = vmatprep.subr.mxu0 0.0
      %1386 = vmatpush2.msra.mxu0 0.0
      %1387 = vmatprep.subr.mxu0 0.0
      %1388 = vmatpush2.msra.mxu0 0.0
      %1389 = vmatprep.subr.mxu0 0.0
      %1390 = vmatpush2.msra.mxu0 0.0
      %1391 = vmatprep.subr.mxu0 0.0
      %1392 = vmatpush2.msra.mxu0 0.0
      %1393 = vmatprep.subr.mxu0 0.0
      %1394 = vmatpush2.msra.mxu0 0.0
      %1395 = vmatprep.subr.mxu0 0.0
      %1396 = vmatpush2.msra.mxu0 0.0
      %1397 = vmatprep.subr.mxu0 0.0
      %1398 = vmatpush2.msra.mxu0 0.0
      %1399 = vmatprep.subr.mxu0 0.0
      %1400 = vmatpush2.msra.mxu0 0.0
      %1401 = vmatprep.subr.mxu0 0.0
      %1402 = vmatpush2.msra.mxu0 0.0
      %1403 = vmatprep.subr.mxu0 0.0
      %1404 = vmatpush2.msra.mxu0 0.0
      %1405 = vmatprep.subr.mxu0 0.0
      %1406 = vmatpush2.msra.mxu0 0.0
      %1407 = vmatprep.subr.mxu0 0.0
      %1408 = vmatpush2.msra.mxu0 0.0
      %1409 = vmatprep.subr.mxu0 0.0
      %1410 = vmatpush2.msra.mxu0 0.0
      %1411 = vmatprep.subr.mxu0 0.0
      %1412 = vmatpush2.msra.mxu0 0.0
      %1413 = vmatprep.subr.mxu0 0.0
      %1414 = vmatpush2.msra.mxu0 0.0
      %1415 = vmatprep.subr.mxu0 0.0
      %1416 = vmatpush2.msra.mxu0 0.0
      %1417 = vmatprep.mubr.f32.mxu0 0.0
      %1418 = vmatmul.mubr.f32.gmra.mxu0 %v1097
      %v1419 = vpop.f32.mrf.mxu0
      %v1420 = vadd.f32 0.0, %v1419
      %v1421 = vpop.f32.mrf.mxu0
      %v1422 = vadd.f32 0.0, %v1421
      %1423 = vdwg.mxu0
      %v1424 = vadd.f32 %v1278, %v1349
      %v1425 = vadd.f32 %v1279, %v1351
      %v1426 = vadd.f32 %v1280, %v1420
      %v1427 = vadd.f32 %v1281, %v1422
      %v1428 = vxor.u32 %v1424, 2147483648
      %v1429 = vmul.f32 %v1428, 1.442695
      %v1430 = vpow.pop %v1429
      %v1431 = vadd.f32 %v1430, 1.0
      %v1432 = vrcp.pop %v1431
      %v1433 = vmul.f32 1.0, %v1432
      %v1434 = vxor.u32 %v1425, 2147483648
      %v1435 = vmul.f32 %v1434, 1.442695
      %v1436 = vpow.pop %v1435
      %v1437 = vadd.f32 %v1436, 1.0
      %v1438 = vrcp.pop %v1437
      %v1439 = vmul.f32 1.0, %v1438
      %v1440 = vtanh.pop %v1426
      %v1441 = vxor.u32 %v1427, 2147483648
      %v1442 = vmul.f32 %v1441, 1.442695
      %v1443 = vpow.pop %v1442
      %v1444 = vadd.f32 %v1443, 1.0
      %v1445 = vrcp.pop %v1444
      %v1446 = vmul.f32 1.0, %v1445
      %v1447 = vmul.f32 %v1439, %v1095
      %v1448 = vmul.f32 %v1433, %v1440
      %v1449 = vadd.f32 %v1447, %v1448
      %v1450 = vtanh.pop %v1449
      %v1451 = vmul.f32 %v1446, %v1450
      %s1452 = scalar_lea.vmem %s245, 16
      %1453 = vst [vmem:[%s1452] sm:$0xff] %v1276
      %s1454 = scalar_lea.vmem %s252, 40
      %1455 = vst [vmem:[%s1454] sm:$0xff] %v1451
      %s1456 = scalar_lea.vmem %s230, 96
      %v1457 = vld [vmem:[%s1456] sm:$0xff]
      %v1458 = vld [vmem:[%s1456 + $0x8] sm:$0xff]
      %v1459 = vld [vmem:[%s1456 + $0x10] sm:$0xff]
      %v1460 = vld [vmem:[%s1456 + $0x18] sm:$0xff]
      %1461 = vmatprep.subr.mxu0 %v324
      %1462 = vmatpush1.msra.mxu0 %v323
      %1463 = vmatprep.subr.mxu0 %v320
      %1464 = vmatpush1.msra.mxu0 %v319
      %1465 = vmatprep.subr.mxu0 %v316
      %1466 = vmatpush1.msra.mxu0 %v315
      %1467 = vmatprep.subr.mxu0 %v312
      %1468 = vmatpush1.msra.mxu0 %v311
      %1469 = vmatprep.subr.mxu0 %v308
      %1470 = vmatpush1.msra.mxu0 %v307
      %1471 = vmatprep.subr.mxu0 %v304
      %1472 = vmatpush1.msra.mxu0 %v303
      %1473 = vmatprep.subr.mxu0 %v300
      %1474 = vmatpush1.msra.mxu0 %v299
      %1475 = vmatprep.subr.mxu0 %v296
      %1476 = vmatpush1.msra.mxu0 %v295
      %1477 = vmatprep.subr.mxu0 %v292
      %1478 = vmatpush1.msra.mxu0 %v291
      %1479 = vmatprep.subr.mxu0 %v288
      %1480 = vmatpush1.msra.mxu0 %v287
      %1481 = vmatprep.subr.mxu0 %v284
      %1482 = vmatpush1.msra.mxu0 %v283
      %1483 = vmatprep.subr.mxu0 %v280
      %1484 = vmatpush1.msra.mxu0 %v279
      %1485 = vmatprep.subr.mxu0 %v276
      %1486 = vmatpush1.msra.mxu0 %v275
      %1487 = vmatprep.subr.mxu0 %v272
      %1488 = vmatpush1.msra.mxu0 %v271
      %1489 = vmatprep.subr.mxu0 %v268
      %1490 = vmatpush1.msra.mxu0 %v267
      %1491 = vmatprep.subr.mxu0 %v264
      %1492 = vmatpush1.msra.mxu0 %v263
      %1493 = vmatprep.subr.mxu0 0.0
      %1494 = vmatpush2.msra.mxu0 0.0
      %1495 = vmatprep.subr.mxu0 0.0
      %1496 = vmatpush2.msra.mxu0 0.0
      %1497 = vmatprep.subr.mxu0 0.0
      %1498 = vmatpush2.msra.mxu0 0.0
      %1499 = vmatprep.subr.mxu0 0.0
      %1500 = vmatpush2.msra.mxu0 0.0
      %1501 = vmatprep.subr.mxu0 0.0
      %1502 = vmatpush2.msra.mxu0 0.0
      %1503 = vmatprep.subr.mxu0 0.0
      %1504 = vmatpush2.msra.mxu0 0.0
      %1505 = vmatprep.subr.mxu0 0.0
      %1506 = vmatpush2.msra.mxu0 0.0
      %1507 = vmatprep.subr.mxu0 0.0
      %1508 = vmatpush2.msra.mxu0 0.0
      %1509 = vmatprep.subr.mxu0 0.0
      %1510 = vmatpush2.msra.mxu0 0.0
      %1511 = vmatprep.subr.mxu0 0.0
      %1512 = vmatpush2.msra.mxu0 0.0
      %1513 = vmatprep.subr.mxu0 0.0
      %1514 = vmatpush2.msra.mxu0 0.0
      %1515 = vmatprep.subr.mxu0 0.0
      %1516 = vmatpush2.msra.mxu0 0.0
      %1517 = vmatprep.subr.mxu0 0.0
      %1518 = vmatpush2.msra.mxu0 0.0
      %1519 = vmatprep.subr.mxu0 0.0
      %1520 = vmatpush2.msra.mxu0 0.0
      %1521 = vmatprep.subr.mxu0 0.0
      %1522 = vmatpush2.msra.mxu0 0.0
      %1523 = vmatprep.subr.mxu0 0.0
      %1524 = vmatpush2.msra.mxu0 0.0
      %1525 = vmatprep.mubr.f32.mxu0 0.0
      %1526 = vmatmul.mubr.f32.gmra.mxu0 %v1276
      %v1527 = vpop.f32.mrf.mxu0
      %v1528 = vadd.f32 0.0, %v1527
      %v1529 = vpop.f32.mrf.mxu0
      %v1530 = vadd.f32 0.0, %v1529
      %1531 = vdwg.mxu0
      %1532 = vmatprep.subr.mxu0 %v326
      %1533 = vmatpush1.msra.mxu0 %v325
      %1534 = vmatprep.subr.mxu0 %v322
      %1535 = vmatpush1.msra.mxu0 %v321
      %1536 = vmatprep.subr.mxu0 %v318
      %1537 = vmatpush1.msra.mxu0 %v317
      %1538 = vmatprep.subr.mxu0 %v314
      %1539 = vmatpush1.msra.mxu0 %v313
      %1540 = vmatprep.subr.mxu0 %v310
      %1541 = vmatpush1.msra.mxu0 %v309
      %1542 = vmatprep.subr.mxu0 %v306
      %1543 = vmatpush1.msra.mxu0 %v305
      %1544 = vmatprep.subr.mxu0 %v302
      %1545 = vmatpush1.msra.mxu0 %v301
      %1546 = vmatprep.subr.mxu0 %v298
      %1547 = vmatpush1.msra.mxu0 %v297
      %1548 = vmatprep.subr.mxu0 %v294
      %1549 = vmatpush1.msra.mxu0 %v293
      %1550 = vmatprep.subr.mxu0 %v290
      %1551 = vmatpush1.msra.mxu0 %v289
      %1552 = vmatprep.subr.mxu0 %v286
      %1553 = vmatpush1.msra.mxu0 %v285
      %1554 = vmatprep.subr.mxu0 %v282
      %1555 = vmatpush1.msra.mxu0 %v281
      %1556 = vmatprep.subr.mxu0 %v278
      %1557 = vmatpush1.msra.mxu0 %v277
      %1558 = vmatprep.subr.mxu0 %v274
      %1559 = vmatpush1.msra.mxu0 %v273
      %1560 = vmatprep.subr.mxu0 %v270
      %1561 = vmatpush1.msra.mxu0 %v269
      %1562 = vmatprep.subr.mxu0 %v266
      %1563 = vmatpush1.msra.mxu0 %v265
      %1564 = vmatprep.subr.mxu0 0.0
      %1565 = vmatpush2.msra.mxu0 0.0
      %1566 = vmatprep.subr.mxu0 0.0
      %1567 = vmatpush2.msra.mxu0 0.0
      %1568 = vmatprep.subr.mxu0 0.0
      %1569 = vmatpush2.msra.mxu0 0.0
      %1570 = vmatprep.subr.mxu0 0.0
      %1571 = vmatpush2.msra.mxu0 0.0
      %1572 = vmatprep.subr.mxu0 0.0
      %1573 = vmatpush2.msra.mxu0 0.0
      %1574 = vmatprep.subr.mxu0 0.0
      %1575 = vmatpush2.msra.mxu0 0.0
      %1576 = vmatprep.subr.mxu0 0.0
      %1577 = vmatpush2.msra.mxu0 0.0
      %1578 = vmatprep.subr.mxu0 0.0
      %1579 = vmatpush2.msra.mxu0 0.0
      %1580 = vmatprep.subr.mxu0 0.0
      %1581 = vmatpush2.msra.mxu0 0.0
      %1582 = vmatprep.subr.mxu0 0.0
      %1583 = vmatpush2.msra.mxu0 0.0
      %1584 = vmatprep.subr.mxu0 0.0
      %1585 = vmatpush2.msra.mxu0 0.0
      %1586 = vmatprep.subr.mxu0 0.0
      %1587 = vmatpush2.msra.mxu0 0.0
      %1588 = vmatprep.subr.mxu0 0.0
      %1589 = vmatpush2.msra.mxu0 0.0
      %1590 = vmatprep.subr.mxu0 0.0
      %1591 = vmatpush2.msra.mxu0 0.0
      %1592 = vmatprep.subr.mxu0 0.0
      %1593 = vmatpush2.msra.mxu0 0.0
      %1594 = vmatprep.subr.mxu0 0.0
      %1595 = vmatpush2.msra.mxu0 0.0
      %1596 = vmatprep.mubr.f32.mxu0 0.0
      %1597 = vmatmul.mubr.f32.gmra.mxu0 %v1276
      %v1598 = vpop.f32.mrf.mxu0
      %v1599 = vadd.f32 0.0, %v1598
      %v1600 = vpop.f32.mrf.mxu0
      %v1601 = vadd.f32 0.0, %v1600
      %1602 = vdwg.mxu0
      %v1603 = vadd.f32 %v1457, %v1528
      %v1604 = vadd.f32 %v1458, %v1530
      %v1605 = vadd.f32 %v1459, %v1599
      %v1606 = vadd.f32 %v1460, %v1601
      %v1607 = vxor.u32 %v1603, 2147483648
      %v1608 = vmul.f32 %v1607, 1.442695
      %v1609 = vpow.pop %v1608
      %v1610 = vadd.f32 %v1609, 1.0
      %v1611 = vrcp.pop %v1610
      %v1612 = vmul.f32 1.0, %v1611
      %v1613 = vxor.u32 %v1604, 2147483648
      %v1614 = vmul.f32 %v1613, 1.442695
      %v1615 = vpow.pop %v1614
      %v1616 = vadd.f32 %v1615, 1.0
      %v1617 = vrcp.pop %v1616
      %v1618 = vmul.f32 1.0, %v1617
      %v1619 = vtanh.pop %v1605
      %v1620 = vxor.u32 %v1606, 2147483648
      %v1621 = vmul.f32 %v1620, 1.442695
      %v1622 = vpow.pop %v1621
      %v1623 = vadd.f32 %v1622, 1.0
      %v1624 = vrcp.pop %v1623
      %v1625 = vmul.f32 1.0, %v1624
      %v1626 = vmul.f32 %v1618, %v1274
      %v1627 = vmul.f32 %v1612, %v1619
      %v1628 = vadd.f32 %v1626, %v1627
      %v1629 = vtanh.pop %v1628
      %v1630 = vmul.f32 %v1625, %v1629
      %s1631 = scalar_lea.vmem %s238, 128
      %v1632 = vld [vmem:[%s1631] sm:$0xff]
      %v1633 = vld [vmem:[%s1631 + $0x8] sm:$0xff]
      %v1634 = vld [vmem:[%s1631 + $0x10] sm:$0xff]
      %v1635 = vld [vmem:[%s1631 + $0x18] sm:$0xff]
      %1636 = vmatprep.subr.mxu0 %v389
      %1637 = vmatpush1.msra.mxu0 %v388
      %1638 = vmatprep.subr.mxu0 %v385
      %1639 = vmatpush1.msra.mxu0 %v384
      %1640 = vmatprep.subr.mxu0 %v381
      %1641 = vmatpush1.msra.mxu0 %v380
      %1642 = vmatprep.subr.mxu0 %v377
      %1643 = vmatpush1.msra.mxu0 %v376
      %1644 = vmatprep.subr.mxu0 %v373
      %1645 = vmatpush1.msra.mxu0 %v372
      %1646 = vmatprep.subr.mxu0 %v369
      %1647 = vmatpush1.msra.mxu0 %v368
      %1648 = vmatprep.subr.mxu0 %v365
      %1649 = vmatpush1.msra.mxu0 %v364
      %1650 = vmatprep.subr.mxu0 %v361
      %1651 = vmatpush1.msra.mxu0 %v360
      %1652 = vmatprep.subr.mxu0 %v357
      %1653 = vmatpush1.msra.mxu0 %v356
      %1654 = vmatprep.subr.mxu0 %v353
      %1655 = vmatpush1.msra.mxu0 %v352
      %1656 = vmatprep.subr.mxu0 %v349
      %1657 = vmatpush1.msra.mxu0 %v348
      %1658 = vmatprep.subr.mxu0 %v345
      %1659 = vmatpush1.msra.mxu0 %v344
      %1660 = vmatprep.subr.mxu0 %v341
      %1661 = vmatpush1.msra.mxu0 %v340
      %1662 = vmatprep.subr.mxu0 %v337
      %1663 = vmatpush1.msra.mxu0 %v336
      %1664 = vmatprep.subr.mxu0 %v333
      %1665 = vmatpush1.msra.mxu0 %v332
      %1666 = vmatprep.subr.mxu0 %v329
      %1667 = vmatpush1.msra.mxu0 %v328
      %1668 = vmatprep.subr.mxu0 0.0
      %1669 = vmatpush2.msra.mxu0 0.0
      %1670 = vmatprep.subr.mxu0 0.0
      %1671 = vmatpush2.msra.mxu0 0.0
      %1672 = vmatprep.subr.mxu0 0.0
      %1673 = vmatpush2.msra.mxu0 0.0
      %1674 = vmatprep.subr.mxu0 0.0
      %1675 = vmatpush2.msra.mxu0 0.0
      %1676 = vmatprep.subr.mxu0 0.0
      %1677 = vmatpush2.msra.mxu0 0.0
      %1678 = vmatprep.subr.mxu0 0.0
      %1679 = vmatpush2.msra.mxu0 0.0
      %1680 = vmatprep.subr.mxu0 0.0
      %1681 = vmatpush2.msra.mxu0 0.0
      %1682 = vmatprep.subr.mxu0 0.0
      %1683 = vmatpush2.msra.mxu0 0.0
      %1684 = vmatprep.subr.mxu0 0.0
      %1685 = vmatpush2.msra.mxu0 0.0
      %1686 = vmatprep.subr.mxu0 0.0
      %1687 = vmatpush2.msra.mxu0 0.0
      %1688 = vmatprep.subr.mxu0 0.0
      %1689 = vmatpush2.msra.mxu0 0.0
      %1690 = vmatprep.subr.mxu0 0.0
      %1691 = vmatpush2.msra.mxu0 0.0
      %1692 = vmatprep.subr.mxu0 0.0
      %1693 = vmatpush2.msra.mxu0 0.0
      %1694 = vmatprep.subr.mxu0 0.0
      %1695 = vmatpush2.msra.mxu0 0.0
      %1696 = vmatprep.subr.mxu0 0.0
      %1697 = vmatpush2.msra.mxu0 0.0
      %1698 = vmatprep.subr.mxu0 0.0
      %1699 = vmatpush2.msra.mxu0 0.0
      %1700 = vmatprep.mubr.f32.mxu0 0.0
      %1701 = vmatmul.mubr.f32.gmra.mxu0 %v1451
      %v1702 = vpop.f32.mrf.mxu0
      %v1703 = vadd.f32 0.0, %v1702
      %v1704 = vpop.f32.mrf.mxu0
      %v1705 = vadd.f32 0.0, %v1704
      %1706 = vdwg.mxu0
      %1707 = vmatprep.subr.mxu0 %v391
      %1708 = vmatpush1.msra.mxu0 %v390
      %1709 = vmatprep.subr.mxu0 %v387
      %1710 = vmatpush1.msra.mxu0 %v386
      %1711 = vmatprep.subr.mxu0 %v383
      %1712 = vmatpush1.msra.mxu0 %v382
      %1713 = vmatprep.subr.mxu0 %v379
      %1714 = vmatpush1.msra.mxu0 %v378
      %1715 = vmatprep.subr.mxu0 %v375
      %1716 = vmatpush1.msra.mxu0 %v374
      %1717 = vmatprep.subr.mxu0 %v371
      %1718 = vmatpush1.msra.mxu0 %v370
      %1719 = vmatprep.subr.mxu0 %v367
      %1720 = vmatpush1.msra.mxu0 %v366
      %1721 = vmatprep.subr.mxu0 %v363
      %1722 = vmatpush1.msra.mxu0 %v362
      %1723 = vmatprep.subr.mxu0 %v359
      %1724 = vmatpush1.msra.mxu0 %v358
      %1725 = vmatprep.subr.mxu0 %v355
      %1726 = vmatpush1.msra.mxu0 %v354
      %1727 = vmatprep.subr.mxu0 %v351
      %1728 = vmatpush1.msra.mxu0 %v350
      %1729 = vmatprep.subr.mxu0 %v347
      %1730 = vmatpush1.msra.mxu0 %v346
      %1731 = vmatprep.subr.mxu0 %v343
      %1732 = vmatpush1.msra.mxu0 %v342
      %1733 = vmatprep.subr.mxu0 %v339
      %1734 = vmatpush1.msra.mxu0 %v338
      %1735 = vmatprep.subr.mxu0 %v335
      %1736 = vmatpush1.msra.mxu0 %v334
      %1737 = vmatprep.subr.mxu0 %v331
      %1738 = vmatpush1.msra.mxu0 %v330
      %1739 = vmatprep.subr.mxu0 0.0
      %1740 = vmatpush2.msra.mxu0 0.0
      %1741 = vmatprep.subr.mxu0 0.0
      %1742 = vmatpush2.msra.mxu0 0.0
      %1743 = vmatprep.subr.mxu0 0.0
      %1744 = vmatpush2.msra.mxu0 0.0
      %1745 = vmatprep.subr.mxu0 0.0
      %1746 = vmatpush2.msra.mxu0 0.0
      %1747 = vmatprep.subr.mxu0 0.0
      %1748 = vmatpush2.msra.mxu0 0.0
      %1749 = vmatprep.subr.mxu0 0.0
      %1750 = vmatpush2.msra.mxu0 0.0
      %1751 = vmatprep.subr.mxu0 0.0
      %1752 = vmatpush2.msra.mxu0 0.0
      %1753 = vmatprep.subr.mxu0 0.0
      %1754 = vmatpush2.msra.mxu0 0.0
      %1755 = vmatprep.subr.mxu0 0.0
      %1756 = vmatpush2.msra.mxu0 0.0
      %1757 = vmatprep.subr.mxu0 0.0
      %1758 = vmatpush2.msra.mxu0 0.0
      %1759 = vmatprep.subr.mxu0 0.0
      %1760 = vmatpush2.msra.mxu0 0.0
      %1761 = vmatprep.subr.mxu0 0.0
      %1762 = vmatpush2.msra.mxu0 0.0
      %1763 = vmatprep.subr.mxu0 0.0
      %1764 = vmatpush2.msra.mxu0 0.0
      %1765 = vmatprep.subr.mxu0 0.0
      %1766 = vmatpush2.msra.mxu0 0.0
      %1767 = vmatprep.subr.mxu0 0.0
      %1768 = vmatpush2.msra.mxu0 0.0
      %1769 = vmatprep.subr.mxu0 0.0
      %1770 = vmatpush2.msra.mxu0 0.0
      %1771 = vmatprep.mubr.f32.mxu0 0.0
      %1772 = vmatmul.mubr.f32.gmra.mxu0 %v1451
      %v1773 = vpop.f32.mrf.mxu0
      %v1774 = vadd.f32 0.0, %v1773
      %v1775 = vpop.f32.mrf.mxu0
      %v1776 = vadd.f32 0.0, %v1775
      %1777 = vdwg.mxu0
      %v1778 = vadd.f32 %v1632, %v1703
      %v1779 = vadd.f32 %v1633, %v1705
      %v1780 = vadd.f32 %v1634, %v1774
      %v1781 = vadd.f32 %v1635, %v1776
      %v1782 = vxor.u32 %v1778, 2147483648
      %v1783 = vmul.f32 %v1782, 1.442695
      %v1784 = vpow.pop %v1783
      %v1785 = vadd.f32 %v1784, 1.0
      %v1786 = vrcp.pop %v1785
      %v1787 = vmul.f32 1.0, %v1786
      %v1788 = vxor.u32 %v1779, 2147483648
      %v1789 = vmul.f32 %v1788, 1.442695
      %v1790 = vpow.pop %v1789
      %v1791 = vadd.f32 %v1790, 1.0
      %v1792 = vrcp.pop %v1791
      %v1793 = vmul.f32 1.0, %v1792
      %v1794 = vtanh.pop %v1780
      %v1795 = vxor.u32 %v1781, 2147483648
      %v1796 = vmul.f32 %v1795, 1.442695
      %v1797 = vpow.pop %v1796
      %v1798 = vadd.f32 %v1797, 1.0
      %v1799 = vrcp.pop %v1798
      %v1800 = vmul.f32 1.0, %v1799
      %v1801 = vmul.f32 %v1793, %v1449
      %v1802 = vmul.f32 %v1787, %v1794
      %v1803 = vadd.f32 %v1801, %v1802
      %v1804 = vtanh.pop %v1803
      %v1805 = vmul.f32 %v1800, %v1804
      %s1806 = scalar_lea.vmem %s245, 24
      %1807 = vst [vmem:[%s1806] sm:$0xff] %v1630
      %s1808 = scalar_lea.vmem %s252, 32
      %1809 = vst [vmem:[%s1808] sm:$0xff] %v1805
      %s1810 = scalar_lea.vmem %s230, 128
      %v1811 = vld [vmem:[%s1810] sm:$0xff]
      %v1812 = vld [vmem:[%s1810 + $0x8] sm:$0xff]
      %v1813 = vld [vmem:[%s1810 + $0x10] sm:$0xff]
      %v1814 = vld [vmem:[%s1810 + $0x18] sm:$0xff]
      %1815 = vmatprep.subr.mxu0 %v324
      %1816 = vmatpush1.msra.mxu0 %v323
      %1817 = vmatprep.subr.mxu0 %v320
      %1818 = vmatpush1.msra.mxu0 %v319
      %1819 = vmatprep.subr.mxu0 %v316
      %1820 = vmatpush1.msra.mxu0 %v315
      %1821 = vmatprep.subr.mxu0 %v312
      %1822 = vmatpush1.msra.mxu0 %v311
      %1823 = vmatprep.subr.mxu0 %v308
      %1824 = vmatpush1.msra.mxu0 %v307
      %1825 = vmatprep.subr.mxu0 %v304
      %1826 = vmatpush1.msra.mxu0 %v303
      %1827 = vmatprep.subr.mxu0 %v300
      %1828 = vmatpush1.msra.mxu0 %v299
      %1829 = vmatprep.subr.mxu0 %v296
      %1830 = vmatpush1.msra.mxu0 %v295
      %1831 = vmatprep.subr.mxu0 %v292
      %1832 = vmatpush1.msra.mxu0 %v291
      %1833 = vmatprep.subr.mxu0 %v288
      %1834 = vmatpush1.msra.mxu0 %v287
      %1835 = vmatprep.subr.mxu0 %v284
      %1836 = vmatpush1.msra.mxu0 %v283
      %1837 = vmatprep.subr.mxu0 %v280
      %1838 = vmatpush1.msra.mxu0 %v279
      %1839 = vmatprep.subr.mxu0 %v276
      %1840 = vmatpush1.msra.mxu0 %v275
      %1841 = vmatprep.subr.mxu0 %v272
      %1842 = vmatpush1.msra.mxu0 %v271
      %1843 = vmatprep.subr.mxu0 %v268
      %1844 = vmatpush1.msra.mxu0 %v267
      %1845 = vmatprep.subr.mxu0 %v264
      %1846 = vmatpush1.msra.mxu0 %v263
      %1847 = vmatprep.subr.mxu0 0.0
      %1848 = vmatpush2.msra.mxu0 0.0
      %1849 = vmatprep.subr.mxu0 0.0
      %1850 = vmatpush2.msra.mxu0 0.0
      %1851 = vmatprep.subr.mxu0 0.0
      %1852 = vmatpush2.msra.mxu0 0.0
      %1853 = vmatprep.subr.mxu0 0.0
      %1854 = vmatpush2.msra.mxu0 0.0
      %1855 = vmatprep.subr.mxu0 0.0
      %1856 = vmatpush2.msra.mxu0 0.0
      %1857 = vmatprep.subr.mxu0 0.0
      %1858 = vmatpush2.msra.mxu0 0.0
      %1859 = vmatprep.subr.mxu0 0.0
      %1860 = vmatpush2.msra.mxu0 0.0
      %1861 = vmatprep.subr.mxu0 0.0
      %1862 = vmatpush2.msra.mxu0 0.0
      %1863 = vmatprep.subr.mxu0 0.0
      %1864 = vmatpush2.msra.mxu0 0.0
      %1865 = vmatprep.subr.mxu0 0.0
      %1866 = vmatpush2.msra.mxu0 0.0
      %1867 = vmatprep.subr.mxu0 0.0
      %1868 = vmatpush2.msra.mxu0 0.0
      %1869 = vmatprep.subr.mxu0 0.0
      %1870 = vmatpush2.msra.mxu0 0.0
      %1871 = vmatprep.subr.mxu0 0.0
      %1872 = vmatpush2.msra.mxu0 0.0
      %1873 = vmatprep.subr.mxu0 0.0
      %1874 = vmatpush2.msra.mxu0 0.0
      %1875 = vmatprep.subr.mxu0 0.0
      %1876 = vmatpush2.msra.mxu0 0.0
      %1877 = vmatprep.subr.mxu0 0.0
      %1878 = vmatpush2.msra.mxu0 0.0
      %1879 = vmatprep.mubr.f32.mxu0 0.0
      %1880 = vmatmul.mubr.f32.gmra.mxu0 %v1630
      %v1881 = vpop.f32.mrf.mxu0
      %v1882 = vadd.f32 0.0, %v1881
      %v1883 = vpop.f32.mrf.mxu0
      %v1884 = vadd.f32 0.0, %v1883
      %1885 = vdwg.mxu0
      %1886 = vmatprep.subr.mxu0 %v326
      %1887 = vmatpush1.msra.mxu0 %v325
      %1888 = vmatprep.subr.mxu0 %v322
      %1889 = vmatpush1.msra.mxu0 %v321
      %1890 = vmatprep.subr.mxu0 %v318
      %1891 = vmatpush1.msra.mxu0 %v317
      %1892 = vmatprep.subr.mxu0 %v314
      %1893 = vmatpush1.msra.mxu0 %v313
      %1894 = vmatprep.subr.mxu0 %v310
      %1895 = vmatpush1.msra.mxu0 %v309
      %1896 = vmatprep.subr.mxu0 %v306
      %1897 = vmatpush1.msra.mxu0 %v305
      %1898 = vmatprep.subr.mxu0 %v302
      %1899 = vmatpush1.msra.mxu0 %v301
      %1900 = vmatprep.subr.mxu0 %v298
      %1901 = vmatpush1.msra.mxu0 %v297
      %1902 = vmatprep.subr.mxu0 %v294
      %1903 = vmatpush1.msra.mxu0 %v293
      %1904 = vmatprep.subr.mxu0 %v290
      %1905 = vmatpush1.msra.mxu0 %v289
      %1906 = vmatprep.subr.mxu0 %v286
      %1907 = vmatpush1.msra.mxu0 %v285
      %1908 = vmatprep.subr.mxu0 %v282
      %1909 = vmatpush1.msra.mxu0 %v281
      %1910 = vmatprep.subr.mxu0 %v278
      %1911 = vmatpush1.msra.mxu0 %v277
      %1912 = vmatprep.subr.mxu0 %v274
      %1913 = vmatpush1.msra.mxu0 %v273
      %1914 = vmatprep.subr.mxu0 %v270
      %1915 = vmatpush1.msra.mxu0 %v269
      %1916 = vmatprep.subr.mxu0 %v266
      %1917 = vmatpush1.msra.mxu0 %v265
      %1918 = vmatprep.subr.mxu0 0.0
      %1919 = vmatpush2.msra.mxu0 0.0
      %1920 = vmatprep.subr.mxu0 0.0
      %1921 = vmatpush2.msra.mxu0 0.0
      %1922 = vmatprep.subr.mxu0 0.0
      %1923 = vmatpush2.msra.mxu0 0.0
      %1924 = vmatprep.subr.mxu0 0.0
      %1925 = vmatpush2.msra.mxu0 0.0
      %1926 = vmatprep.subr.mxu0 0.0
      %1927 = vmatpush2.msra.mxu0 0.0
      %1928 = vmatprep.subr.mxu0 0.0
      %1929 = vmatpush2.msra.mxu0 0.0
      %1930 = vmatprep.subr.mxu0 0.0
      %1931 = vmatpush2.msra.mxu0 0.0
      %1932 = vmatprep.subr.mxu0 0.0
      %1933 = vmatpush2.msra.mxu0 0.0
      %1934 = vmatprep.subr.mxu0 0.0
      %1935 = vmatpush2.msra.mxu0 0.0
      %1936 = vmatprep.subr.mxu0 0.0
      %1937 = vmatpush2.msra.mxu0 0.0
      %1938 = vmatprep.subr.mxu0 0.0
      %1939 = vmatpush2.msra.mxu0 0.0
      %1940 = vmatprep.subr.mxu0 0.0
      %1941 = vmatpush2.msra.mxu0 0.0
      %1942 = vmatprep.subr.mxu0 0.0
      %1943 = vmatpush2.msra.mxu0 0.0
      %1944 = vmatprep.subr.mxu0 0.0
      %1945 = vmatpush2.msra.mxu0 0.0
      %1946 = vmatprep.subr.mxu0 0.0
      %1947 = vmatpush2.msra.mxu0 0.0
      %1948 = vmatprep.subr.mxu0 0.0
      %1949 = vmatpush2.msra.mxu0 0.0
      %1950 = vmatprep.mubr.f32.mxu0 0.0
      %1951 = vmatmul.mubr.f32.gmra.mxu0 %v1630
      %v1952 = vpop.f32.mrf.mxu0
      %v1953 = vadd.f32 0.0, %v1952
      %v1954 = vpop.f32.mrf.mxu0
      %v1955 = vadd.f32 0.0, %v1954
      %1956 = vdwg.mxu0
      %v1957 = vadd.f32 %v1811, %v1882
      %v1958 = vadd.f32 %v1812, %v1884
      %v1959 = vadd.f32 %v1813, %v1953
      %v1960 = vadd.f32 %v1814, %v1955
      %v1961 = vxor.u32 %v1957, 2147483648
      %v1962 = vmul.f32 %v1961, 1.442695
      %v1963 = vpow.pop %v1962
      %v1964 = vadd.f32 %v1963, 1.0
      %v1965 = vrcp.pop %v1964
      %v1966 = vmul.f32 1.0, %v1965
      %v1967 = vxor.u32 %v1958, 2147483648
      %v1968 = vmul.f32 %v1967, 1.442695
      %v1969 = vpow.pop %v1968
      %v1970 = vadd.f32 %v1969, 1.0
      %v1971 = vrcp.pop %v1970
      %v1972 = vmul.f32 1.0, %v1971
      %v1973 = vtanh.pop %v1959
      %v1974 = vxor.u32 %v1960, 2147483648
      %v1975 = vmul.f32 %v1974, 1.442695
      %v1976 = vpow.pop %v1975
      %v1977 = vadd.f32 %v1976, 1.0
      %v1978 = vrcp.pop %v1977
      %v1979 = vmul.f32 1.0, %v1978
      %v1980 = vmul.f32 %v1972, %v1628
      %v1981 = vmul.f32 %v1966, %v1973
      %v1982 = vadd.f32 %v1980, %v1981
      %v1983 = vtanh.pop %v1982
      %v1984 = vmul.f32 %v1979, %v1983
      %s1985 = scalar_lea.vmem %s238, 96
      %v1986 = vld [vmem:[%s1985] sm:$0xff]
      %v1987 = vld [vmem:[%s1985 + $0x8] sm:$0xff]
      %v1988 = vld [vmem:[%s1985 + $0x10] sm:$0xff]
      %v1989 = vld [vmem:[%s1985 + $0x18] sm:$0xff]
      %1990 = vmatprep.subr.mxu0 %v389
      %1991 = vmatpush1.msra.mxu0 %v388
      %1992 = vmatprep.subr.mxu0 %v385
      %1993 = vmatpush1.msra.mxu0 %v384
      %1994 = vmatprep.subr.mxu0 %v381
      %1995 = vmatpush1.msra.mxu0 %v380
      %1996 = vmatprep.subr.mxu0 %v377
      %1997 = vmatpush1.msra.mxu0 %v376
      %1998 = vmatprep.subr.mxu0 %v373
      %1999 = vmatpush1.msra.mxu0 %v372
      %2000 = vmatprep.subr.mxu0 %v369
      %2001 = vmatpush1.msra.mxu0 %v368
      %2002 = vmatprep.subr.mxu0 %v365
      %2003 = vmatpush1.msra.mxu0 %v364
      %2004 = vmatprep.subr.mxu0 %v361
      %2005 = vmatpush1.msra.mxu0 %v360
      %2006 = vmatprep.subr.mxu0 %v357
      %2007 = vmatpush1.msra.mxu0 %v356
      %2008 = vmatprep.subr.mxu0 %v353
      %2009 = vmatpush1.msra.mxu0 %v352
      %2010 = vmatprep.subr.mxu0 %v349
      %2011 = vmatpush1.msra.mxu0 %v348
      %2012 = vmatprep.subr.mxu0 %v345
      %2013 = vmatpush1.msra.mxu0 %v344
      %2014 = vmatprep.subr.mxu0 %v341
      %2015 = vmatpush1.msra.mxu0 %v340
      %2016 = vmatprep.subr.mxu0 %v337
      %2017 = vmatpush1.msra.mxu0 %v336
      %2018 = vmatprep.subr.mxu0 %v333
      %2019 = vmatpush1.msra.mxu0 %v332
      %2020 = vmatprep.subr.mxu0 %v329
      %2021 = vmatpush1.msra.mxu0 %v328
      %2022 = vmatprep.subr.mxu0 0.0
      %2023 = vmatpush2.msra.mxu0 0.0
      %2024 = vmatprep.subr.mxu0 0.0
      %2025 = vmatpush2.msra.mxu0 0.0
      %2026 = vmatprep.subr.mxu0 0.0
      %2027 = vmatpush2.msra.mxu0 0.0
      %2028 = vmatprep.subr.mxu0 0.0
      %2029 = vmatpush2.msra.mxu0 0.0
      %2030 = vmatprep.subr.mxu0 0.0
      %2031 = vmatpush2.msra.mxu0 0.0
      %2032 = vmatprep.subr.mxu0 0.0
      %2033 = vmatpush2.msra.mxu0 0.0
      %2034 = vmatprep.subr.mxu0 0.0
      %2035 = vmatpush2.msra.mxu0 0.0
      %2036 = vmatprep.subr.mxu0 0.0
      %2037 = vmatpush2.msra.mxu0 0.0
      %2038 = vmatprep.subr.mxu0 0.0
      %2039 = vmatpush2.msra.mxu0 0.0
      %2040 = vmatprep.subr.mxu0 0.0
      %2041 = vmatpush2.msra.mxu0 0.0
      %2042 = vmatprep.subr.mxu0 0.0
      %2043 = vmatpush2.msra.mxu0 0.0
      %2044 = vmatprep.subr.mxu0 0.0
      %2045 = vmatpush2.msra.mxu0 0.0
      %2046 = vmatprep.subr.mxu0 0.0
      %2047 = vmatpush2.msra.mxu0 0.0
      %2048 = vmatprep.subr.mxu0 0.0
      %2049 = vmatpush2.msra.mxu0 0.0
      %2050 = vmatprep.subr.mxu0 0.0
      %2051 = vmatpush2.msra.mxu0 0.0
      %2052 = vmatprep.subr.mxu0 0.0
      %2053 = vmatpush2.msra.mxu0 0.0
      %2054 = vmatprep.mubr.f32.mxu0 0.0
      %2055 = vmatmul.mubr.f32.gmra.mxu0 %v1805
      %v2056 = vpop.f32.mrf.mxu0
      %v2057 = vadd.f32 0.0, %v2056
      %v2058 = vpop.f32.mrf.mxu0
      %v2059 = vadd.f32 0.0, %v2058
      %2060 = vdwg.mxu0
      %2061 = vmatprep.subr.mxu0 %v391
      %2062 = vmatpush1.msra.mxu0 %v390
      %2063 = vmatprep.subr.mxu0 %v387
      %2064 = vmatpush1.msra.mxu0 %v386
      %2065 = vmatprep.subr.mxu0 %v383
      %2066 = vmatpush1.msra.mxu0 %v382
      %2067 = vmatprep.subr.mxu0 %v379
      %2068 = vmatpush1.msra.mxu0 %v378
      %2069 = vmatprep.subr.mxu0 %v375
      %2070 = vmatpush1.msra.mxu0 %v374
      %2071 = vmatprep.subr.mxu0 %v371
      %2072 = vmatpush1.msra.mxu0 %v370
      %2073 = vmatprep.subr.mxu0 %v367
      %2074 = vmatpush1.msra.mxu0 %v366
      %2075 = vmatprep.subr.mxu0 %v363
      %2076 = vmatpush1.msra.mxu0 %v362
      %2077 = vmatprep.subr.mxu0 %v359
      %2078 = vmatpush1.msra.mxu0 %v358
      %2079 = vmatprep.subr.mxu0 %v355
      %2080 = vmatpush1.msra.mxu0 %v354
      %2081 = vmatprep.subr.mxu0 %v351
      %2082 = vmatpush1.msra.mxu0 %v350
      %2083 = vmatprep.subr.mxu0 %v347
      %2084 = vmatpush1.msra.mxu0 %v346
      %2085 = vmatprep.subr.mxu0 %v343
      %2086 = vmatpush1.msra.mxu0 %v342
      %2087 = vmatprep.subr.mxu0 %v339
      %2088 = vmatpush1.msra.mxu0 %v338
      %2089 = vmatprep.subr.mxu0 %v335
      %2090 = vmatpush1.msra.mxu0 %v334
      %2091 = vmatprep.subr.mxu0 %v331
      %2092 = vmatpush1.msra.mxu0 %v330
      %2093 = vmatprep.subr.mxu0 0.0
      %2094 = vmatpush2.msra.mxu0 0.0
      %2095 = vmatprep.subr.mxu0 0.0
      %2096 = vmatpush2.msra.mxu0 0.0
      %2097 = vmatprep.subr.mxu0 0.0
      %2098 = vmatpush2.msra.mxu0 0.0
      %2099 = vmatprep.subr.mxu0 0.0
      %2100 = vmatpush2.msra.mxu0 0.0
      %2101 = vmatprep.subr.mxu0 0.0
      %2102 = vmatpush2.msra.mxu0 0.0
      %2103 = vmatprep.subr.mxu0 0.0
      %2104 = vmatpush2.msra.mxu0 0.0
      %2105 = vmatprep.subr.mxu0 0.0
      %2106 = vmatpush2.msra.mxu0 0.0
      %2107 = vmatprep.subr.mxu0 0.0
      %2108 = vmatpush2.msra.mxu0 0.0
      %2109 = vmatprep.subr.mxu0 0.0
      %2110 = vmatpush2.msra.mxu0 0.0
      %2111 = vmatprep.subr.mxu0 0.0
      %2112 = vmatpush2.msra.mxu0 0.0
      %2113 = vmatprep.subr.mxu0 0.0
      %2114 = vmatpush2.msra.mxu0 0.0
      %2115 = vmatprep.subr.mxu0 0.0
      %2116 = vmatpush2.msra.mxu0 0.0
      %2117 = vmatprep.subr.mxu0 0.0
      %2118 = vmatpush2.msra.mxu0 0.0
      %2119 = vmatprep.subr.mxu0 0.0
      %2120 = vmatpush2.msra.mxu0 0.0
      %2121 = vmatprep.subr.mxu0 0.0
      %2122 = vmatpush2.msra.mxu0 0.0
      %2123 = vmatprep.subr.mxu0 0.0
      %2124 = vmatpush2.msra.mxu0 0.0
      %2125 = vmatprep.mubr.f32.mxu0 0.0
      %2126 = vmatmul.mubr.f32.gmra.mxu0 %v1805
      %v2127 = vpop.f32.mrf.mxu0
      %v2128 = vadd.f32 0.0, %v2127
      %v2129 = vpop.f32.mrf.mxu0
      %v2130 = vadd.f32 0.0, %v2129
      %2131 = vdwg.mxu0
      %v2132 = vadd.f32 %v1986, %v2057
      %v2133 = vadd.f32 %v1987, %v2059
      %v2134 = vadd.f32 %v1988, %v2128
      %v2135 = vadd.f32 %v1989, %v2130
      %v2136 = vxor.u32 %v2132, 2147483648
      %v2137 = vmul.f32 %v2136, 1.442695
      %v2138 = vpow.pop %v2137
      %v2139 = vadd.f32 %v2138, 1.0
      %v2140 = vrcp.pop %v2139
      %v2141 = vmul.f32 1.0, %v2140
      %v2142 = vxor.u32 %v2133, 2147483648
      %v2143 = vmul.f32 %v2142, 1.442695
      %v2144 = vpow.pop %v2143
      %v2145 = vadd.f32 %v2144, 1.0
      %v2146 = vrcp.pop %v2145
      %v2147 = vmul.f32 1.0, %v2146
      %v2148 = vtanh.pop %v2134
      %v2149 = vxor.u32 %v2135, 2147483648
      %v2150 = vmul.f32 %v2149, 1.442695
      %v2151 = vpow.pop %v2150
      %v2152 = vadd.f32 %v2151, 1.0
      %v2153 = vrcp.pop %v2152
      %v2154 = vmul.f32 1.0, %v2153
      %v2155 = vmul.f32 %v2147, %v1803
      %v2156 = vmul.f32 %v2141, %v2148
      %v2157 = vadd.f32 %v2155, %v2156
      %v2158 = vtanh.pop %v2157
      %v2159 = vmul.f32 %v2154, %v2158
      %s2160 = scalar_lea.vmem %s245, 32
      %2161 = vst [vmem:[%s2160] sm:$0xff] %v1984
      %s2162 = scalar_lea.vmem %s252, 24
      %2163 = vst [vmem:[%s2162] sm:$0xff] %v2159
      %s2164 = scalar_lea.vmem %s230, 160
      %v2165 = vld [vmem:[%s2164] sm:$0xff]
      %v2166 = vld [vmem:[%s2164 + $0x8] sm:$0xff]
      %v2167 = vld [vmem:[%s2164 + $0x10] sm:$0xff]
      %v2168 = vld [vmem:[%s2164 + $0x18] sm:$0xff]
      %2169 = vmatprep.subr.mxu0 %v324
      %2170 = vmatpush1.msra.mxu0 %v323
      %2171 = vmatprep.subr.mxu0 %v320
      %2172 = vmatpush1.msra.mxu0 %v319
      %2173 = vmatprep.subr.mxu0 %v316
      %2174 = vmatpush1.msra.mxu0 %v315
      %2175 = vmatprep.subr.mxu0 %v312
      %2176 = vmatpush1.msra.mxu0 %v311
      %2177 = vmatprep.subr.mxu0 %v308
      %2178 = vmatpush1.msra.mxu0 %v307
      %2179 = vmatprep.subr.mxu0 %v304
      %2180 = vmatpush1.msra.mxu0 %v303
      %2181 = vmatprep.subr.mxu0 %v300
      %2182 = vmatpush1.msra.mxu0 %v299
      %2183 = vmatprep.subr.mxu0 %v296
      %2184 = vmatpush1.msra.mxu0 %v295
      %2185 = vmatprep.subr.mxu0 %v292
      %2186 = vmatpush1.msra.mxu0 %v291
      %2187 = vmatprep.subr.mxu0 %v288
      %2188 = vmatpush1.msra.mxu0 %v287
      %2189 = vmatprep.subr.mxu0 %v284
      %2190 = vmatpush1.msra.mxu0 %v283
      %2191 = vmatprep.subr.mxu0 %v280
      %2192 = vmatpush1.msra.mxu0 %v279
      %2193 = vmatprep.subr.mxu0 %v276
      %2194 = vmatpush1.msra.mxu0 %v275
      %2195 = vmatprep.subr.mxu0 %v272
      %2196 = vmatpush1.msra.mxu0 %v271
      %2197 = vmatprep.subr.mxu0 %v268
      %2198 = vmatpush1.msra.mxu0 %v267
      %2199 = vmatprep.subr.mxu0 %v264
      %2200 = vmatpush1.msra.mxu0 %v263
      %2201 = vmatprep.subr.mxu0 0.0
      %2202 = vmatpush2.msra.mxu0 0.0
      %2203 = vmatprep.subr.mxu0 0.0
      %2204 = vmatpush2.msra.mxu0 0.0
      %2205 = vmatprep.subr.mxu0 0.0
      %2206 = vmatpush2.msra.mxu0 0.0
      %2207 = vmatprep.subr.mxu0 0.0
      %2208 = vmatpush2.msra.mxu0 0.0
      %2209 = vmatprep.subr.mxu0 0.0
      %2210 = vmatpush2.msra.mxu0 0.0
      %2211 = vmatprep.subr.mxu0 0.0
      %2212 = vmatpush2.msra.mxu0 0.0
      %2213 = vmatprep.subr.mxu0 0.0
      %2214 = vmatpush2.msra.mxu0 0.0
      %2215 = vmatprep.subr.mxu0 0.0
      %2216 = vmatpush2.msra.mxu0 0.0
      %2217 = vmatprep.subr.mxu0 0.0
      %2218 = vmatpush2.msra.mxu0 0.0
      %2219 = vmatprep.subr.mxu0 0.0
      %2220 = vmatpush2.msra.mxu0 0.0
      %2221 = vmatprep.subr.mxu0 0.0
      %2222 = vmatpush2.msra.mxu0 0.0
      %2223 = vmatprep.subr.mxu0 0.0
      %2224 = vmatpush2.msra.mxu0 0.0
      %2225 = vmatprep.subr.mxu0 0.0
      %2226 = vmatpush2.msra.mxu0 0.0
      %2227 = vmatprep.subr.mxu0 0.0
      %2228 = vmatpush2.msra.mxu0 0.0
      %2229 = vmatprep.subr.mxu0 0.0
      %2230 = vmatpush2.msra.mxu0 0.0
      %2231 = vmatprep.subr.mxu0 0.0
      %2232 = vmatpush2.msra.mxu0 0.0
      %2233 = vmatprep.mubr.f32.mxu0 0.0
      %2234 = vmatmul.mubr.f32.gmra.mxu0 %v1984
      %v2235 = vpop.f32.mrf.mxu0
      %v2236 = vadd.f32 0.0, %v2235
      %v2237 = vpop.f32.mrf.mxu0
      %v2238 = vadd.f32 0.0, %v2237
      %2239 = vdwg.mxu0
      %2240 = vmatprep.subr.mxu0 %v326
      %2241 = vmatpush1.msra.mxu0 %v325
      %2242 = vmatprep.subr.mxu0 %v322
      %2243 = vmatpush1.msra.mxu0 %v321
      %2244 = vmatprep.subr.mxu0 %v318
      %2245 = vmatpush1.msra.mxu0 %v317
      %2246 = vmatprep.subr.mxu0 %v314
      %2247 = vmatpush1.msra.mxu0 %v313
      %2248 = vmatprep.subr.mxu0 %v310
      %2249 = vmatpush1.msra.mxu0 %v309
      %2250 = vmatprep.subr.mxu0 %v306
      %2251 = vmatpush1.msra.mxu0 %v305
      %2252 = vmatprep.subr.mxu0 %v302
      %2253 = vmatpush1.msra.mxu0 %v301
      %2254 = vmatprep.subr.mxu0 %v298
      %2255 = vmatpush1.msra.mxu0 %v297
      %2256 = vmatprep.subr.mxu0 %v294
      %2257 = vmatpush1.msra.mxu0 %v293
      %2258 = vmatprep.subr.mxu0 %v290
      %2259 = vmatpush1.msra.mxu0 %v289
      %2260 = vmatprep.subr.mxu0 %v286
      %2261 = vmatpush1.msra.mxu0 %v285
      %2262 = vmatprep.subr.mxu0 %v282
      %2263 = vmatpush1.msra.mxu0 %v281
      %2264 = vmatprep.subr.mxu0 %v278
      %2265 = vmatpush1.msra.mxu0 %v277
      %2266 = vmatprep.subr.mxu0 %v274
      %2267 = vmatpush1.msra.mxu0 %v273
      %2268 = vmatprep.subr.mxu0 %v270
      %2269 = vmatpush1.msra.mxu0 %v269
      %2270 = vmatprep.subr.mxu0 %v266
      %2271 = vmatpush1.msra.mxu0 %v265
      %2272 = vmatprep.subr.mxu0 0.0
      %2273 = vmatpush2.msra.mxu0 0.0
      %2274 = vmatprep.subr.mxu0 0.0
      %2275 = vmatpush2.msra.mxu0 0.0
      %2276 = vmatprep.subr.mxu0 0.0
      %2277 = vmatpush2.msra.mxu0 0.0
      %2278 = vmatprep.subr.mxu0 0.0
      %2279 = vmatpush2.msra.mxu0 0.0
      %2280 = vmatprep.subr.mxu0 0.0
      %2281 = vmatpush2.msra.mxu0 0.0
      %2282 = vmatprep.subr.mxu0 0.0
      %2283 = vmatpush2.msra.mxu0 0.0
      %2284 = vmatprep.subr.mxu0 0.0
      %2285 = vmatpush2.msra.mxu0 0.0
      %2286 = vmatprep.subr.mxu0 0.0
      %2287 = vmatpush2.msra.mxu0 0.0
      %2288 = vmatprep.subr.mxu0 0.0
      %2289 = vmatpush2.msra.mxu0 0.0
      %2290 = vmatprep.subr.mxu0 0.0
      %2291 = vmatpush2.msra.mxu0 0.0
      %2292 = vmatprep.subr.mxu0 0.0
      %2293 = vmatpush2.msra.mxu0 0.0
      %2294 = vmatprep.subr.mxu0 0.0
      %2295 = vmatpush2.msra.mxu0 0.0
      %2296 = vmatprep.subr.mxu0 0.0
      %2297 = vmatpush2.msra.mxu0 0.0
      %2298 = vmatprep.subr.mxu0 0.0
      %2299 = vmatpush2.msra.mxu0 0.0
      %2300 = vmatprep.subr.mxu0 0.0
      %2301 = vmatpush2.msra.mxu0 0.0
      %2302 = vmatprep.subr.mxu0 0.0
      %2303 = vmatpush2.msra.mxu0 0.0
      %2304 = vmatprep.mubr.f32.mxu0 0.0
      %2305 = vmatmul.mubr.f32.gmra.mxu0 %v1984
      %v2306 = vpop.f32.mrf.mxu0
      %v2307 = vadd.f32 0.0, %v2306
      %v2308 = vpop.f32.mrf.mxu0
      %v2309 = vadd.f32 0.0, %v2308
      %2310 = vdwg.mxu0
      %v2311 = vadd.f32 %v2165, %v2236
      %v2312 = vadd.f32 %v2166, %v2238
      %v2313 = vadd.f32 %v2167, %v2307
      %v2314 = vadd.f32 %v2168, %v2309
      %v2315 = vxor.u32 %v2311, 2147483648
      %v2316 = vmul.f32 %v2315, 1.442695
      %v2317 = vpow.pop %v2316
      %v2318 = vadd.f32 %v2317, 1.0
      %v2319 = vrcp.pop %v2318
      %v2320 = vmul.f32 1.0, %v2319
      %v2321 = vxor.u32 %v2312, 2147483648
      %v2322 = vmul.f32 %v2321, 1.442695
      %v2323 = vpow.pop %v2322
      %v2324 = vadd.f32 %v2323, 1.0
      %v2325 = vrcp.pop %v2324
      %v2326 = vmul.f32 1.0, %v2325
      %v2327 = vtanh.pop %v2313
      %v2328 = vxor.u32 %v2314, 2147483648
      %v2329 = vmul.f32 %v2328, 1.442695
      %v2330 = vpow.pop %v2329
      %v2331 = vadd.f32 %v2330, 1.0
      %v2332 = vrcp.pop %v2331
      %v2333 = vmul.f32 1.0, %v2332
      %v2334 = vmul.f32 %v2326, %v1982
      %v2335 = vmul.f32 %v2320, %v2327
      %v2336 = vadd.f32 %v2334, %v2335
      %v2337 = vtanh.pop %v2336
      %v2338 = vmul.f32 %v2333, %v2337
      %s2339 = scalar_lea.vmem %s238, 64
      %v2340 = vld [vmem:[%s2339] sm:$0xff]
      %v2341 = vld [vmem:[%s2339 + $0x8] sm:$0xff]
      %v2342 = vld [vmem:[%s2339 + $0x10] sm:$0xff]
      %v2343 = vld [vmem:[%s2339 + $0x18] sm:$0xff]
      %2344 = vmatprep.subr.mxu0 %v389
      %2345 = vmatpush1.msra.mxu0 %v388
      %2346 = vmatprep.subr.mxu0 %v385
      %2347 = vmatpush1.msra.mxu0 %v384
      %2348 = vmatprep.subr.mxu0 %v381
      %2349 = vmatpush1.msra.mxu0 %v380
      %2350 = vmatprep.subr.mxu0 %v377
      %2351 = vmatpush1.msra.mxu0 %v376
      %2352 = vmatprep.subr.mxu0 %v373
      %2353 = vmatpush1.msra.mxu0 %v372
      %2354 = vmatprep.subr.mxu0 %v369
      %2355 = vmatpush1.msra.mxu0 %v368
      %2356 = vmatprep.subr.mxu0 %v365
      %2357 = vmatpush1.msra.mxu0 %v364
      %2358 = vmatprep.subr.mxu0 %v361
      %2359 = vmatpush1.msra.mxu0 %v360
      %2360 = vmatprep.subr.mxu0 %v357
      %2361 = vmatpush1.msra.mxu0 %v356
      %2362 = vmatprep.subr.mxu0 %v353
      %2363 = vmatpush1.msra.mxu0 %v352
      %2364 = vmatprep.subr.mxu0 %v349
      %2365 = vmatpush1.msra.mxu0 %v348
      %2366 = vmatprep.subr.mxu0 %v345
      %2367 = vmatpush1.msra.mxu0 %v344
      %2368 = vmatprep.subr.mxu0 %v341
      %2369 = vmatpush1.msra.mxu0 %v340
      %2370 = vmatprep.subr.mxu0 %v337
      %2371 = vmatpush1.msra.mxu0 %v336
      %2372 = vmatprep.subr.mxu0 %v333
      %2373 = vmatpush1.msra.mxu0 %v332
      %2374 = vmatprep.subr.mxu0 %v329
      %2375 = vmatpush1.msra.mxu0 %v328
      %2376 = vmatprep.subr.mxu0 0.0
      %2377 = vmatpush2.msra.mxu0 0.0
      %2378 = vmatprep.subr.mxu0 0.0
      %2379 = vmatpush2.msra.mxu0 0.0
      %2380 = vmatprep.subr.mxu0 0.0
      %2381 = vmatpush2.msra.mxu0 0.0
      %2382 = vmatprep.subr.mxu0 0.0
      %2383 = vmatpush2.msra.mxu0 0.0
      %2384 = vmatprep.subr.mxu0 0.0
      %2385 = vmatpush2.msra.mxu0 0.0
      %2386 = vmatprep.subr.mxu0 0.0
      %2387 = vmatpush2.msra.mxu0 0.0
      %2388 = vmatprep.subr.mxu0 0.0
      %2389 = vmatpush2.msra.mxu0 0.0
      %2390 = vmatprep.subr.mxu0 0.0
      %2391 = vmatpush2.msra.mxu0 0.0
      %2392 = vmatprep.subr.mxu0 0.0
      %2393 = vmatpush2.msra.mxu0 0.0
      %2394 = vmatprep.subr.mxu0 0.0
      %2395 = vmatpush2.msra.mxu0 0.0
      %2396 = vmatprep.subr.mxu0 0.0
      %2397 = vmatpush2.msra.mxu0 0.0
      %2398 = vmatprep.subr.mxu0 0.0
      %2399 = vmatpush2.msra.mxu0 0.0
      %2400 = vmatprep.subr.mxu0 0.0
      %2401 = vmatpush2.msra.mxu0 0.0
      %2402 = vmatprep.subr.mxu0 0.0
      %2403 = vmatpush2.msra.mxu0 0.0
      %2404 = vmatprep.subr.mxu0 0.0
      %2405 = vmatpush2.msra.mxu0 0.0
      %2406 = vmatprep.subr.mxu0 0.0
      %2407 = vmatpush2.msra.mxu0 0.0
      %2408 = vmatprep.mubr.f32.mxu0 0.0
      %2409 = vmatmul.mubr.f32.gmra.mxu0 %v2159
      %v2410 = vpop.f32.mrf.mxu0
      %v2411 = vadd.f32 0.0, %v2410
      %v2412 = vpop.f32.mrf.mxu0
      %v2413 = vadd.f32 0.0, %v2412
      %2414 = vdwg.mxu0
      %2415 = vmatprep.subr.mxu0 %v391
      %2416 = vmatpush1.msra.mxu0 %v390
      %2417 = vmatprep.subr.mxu0 %v387
      %2418 = vmatpush1.msra.mxu0 %v386
      %2419 = vmatprep.subr.mxu0 %v383
      %2420 = vmatpush1.msra.mxu0 %v382
      %2421 = vmatprep.subr.mxu0 %v379
      %2422 = vmatpush1.msra.mxu0 %v378
      %2423 = vmatprep.subr.mxu0 %v375
      %2424 = vmatpush1.msra.mxu0 %v374
      %2425 = vmatprep.subr.mxu0 %v371
      %2426 = vmatpush1.msra.mxu0 %v370
      %2427 = vmatprep.subr.mxu0 %v367
      %2428 = vmatpush1.msra.mxu0 %v366
      %2429 = vmatprep.subr.mxu0 %v363
      %2430 = vmatpush1.msra.mxu0 %v362
      %2431 = vmatprep.subr.mxu0 %v359
      %2432 = vmatpush1.msra.mxu0 %v358
      %2433 = vmatprep.subr.mxu0 %v355
      %2434 = vmatpush1.msra.mxu0 %v354
      %2435 = vmatprep.subr.mxu0 %v351
      %2436 = vmatpush1.msra.mxu0 %v350
      %2437 = vmatprep.subr.mxu0 %v347
      %2438 = vmatpush1.msra.mxu0 %v346
      %2439 = vmatprep.subr.mxu0 %v343
      %2440 = vmatpush1.msra.mxu0 %v342
      %2441 = vmatprep.subr.mxu0 %v339
      %2442 = vmatpush1.msra.mxu0 %v338
      %2443 = vmatprep.subr.mxu0 %v335
      %2444 = vmatpush1.msra.mxu0 %v334
      %2445 = vmatprep.subr.mxu0 %v331
      %2446 = vmatpush1.msra.mxu0 %v330
      %2447 = vmatprep.subr.mxu0 0.0
      %2448 = vmatpush2.msra.mxu0 0.0
      %2449 = vmatprep.subr.mxu0 0.0
      %2450 = vmatpush2.msra.mxu0 0.0
      %2451 = vmatprep.subr.mxu0 0.0
      %2452 = vmatpush2.msra.mxu0 0.0
      %2453 = vmatprep.subr.mxu0 0.0
      %2454 = vmatpush2.msra.mxu0 0.0
      %2455 = vmatprep.subr.mxu0 0.0
      %2456 = vmatpush2.msra.mxu0 0.0
      %2457 = vmatprep.subr.mxu0 0.0
      %2458 = vmatpush2.msra.mxu0 0.0
      %2459 = vmatprep.subr.mxu0 0.0
      %2460 = vmatpush2.msra.mxu0 0.0
      %2461 = vmatprep.subr.mxu0 0.0
      %2462 = vmatpush2.msra.mxu0 0.0
      %2463 = vmatprep.subr.mxu0 0.0
      %2464 = vmatpush2.msra.mxu0 0.0
      %2465 = vmatprep.subr.mxu0 0.0
      %2466 = vmatpush2.msra.mxu0 0.0
      %2467 = vmatprep.subr.mxu0 0.0
      %2468 = vmatpush2.msra.mxu0 0.0
      %2469 = vmatprep.subr.mxu0 0.0
      %2470 = vmatpush2.msra.mxu0 0.0
      %2471 = vmatprep.subr.mxu0 0.0
      %2472 = vmatpush2.msra.mxu0 0.0
      %2473 = vmatprep.subr.mxu0 0.0
      %2474 = vmatpush2.msra.mxu0 0.0
      %2475 = vmatprep.subr.mxu0 0.0
      %2476 = vmatpush2.msra.mxu0 0.0
      %2477 = vmatprep.subr.mxu0 0.0
      %2478 = vmatpush2.msra.mxu0 0.0
      %2479 = vmatprep.mubr.f32.mxu0 0.0
      %2480 = vmatmul.mubr.f32.gmra.mxu0 %v2159
      %v2481 = vpop.f32.mrf.mxu0
      %v2482 = vadd.f32 0.0, %v2481
      %v2483 = vpop.f32.mrf.mxu0
      %v2484 = vadd.f32 0.0, %v2483
      %2485 = vdwg.mxu0
      %v2486 = vadd.f32 %v2340, %v2411
      %v2487 = vadd.f32 %v2341, %v2413
      %v2488 = vadd.f32 %v2342, %v2482
      %v2489 = vadd.f32 %v2343, %v2484
      %v2490 = vxor.u32 %v2486, 2147483648
      %v2491 = vmul.f32 %v2490, 1.442695
      %v2492 = vpow.pop %v2491
      %v2493 = vadd.f32 %v2492, 1.0
      %v2494 = vrcp.pop %v2493
      %v2495 = vmul.f32 1.0, %v2494
      %v2496 = vxor.u32 %v2487, 2147483648
      %v2497 = vmul.f32 %v2496, 1.442695
      %v2498 = vpow.pop %v2497
      %v2499 = vadd.f32 %v2498, 1.0
      %v2500 = vrcp.pop %v2499
      %v2501 = vmul.f32 1.0, %v2500
      %v2502 = vtanh.pop %v2488
      %v2503 = vxor.u32 %v2489, 2147483648
      %v2504 = vmul.f32 %v2503, 1.442695
      %v2505 = vpow.pop %v2504
      %v2506 = vadd.f32 %v2505, 1.0
      %v2507 = vrcp.pop %v2506
      %v2508 = vmul.f32 1.0, %v2507
      %v2509 = vmul.f32 %v2501, %v2157
      %v2510 = vmul.f32 %v2495, %v2502
      %v2511 = vadd.f32 %v2509, %v2510
      %v2512 = vtanh.pop %v2511
      %v2513 = vmul.f32 %v2508, %v2512
      %s2514 = scalar_lea.vmem %s245, 40
      %2515 = vst [vmem:[%s2514] sm:$0xff] %v2338
      %s2516 = scalar_lea.vmem %s252, 16
      %2517 = vst [vmem:[%s2516] sm:$0xff] %v2513
      %s2518 = scalar_lea.vmem %s230, 192
      %v2519 = vld [vmem:[%s2518] sm:$0xff]
      %v2520 = vld [vmem:[%s2518 + $0x8] sm:$0xff]
      %v2521 = vld [vmem:[%s2518 + $0x10] sm:$0xff]
      %v2522 = vld [vmem:[%s2518 + $0x18] sm:$0xff]
      %2523 = vmatprep.subr.mxu0 %v324
      %2524 = vmatpush1.msra.mxu0 %v323
      %2525 = vmatprep.subr.mxu0 %v320
      %2526 = vmatpush1.msra.mxu0 %v319
      %2527 = vmatprep.subr.mxu0 %v316
      %2528 = vmatpush1.msra.mxu0 %v315
      %2529 = vmatprep.subr.mxu0 %v312
      %2530 = vmatpush1.msra.mxu0 %v311
      %2531 = vmatprep.subr.mxu0 %v308
      %2532 = vmatpush1.msra.mxu0 %v307
      %2533 = vmatprep.subr.mxu0 %v304
      %2534 = vmatpush1.msra.mxu0 %v303
      %2535 = vmatprep.subr.mxu0 %v300
      %2536 = vmatpush1.msra.mxu0 %v299
      %2537 = vmatprep.subr.mxu0 %v296
      %2538 = vmatpush1.msra.mxu0 %v295
      %2539 = vmatprep.subr.mxu0 %v292
      %2540 = vmatpush1.msra.mxu0 %v291
      %2541 = vmatprep.subr.mxu0 %v288
      %2542 = vmatpush1.msra.mxu0 %v287
      %2543 = vmatprep.subr.mxu0 %v284
      %2544 = vmatpush1.msra.mxu0 %v283
      %2545 = vmatprep.subr.mxu0 %v280
      %2546 = vmatpush1.msra.mxu0 %v279
      %2547 = vmatprep.subr.mxu0 %v276
      %2548 = vmatpush1.msra.mxu0 %v275
      %2549 = vmatprep.subr.mxu0 %v272
      %2550 = vmatpush1.msra.mxu0 %v271
      %2551 = vmatprep.subr.mxu0 %v268
      %2552 = vmatpush1.msra.mxu0 %v267
      %2553 = vmatprep.subr.mxu0 %v264
      %2554 = vmatpush1.msra.mxu0 %v263
      %2555 = vmatprep.subr.mxu0 0.0
      %2556 = vmatpush2.msra.mxu0 0.0
      %2557 = vmatprep.subr.mxu0 0.0
      %2558 = vmatpush2.msra.mxu0 0.0
      %2559 = vmatprep.subr.mxu0 0.0
      %2560 = vmatpush2.msra.mxu0 0.0
      %2561 = vmatprep.subr.mxu0 0.0
      %2562 = vmatpush2.msra.mxu0 0.0
      %2563 = vmatprep.subr.mxu0 0.0
      %2564 = vmatpush2.msra.mxu0 0.0
      %2565 = vmatprep.subr.mxu0 0.0
      %2566 = vmatpush2.msra.mxu0 0.0
      %2567 = vmatprep.subr.mxu0 0.0
      %2568 = vmatpush2.msra.mxu0 0.0
      %2569 = vmatprep.subr.mxu0 0.0
      %2570 = vmatpush2.msra.mxu0 0.0
      %2571 = vmatprep.subr.mxu0 0.0
      %2572 = vmatpush2.msra.mxu0 0.0
      %2573 = vmatprep.subr.mxu0 0.0
      %2574 = vmatpush2.msra.mxu0 0.0
      %2575 = vmatprep.subr.mxu0 0.0
      %2576 = vmatpush2.msra.mxu0 0.0
      %2577 = vmatprep.subr.mxu0 0.0
      %2578 = vmatpush2.msra.mxu0 0.0
      %2579 = vmatprep.subr.mxu0 0.0
      %2580 = vmatpush2.msra.mxu0 0.0
      %2581 = vmatprep.subr.mxu0 0.0
      %2582 = vmatpush2.msra.mxu0 0.0
      %2583 = vmatprep.subr.mxu0 0.0
      %2584 = vmatpush2.msra.mxu0 0.0
      %2585 = vmatprep.subr.mxu0 0.0
      %2586 = vmatpush2.msra.mxu0 0.0
      %2587 = vmatprep.mubr.f32.mxu0 0.0
      %2588 = vmatmul.mubr.f32.gmra.mxu0 %v2338
      %v2589 = vpop.f32.mrf.mxu0
      %v2590 = vadd.f32 0.0, %v2589
      %v2591 = vpop.f32.mrf.mxu0
      %v2592 = vadd.f32 0.0, %v2591
      %2593 = vdwg.mxu0
      %2594 = vmatprep.subr.mxu0 %v326
      %2595 = vmatpush1.msra.mxu0 %v325
      %2596 = vmatprep.subr.mxu0 %v322
      %2597 = vmatpush1.msra.mxu0 %v321
      %2598 = vmatprep.subr.mxu0 %v318
      %2599 = vmatpush1.msra.mxu0 %v317
      %2600 = vmatprep.subr.mxu0 %v314
      %2601 = vmatpush1.msra.mxu0 %v313
      %2602 = vmatprep.subr.mxu0 %v310
      %2603 = vmatpush1.msra.mxu0 %v309
      %2604 = vmatprep.subr.mxu0 %v306
      %2605 = vmatpush1.msra.mxu0 %v305
      %2606 = vmatprep.subr.mxu0 %v302
      %2607 = vmatpush1.msra.mxu0 %v301
      %2608 = vmatprep.subr.mxu0 %v298
      %2609 = vmatpush1.msra.mxu0 %v297
      %2610 = vmatprep.subr.mxu0 %v294
      %2611 = vmatpush1.msra.mxu0 %v293
      %2612 = vmatprep.subr.mxu0 %v290
      %2613 = vmatpush1.msra.mxu0 %v289
      %2614 = vmatprep.subr.mxu0 %v286
      %2615 = vmatpush1.msra.mxu0 %v285
      %2616 = vmatprep.subr.mxu0 %v282
      %2617 = vmatpush1.msra.mxu0 %v281
      %2618 = vmatprep.subr.mxu0 %v278
      %2619 = vmatpush1.msra.mxu0 %v277
      %2620 = vmatprep.subr.mxu0 %v274
      %2621 = vmatpush1.msra.mxu0 %v273
      %2622 = vmatprep.subr.mxu0 %v270
      %2623 = vmatpush1.msra.mxu0 %v269
      %2624 = vmatprep.subr.mxu0 %v266
      %2625 = vmatpush1.msra.mxu0 %v265
      %2626 = vmatprep.subr.mxu0 0.0
      %2627 = vmatpush2.msra.mxu0 0.0
      %2628 = vmatprep.subr.mxu0 0.0
      %2629 = vmatpush2.msra.mxu0 0.0
      %2630 = vmatprep.subr.mxu0 0.0
      %2631 = vmatpush2.msra.mxu0 0.0
      %2632 = vmatprep.subr.mxu0 0.0
      %2633 = vmatpush2.msra.mxu0 0.0
      %2634 = vmatprep.subr.mxu0 0.0
      %2635 = vmatpush2.msra.mxu0 0.0
      %2636 = vmatprep.subr.mxu0 0.0
      %2637 = vmatpush2.msra.mxu0 0.0
      %2638 = vmatprep.subr.mxu0 0.0
      %2639 = vmatpush2.msra.mxu0 0.0
      %2640 = vmatprep.subr.mxu0 0.0
      %2641 = vmatpush2.msra.mxu0 0.0
      %2642 = vmatprep.subr.mxu0 0.0
      %2643 = vmatpush2.msra.mxu0 0.0
      %2644 = vmatprep.subr.mxu0 0.0
      %2645 = vmatpush2.msra.mxu0 0.0
      %2646 = vmatprep.subr.mxu0 0.0
      %2647 = vmatpush2.msra.mxu0 0.0
      %2648 = vmatprep.subr.mxu0 0.0
      %2649 = vmatpush2.msra.mxu0 0.0
      %2650 = vmatprep.subr.mxu0 0.0
      %2651 = vmatpush2.msra.mxu0 0.0
      %2652 = vmatprep.subr.mxu0 0.0
      %2653 = vmatpush2.msra.mxu0 0.0
      %2654 = vmatprep.subr.mxu0 0.0
      %2655 = vmatpush2.msra.mxu0 0.0
      %2656 = vmatprep.subr.mxu0 0.0
      %2657 = vmatpush2.msra.mxu0 0.0
      %2658 = vmatprep.mubr.f32.mxu0 0.0
      %2659 = vmatmul.mubr.f32.gmra.mxu0 %v2338
      %v2660 = vpop.f32.mrf.mxu0
      %v2661 = vadd.f32 0.0, %v2660
      %v2662 = vpop.f32.mrf.mxu0
      %v2663 = vadd.f32 0.0, %v2662
      %2664 = vdwg.mxu0
      %v2665 = vadd.f32 %v2519, %v2590
      %v2666 = vadd.f32 %v2520, %v2592
      %v2667 = vadd.f32 %v2521, %v2661
      %v2668 = vadd.f32 %v2522, %v2663
      %v2669 = vxor.u32 %v2665, 2147483648
      %v2670 = vmul.f32 %v2669, 1.442695
      %v2671 = vpow.pop %v2670
      %v2672 = vadd.f32 %v2671, 1.0
      %v2673 = vrcp.pop %v2672
      %v2674 = vmul.f32 1.0, %v2673
      %v2675 = vxor.u32 %v2666, 2147483648
      %v2676 = vmul.f32 %v2675, 1.442695
      %v2677 = vpow.pop %v2676
      %v2678 = vadd.f32 %v2677, 1.0
      %v2679 = vrcp.pop %v2678
      %v2680 = vmul.f32 1.0, %v2679
      %v2681 = vtanh.pop %v2667
      %v2682 = vxor.u32 %v2668, 2147483648
      %v2683 = vmul.f32 %v2682, 1.442695
      %v2684 = vpow.pop %v2683
      %v2685 = vadd.f32 %v2684, 1.0
      %v2686 = vrcp.pop %v2685
      %v2687 = vmul.f32 1.0, %v2686
      %v2688 = vmul.f32 %v2680, %v2336
      %v2689 = vmul.f32 %v2674, %v2681
      %v2690 = vadd.f32 %v2688, %v2689
      %v2691 = vtanh.pop %v2690
      %v2692 = vmul.f32 %v2687, %v2691
      %s2693 = scalar_lea.vmem %s238, 32
      %v2694 = vld [vmem:[%s2693] sm:$0xff]
      %v2695 = vld [vmem:[%s2693 + $0x8] sm:$0xff]
      %v2696 = vld [vmem:[%s2693 + $0x10] sm:$0xff]
      %v2697 = vld [vmem:[%s2693 + $0x18] sm:$0xff]
      %2698 = vmatprep.subr.mxu0 %v389
      %2699 = vmatpush1.msra.mxu0 %v388
      %2700 = vmatprep.subr.mxu0 %v385
      %2701 = vmatpush1.msra.mxu0 %v384
      %2702 = vmatprep.subr.mxu0 %v381
      %2703 = vmatpush1.msra.mxu0 %v380
      %2704 = vmatprep.subr.mxu0 %v377
      %2705 = vmatpush1.msra.mxu0 %v376
      %2706 = vmatprep.subr.mxu0 %v373
      %2707 = vmatpush1.msra.mxu0 %v372
      %2708 = vmatprep.subr.mxu0 %v369
      %2709 = vmatpush1.msra.mxu0 %v368
      %2710 = vmatprep.subr.mxu0 %v365
      %2711 = vmatpush1.msra.mxu0 %v364
      %2712 = vmatprep.subr.mxu0 %v361
      %2713 = vmatpush1.msra.mxu0 %v360
      %2714 = vmatprep.subr.mxu0 %v357
      %2715 = vmatpush1.msra.mxu0 %v356
      %2716 = vmatprep.subr.mxu0 %v353
      %2717 = vmatpush1.msra.mxu0 %v352
      %2718 = vmatprep.subr.mxu0 %v349
      %2719 = vmatpush1.msra.mxu0 %v348
      %2720 = vmatprep.subr.mxu0 %v345
      %2721 = vmatpush1.msra.mxu0 %v344
      %2722 = vmatprep.subr.mxu0 %v341
      %2723 = vmatpush1.msra.mxu0 %v340
      %2724 = vmatprep.subr.mxu0 %v337
      %2725 = vmatpush1.msra.mxu0 %v336
      %2726 = vmatprep.subr.mxu0 %v333
      %2727 = vmatpush1.msra.mxu0 %v332
      %2728 = vmatprep.subr.mxu0 %v329
      %2729 = vmatpush1.msra.mxu0 %v328
      %2730 = vmatprep.subr.mxu0 0.0
      %2731 = vmatpush2.msra.mxu0 0.0
      %2732 = vmatprep.subr.mxu0 0.0
      %2733 = vmatpush2.msra.mxu0 0.0
      %2734 = vmatprep.subr.mxu0 0.0
      %2735 = vmatpush2.msra.mxu0 0.0
      %2736 = vmatprep.subr.mxu0 0.0
      %2737 = vmatpush2.msra.mxu0 0.0
      %2738 = vmatprep.subr.mxu0 0.0
      %2739 = vmatpush2.msra.mxu0 0.0
      %2740 = vmatprep.subr.mxu0 0.0
      %2741 = vmatpush2.msra.mxu0 0.0
      %2742 = vmatprep.subr.mxu0 0.0
      %2743 = vmatpush2.msra.mxu0 0.0
      %2744 = vmatprep.subr.mxu0 0.0
      %2745 = vmatpush2.msra.mxu0 0.0
      %2746 = vmatprep.subr.mxu0 0.0
      %2747 = vmatpush2.msra.mxu0 0.0
      %2748 = vmatprep.subr.mxu0 0.0
      %2749 = vmatpush2.msra.mxu0 0.0
      %2750 = vmatprep.subr.mxu0 0.0
      %2751 = vmatpush2.msra.mxu0 0.0
      %2752 = vmatprep.subr.mxu0 0.0
      %2753 = vmatpush2.msra.mxu0 0.0
      %2754 = vmatprep.subr.mxu0 0.0
      %2755 = vmatpush2.msra.mxu0 0.0
      %2756 = vmatprep.subr.mxu0 0.0
      %2757 = vmatpush2.msra.mxu0 0.0
      %2758 = vmatprep.subr.mxu0 0.0
      %2759 = vmatpush2.msra.mxu0 0.0
      %2760 = vmatprep.subr.mxu0 0.0
      %2761 = vmatpush2.msra.mxu0 0.0
      %2762 = vmatprep.mubr.f32.mxu0 0.0
      %2763 = vmatmul.mubr.f32.gmra.mxu0 %v2513
      %v2764 = vpop.f32.mrf.mxu0
      %v2765 = vadd.f32 0.0, %v2764
      %v2766 = vpop.f32.mrf.mxu0
      %v2767 = vadd.f32 0.0, %v2766
      %2768 = vdwg.mxu0
      %2769 = vmatprep.subr.mxu0 %v391
      %2770 = vmatpush1.msra.mxu0 %v390
      %2771 = vmatprep.subr.mxu0 %v387
      %2772 = vmatpush1.msra.mxu0 %v386
      %2773 = vmatprep.subr.mxu0 %v383
      %2774 = vmatpush1.msra.mxu0 %v382
      %2775 = vmatprep.subr.mxu0 %v379
      %2776 = vmatpush1.msra.mxu0 %v378
      %2777 = vmatprep.subr.mxu0 %v375
      %2778 = vmatpush1.msra.mxu0 %v374
      %2779 = vmatprep.subr.mxu0 %v371
      %2780 = vmatpush1.msra.mxu0 %v370
      %2781 = vmatprep.subr.mxu0 %v367
      %2782 = vmatpush1.msra.mxu0 %v366
      %2783 = vmatprep.subr.mxu0 %v363
      %2784 = vmatpush1.msra.mxu0 %v362
      %2785 = vmatprep.subr.mxu0 %v359
      %2786 = vmatpush1.msra.mxu0 %v358
      %2787 = vmatprep.subr.mxu0 %v355
      %2788 = vmatpush1.msra.mxu0 %v354
      %2789 = vmatprep.subr.mxu0 %v351
      %2790 = vmatpush1.msra.mxu0 %v350
      %2791 = vmatprep.subr.mxu0 %v347
      %2792 = vmatpush1.msra.mxu0 %v346
      %2793 = vmatprep.subr.mxu0 %v343
      %2794 = vmatpush1.msra.mxu0 %v342
      %2795 = vmatprep.subr.mxu0 %v339
      %2796 = vmatpush1.msra.mxu0 %v338
      %2797 = vmatprep.subr.mxu0 %v335
      %2798 = vmatpush1.msra.mxu0 %v334
      %2799 = vmatprep.subr.mxu0 %v331
      %2800 = vmatpush1.msra.mxu0 %v330
      %2801 = vmatprep.subr.mxu0 0.0
      %2802 = vmatpush2.msra.mxu0 0.0
      %2803 = vmatprep.subr.mxu0 0.0
      %2804 = vmatpush2.msra.mxu0 0.0
      %2805 = vmatprep.subr.mxu0 0.0
      %2806 = vmatpush2.msra.mxu0 0.0
      %2807 = vmatprep.subr.mxu0 0.0
      %2808 = vmatpush2.msra.mxu0 0.0
      %2809 = vmatprep.subr.mxu0 0.0
      %2810 = vmatpush2.msra.mxu0 0.0
      %2811 = vmatprep.subr.mxu0 0.0
      %2812 = vmatpush2.msra.mxu0 0.0
      %2813 = vmatprep.subr.mxu0 0.0
      %2814 = vmatpush2.msra.mxu0 0.0
      %2815 = vmatprep.subr.mxu0 0.0
      %2816 = vmatpush2.msra.mxu0 0.0
      %2817 = vmatprep.subr.mxu0 0.0
      %2818 = vmatpush2.msra.mxu0 0.0
      %2819 = vmatprep.subr.mxu0 0.0
      %2820 = vmatpush2.msra.mxu0 0.0
      %2821 = vmatprep.subr.mxu0 0.0
      %2822 = vmatpush2.msra.mxu0 0.0
      %2823 = vmatprep.subr.mxu0 0.0
      %2824 = vmatpush2.msra.mxu0 0.0
      %2825 = vmatprep.subr.mxu0 0.0
      %2826 = vmatpush2.msra.mxu0 0.0
      %2827 = vmatprep.subr.mxu0 0.0
      %2828 = vmatpush2.msra.mxu0 0.0
      %2829 = vmatprep.subr.mxu0 0.0
      %2830 = vmatpush2.msra.mxu0 0.0
      %2831 = vmatprep.subr.mxu0 0.0
      %2832 = vmatpush2.msra.mxu0 0.0
      %2833 = vmatprep.mubr.f32.mxu0 0.0
      %2834 = vmatmul.mubr.f32.gmra.mxu0 %v2513
      %v2835 = vpop.f32.mrf.mxu0
      %v2836 = vadd.f32 0.0, %v2835
      %v2837 = vpop.f32.mrf.mxu0
      %v2838 = vadd.f32 0.0, %v2837
      %2839 = vdwg.mxu0
      %v2840 = vadd.f32 %v2694, %v2765
      %v2841 = vadd.f32 %v2695, %v2767
      %v2842 = vadd.f32 %v2696, %v2836
      %v2843 = vadd.f32 %v2697, %v2838
      %v2844 = vxor.u32 %v2840, 2147483648
      %v2845 = vmul.f32 %v2844, 1.442695
      %v2846 = vpow.pop %v2845
      %v2847 = vadd.f32 %v2846, 1.0
      %v2848 = vrcp.pop %v2847
      %v2849 = vmul.f32 1.0, %v2848
      %v2850 = vxor.u32 %v2841, 2147483648
      %v2851 = vmul.f32 %v2850, 1.442695
      %v2852 = vpow.pop %v2851
      %v2853 = vadd.f32 %v2852, 1.0
      %v2854 = vrcp.pop %v2853
      %v2855 = vmul.f32 1.0, %v2854
      %v2856 = vtanh.pop %v2842
      %v2857 = vxor.u32 %v2843, 2147483648
      %v2858 = vmul.f32 %v2857, 1.442695
      %v2859 = vpow.pop %v2858
      %v2860 = vadd.f32 %v2859, 1.0
      %v2861 = vrcp.pop %v2860
      %v2862 = vmul.f32 1.0, %v2861
      %v2863 = vmul.f32 %v2855, %v2511
      %v2864 = vmul.f32 %v2849, %v2856
      %v2865 = vadd.f32 %v2863, %v2864
      %v2866 = vtanh.pop %v2865
      %v2867 = vmul.f32 %v2862, %v2866
      %s2868 = scalar_lea.vmem %s245, 48
      %2869 = vst [vmem:[%s2868] sm:$0xff] %v2692
      %s2870 = scalar_lea.vmem %s252, 8
      %2871 = vst [vmem:[%s2870] sm:$0xff] %v2867
      %s2872 = scalar_lea.vmem %s230, 224
      %v2873 = vld [vmem:[%s2872] sm:$0xff]
      %v2874 = vld [vmem:[%s2872 + $0x8] sm:$0xff]
      %v2875 = vld [vmem:[%s2872 + $0x10] sm:$0xff]
      %v2876 = vld [vmem:[%s2872 + $0x18] sm:$0xff]
      %2877 = vmatprep.subr.mxu0 %v324
      %2878 = vmatpush1.msra.mxu0 %v323
      %2879 = vmatprep.subr.mxu0 %v320
      %2880 = vmatpush1.msra.mxu0 %v319
      %2881 = vmatprep.subr.mxu0 %v316
      %2882 = vmatpush1.msra.mxu0 %v315
      %2883 = vmatprep.subr.mxu0 %v312
      %2884 = vmatpush1.msra.mxu0 %v311
      %2885 = vmatprep.subr.mxu0 %v308
      %2886 = vmatpush1.msra.mxu0 %v307
      %2887 = vmatprep.subr.mxu0 %v304
      %2888 = vmatpush1.msra.mxu0 %v303
      %2889 = vmatprep.subr.mxu0 %v300
      %2890 = vmatpush1.msra.mxu0 %v299
      %2891 = vmatprep.subr.mxu0 %v296
      %2892 = vmatpush1.msra.mxu0 %v295
      %2893 = vmatprep.subr.mxu0 %v292
      %2894 = vmatpush1.msra.mxu0 %v291
      %2895 = vmatprep.subr.mxu0 %v288
      %2896 = vmatpush1.msra.mxu0 %v287
      %2897 = vmatprep.subr.mxu0 %v284
      %2898 = vmatpush1.msra.mxu0 %v283
      %2899 = vmatprep.subr.mxu0 %v280
      %2900 = vmatpush1.msra.mxu0 %v279
      %2901 = vmatprep.subr.mxu0 %v276
      %2902 = vmatpush1.msra.mxu0 %v275
      %2903 = vmatprep.subr.mxu0 %v272
      %2904 = vmatpush1.msra.mxu0 %v271
      %2905 = vmatprep.subr.mxu0 %v268
      %2906 = vmatpush1.msra.mxu0 %v267
      %2907 = vmatprep.subr.mxu0 %v264
      %2908 = vmatpush1.msra.mxu0 %v263
      %2909 = vmatprep.subr.mxu0 0.0
      %2910 = vmatpush2.msra.mxu0 0.0
      %2911 = vmatprep.subr.mxu0 0.0
      %2912 = vmatpush2.msra.mxu0 0.0
      %2913 = vmatprep.subr.mxu0 0.0
      %2914 = vmatpush2.msra.mxu0 0.0
      %2915 = vmatprep.subr.mxu0 0.0
      %2916 = vmatpush2.msra.mxu0 0.0
      %2917 = vmatprep.subr.mxu0 0.0
      %2918 = vmatpush2.msra.mxu0 0.0
      %2919 = vmatprep.subr.mxu0 0.0
      %2920 = vmatpush2.msra.mxu0 0.0
      %2921 = vmatprep.subr.mxu0 0.0
      %2922 = vmatpush2.msra.mxu0 0.0
      %2923 = vmatprep.subr.mxu0 0.0
      %2924 = vmatpush2.msra.mxu0 0.0
      %2925 = vmatprep.subr.mxu0 0.0
      %2926 = vmatpush2.msra.mxu0 0.0
      %2927 = vmatprep.subr.mxu0 0.0
      %2928 = vmatpush2.msra.mxu0 0.0
      %2929 = vmatprep.subr.mxu0 0.0
      %2930 = vmatpush2.msra.mxu0 0.0
      %2931 = vmatprep.subr.mxu0 0.0
      %2932 = vmatpush2.msra.mxu0 0.0
      %2933 = vmatprep.subr.mxu0 0.0
      %2934 = vmatpush2.msra.mxu0 0.0
      %2935 = vmatprep.subr.mxu0 0.0
      %2936 = vmatpush2.msra.mxu0 0.0
      %2937 = vmatprep.subr.mxu0 0.0
      %2938 = vmatpush2.msra.mxu0 0.0
      %2939 = vmatprep.subr.mxu0 0.0
      %2940 = vmatpush2.msra.mxu0 0.0
      %2941 = vmatprep.mubr.f32.mxu0 0.0
      %2942 = vmatmul.mubr.f32.gmra.mxu0 %v2692
      %v2943 = vpop.f32.mrf.mxu0
      %v2944 = vadd.f32 0.0, %v2943
      %v2945 = vpop.f32.mrf.mxu0
      %v2946 = vadd.f32 0.0, %v2945
      %2947 = vdwg.mxu0
      %2948 = vmatprep.subr.mxu0 %v326
      %2949 = vmatpush1.msra.mxu0 %v325
      %2950 = vmatprep.subr.mxu0 %v322
      %2951 = vmatpush1.msra.mxu0 %v321
      %2952 = vmatprep.subr.mxu0 %v318
      %2953 = vmatpush1.msra.mxu0 %v317
      %2954 = vmatprep.subr.mxu0 %v314
      %2955 = vmatpush1.msra.mxu0 %v313
      %2956 = vmatprep.subr.mxu0 %v310
      %2957 = vmatpush1.msra.mxu0 %v309
      %2958 = vmatprep.subr.mxu0 %v306
      %2959 = vmatpush1.msra.mxu0 %v305
      %2960 = vmatprep.subr.mxu0 %v302
      %2961 = vmatpush1.msra.mxu0 %v301
      %2962 = vmatprep.subr.mxu0 %v298
      %2963 = vmatpush1.msra.mxu0 %v297
      %2964 = vmatprep.subr.mxu0 %v294
      %2965 = vmatpush1.msra.mxu0 %v293
      %2966 = vmatprep.subr.mxu0 %v290
      %2967 = vmatpush1.msra.mxu0 %v289
      %2968 = vmatprep.subr.mxu0 %v286
      %2969 = vmatpush1.msra.mxu0 %v285
      %2970 = vmatprep.subr.mxu0 %v282
      %2971 = vmatpush1.msra.mxu0 %v281
      %2972 = vmatprep.subr.mxu0 %v278
      %2973 = vmatpush1.msra.mxu0 %v277
      %2974 = vmatprep.subr.mxu0 %v274
      %2975 = vmatpush1.msra.mxu0 %v273
      %2976 = vmatprep.subr.mxu0 %v270
      %2977 = vmatpush1.msra.mxu0 %v269
      %2978 = vmatprep.subr.mxu0 %v266
      %2979 = vmatpush1.msra.mxu0 %v265
      %2980 = vmatprep.subr.mxu0 0.0
      %2981 = vmatpush2.msra.mxu0 0.0
      %2982 = vmatprep.subr.mxu0 0.0
      %2983 = vmatpush2.msra.mxu0 0.0
      %2984 = vmatprep.subr.mxu0 0.0
      %2985 = vmatpush2.msra.mxu0 0.0
      %2986 = vmatprep.subr.mxu0 0.0
      %2987 = vmatpush2.msra.mxu0 0.0
      %2988 = vmatprep.subr.mxu0 0.0
      %2989 = vmatpush2.msra.mxu0 0.0
      %2990 = vmatprep.subr.mxu0 0.0
      %2991 = vmatpush2.msra.mxu0 0.0
      %2992 = vmatprep.subr.mxu0 0.0
      %2993 = vmatpush2.msra.mxu0 0.0
      %2994 = vmatprep.subr.mxu0 0.0
      %2995 = vmatpush2.msra.mxu0 0.0
      %2996 = vmatprep.subr.mxu0 0.0
      %2997 = vmatpush2.msra.mxu0 0.0
      %2998 = vmatprep.subr.mxu0 0.0
      %2999 = vmatpush2.msra.mxu0 0.0
      %3000 = vmatprep.subr.mxu0 0.0
      %3001 = vmatpush2.msra.mxu0 0.0
      %3002 = vmatprep.subr.mxu0 0.0
      %3003 = vmatpush2.msra.mxu0 0.0
      %3004 = vmatprep.subr.mxu0 0.0
      %3005 = vmatpush2.msra.mxu0 0.0
      %3006 = vmatprep.subr.mxu0 0.0
      %3007 = vmatpush2.msra.mxu0 0.0
      %3008 = vmatprep.subr.mxu0 0.0
      %3009 = vmatpush2.msra.mxu0 0.0
      %3010 = vmatprep.subr.mxu0 0.0
      %3011 = vmatpush2.msra.mxu0 0.0
      %3012 = vmatprep.mubr.f32.mxu0 0.0
      %3013 = vmatmul.mubr.f32.gmra.mxu0 %v2692
      %v3014 = vpop.f32.mrf.mxu0
      %v3015 = vadd.f32 0.0, %v3014
      %v3016 = vpop.f32.mrf.mxu0
      %v3017 = vadd.f32 0.0, %v3016
      %3018 = vdwg.mxu0
      %v3019 = vadd.f32 %v2873, %v2944
      %v3020 = vadd.f32 %v2874, %v2946
      %v3021 = vadd.f32 %v2875, %v3015
      %v3022 = vadd.f32 %v2876, %v3017
      %v3023 = vxor.u32 %v3019, 2147483648
      %v3024 = vmul.f32 %v3023, 1.442695
      %v3025 = vpow.pop %v3024
      %v3026 = vadd.f32 %v3025, 1.0
      %v3027 = vrcp.pop %v3026
      %v3028 = vmul.f32 1.0, %v3027
      %v3029 = vxor.u32 %v3020, 2147483648
      %v3030 = vmul.f32 %v3029, 1.442695
      %v3031 = vpow.pop %v3030
      %v3032 = vadd.f32 %v3031, 1.0
      %v3033 = vrcp.pop %v3032
      %v3034 = vmul.f32 1.0, %v3033
      %v3035 = vtanh.pop %v3021
      %v3036 = vxor.u32 %v3022, 2147483648
      %v3037 = vmul.f32 %v3036, 1.442695
      %v3038 = vpow.pop %v3037
      %v3039 = vadd.f32 %v3038, 1.0
      %v3040 = vrcp.pop %v3039
      %v3041 = vmul.f32 1.0, %v3040
      %v3042 = vmul.f32 %v3034, %v2690
      %v3043 = vmul.f32 %v3028, %v3035
      %v3044 = vadd.f32 %v3042, %v3043
      %v3045 = vtanh.pop %v3044
      %v3046 = vmul.f32 %v3041, %v3045
      %v3047 = vld [vmem:[%s238] sm:$0xff]
      %v3048 = vld [vmem:[%s238 + $0x8] sm:$0xff]
      %v3049 = vld [vmem:[%s238 + $0x10] sm:$0xff]
      %v3050 = vld [vmem:[%s238 + $0x18] sm:$0xff]
      %3051 = vmatprep.subr.mxu0 %v389
      %3052 = vmatpush1.msra.mxu0 %v388
      %3053 = vmatprep.subr.mxu0 %v385
      %3054 = vmatpush1.msra.mxu0 %v384
      %3055 = vmatprep.subr.mxu0 %v381
      %3056 = vmatpush1.msra.mxu0 %v380
      %3057 = vmatprep.subr.mxu0 %v377
      %3058 = vmatpush1.msra.mxu0 %v376
      %3059 = vmatprep.subr.mxu0 %v373
      %3060 = vmatpush1.msra.mxu0 %v372
      %3061 = vmatprep.subr.mxu0 %v369
      %3062 = vmatpush1.msra.mxu0 %v368
      %3063 = vmatprep.subr.mxu0 %v365
      %3064 = vmatpush1.msra.mxu0 %v364
      %3065 = vmatprep.subr.mxu0 %v361
      %3066 = vmatpush1.msra.mxu0 %v360
      %3067 = vmatprep.subr.mxu0 %v357
      %3068 = vmatpush1.msra.mxu0 %v356
      %3069 = vmatprep.subr.mxu0 %v353
      %3070 = vmatpush1.msra.mxu0 %v352
      %3071 = vmatprep.subr.mxu0 %v349
      %3072 = vmatpush1.msra.mxu0 %v348
      %3073 = vmatprep.subr.mxu0 %v345
      %3074 = vmatpush1.msra.mxu0 %v344
      %3075 = vmatprep.subr.mxu0 %v341
      %3076 = vmatpush1.msra.mxu0 %v340
      %3077 = vmatprep.subr.mxu0 %v337
      %3078 = vmatpush1.msra.mxu0 %v336
      %3079 = vmatprep.subr.mxu0 %v333
      %3080 = vmatpush1.msra.mxu0 %v332
      %3081 = vmatprep.subr.mxu0 %v329
      %3082 = vmatpush1.msra.mxu0 %v328
      %3083 = vmatprep.subr.mxu0 0.0
      %3084 = vmatpush2.msra.mxu0 0.0
      %3085 = vmatprep.subr.mxu0 0.0
      %3086 = vmatpush2.msra.mxu0 0.0
      %3087 = vmatprep.subr.mxu0 0.0
      %3088 = vmatpush2.msra.mxu0 0.0
      %3089 = vmatprep.subr.mxu0 0.0
      %3090 = vmatpush2.msra.mxu0 0.0
      %3091 = vmatprep.subr.mxu0 0.0
      %3092 = vmatpush2.msra.mxu0 0.0
      %3093 = vmatprep.subr.mxu0 0.0
      %3094 = vmatpush2.msra.mxu0 0.0
      %3095 = vmatprep.subr.mxu0 0.0
      %3096 = vmatpush2.msra.mxu0 0.0
      %3097 = vmatprep.subr.mxu0 0.0
      %3098 = vmatpush2.msra.mxu0 0.0
      %3099 = vmatprep.subr.mxu0 0.0
      %3100 = vmatpush2.msra.mxu0 0.0
      %3101 = vmatprep.subr.mxu0 0.0
      %3102 = vmatpush2.msra.mxu0 0.0
      %3103 = vmatprep.subr.mxu0 0.0
      %3104 = vmatpush2.msra.mxu0 0.0
      %3105 = vmatprep.subr.mxu0 0.0
      %3106 = vmatpush2.msra.mxu0 0.0
      %3107 = vmatprep.subr.mxu0 0.0
      %3108 = vmatpush2.msra.mxu0 0.0
      %3109 = vmatprep.subr.mxu0 0.0
      %3110 = vmatpush2.msra.mxu0 0.0
      %3111 = vmatprep.subr.mxu0 0.0
      %3112 = vmatpush2.msra.mxu0 0.0
      %3113 = vmatprep.subr.mxu0 0.0
      %3114 = vmatpush2.msra.mxu0 0.0
      %3115 = vmatprep.mubr.f32.mxu0 0.0
      %3116 = vmatmul.mubr.f32.gmra.mxu0 %v2867
      %v3117 = vpop.f32.mrf.mxu0
      %v3118 = vadd.f32 0.0, %v3117
      %v3119 = vpop.f32.mrf.mxu0
      %v3120 = vadd.f32 0.0, %v3119
      %3121 = vdwg.mxu0
      %3122 = vmatprep.subr.mxu0 %v391
      %3123 = vmatpush1.msra.mxu0 %v390
      %3124 = vmatprep.subr.mxu0 %v387
      %3125 = vmatpush1.msra.mxu0 %v386
      %3126 = vmatprep.subr.mxu0 %v383
      %3127 = vmatpush1.msra.mxu0 %v382
      %3128 = vmatprep.subr.mxu0 %v379
      %3129 = vmatpush1.msra.mxu0 %v378
      %3130 = vmatprep.subr.mxu0 %v375
      %3131 = vmatpush1.msra.mxu0 %v374
      %3132 = vmatprep.subr.mxu0 %v371
      %3133 = vmatpush1.msra.mxu0 %v370
      %3134 = vmatprep.subr.mxu0 %v367
      %3135 = vmatpush1.msra.mxu0 %v366
      %3136 = vmatprep.subr.mxu0 %v363
      %3137 = vmatpush1.msra.mxu0 %v362
      %3138 = vmatprep.subr.mxu0 %v359
      %3139 = vmatpush1.msra.mxu0 %v358
      %3140 = vmatprep.subr.mxu0 %v355
      %3141 = vmatpush1.msra.mxu0 %v354
      %3142 = vmatprep.subr.mxu0 %v351
      %3143 = vmatpush1.msra.mxu0 %v350
      %3144 = vmatprep.subr.mxu0 %v347
      %3145 = vmatpush1.msra.mxu0 %v346
      %3146 = vmatprep.subr.mxu0 %v343
      %3147 = vmatpush1.msra.mxu0 %v342
      %3148 = vmatprep.subr.mxu0 %v339
      %3149 = vmatpush1.msra.mxu0 %v338
      %3150 = vmatprep.subr.mxu0 %v335
      %3151 = vmatpush1.msra.mxu0 %v334
      %3152 = vmatprep.subr.mxu0 %v331
      %3153 = vmatpush1.msra.mxu0 %v330
      %3154 = vmatprep.subr.mxu0 0.0
      %3155 = vmatpush2.msra.mxu0 0.0
      %3156 = vmatprep.subr.mxu0 0.0
      %3157 = vmatpush2.msra.mxu0 0.0
      %3158 = vmatprep.subr.mxu0 0.0
      %3159 = vmatpush2.msra.mxu0 0.0
      %3160 = vmatprep.subr.mxu0 0.0
      %3161 = vmatpush2.msra.mxu0 0.0
      %3162 = vmatprep.subr.mxu0 0.0
      %3163 = vmatpush2.msra.mxu0 0.0
      %3164 = vmatprep.subr.mxu0 0.0
      %3165 = vmatpush2.msra.mxu0 0.0
      %3166 = vmatprep.subr.mxu0 0.0
      %3167 = vmatpush2.msra.mxu0 0.0
      %3168 = vmatprep.subr.mxu0 0.0
      %3169 = vmatpush2.msra.mxu0 0.0
      %3170 = vmatprep.subr.mxu0 0.0
      %3171 = vmatpush2.msra.mxu0 0.0
      %3172 = vmatprep.subr.mxu0 0.0
      %3173 = vmatpush2.msra.mxu0 0.0
      %3174 = vmatprep.subr.mxu0 0.0
      %3175 = vmatpush2.msra.mxu0 0.0
      %3176 = vmatprep.subr.mxu0 0.0
      %3177 = vmatpush2.msra.mxu0 0.0
      %3178 = vmatprep.subr.mxu0 0.0
      %3179 = vmatpush2.msra.mxu0 0.0
      %3180 = vmatprep.subr.mxu0 0.0
      %3181 = vmatpush2.msra.mxu0 0.0
      %3182 = vmatprep.subr.mxu0 0.0
      %3183 = vmatpush2.msra.mxu0 0.0
      %3184 = vmatprep.subr.mxu0 0.0
      %3185 = vmatpush2.msra.mxu0 0.0
      %3186 = vmatprep.mubr.f32.mxu0 0.0
      %3187 = vmatmul.mubr.f32.gmra.mxu0 %v2867
      %v3188 = vpop.f32.mrf.mxu0
      %v3189 = vadd.f32 0.0, %v3188
      %v3190 = vpop.f32.mrf.mxu0
      %v3191 = vadd.f32 0.0, %v3190
      %3192 = vdwg.mxu0
      %v3193 = vadd.f32 %v3047, %v3118
      %v3194 = vadd.f32 %v3048, %v3120
      %v3195 = vadd.f32 %v3049, %v3189
      %v3196 = vadd.f32 %v3050, %v3191
      %v3197 = vxor.u32 %v3193, 2147483648
      %v3198 = vmul.f32 %v3197, 1.442695
      %v3199 = vpow.pop %v3198
      %v3200 = vadd.f32 %v3199, 1.0
      %v3201 = vrcp.pop %v3200
      %v3202 = vmul.f32 1.0, %v3201
      %v3203 = vxor.u32 %v3194, 2147483648
      %v3204 = vmul.f32 %v3203, 1.442695
      %v3205 = vpow.pop %v3204
      %v3206 = vadd.f32 %v3205, 1.0
      %v3207 = vrcp.pop %v3206
      %v3208 = vmul.f32 1.0, %v3207
      %v3209 = vtanh.pop %v3195
      %v3210 = vxor.u32 %v3196, 2147483648
      %v3211 = vmul.f32 %v3210, 1.442695
      %v3212 = vpow.pop %v3211
      %v3213 = vadd.f32 %v3212, 1.0
      %v3214 = vrcp.pop %v3213
      %v3215 = vmul.f32 1.0, %v3214
      %v3216 = vmul.f32 %v3208, %v2865
      %v3217 = vmul.f32 %v3202, %v3209
      %v3218 = vadd.f32 %v3216, %v3217
      %v3219 = vtanh.pop %v3218
      %v3220 = vmul.f32 %v3215, %v3219
      %s3221 = scalar_lea.vmem %s245, 56
      %3222 = vst [vmem:[%s3221] sm:$0xff] %v3046
      %3223 = vst [vmem:[%s252] sm:$0xff] %v3220
      %3224 = vst [vmem:[#allocation2] sm:$0xff] %v3046
      %3225 = vst [vmem:[#allocation3] sm:$0xff] %v3044
      %3226 = vst [vmem:[#allocation4] sm:$0xff] %v3220
      %3227 = vst [vmem:[#allocation5] sm:$0xff] %v3218
      %s3228 = smul.u32 8, %s16
      %p3229 = scmp.lt.s32.totalorder %s3228, 15
      %s3230 = scalar_select %p3229, %s3228, 15
      %s3231 = smul.addr %s3230, 8
      %s3232 = scalar_lea.vmem %s3, %s3231
      %s3233 = ssub.s32 1, %s16
      %s3234 = smul.u32 8, %s3233
      %p3235 = scmp.lt.s32.totalorder %s3234, 15
      %s3236 = scalar_select %p3235, %s3234, 15
      %s3237 = smul.addr %s3236, 8
      %s3238 = scalar_lea.vmem %s4, %s3237
      // Predicated region
      $region37: #{seq_to_emb_forward.2} parent=31 // pred_check
        %p3239 = pneg %p109
      $region38: #{seq_to_emb_forward.2} parent=31 // pred_check_branch
        %3241 = sbr.rel (%p3239) target = $region40
      $region39: #{seq_to_emb_forward.2} parent=31 // pred_region
        %s3242 = smul.u32 8, %s16
      $region40: #{seq_to_emb_forward.2} parent=31 // pred_fallthru
        _
      // Predicated region
      $region41: #{seq_to_emb_forward.2} parent=31 // pred_check
        %p3243 = pneg %p137
      $region42: #{seq_to_emb_forward.2} parent=31 // pred_check_branch
        %3245 = sbr.rel (%p3243) target = $region44
      $region43: #{seq_to_emb_forward.2} parent=31 // pred_region
        %s3246 = ssub.s32 1, %s16
        %s3247 = smul.u32 8, %s3246
      $region44: #{seq_to_emb_forward.2} parent=31 // pred_fallthru
        _
    $region32: #{seq_to_emb_forward.2} parent=5 // pred_fallthru
      _
    %p3248 = scmp.le.s32.totalorder 2, %s11
    // Predicated region
    $region45: #{seq_to_emb_forward.2} parent=5 // pred_check
      %p3249 = pneg %p3248
    $region46: #{seq_to_emb_forward.2} parent=5 // pred_check_branch
      %3251 = sbr.rel (%p3249) target = $region48
    $region47: #{seq_to_emb_forward.2} parent=5 // pred_region
      %s3252 = ssub.s32 %s11, 2
      // Predicated region
      $region49: #{seq_to_emb_forward.2} parent=47 // pred_check
        %p3253 = pneg %p115
      $region50: #{seq_to_emb_forward.2} parent=47 // pred_check_branch
        %3255 = sbr.rel (%p3253) target = $region52
      $region51: #{seq_to_emb_forward.2} parent=47 // pred_region
        %s3256 = smul.u32 8, %s17
        %p3257 = scmp.lt.s32.totalorder %s3256, 15
        %s3258 = scalar_select %p3257, %s3256, 15
        %s3259 = smul.addr %s3258, 8
        %s3260 = scalar_lea.vmem %s3, %s3259
      $region52: #{seq_to_emb_forward.2} parent=47 // pred_fallthru
        _
      // Predicated region
      $region53: #{seq_to_emb_forward.2} parent=47 // pred_check
        %p3261 = pneg %p143
      $region54: #{seq_to_emb_forward.2} parent=47 // pred_check_branch
        %3263 = sbr.rel (%p3261) target = $region56
      $region55: #{seq_to_emb_forward.2} parent=47 // pred_region
        %s3264 = ssub.s32 1, %s17
        %s3265 = smul.u32 8, %s3264
        %p3266 = scmp.lt.s32.totalorder %s3265, 15
        %s3267 = scalar_select %p3266, %s3265, 15
        %s3268 = smul.addr %s3267, 8
        %s3269 = scalar_lea.vmem %s4, %s3268
      $region56: #{seq_to_emb_forward.2} parent=47 // pred_fallthru
        _
    $region48: #{seq_to_emb_forward.2} parent=5 // pred_fallthru
      _
  $region6: #{seq_to_emb_forward.2} parent=0 // loop_footer
    %s15 = sadd.s32 1, %s11
  $region7: #{seq_to_emb_forward.2} parent=0 // loop_footer_branch
    %10 = sbr.rel target = $region3
  $region8: #{seq_to_emb_forward.2} parent=0 // loop_exit
    _

// kernel: seq_to_emb_forward.3
$region0: #{seq_to_emb_forward.3}
  #allocation0 [shape = 'u32[]', space=smem, size = 0x4, offset = 0x4, fixed_abs, tag = 'smem constant byte address 0x4 - core index']
  #allocation1 [shape = 'u32[144,128]{1,0:T(1,128)}', space=vmem, size = 0x12000, scoped, tag = 'internal scratch']
  #allocation2 [shape = 'f32[8,128]{1,0:T(8,128)}', space=vmem, size = 0x1000, scoped, tag = 'scratch operand']
  #allocation3 [shape = 'f32[8,128]{1,0:T(8,128)}', space=vmem, size = 0x1000, scoped, tag = 'scratch operand']
  #allocation4 [shape = 'f32[8,128]{1,0:T(8,128)}', space=vmem, size = 0x1000, scoped, tag = 'scratch operand']
  #allocation5 [shape = 'f32[8,128]{1,0:T(8,128)}', space=vmem, size = 0x1000, scoped, tag = 'scratch operand']
  %s0 = inlined_call_operand.vmem [shape: f32[16,8,512], index: 0, kind: input, shape index: {}]
  %s1 = inlined_call_operand.vmem [shape: f32[16,8,512], index: 1, kind: input, shape index: {}]
  %s2 = inlined_call_operand.vmem [shape: f32[2,128,512], index: 2, kind: input, shape index: {}]
  %s3 = inlined_call_operand.vmem [shape: f32[8,256], index: 3, kind: output, shape index: {}]
  %s4 = sld [smem:[#allocation0]]
  $region53: #{seq_to_emb_forward.3} parent=0
    _
  %s6 = ssub.s32 1, %s4
  %s7 = scalar_select 0, %s6, %s4
  loop: start=0, step=1, limit=4
  $region2: #{seq_to_emb_forward.3} parent=0 // loop_pre_header
    _
  $region3: #{seq_to_emb_forward.3} parent=0 // loop_header
    %s9 = sphi 0, %s13
    %p10 = scmp.ge.s32.totalorder %s9, 4
    %s19 = sphi 0, %s21
    %s22 = sphi 0, %s19
    %s23 = sphi 0, %s22
    %s39 = sphi 0, %s23
    %s47 = sphi 0, %s49
    %s50 = sphi 0, %s47
    %s51 = sphi 0, %s50
    %s67 = sphi 0, %s51
    %s71 = sphi 0, %s71
    %s73 = sphi 0, %s71
    %s74 = sphi 0, %s73
    %s88 = sphi 0, %s74
    %s92 = sphi 0, %s92
    %s94 = sphi 0, %s92
    %s95 = sphi 0, %s94
    %s109 = sphi 0, %s95
  $region4: #{seq_to_emb_forward.3} parent=0 // loop_header_branch
    %12 = sbr.rel (%p10) target = $region8
  $region5: #{seq_to_emb_forward.3} parent=0 // loop_body
    %s14 = ssub.s32 %s9, 1
    %s15 = ssub.s32 %s9, 2
    %s16 = sadd.s32 %s9, 1
    %s17 = ssub.s32 %s9, %s16
    %p18 = scmp.eq.s32.totalorder %s17, 0
    %s20 = sadd.s32 %s19, 1
    %s21 = scalar_select %p18, %s19, %s20
    %p24 = pneg %p18
    %p25 = scmp.eq.s32.totalorder %s9, 1
    %p26 = por %p24, %p25
    %p27 = scmp.ne.s32.totalorder %s19, %s22
    %p28 = scmp.eq.s32.totalorder %s9, 0
    %p29 = por %p27, %p28
    %p30 = scmp.ne.s32.totalorder %s19, %s22
    %p31 = scmp.eq.s32.totalorder %s14, 1
    %p32 = por %p30, %p31
    %p33 = scmp.ne.s32.totalorder %s22, %s23
    %p34 = scmp.eq.s32.totalorder %s14, 0
    %p35 = por %p33, %p34
    %p36 = scmp.ne.s32.totalorder %s22, %s23
    %p37 = scmp.eq.s32.totalorder %s15, 1
    %p38 = por %p36, %p37
    %p40 = scmp.ne.s32.totalorder %s23, %s39
    %p41 = scmp.eq.s32.totalorder %s15, 0
    %p42 = por %p40, %p41
    %s43 = ssub.s32 1, %s9
    %s44 = ssub.s32 1, %s16
    %s45 = ssub.s32 %s43, %s44
    %p46 = scmp.eq.s32.totalorder %s45, 0
    %s48 = sadd.s32 %s47, 1
    %s49 = scalar_select %p46, %s47, %s48
    %p52 = pneg %p46
    %p53 = scmp.eq.s32.totalorder %s9, 1
    %p54 = por %p52, %p53
    %p55 = scmp.ne.s32.totalorder %s47, %s50
    %p56 = scmp.eq.s32.totalorder %s9, 0
    %p57 = por %p55, %p56
    %p58 = scmp.ne.s32.totalorder %s47, %s50
    %p59 = scmp.eq.s32.totalorder %s14, 1
    %p60 = por %p58, %p59
    %p61 = scmp.ne.s32.totalorder %s50, %s51
    %p62 = scmp.eq.s32.totalorder %s14, 0
    %p63 = por %p61, %p62
    %p64 = scmp.ne.s32.totalorder %s50, %s51
    %p65 = scmp.eq.s32.totalorder %s15, 1
    %p66 = por %p64, %p65
    %p68 = scmp.ne.s32.totalorder %s51, %s67
    %p69 = scmp.eq.s32.totalorder %s15, 0
    %p70 = por %p68, %p69
    %s72 = sadd.s32 %s71, 1
    %p75 = scmp.eq.s32.totalorder %s9, 1
    %p76 = scmp.ne.s32.totalorder %s71, %s73
    %p77 = scmp.eq.s32.totalorder %s9, 0
    %p78 = por %p76, %p77
    %p79 = scmp.ne.s32.totalorder %s71, %s73
    %p80 = scmp.eq.s32.totalorder %s14, 1
    %p81 = por %p79, %p80
    %p82 = scmp.ne.s32.totalorder %s73, %s74
    %p83 = scmp.eq.s32.totalorder %s14, 0
    %p84 = por %p82, %p83
    %p85 = scmp.ne.s32.totalorder %s73, %s74
    %p86 = scmp.eq.s32.totalorder %s15, 1
    %p87 = por %p85, %p86
    %p89 = scmp.ne.s32.totalorder %s74, %s88
    %p90 = scmp.eq.s32.totalorder %s15, 0
    %p91 = por %p89, %p90
    %s93 = sadd.s32 %s92, 1
    %p96 = scmp.eq.s32.totalorder %s9, 1
    %p97 = scmp.ne.s32.totalorder %s92, %s94
    %p98 = scmp.eq.s32.totalorder %s9, 0
    %p99 = por %p97, %p98
    %p100 = scmp.ne.s32.totalorder %s92, %s94
    %p101 = scmp.eq.s32.totalorder %s14, 1
    %p102 = por %p100, %p101
    %p103 = scmp.ne.s32.totalorder %s94, %s95
    %p104 = scmp.eq.s32.totalorder %s14, 0
    %p105 = por %p103, %p104
    %p106 = scmp.ne.s32.totalorder %s94, %s95
    %p107 = scmp.eq.s32.totalorder %s15, 1
    %p108 = por %p106, %p107
    %p110 = scmp.ne.s32.totalorder %s95, %s109
    %p111 = scmp.eq.s32.totalorder %s15, 0
    %p112 = por %p110, %p111
    %p113 = scmp.le.s32.totalorder 1, %s9
    %p114 = scmp.lt.s32.totalorder %s9, 3
    %p115 = pnand %p113, %p114
    %p116 = pneg %p115
    // Predicated region
    $region9: #{seq_to_emb_forward.3} parent=5 // pred_check
      _
    $region10: #{seq_to_emb_forward.3} parent=5 // pred_check_branch
      %118 = sbr.rel (%p115) target = $region12
    $region11: #{seq_to_emb_forward.3} parent=5 // pred_region
      %s119 = ssub.s32 %s9, 1
      // Predicated region
      $region13: #{seq_to_emb_forward.3} parent=11 // pred_check
        %p120 = pneg %p84
      $region14: #{seq_to_emb_forward.3} parent=11 // pred_check_branch
        %122 = sbr.rel (%p120) target = $region16
      $region15: #{seq_to_emb_forward.3} parent=11 // pred_region
        _
      $region16: #{seq_to_emb_forward.3} parent=11 // pred_fallthru
        _
    $region12: #{seq_to_emb_forward.3} parent=5 // pred_fallthru
      _
    %p123 = scmp.lt.s32.totalorder %s9, 2
    // Predicated region
    $region17: #{seq_to_emb_forward.3} parent=5 // pred_check
      %p124 = pneg %p123
    $region18: #{seq_to_emb_forward.3} parent=5 // pred_check_branch
      %126 = sbr.rel (%p124) target = $region20
    $region19: #{seq_to_emb_forward.3} parent=5 // pred_region
      // Predicated region
      $region21: #{seq_to_emb_forward.3} parent=19 // pred_check
        %p127 = pneg %p29
      $region22: #{seq_to_emb_forward.3} parent=19 // pred_check_branch
        %129 = sbr.rel (%p127) target = $region24
      $region23: #{seq_to_emb_forward.3} parent=19 // pred_region
        %s130 = smul.u32 8, %s9
        %p131 = scmp.lt.s32.totalorder %s130, 15
        %s132 = scalar_select %p131, %s130, 15
        %s133 = smul.addr %s132, 4
        %s134 = smul.addr %s133, 8
        %s135 = scalar_lea.vmem %s0, %s134
        %s136 = smul.u32 8, %s9
      $region24: #{seq_to_emb_forward.3} parent=19 // pred_fallthru
        _
      // Predicated region
      $region25: #{seq_to_emb_forward.3} parent=19 // pred_check
        %p137 = pneg %p57
      $region26: #{seq_to_emb_forward.3} parent=19 // pred_check_branch
        %139 = sbr.rel (%p137) target = $region28
      $region27: #{seq_to_emb_forward.3} parent=19 // pred_region
        %s140 = ssub.s32 1, %s9
        %s141 = smul.u32 8, %s140
        %p142 = scmp.lt.s32.totalorder %s141, 15
        %s143 = scalar_select %p142, %s141, 15
        %s144 = smul.addr %s143, 4
        %s145 = smul.addr %s144, 8
        %s146 = scalar_lea.vmem %s1, %s145
        %s147 = ssub.s32 1, %s9
        %s148 = smul.u32 8, %s147
      $region28: #{seq_to_emb_forward.3} parent=19 // pred_fallthru
        _
    $region20: #{seq_to_emb_forward.3} parent=5 // pred_fallthru
      _
    %p149 = scmp.le.s32.totalorder 1, %s9
    %p150 = scmp.lt.s32.totalorder %s9, 3
    %p151 = pnand %p149, %p150
    %p152 = pneg %p151
    // Predicated region
    $region29: #{seq_to_emb_forward.3} parent=5 // pred_check
      _
    $region30: #{seq_to_emb_forward.3} parent=5 // pred_check_branch
      %154 = sbr.rel (%p151) target = $region32
    $region31: #{seq_to_emb_forward.3} parent=5 // pred_region
      %s155 = ssub.s32 %s9, 1
      %s156 = smul.u32 8, %s14
      %p157 = scmp.lt.s32.totalorder %s156, 15
      %s158 = scalar_select %p157, %s156, 15
      %s159 = smul.addr %s158, 4
      %s160 = smul.addr %s159, 8
      %s161 = scalar_lea.vmem %s0, %s160
      %p162 = pneg %p35
      %p163 = pneg %p32
      %s164 = ssub.s32 1, %s14
      %s165 = smul.u32 8, %s164
      %p166 = scmp.lt.s32.totalorder %s165, 15
      %s167 = scalar_select %p166, %s165, 15
      %s168 = smul.addr %s167, 4
      %s169 = smul.addr %s168, 8
      %s170 = scalar_lea.vmem %s1, %s169
      %p171 = pneg %p63
      %p172 = pneg %p60
      %p173 = pneg %p84
      %p174 = pneg %p81
      %p175 = pneg %p105
      %p176 = pneg %p102
      %s177 = smul.u32 8, %s14
      %p178 = scmp.lt.s32.totalorder %s177, 15
      %s179 = scalar_select %p178, %s177, 15
      %s180 = smul.addr %s179, 4
      %s181 = smul.addr %s180, 8
      %s182 = scalar_lea.vmem %s0, %s181
      %s183 = smul.u32 8, %s14
      %s184 = ssub.s32 1, %s14
      %s185 = smul.u32 8, %s184
      %p186 = scmp.lt.s32.totalorder %s185, 15
      %s187 = scalar_select %p186, %s185, 15
      %s188 = smul.addr %s187, 4
      %s189 = smul.addr %s188, 8
      %s190 = scalar_lea.vmem %s1, %s189
      %s191 = ssub.s32 1, %s14
      %s192 = smul.u32 8, %s191
      %p193 = scmp.eq.s32.totalorder %s14, 0
      // Predicated region
      $region33: #{seq_to_emb_forward.3} parent=31 // pred_check
        %p194 = pneg %p193
      $region34: #{seq_to_emb_forward.3} parent=31 // pred_check_branch
        %196 = sbr.rel (%p194) target = $region36
      $region35: #{seq_to_emb_forward.3} parent=31 // pred_region
        %197 = vst [vmem:[#allocation2] sm:$0xff] 0.0
        %198 = vst [vmem:[#allocation3] sm:$0xff] 0.0
        %199 = vst [vmem:[#allocation4] sm:$0xff] 0.0
        %200 = vst [vmem:[#allocation5] sm:$0xff] 0.0
      $region36: #{seq_to_emb_forward.3} parent=31 // pred_fallthru
        _
      %v201 = vld [vmem:[%s2] sm:$0xff]
      %v202 = vld [vmem:[%s2 + $0x8] sm:$0xff]
      %v203 = vld [vmem:[%s2 + $0x10] sm:$0xff]
      %v204 = vld [vmem:[%s2 + $0x18] sm:$0xff]
      %v205 = vld [vmem:[%s2 + $0x20] sm:$0xff]
      %v206 = vld [vmem:[%s2 + $0x28] sm:$0xff]
      %v207 = vld [vmem:[%s2 + $0x30] sm:$0xff]
      %v208 = vld [vmem:[%s2 + $0x38] sm:$0xff]
      %v209 = vld [vmem:[%s2 + $0x40] sm:$0xff]
      %v210 = vld [vmem:[%s2 + $0x48] sm:$0xff]
      %v211 = vld [vmem:[%s2 + $0x50] sm:$0xff]
      %v212 = vld [vmem:[%s2 + $0x58] sm:$0xff]
      %v213 = vld [vmem:[%s2 + $0x60] sm:$0xff]
      %v214 = vld [vmem:[%s2 + $0x68] sm:$0xff]
      %v215 = vld [vmem:[%s2 + $0x70] sm:$0xff]
      %v216 = vld [vmem:[%s2 + $0x78] sm:$0xff]
      %v217 = vld [vmem:[%s2 + $0x80] sm:$0xff]
      %v218 = vld [vmem:[%s2 + $0x88] sm:$0xff]
      %v219 = vld [vmem:[%s2 + $0x90] sm:$0xff]
      %v220 = vld [vmem:[%s2 + $0x98] sm:$0xff]
      %v221 = vld [vmem:[%s2 + $0xa0] sm:$0xff]
      %v222 = vld [vmem:[%s2 + $0xa8] sm:$0xff]
      %v223 = vld [vmem:[%s2 + $0xb0] sm:$0xff]
      %v224 = vld [vmem:[%s2 + $0xb8] sm:$0xff]
      %v225 = vld [vmem:[%s2 + $0xc0] sm:$0xff]
      %v226 = vld [vmem:[%s2 + $0xc8] sm:$0xff]
      %v227 = vld [vmem:[%s2 + $0xd0] sm:$0xff]
      %v228 = vld [vmem:[%s2 + $0xd8] sm:$0xff]
      %v229 = vld [vmem:[%s2 + $0xe0] sm:$0xff]
      %v230 = vld [vmem:[%s2 + $0xe8] sm:$0xff]
      %v231 = vld [vmem:[%s2 + $0xf0] sm:$0xff]
      %v232 = vld [vmem:[%s2 + $0xf8] sm:$0xff]
      %v233 = vld [vmem:[%s2 + $0x100] sm:$0xff]
      %v234 = vld [vmem:[%s2 + $0x108] sm:$0xff]
      %v235 = vld [vmem:[%s2 + $0x110] sm:$0xff]
      %v236 = vld [vmem:[%s2 + $0x118] sm:$0xff]
      %v237 = vld [vmem:[%s2 + $0x120] sm:$0xff]
      %v238 = vld [vmem:[%s2 + $0x128] sm:$0xff]
      %v239 = vld [vmem:[%s2 + $0x130] sm:$0xff]
      %v240 = vld [vmem:[%s2 + $0x138] sm:$0xff]
      %v241 = vld [vmem:[%s2 + $0x140] sm:$0xff]
      %v242 = vld [vmem:[%s2 + $0x148] sm:$0xff]
      %v243 = vld [vmem:[%s2 + $0x150] sm:$0xff]
      %v244 = vld [vmem:[%s2 + $0x158] sm:$0xff]
      %v245 = vld [vmem:[%s2 + $0x160] sm:$0xff]
      %v246 = vld [vmem:[%s2 + $0x168] sm:$0xff]
      %v247 = vld [vmem:[%s2 + $0x170] sm:$0xff]
      %v248 = vld [vmem:[%s2 + $0x178] sm:$0xff]
      %v249 = vld [vmem:[%s2 + $0x180] sm:$0xff]
      %v250 = vld [vmem:[%s2 + $0x188] sm:$0xff]
      %v251 = vld [vmem:[%s2 + $0x190] sm:$0xff]
      %v252 = vld [vmem:[%s2 + $0x198] sm:$0xff]
      %v253 = vld [vmem:[%s2 + $0x1a0] sm:$0xff]
      %v254 = vld [vmem:[%s2 + $0x1a8] sm:$0xff]
      %v255 = vld [vmem:[%s2 + $0x1b0] sm:$0xff]
      %v256 = vld [vmem:[%s2 + $0x1b8] sm:$0xff]
      %v257 = vld [vmem:[%s2 + $0x1c0] sm:$0xff]
      %v258 = vld [vmem:[%s2 + $0x1c8] sm:$0xff]
      %v259 = vld [vmem:[%s2 + $0x1d0] sm:$0xff]
      %v260 = vld [vmem:[%s2 + $0x1d8] sm:$0xff]
      %v261 = vld [vmem:[%s2 + $0x1e0] sm:$0xff]
      %v262 = vld [vmem:[%s2 + $0x1e8] sm:$0xff]
      %v263 = vld [vmem:[%s2 + $0x1f0] sm:$0xff]
      %v264 = vld [vmem:[%s2 + $0x1f8] sm:$0xff]
      %s265 = scalar_lea.vmem %s2, 512
      %v266 = vld [vmem:[%s265] sm:$0xff]
      %v267 = vld [vmem:[%s265 + $0x8] sm:$0xff]
      %v268 = vld [vmem:[%s265 + $0x10] sm:$0xff]
      %v269 = vld [vmem:[%s265 + $0x18] sm:$0xff]
      %v270 = vld [vmem:[%s265 + $0x20] sm:$0xff]
      %v271 = vld [vmem:[%s265 + $0x28] sm:$0xff]
      %v272 = vld [vmem:[%s265 + $0x30] sm:$0xff]
      %v273 = vld [vmem:[%s265 + $0x38] sm:$0xff]
      %v274 = vld [vmem:[%s265 + $0x40] sm:$0xff]
      %v275 = vld [vmem:[%s265 + $0x48] sm:$0xff]
      %v276 = vld [vmem:[%s265 + $0x50] sm:$0xff]
      %v277 = vld [vmem:[%s265 + $0x58] sm:$0xff]
      %v278 = vld [vmem:[%s265 + $0x60] sm:$0xff]
      %v279 = vld [vmem:[%s265 + $0x68] sm:$0xff]
      %v280 = vld [vmem:[%s265 + $0x70] sm:$0xff]
      %v281 = vld [vmem:[%s265 + $0x78] sm:$0xff]
      %v282 = vld [vmem:[%s265 + $0x80] sm:$0xff]
      %v283 = vld [vmem:[%s265 + $0x88] sm:$0xff]
      %v284 = vld [vmem:[%s265 + $0x90] sm:$0xff]
      %v285 = vld [vmem:[%s265 + $0x98] sm:$0xff]
      %v286 = vld [vmem:[%s265 + $0xa0] sm:$0xff]
      %v287 = vld [vmem:[%s265 + $0xa8] sm:$0xff]
      %v288 = vld [vmem:[%s265 + $0xb0] sm:$0xff]
      %v289 = vld [vmem:[%s265 + $0xb8] sm:$0xff]
      %v290 = vld [vmem:[%s265 + $0xc0] sm:$0xff]
      %v291 = vld [vmem:[%s265 + $0xc8] sm:$0xff]
      %v292 = vld [vmem:[%s265 + $0xd0] sm:$0xff]
      %v293 = vld [vmem:[%s265 + $0xd8] sm:$0xff]
      %v294 = vld [vmem:[%s265 + $0xe0] sm:$0xff]
      %v295 = vld [vmem:[%s265 + $0xe8] sm:$0xff]
      %v296 = vld [vmem:[%s265 + $0xf0] sm:$0xff]
      %v297 = vld [vmem:[%s265 + $0xf8] sm:$0xff]
      %v298 = vld [vmem:[%s265 + $0x100] sm:$0xff]
      %v299 = vld [vmem:[%s265 + $0x108] sm:$0xff]
      %v300 = vld [vmem:[%s265 + $0x110] sm:$0xff]
      %v301 = vld [vmem:[%s265 + $0x118] sm:$0xff]
      %v302 = vld [vmem:[%s265 + $0x120] sm:$0xff]
      %v303 = vld [vmem:[%s265 + $0x128] sm:$0xff]
      %v304 = vld [vmem:[%s265 + $0x130] sm:$0xff]
      %v305 = vld [vmem:[%s265 + $0x138] sm:$0xff]
      %v306 = vld [vmem:[%s265 + $0x140] sm:$0xff]
      %v307 = vld [vmem:[%s265 + $0x148] sm:$0xff]
      %v308 = vld [vmem:[%s265 + $0x150] sm:$0xff]
      %v309 = vld [vmem:[%s265 + $0x158] sm:$0xff]
      %v310 = vld [vmem:[%s265 + $0x160] sm:$0xff]
      %v311 = vld [vmem:[%s265 + $0x168] sm:$0xff]
      %v312 = vld [vmem:[%s265 + $0x170] sm:$0xff]
      %v313 = vld [vmem:[%s265 + $0x178] sm:$0xff]
      %v314 = vld [vmem:[%s265 + $0x180] sm:$0xff]
      %v315 = vld [vmem:[%s265 + $0x188] sm:$0xff]
      %v316 = vld [vmem:[%s265 + $0x190] sm:$0xff]
      %v317 = vld [vmem:[%s265 + $0x198] sm:$0xff]
      %v318 = vld [vmem:[%s265 + $0x1a0] sm:$0xff]
      %v319 = vld [vmem:[%s265 + $0x1a8] sm:$0xff]
      %v320 = vld [vmem:[%s265 + $0x1b0] sm:$0xff]
      %v321 = vld [vmem:[%s265 + $0x1b8] sm:$0xff]
      %v322 = vld [vmem:[%s265 + $0x1c0] sm:$0xff]
      %v323 = vld [vmem:[%s265 + $0x1c8] sm:$0xff]
      %v324 = vld [vmem:[%s265 + $0x1d0] sm:$0xff]
      %v325 = vld [vmem:[%s265 + $0x1d8] sm:$0xff]
      %v326 = vld [vmem:[%s265 + $0x1e0] sm:$0xff]
      %v327 = vld [vmem:[%s265 + $0x1e8] sm:$0xff]
      %v328 = vld [vmem:[%s265 + $0x1f0] sm:$0xff]
      %v329 = vld [vmem:[%s265 + $0x1f8] sm:$0xff]
      %v330 = vld [vmem:[#allocation2] sm:$0xff]
      %v331 = vld [vmem:[#allocation3] sm:$0xff]
      %v332 = vld [vmem:[#allocation4] sm:$0xff]
      %v333 = vld [vmem:[#allocation5] sm:$0xff]
      %v334 = vld [vmem:[%s182] sm:$0xff]
      %v335 = vld [vmem:[%s182 + $0x8] sm:$0xff]
      %v336 = vld [vmem:[%s182 + $0x10] sm:$0xff]
      %v337 = vld [vmem:[%s182 + $0x18] sm:$0xff]
      %338 = vmatprep.subr.mxu0 %v262
      %339 = vmatpush1.msra.mxu0 %v261
      %340 = vmatprep.subr.mxu0 %v258
      %341 = vmatpush1.msra.mxu0 %v257
      %342 = vmatprep.subr.mxu0 %v254
      %343 = vmatpush1.msra.mxu0 %v253
      %344 = vmatprep.subr.mxu0 %v250
      %345 = vmatpush1.msra.mxu0 %v249
      %346 = vmatprep.subr.mxu0 %v246
      %347 = vmatpush1.msra.mxu0 %v245
      %348 = vmatprep.subr.mxu0 %v242
      %349 = vmatpush1.msra.mxu0 %v241
      %350 = vmatprep.subr.mxu0 %v238
      %351 = vmatpush1.msra.mxu0 %v237
      %352 = vmatprep.subr.mxu0 %v234
      %353 = vmatpush1.msra.mxu0 %v233
      %354 = vmatprep.subr.mxu0 %v230
      %355 = vmatpush1.msra.mxu0 %v229
      %356 = vmatprep.subr.mxu0 %v226
      %357 = vmatpush1.msra.mxu0 %v225
      %358 = vmatprep.subr.mxu0 %v222
      %359 = vmatpush1.msra.mxu0 %v221
      %360 = vmatprep.subr.mxu0 %v218
      %361 = vmatpush1.msra.mxu0 %v217
      %362 = vmatprep.subr.mxu0 %v214
      %363 = vmatpush1.msra.mxu0 %v213
      %364 = vmatprep.subr.mxu0 %v210
      %365 = vmatpush1.msra.mxu0 %v209
      %366 = vmatprep.subr.mxu0 %v206
      %367 = vmatpush1.msra.mxu0 %v205
      %368 = vmatprep.subr.mxu0 %v202
      %369 = vmatpush1.msra.mxu0 %v201
      %370 = vmatprep.subr.mxu0 0.0
      %371 = vmatpush2.msra.mxu0 0.0
      %372 = vmatprep.subr.mxu0 0.0
      %373 = vmatpush2.msra.mxu0 0.0
      %374 = vmatprep.subr.mxu0 0.0
      %375 = vmatpush2.msra.mxu0 0.0
      %376 = vmatprep.subr.mxu0 0.0
      %377 = vmatpush2.msra.mxu0 0.0
      %378 = vmatprep.subr.mxu0 0.0
      %379 = vmatpush2.msra.mxu0 0.0
      %380 = vmatprep.subr.mxu0 0.0
      %381 = vmatpush2.msra.mxu0 0.0
      %382 = vmatprep.subr.mxu0 0.0
      %383 = vmatpush2.msra.mxu0 0.0
      %384 = vmatprep.subr.mxu0 0.0
      %385 = vmatpush2.msra.mxu0 0.0
      %386 = vmatprep.subr.mxu0 0.0
      %387 = vmatpush2.msra.mxu0 0.0
      %388 = vmatprep.subr.mxu0 0.0
      %389 = vmatpush2.msra.mxu0 0.0
      %390 = vmatprep.subr.mxu0 0.0
      %391 = vmatpush2.msra.mxu0 0.0
      %392 = vmatprep.subr.mxu0 0.0
      %393 = vmatpush2.msra.mxu0 0.0
      %394 = vmatprep.subr.mxu0 0.0
      %395 = vmatpush2.msra.mxu0 0.0
      %396 = vmatprep.subr.mxu0 0.0
      %397 = vmatpush2.msra.mxu0 0.0
      %398 = vmatprep.subr.mxu0 0.0
      %399 = vmatpush2.msra.mxu0 0.0
      %400 = vmatprep.subr.mxu0 0.0
      %401 = vmatpush2.msra.mxu0 0.0
      %402 = vmatprep.mubr.f32.mxu0 0.0
      %403 = vmatmul.mubr.f32.gmra.mxu0 %v330
      %v404 = vpop.f32.mrf.mxu0
      %v405 = vadd.f32 0.0, %v404
      %v406 = vpop.f32.mrf.mxu0
      %v407 = vadd.f32 0.0, %v406
      %408 = vdwg.mxu0
      %409 = vmatprep.subr.mxu0 %v264
      %410 = vmatpush1.msra.mxu0 %v263
      %411 = vmatprep.subr.mxu0 %v260
      %412 = vmatpush1.msra.mxu0 %v259
      %413 = vmatprep.subr.mxu0 %v256
      %414 = vmatpush1.msra.mxu0 %v255
      %415 = vmatprep.subr.mxu0 %v252
      %416 = vmatpush1.msra.mxu0 %v251
      %417 = vmatprep.subr.mxu0 %v248
      %418 = vmatpush1.msra.mxu0 %v247
      %419 = vmatprep.subr.mxu0 %v244
      %420 = vmatpush1.msra.mxu0 %v243
      %421 = vmatprep.subr.mxu0 %v240
      %422 = vmatpush1.msra.mxu0 %v239
      %423 = vmatprep.subr.mxu0 %v236
      %424 = vmatpush1.msra.mxu0 %v235
      %425 = vmatprep.subr.mxu0 %v232
      %426 = vmatpush1.msra.mxu0 %v231
      %427 = vmatprep.subr.mxu0 %v228
      %428 = vmatpush1.msra.mxu0 %v227
      %429 = vmatprep.subr.mxu0 %v224
      %430 = vmatpush1.msra.mxu0 %v223
      %431 = vmatprep.subr.mxu0 %v220
      %432 = vmatpush1.msra.mxu0 %v219
      %433 = vmatprep.subr.mxu0 %v216
      %434 = vmatpush1.msra.mxu0 %v215
      %435 = vmatprep.subr.mxu0 %v212
      %436 = vmatpush1.msra.mxu0 %v211
      %437 = vmatprep.subr.mxu0 %v208
      %438 = vmatpush1.msra.mxu0 %v207
      %439 = vmatprep.subr.mxu0 %v204
      %440 = vmatpush1.msra.mxu0 %v203
      %441 = vmatprep.subr.mxu0 0.0
      %442 = vmatpush2.msra.mxu0 0.0
      %443 = vmatprep.subr.mxu0 0.0
      %444 = vmatpush2.msra.mxu0 0.0
      %445 = vmatprep.subr.mxu0 0.0
      %446 = vmatpush2.msra.mxu0 0.0
      %447 = vmatprep.subr.mxu0 0.0
      %448 = vmatpush2.msra.mxu0 0.0
      %449 = vmatprep.subr.mxu0 0.0
      %450 = vmatpush2.msra.mxu0 0.0
      %451 = vmatprep.subr.mxu0 0.0
      %452 = vmatpush2.msra.mxu0 0.0
      %453 = vmatprep.subr.mxu0 0.0
      %454 = vmatpush2.msra.mxu0 0.0
      %455 = vmatprep.subr.mxu0 0.0
      %456 = vmatpush2.msra.mxu0 0.0
      %457 = vmatprep.subr.mxu0 0.0
      %458 = vmatpush2.msra.mxu0 0.0
      %459 = vmatprep.subr.mxu0 0.0
      %460 = vmatpush2.msra.mxu0 0.0
      %461 = vmatprep.subr.mxu0 0.0
      %462 = vmatpush2.msra.mxu0 0.0
      %463 = vmatprep.subr.mxu0 0.0
      %464 = vmatpush2.msra.mxu0 0.0
      %465 = vmatprep.subr.mxu0 0.0
      %466 = vmatpush2.msra.mxu0 0.0
      %467 = vmatprep.subr.mxu0 0.0
      %468 = vmatpush2.msra.mxu0 0.0
      %469 = vmatprep.subr.mxu0 0.0
      %470 = vmatpush2.msra.mxu0 0.0
      %471 = vmatprep.subr.mxu0 0.0
      %472 = vmatpush2.msra.mxu0 0.0
      %473 = vmatprep.mubr.f32.mxu0 0.0
      %474 = vmatmul.mubr.f32.gmra.mxu0 %v330
      %v475 = vpop.f32.mrf.mxu0
      %v476 = vadd.f32 0.0, %v475
      %v477 = vpop.f32.mrf.mxu0
      %v478 = vadd.f32 0.0, %v477
      %479 = vdwg.mxu0
      %v480 = vadd.f32 %v334, %v405
      %v481 = vadd.f32 %v335, %v407
      %v482 = vadd.f32 %v336, %v476
      %v483 = vadd.f32 %v337, %v478
      %v484 = vxor.u32 %v480, 2147483648
      %v485 = vmul.f32 %v484, 1.442695
      %v486 = vpow.pop %v485
      %v487 = vadd.f32 %v486, 1.0
      %v488 = vrcp.pop %v487
      %v489 = vmul.f32 1.0, %v488
      %v490 = vxor.u32 %v481, 2147483648
      %v491 = vmul.f32 %v490, 1.442695
      %v492 = vpow.pop %v491
      %v493 = vadd.f32 %v492, 1.0
      %v494 = vrcp.pop %v493
      %v495 = vmul.f32 1.0, %v494
      %v496 = vtanh.pop %v482
      %v497 = vxor.u32 %v483, 2147483648
      %v498 = vmul.f32 %v497, 1.442695
      %v499 = vpow.pop %v498
      %v500 = vadd.f32 %v499, 1.0
      %v501 = vrcp.pop %v500
      %v502 = vmul.f32 1.0, %v501
      %v503 = vmul.f32 %v495, %v331
      %v504 = vmul.f32 %v489, %v496
      %v505 = vadd.f32 %v503, %v504
      %v506 = vtanh.pop %v505
      %v507 = vmul.f32 %v502, %v506
      %s508 = scalar_lea.vmem %s190, 224
      %v509 = vld [vmem:[%s508] sm:$0xff]
      %v510 = vld [vmem:[%s508 + $0x8] sm:$0xff]
      %v511 = vld [vmem:[%s508 + $0x10] sm:$0xff]
      %v512 = vld [vmem:[%s508 + $0x18] sm:$0xff]
      %513 = vmatprep.subr.mxu0 %v327
      %514 = vmatpush1.msra.mxu0 %v326
      %515 = vmatprep.subr.mxu0 %v323
      %516 = vmatpush1.msra.mxu0 %v322
      %517 = vmatprep.subr.mxu0 %v319
      %518 = vmatpush1.msra.mxu0 %v318
      %519 = vmatprep.subr.mxu0 %v315
      %520 = vmatpush1.msra.mxu0 %v314
      %521 = vmatprep.subr.mxu0 %v311
      %522 = vmatpush1.msra.mxu0 %v310
      %523 = vmatprep.subr.mxu0 %v307
      %524 = vmatpush1.msra.mxu0 %v306
      %525 = vmatprep.subr.mxu0 %v303
      %526 = vmatpush1.msra.mxu0 %v302
      %527 = vmatprep.subr.mxu0 %v299
      %528 = vmatpush1.msra.mxu0 %v298
      %529 = vmatprep.subr.mxu0 %v295
      %530 = vmatpush1.msra.mxu0 %v294
      %531 = vmatprep.subr.mxu0 %v291
      %532 = vmatpush1.msra.mxu0 %v290
      %533 = vmatprep.subr.mxu0 %v287
      %534 = vmatpush1.msra.mxu0 %v286
      %535 = vmatprep.subr.mxu0 %v283
      %536 = vmatpush1.msra.mxu0 %v282
      %537 = vmatprep.subr.mxu0 %v279
      %538 = vmatpush1.msra.mxu0 %v278
      %539 = vmatprep.subr.mxu0 %v275
      %540 = vmatpush1.msra.mxu0 %v274
      %541 = vmatprep.subr.mxu0 %v271
      %542 = vmatpush1.msra.mxu0 %v270
      %543 = vmatprep.subr.mxu0 %v267
      %544 = vmatpush1.msra.mxu0 %v266
      %545 = vmatprep.subr.mxu0 0.0
      %546 = vmatpush2.msra.mxu0 0.0
      %547 = vmatprep.subr.mxu0 0.0
      %548 = vmatpush2.msra.mxu0 0.0
      %549 = vmatprep.subr.mxu0 0.0
      %550 = vmatpush2.msra.mxu0 0.0
      %551 = vmatprep.subr.mxu0 0.0
      %552 = vmatpush2.msra.mxu0 0.0
      %553 = vmatprep.subr.mxu0 0.0
      %554 = vmatpush2.msra.mxu0 0.0
      %555 = vmatprep.subr.mxu0 0.0
      %556 = vmatpush2.msra.mxu0 0.0
      %557 = vmatprep.subr.mxu0 0.0
      %558 = vmatpush2.msra.mxu0 0.0
      %559 = vmatprep.subr.mxu0 0.0
      %560 = vmatpush2.msra.mxu0 0.0
      %561 = vmatprep.subr.mxu0 0.0
      %562 = vmatpush2.msra.mxu0 0.0
      %563 = vmatprep.subr.mxu0 0.0
      %564 = vmatpush2.msra.mxu0 0.0
      %565 = vmatprep.subr.mxu0 0.0
      %566 = vmatpush2.msra.mxu0 0.0
      %567 = vmatprep.subr.mxu0 0.0
      %568 = vmatpush2.msra.mxu0 0.0
      %569 = vmatprep.subr.mxu0 0.0
      %570 = vmatpush2.msra.mxu0 0.0
      %571 = vmatprep.subr.mxu0 0.0
      %572 = vmatpush2.msra.mxu0 0.0
      %573 = vmatprep.subr.mxu0 0.0
      %574 = vmatpush2.msra.mxu0 0.0
      %575 = vmatprep.subr.mxu0 0.0
      %576 = vmatpush2.msra.mxu0 0.0
      %577 = vmatprep.mubr.f32.mxu0 0.0
      %578 = vmatmul.mubr.f32.gmra.mxu0 %v332
      %v579 = vpop.f32.mrf.mxu0
      %v580 = vadd.f32 0.0, %v579
      %v581 = vpop.f32.mrf.mxu0
      %v582 = vadd.f32 0.0, %v581
      %583 = vdwg.mxu0
      %584 = vmatprep.subr.mxu0 %v329
      %585 = vmatpush1.msra.mxu0 %v328
      %586 = vmatprep.subr.mxu0 %v325
      %587 = vmatpush1.msra.mxu0 %v324
      %588 = vmatprep.subr.mxu0 %v321
      %589 = vmatpush1.msra.mxu0 %v320
      %590 = vmatprep.subr.mxu0 %v317
      %591 = vmatpush1.msra.mxu0 %v316
      %592 = vmatprep.subr.mxu0 %v313
      %593 = vmatpush1.msra.mxu0 %v312
      %594 = vmatprep.subr.mxu0 %v309
      %595 = vmatpush1.msra.mxu0 %v308
      %596 = vmatprep.subr.mxu0 %v305
      %597 = vmatpush1.msra.mxu0 %v304
      %598 = vmatprep.subr.mxu0 %v301
      %599 = vmatpush1.msra.mxu0 %v300
      %600 = vmatprep.subr.mxu0 %v297
      %601 = vmatpush1.msra.mxu0 %v296
      %602 = vmatprep.subr.mxu0 %v293
      %603 = vmatpush1.msra.mxu0 %v292
      %604 = vmatprep.subr.mxu0 %v289
      %605 = vmatpush1.msra.mxu0 %v288
      %606 = vmatprep.subr.mxu0 %v285
      %607 = vmatpush1.msra.mxu0 %v284
      %608 = vmatprep.subr.mxu0 %v281
      %609 = vmatpush1.msra.mxu0 %v280
      %610 = vmatprep.subr.mxu0 %v277
      %611 = vmatpush1.msra.mxu0 %v276
      %612 = vmatprep.subr.mxu0 %v273
      %613 = vmatpush1.msra.mxu0 %v272
      %614 = vmatprep.subr.mxu0 %v269
      %615 = vmatpush1.msra.mxu0 %v268
      %616 = vmatprep.subr.mxu0 0.0
      %617 = vmatpush2.msra.mxu0 0.0
      %618 = vmatprep.subr.mxu0 0.0
      %619 = vmatpush2.msra.mxu0 0.0
      %620 = vmatprep.subr.mxu0 0.0
      %621 = vmatpush2.msra.mxu0 0.0
      %622 = vmatprep.subr.mxu0 0.0
      %623 = vmatpush2.msra.mxu0 0.0
      %624 = vmatprep.subr.mxu0 0.0
      %625 = vmatpush2.msra.mxu0 0.0
      %626 = vmatprep.subr.mxu0 0.0
      %627 = vmatpush2.msra.mxu0 0.0
      %628 = vmatprep.subr.mxu0 0.0
      %629 = vmatpush2.msra.mxu0 0.0
      %630 = vmatprep.subr.mxu0 0.0
      %631 = vmatpush2.msra.mxu0 0.0
      %632 = vmatprep.subr.mxu0 0.0
      %633 = vmatpush2.msra.mxu0 0.0
      %634 = vmatprep.subr.mxu0 0.0
      %635 = vmatpush2.msra.mxu0 0.0
      %636 = vmatprep.subr.mxu0 0.0
      %637 = vmatpush2.msra.mxu0 0.0
      %638 = vmatprep.subr.mxu0 0.0
      %639 = vmatpush2.msra.mxu0 0.0
      %640 = vmatprep.subr.mxu0 0.0
      %641 = vmatpush2.msra.mxu0 0.0
      %642 = vmatprep.subr.mxu0 0.0
      %643 = vmatpush2.msra.mxu0 0.0
      %644 = vmatprep.subr.mxu0 0.0
      %645 = vmatpush2.msra.mxu0 0.0
      %646 = vmatprep.subr.mxu0 0.0
      %647 = vmatpush2.msra.mxu0 0.0
      %648 = vmatprep.mubr.f32.mxu0 0.0
      %649 = vmatmul.mubr.f32.gmra.mxu0 %v332
      %v650 = vpop.f32.mrf.mxu0
      %v651 = vadd.f32 0.0, %v650
      %v652 = vpop.f32.mrf.mxu0
      %v653 = vadd.f32 0.0, %v652
      %654 = vdwg.mxu0
      %v655 = vadd.f32 %v509, %v580
      %v656 = vadd.f32 %v510, %v582
      %v657 = vadd.f32 %v511, %v651
      %v658 = vadd.f32 %v512, %v653
      %v659 = vxor.u32 %v655, 2147483648
      %v660 = vmul.f32 %v659, 1.442695
      %v661 = vpow.pop %v660
      %v662 = vadd.f32 %v661, 1.0
      %v663 = vrcp.pop %v662
      %v664 = vmul.f32 1.0, %v663
      %v665 = vxor.u32 %v656, 2147483648
      %v666 = vmul.f32 %v665, 1.442695
      %v667 = vpow.pop %v666
      %v668 = vadd.f32 %v667, 1.0
      %v669 = vrcp.pop %v668
      %v670 = vmul.f32 1.0, %v669
      %v671 = vtanh.pop %v657
      %v672 = vxor.u32 %v658, 2147483648
      %v673 = vmul.f32 %v672, 1.442695
      %v674 = vpow.pop %v673
      %v675 = vadd.f32 %v674, 1.0
      %v676 = vrcp.pop %v675
      %v677 = vmul.f32 1.0, %v676
      %v678 = vmul.f32 %v670, %v333
      %v679 = vmul.f32 %v664, %v671
      %v680 = vadd.f32 %v678, %v679
      %v681 = vtanh.pop %v680
      %v682 = vmul.f32 %v677, %v681
      %s683 = scalar_lea.vmem %s182, 32
      %v684 = vld [vmem:[%s683] sm:$0xff]
      %v685 = vld [vmem:[%s683 + $0x8] sm:$0xff]
      %v686 = vld [vmem:[%s683 + $0x10] sm:$0xff]
      %v687 = vld [vmem:[%s683 + $0x18] sm:$0xff]
      %688 = vmatprep.subr.mxu0 %v262
      %689 = vmatpush1.msra.mxu0 %v261
      %690 = vmatprep.subr.mxu0 %v258
      %691 = vmatpush1.msra.mxu0 %v257
      %692 = vmatprep.subr.mxu0 %v254
      %693 = vmatpush1.msra.mxu0 %v253
      %694 = vmatprep.subr.mxu0 %v250
      %695 = vmatpush1.msra.mxu0 %v249
      %696 = vmatprep.subr.mxu0 %v246
      %697 = vmatpush1.msra.mxu0 %v245
      %698 = vmatprep.subr.mxu0 %v242
      %699 = vmatpush1.msra.mxu0 %v241
      %700 = vmatprep.subr.mxu0 %v238
      %701 = vmatpush1.msra.mxu0 %v237
      %702 = vmatprep.subr.mxu0 %v234
      %703 = vmatpush1.msra.mxu0 %v233
      %704 = vmatprep.subr.mxu0 %v230
      %705 = vmatpush1.msra.mxu0 %v229
      %706 = vmatprep.subr.mxu0 %v226
      %707 = vmatpush1.msra.mxu0 %v225
      %708 = vmatprep.subr.mxu0 %v222
      %709 = vmatpush1.msra.mxu0 %v221
      %710 = vmatprep.subr.mxu0 %v218
      %711 = vmatpush1.msra.mxu0 %v217
      %712 = vmatprep.subr.mxu0 %v214
      %713 = vmatpush1.msra.mxu0 %v213
      %714 = vmatprep.subr.mxu0 %v210
      %715 = vmatpush1.msra.mxu0 %v209
      %716 = vmatprep.subr.mxu0 %v206
      %717 = vmatpush1.msra.mxu0 %v205
      %718 = vmatprep.subr.mxu0 %v202
      %719 = vmatpush1.msra.mxu0 %v201
      %720 = vmatprep.subr.mxu0 0.0
      %721 = vmatpush2.msra.mxu0 0.0
      %722 = vmatprep.subr.mxu0 0.0
      %723 = vmatpush2.msra.mxu0 0.0
      %724 = vmatprep.subr.mxu0 0.0
      %725 = vmatpush2.msra.mxu0 0.0
      %726 = vmatprep.subr.mxu0 0.0
      %727 = vmatpush2.msra.mxu0 0.0
      %728 = vmatprep.subr.mxu0 0.0
      %729 = vmatpush2.msra.mxu0 0.0
      %730 = vmatprep.subr.mxu0 0.0
      %731 = vmatpush2.msra.mxu0 0.0
      %732 = vmatprep.subr.mxu0 0.0
      %733 = vmatpush2.msra.mxu0 0.0
      %734 = vmatprep.subr.mxu0 0.0
      %735 = vmatpush2.msra.mxu0 0.0
      %736 = vmatprep.subr.mxu0 0.0
      %737 = vmatpush2.msra.mxu0 0.0
      %738 = vmatprep.subr.mxu0 0.0
      %739 = vmatpush2.msra.mxu0 0.0
      %740 = vmatprep.subr.mxu0 0.0
      %741 = vmatpush2.msra.mxu0 0.0
      %742 = vmatprep.subr.mxu0 0.0
      %743 = vmatpush2.msra.mxu0 0.0
      %744 = vmatprep.subr.mxu0 0.0
      %745 = vmatpush2.msra.mxu0 0.0
      %746 = vmatprep.subr.mxu0 0.0
      %747 = vmatpush2.msra.mxu0 0.0
      %748 = vmatprep.subr.mxu0 0.0
      %749 = vmatpush2.msra.mxu0 0.0
      %750 = vmatprep.subr.mxu0 0.0
      %751 = vmatpush2.msra.mxu0 0.0
      %752 = vmatprep.mubr.f32.mxu0 0.0
      %753 = vmatmul.mubr.f32.gmra.mxu0 %v507
      %v754 = vpop.f32.mrf.mxu0
      %v755 = vadd.f32 0.0, %v754
      %v756 = vpop.f32.mrf.mxu0
      %v757 = vadd.f32 0.0, %v756
      %758 = vdwg.mxu0
      %759 = vmatprep.subr.mxu0 %v264
      %760 = vmatpush1.msra.mxu0 %v263
      %761 = vmatprep.subr.mxu0 %v260
      %762 = vmatpush1.msra.mxu0 %v259
      %763 = vmatprep.subr.mxu0 %v256
      %764 = vmatpush1.msra.mxu0 %v255
      %765 = vmatprep.subr.mxu0 %v252
      %766 = vmatpush1.msra.mxu0 %v251
      %767 = vmatprep.subr.mxu0 %v248
      %768 = vmatpush1.msra.mxu0 %v247
      %769 = vmatprep.subr.mxu0 %v244
      %770 = vmatpush1.msra.mxu0 %v243
      %771 = vmatprep.subr.mxu0 %v240
      %772 = vmatpush1.msra.mxu0 %v239
      %773 = vmatprep.subr.mxu0 %v236
      %774 = vmatpush1.msra.mxu0 %v235
      %775 = vmatprep.subr.mxu0 %v232
      %776 = vmatpush1.msra.mxu0 %v231
      %777 = vmatprep.subr.mxu0 %v228
      %778 = vmatpush1.msra.mxu0 %v227
      %779 = vmatprep.subr.mxu0 %v224
      %780 = vmatpush1.msra.mxu0 %v223
      %781 = vmatprep.subr.mxu0 %v220
      %782 = vmatpush1.msra.mxu0 %v219
      %783 = vmatprep.subr.mxu0 %v216
      %784 = vmatpush1.msra.mxu0 %v215
      %785 = vmatprep.subr.mxu0 %v212
      %786 = vmatpush1.msra.mxu0 %v211
      %787 = vmatprep.subr.mxu0 %v208
      %788 = vmatpush1.msra.mxu0 %v207
      %789 = vmatprep.subr.mxu0 %v204
      %790 = vmatpush1.msra.mxu0 %v203
      %791 = vmatprep.subr.mxu0 0.0
      %792 = vmatpush2.msra.mxu0 0.0
      %793 = vmatprep.subr.mxu0 0.0
      %794 = vmatpush2.msra.mxu0 0.0
      %795 = vmatprep.subr.mxu0 0.0
      %796 = vmatpush2.msra.mxu0 0.0
      %797 = vmatprep.subr.mxu0 0.0
      %798 = vmatpush2.msra.mxu0 0.0
      %799 = vmatprep.subr.mxu0 0.0
      %800 = vmatpush2.msra.mxu0 0.0
      %801 = vmatprep.subr.mxu0 0.0
      %802 = vmatpush2.msra.mxu0 0.0
      %803 = vmatprep.subr.mxu0 0.0
      %804 = vmatpush2.msra.mxu0 0.0
      %805 = vmatprep.subr.mxu0 0.0
      %806 = vmatpush2.msra.mxu0 0.0
      %807 = vmatprep.subr.mxu0 0.0
      %808 = vmatpush2.msra.mxu0 0.0
      %809 = vmatprep.subr.mxu0 0.0
      %810 = vmatpush2.msra.mxu0 0.0
      %811 = vmatprep.subr.mxu0 0.0
      %812 = vmatpush2.msra.mxu0 0.0
      %813 = vmatprep.subr.mxu0 0.0
      %814 = vmatpush2.msra.mxu0 0.0
      %815 = vmatprep.subr.mxu0 0.0
      %816 = vmatpush2.msra.mxu0 0.0
      %817 = vmatprep.subr.mxu0 0.0
      %818 = vmatpush2.msra.mxu0 0.0
      %819 = vmatprep.subr.mxu0 0.0
      %820 = vmatpush2.msra.mxu0 0.0
      %821 = vmatprep.subr.mxu0 0.0
      %822 = vmatpush2.msra.mxu0 0.0
      %823 = vmatprep.mubr.f32.mxu0 0.0
      %824 = vmatmul.mubr.f32.gmra.mxu0 %v507
      %v825 = vpop.f32.mrf.mxu0
      %v826 = vadd.f32 0.0, %v825
      %v827 = vpop.f32.mrf.mxu0
      %v828 = vadd.f32 0.0, %v827
      %829 = vdwg.mxu0
      %v830 = vadd.f32 %v684, %v755
      %v831 = vadd.f32 %v685, %v757
      %v832 = vadd.f32 %v686, %v826
      %v833 = vadd.f32 %v687, %v828
      %v834 = vxor.u32 %v830, 2147483648
      %v835 = vmul.f32 %v834, 1.442695
      %v836 = vpow.pop %v835
      %v837 = vadd.f32 %v836, 1.0
      %v838 = vrcp.pop %v837
      %v839 = vmul.f32 1.0, %v838
      %v840 = vxor.u32 %v831, 2147483648
      %v841 = vmul.f32 %v840, 1.442695
      %v842 = vpow.pop %v841
      %v843 = vadd.f32 %v842, 1.0
      %v844 = vrcp.pop %v843
      %v845 = vmul.f32 1.0, %v844
      %v846 = vtanh.pop %v832
      %v847 = vxor.u32 %v833, 2147483648
      %v848 = vmul.f32 %v847, 1.442695
      %v849 = vpow.pop %v848
      %v850 = vadd.f32 %v849, 1.0
      %v851 = vrcp.pop %v850
      %v852 = vmul.f32 1.0, %v851
      %v853 = vmul.f32 %v845, %v505
      %v854 = vmul.f32 %v839, %v846
      %v855 = vadd.f32 %v853, %v854
      %v856 = vtanh.pop %v855
      %v857 = vmul.f32 %v852, %v856
      %s858 = scalar_lea.vmem %s190, 192
      %v859 = vld [vmem:[%s858] sm:$0xff]
      %v860 = vld [vmem:[%s858 + $0x8] sm:$0xff]
      %v861 = vld [vmem:[%s858 + $0x10] sm:$0xff]
      %v862 = vld [vmem:[%s858 + $0x18] sm:$0xff]
      %863 = vmatprep.subr.mxu0 %v327
      %864 = vmatpush1.msra.mxu0 %v326
      %865 = vmatprep.subr.mxu0 %v323
      %866 = vmatpush1.msra.mxu0 %v322
      %867 = vmatprep.subr.mxu0 %v319
      %868 = vmatpush1.msra.mxu0 %v318
      %869 = vmatprep.subr.mxu0 %v315
      %870 = vmatpush1.msra.mxu0 %v314
      %871 = vmatprep.subr.mxu0 %v311
      %872 = vmatpush1.msra.mxu0 %v310
      %873 = vmatprep.subr.mxu0 %v307
      %874 = vmatpush1.msra.mxu0 %v306
      %875 = vmatprep.subr.mxu0 %v303
      %876 = vmatpush1.msra.mxu0 %v302
      %877 = vmatprep.subr.mxu0 %v299
      %878 = vmatpush1.msra.mxu0 %v298
      %879 = vmatprep.subr.mxu0 %v295
      %880 = vmatpush1.msra.mxu0 %v294
      %881 = vmatprep.subr.mxu0 %v291
      %882 = vmatpush1.msra.mxu0 %v290
      %883 = vmatprep.subr.mxu0 %v287
      %884 = vmatpush1.msra.mxu0 %v286
      %885 = vmatprep.subr.mxu0 %v283
      %886 = vmatpush1.msra.mxu0 %v282
      %887 = vmatprep.subr.mxu0 %v279
      %888 = vmatpush1.msra.mxu0 %v278
      %889 = vmatprep.subr.mxu0 %v275
      %890 = vmatpush1.msra.mxu0 %v274
      %891 = vmatprep.subr.mxu0 %v271
      %892 = vmatpush1.msra.mxu0 %v270
      %893 = vmatprep.subr.mxu0 %v267
      %894 = vmatpush1.msra.mxu0 %v266
      %895 = vmatprep.subr.mxu0 0.0
      %896 = vmatpush2.msra.mxu0 0.0
      %897 = vmatprep.subr.mxu0 0.0
      %898 = vmatpush2.msra.mxu0 0.0
      %899 = vmatprep.subr.mxu0 0.0
      %900 = vmatpush2.msra.mxu0 0.0
      %901 = vmatprep.subr.mxu0 0.0
      %902 = vmatpush2.msra.mxu0 0.0
      %903 = vmatprep.subr.mxu0 0.0
      %904 = vmatpush2.msra.mxu0 0.0
      %905 = vmatprep.subr.mxu0 0.0
      %906 = vmatpush2.msra.mxu0 0.0
      %907 = vmatprep.subr.mxu0 0.0
      %908 = vmatpush2.msra.mxu0 0.0
      %909 = vmatprep.subr.mxu0 0.0
      %910 = vmatpush2.msra.mxu0 0.0
      %911 = vmatprep.subr.mxu0 0.0
      %912 = vmatpush2.msra.mxu0 0.0
      %913 = vmatprep.subr.mxu0 0.0
      %914 = vmatpush2.msra.mxu0 0.0
      %915 = vmatprep.subr.mxu0 0.0
      %916 = vmatpush2.msra.mxu0 0.0
      %917 = vmatprep.subr.mxu0 0.0
      %918 = vmatpush2.msra.mxu0 0.0
      %919 = vmatprep.subr.mxu0 0.0
      %920 = vmatpush2.msra.mxu0 0.0
      %921 = vmatprep.subr.mxu0 0.0
      %922 = vmatpush2.msra.mxu0 0.0
      %923 = vmatprep.subr.mxu0 0.0
      %924 = vmatpush2.msra.mxu0 0.0
      %925 = vmatprep.subr.mxu0 0.0
      %926 = vmatpush2.msra.mxu0 0.0
      %927 = vmatprep.mubr.f32.mxu0 0.0
      %928 = vmatmul.mubr.f32.gmra.mxu0 %v682
      %v929 = vpop.f32.mrf.mxu0
      %v930 = vadd.f32 0.0, %v929
      %v931 = vpop.f32.mrf.mxu0
      %v932 = vadd.f32 0.0, %v931
      %933 = vdwg.mxu0
      %934 = vmatprep.subr.mxu0 %v329
      %935 = vmatpush1.msra.mxu0 %v328
      %936 = vmatprep.subr.mxu0 %v325
      %937 = vmatpush1.msra.mxu0 %v324
      %938 = vmatprep.subr.mxu0 %v321
      %939 = vmatpush1.msra.mxu0 %v320
      %940 = vmatprep.subr.mxu0 %v317
      %941 = vmatpush1.msra.mxu0 %v316
      %942 = vmatprep.subr.mxu0 %v313
      %943 = vmatpush1.msra.mxu0 %v312
      %944 = vmatprep.subr.mxu0 %v309
      %945 = vmatpush1.msra.mxu0 %v308
      %946 = vmatprep.subr.mxu0 %v305
      %947 = vmatpush1.msra.mxu0 %v304
      %948 = vmatprep.subr.mxu0 %v301
      %949 = vmatpush1.msra.mxu0 %v300
      %950 = vmatprep.subr.mxu0 %v297
      %951 = vmatpush1.msra.mxu0 %v296
      %952 = vmatprep.subr.mxu0 %v293
      %953 = vmatpush1.msra.mxu0 %v292
      %954 = vmatprep.subr.mxu0 %v289
      %955 = vmatpush1.msra.mxu0 %v288
      %956 = vmatprep.subr.mxu0 %v285
      %957 = vmatpush1.msra.mxu0 %v284
      %958 = vmatprep.subr.mxu0 %v281
      %959 = vmatpush1.msra.mxu0 %v280
      %960 = vmatprep.subr.mxu0 %v277
      %961 = vmatpush1.msra.mxu0 %v276
      %962 = vmatprep.subr.mxu0 %v273
      %963 = vmatpush1.msra.mxu0 %v272
      %964 = vmatprep.subr.mxu0 %v269
      %965 = vmatpush1.msra.mxu0 %v268
      %966 = vmatprep.subr.mxu0 0.0
      %967 = vmatpush2.msra.mxu0 0.0
      %968 = vmatprep.subr.mxu0 0.0
      %969 = vmatpush2.msra.mxu0 0.0
      %970 = vmatprep.subr.mxu0 0.0
      %971 = vmatpush2.msra.mxu0 0.0
      %972 = vmatprep.subr.mxu0 0.0
      %973 = vmatpush2.msra.mxu0 0.0
      %974 = vmatprep.subr.mxu0 0.0
      %975 = vmatpush2.msra.mxu0 0.0
      %976 = vmatprep.subr.mxu0 0.0
      %977 = vmatpush2.msra.mxu0 0.0
      %978 = vmatprep.subr.mxu0 0.0
      %979 = vmatpush2.msra.mxu0 0.0
      %980 = vmatprep.subr.mxu0 0.0
      %981 = vmatpush2.msra.mxu0 0.0
      %982 = vmatprep.subr.mxu0 0.0
      %983 = vmatpush2.msra.mxu0 0.0
      %984 = vmatprep.subr.mxu0 0.0
      %985 = vmatpush2.msra.mxu0 0.0
      %986 = vmatprep.subr.mxu0 0.0
      %987 = vmatpush2.msra.mxu0 0.0
      %988 = vmatprep.subr.mxu0 0.0
      %989 = vmatpush2.msra.mxu0 0.0
      %990 = vmatprep.subr.mxu0 0.0
      %991 = vmatpush2.msra.mxu0 0.0
      %992 = vmatprep.subr.mxu0 0.0
      %993 = vmatpush2.msra.mxu0 0.0
      %994 = vmatprep.subr.mxu0 0.0
      %995 = vmatpush2.msra.mxu0 0.0
      %996 = vmatprep.subr.mxu0 0.0
      %997 = vmatpush2.msra.mxu0 0.0
      %998 = vmatprep.mubr.f32.mxu0 0.0
      %999 = vmatmul.mubr.f32.gmra.mxu0 %v682
      %v1000 = vpop.f32.mrf.mxu0
      %v1001 = vadd.f32 0.0, %v1000
      %v1002 = vpop.f32.mrf.mxu0
      %v1003 = vadd.f32 0.0, %v1002
      %1004 = vdwg.mxu0
      %v1005 = vadd.f32 %v859, %v930
      %v1006 = vadd.f32 %v860, %v932
      %v1007 = vadd.f32 %v861, %v1001
      %v1008 = vadd.f32 %v862, %v1003
      %v1009 = vxor.u32 %v1005, 2147483648
      %v1010 = vmul.f32 %v1009, 1.442695
      %v1011 = vpow.pop %v1010
      %v1012 = vadd.f32 %v1011, 1.0
      %v1013 = vrcp.pop %v1012
      %v1014 = vmul.f32 1.0, %v1013
      %v1015 = vxor.u32 %v1006, 2147483648
      %v1016 = vmul.f32 %v1015, 1.442695
      %v1017 = vpow.pop %v1016
      %v1018 = vadd.f32 %v1017, 1.0
      %v1019 = vrcp.pop %v1018
      %v1020 = vmul.f32 1.0, %v1019
      %v1021 = vtanh.pop %v1007
      %v1022 = vxor.u32 %v1008, 2147483648
      %v1023 = vmul.f32 %v1022, 1.442695
      %v1024 = vpow.pop %v1023
      %v1025 = vadd.f32 %v1024, 1.0
      %v1026 = vrcp.pop %v1025
      %v1027 = vmul.f32 1.0, %v1026
      %v1028 = vmul.f32 %v1020, %v680
      %v1029 = vmul.f32 %v1014, %v1021
      %v1030 = vadd.f32 %v1028, %v1029
      %v1031 = vtanh.pop %v1030
      %v1032 = vmul.f32 %v1027, %v1031
      %s1033 = scalar_lea.vmem %s182, 64
      %v1034 = vld [vmem:[%s1033] sm:$0xff]
      %v1035 = vld [vmem:[%s1033 + $0x8] sm:$0xff]
      %v1036 = vld [vmem:[%s1033 + $0x10] sm:$0xff]
      %v1037 = vld [vmem:[%s1033 + $0x18] sm:$0xff]
      %1038 = vmatprep.subr.mxu0 %v262
      %1039 = vmatpush1.msra.mxu0 %v261
      %1040 = vmatprep.subr.mxu0 %v258
      %1041 = vmatpush1.msra.mxu0 %v257
      %1042 = vmatprep.subr.mxu0 %v254
      %1043 = vmatpush1.msra.mxu0 %v253
      %1044 = vmatprep.subr.mxu0 %v250
      %1045 = vmatpush1.msra.mxu0 %v249
      %1046 = vmatprep.subr.mxu0 %v246
      %1047 = vmatpush1.msra.mxu0 %v245
      %1048 = vmatprep.subr.mxu0 %v242
      %1049 = vmatpush1.msra.mxu0 %v241
      %1050 = vmatprep.subr.mxu0 %v238
      %1051 = vmatpush1.msra.mxu0 %v237
      %1052 = vmatprep.subr.mxu0 %v234
      %1053 = vmatpush1.msra.mxu0 %v233
      %1054 = vmatprep.subr.mxu0 %v230
      %1055 = vmatpush1.msra.mxu0 %v229
      %1056 = vmatprep.subr.mxu0 %v226
      %1057 = vmatpush1.msra.mxu0 %v225
      %1058 = vmatprep.subr.mxu0 %v222
      %1059 = vmatpush1.msra.mxu0 %v221
      %1060 = vmatprep.subr.mxu0 %v218
      %1061 = vmatpush1.msra.mxu0 %v217
      %1062 = vmatprep.subr.mxu0 %v214
      %1063 = vmatpush1.msra.mxu0 %v213
      %1064 = vmatprep.subr.mxu0 %v210
      %1065 = vmatpush1.msra.mxu0 %v209
      %1066 = vmatprep.subr.mxu0 %v206
      %1067 = vmatpush1.msra.mxu0 %v205
      %1068 = vmatprep.subr.mxu0 %v202
      %1069 = vmatpush1.msra.mxu0 %v201
      %1070 = vmatprep.subr.mxu0 0.0
      %1071 = vmatpush2.msra.mxu0 0.0
      %1072 = vmatprep.subr.mxu0 0.0
      %1073 = vmatpush2.msra.mxu0 0.0
      %1074 = vmatprep.subr.mxu0 0.0
      %1075 = vmatpush2.msra.mxu0 0.0
      %1076 = vmatprep.subr.mxu0 0.0
      %1077 = vmatpush2.msra.mxu0 0.0
      %1078 = vmatprep.subr.mxu0 0.0
      %1079 = vmatpush2.msra.mxu0 0.0
      %1080 = vmatprep.subr.mxu0 0.0
      %1081 = vmatpush2.msra.mxu0 0.0
      %1082 = vmatprep.subr.mxu0 0.0
      %1083 = vmatpush2.msra.mxu0 0.0
      %1084 = vmatprep.subr.mxu0 0.0
      %1085 = vmatpush2.msra.mxu0 0.0
      %1086 = vmatprep.subr.mxu0 0.0
      %1087 = vmatpush2.msra.mxu0 0.0
      %1088 = vmatprep.subr.mxu0 0.0
      %1089 = vmatpush2.msra.mxu0 0.0
      %1090 = vmatprep.subr.mxu0 0.0
      %1091 = vmatpush2.msra.mxu0 0.0
      %1092 = vmatprep.subr.mxu0 0.0
      %1093 = vmatpush2.msra.mxu0 0.0
      %1094 = vmatprep.subr.mxu0 0.0
      %1095 = vmatpush2.msra.mxu0 0.0
      %1096 = vmatprep.subr.mxu0 0.0
      %1097 = vmatpush2.msra.mxu0 0.0
      %1098 = vmatprep.subr.mxu0 0.0
      %1099 = vmatpush2.msra.mxu0 0.0
      %1100 = vmatprep.subr.mxu0 0.0
      %1101 = vmatpush2.msra.mxu0 0.0
      %1102 = vmatprep.mubr.f32.mxu0 0.0
      %1103 = vmatmul.mubr.f32.gmra.mxu0 %v857
      %v1104 = vpop.f32.mrf.mxu0
      %v1105 = vadd.f32 0.0, %v1104
      %v1106 = vpop.f32.mrf.mxu0
      %v1107 = vadd.f32 0.0, %v1106
      %1108 = vdwg.mxu0
      %1109 = vmatprep.subr.mxu0 %v264
      %1110 = vmatpush1.msra.mxu0 %v263
      %1111 = vmatprep.subr.mxu0 %v260
      %1112 = vmatpush1.msra.mxu0 %v259
      %1113 = vmatprep.subr.mxu0 %v256
      %1114 = vmatpush1.msra.mxu0 %v255
      %1115 = vmatprep.subr.mxu0 %v252
      %1116 = vmatpush1.msra.mxu0 %v251
      %1117 = vmatprep.subr.mxu0 %v248
      %1118 = vmatpush1.msra.mxu0 %v247
      %1119 = vmatprep.subr.mxu0 %v244
      %1120 = vmatpush1.msra.mxu0 %v243
      %1121 = vmatprep.subr.mxu0 %v240
      %1122 = vmatpush1.msra.mxu0 %v239
      %1123 = vmatprep.subr.mxu0 %v236
      %1124 = vmatpush1.msra.mxu0 %v235
      %1125 = vmatprep.subr.mxu0 %v232
      %1126 = vmatpush1.msra.mxu0 %v231
      %1127 = vmatprep.subr.mxu0 %v228
      %1128 = vmatpush1.msra.mxu0 %v227
      %1129 = vmatprep.subr.mxu0 %v224
      %1130 = vmatpush1.msra.mxu0 %v223
      %1131 = vmatprep.subr.mxu0 %v220
      %1132 = vmatpush1.msra.mxu0 %v219
      %1133 = vmatprep.subr.mxu0 %v216
      %1134 = vmatpush1.msra.mxu0 %v215
      %1135 = vmatprep.subr.mxu0 %v212
      %1136 = vmatpush1.msra.mxu0 %v211
      %1137 = vmatprep.subr.mxu0 %v208
      %1138 = vmatpush1.msra.mxu0 %v207
      %1139 = vmatprep.subr.mxu0 %v204
      %1140 = vmatpush1.msra.mxu0 %v203
      %1141 = vmatprep.subr.mxu0 0.0
      %1142 = vmatpush2.msra.mxu0 0.0
      %1143 = vmatprep.subr.mxu0 0.0
      %1144 = vmatpush2.msra.mxu0 0.0
      %1145 = vmatprep.subr.mxu0 0.0
      %1146 = vmatpush2.msra.mxu0 0.0
      %1147 = vmatprep.subr.mxu0 0.0
      %1148 = vmatpush2.msra.mxu0 0.0
      %1149 = vmatprep.subr.mxu0 0.0
      %1150 = vmatpush2.msra.mxu0 0.0
      %1151 = vmatprep.subr.mxu0 0.0
      %1152 = vmatpush2.msra.mxu0 0.0
      %1153 = vmatprep.subr.mxu0 0.0
      %1154 = vmatpush2.msra.mxu0 0.0
      %1155 = vmatprep.subr.mxu0 0.0
      %1156 = vmatpush2.msra.mxu0 0.0
      %1157 = vmatprep.subr.mxu0 0.0
      %1158 = vmatpush2.msra.mxu0 0.0
      %1159 = vmatprep.subr.mxu0 0.0
      %1160 = vmatpush2.msra.mxu0 0.0
      %1161 = vmatprep.subr.mxu0 0.0
      %1162 = vmatpush2.msra.mxu0 0.0
      %1163 = vmatprep.subr.mxu0 0.0
      %1164 = vmatpush2.msra.mxu0 0.0
      %1165 = vmatprep.subr.mxu0 0.0
      %1166 = vmatpush2.msra.mxu0 0.0
      %1167 = vmatprep.subr.mxu0 0.0
      %1168 = vmatpush2.msra.mxu0 0.0
      %1169 = vmatprep.subr.mxu0 0.0
      %1170 = vmatpush2.msra.mxu0 0.0
      %1171 = vmatprep.subr.mxu0 0.0
      %1172 = vmatpush2.msra.mxu0 0.0
      %1173 = vmatprep.mubr.f32.mxu0 0.0
      %1174 = vmatmul.mubr.f32.gmra.mxu0 %v857
      %v1175 = vpop.f32.mrf.mxu0
      %v1176 = vadd.f32 0.0, %v1175
      %v1177 = vpop.f32.mrf.mxu0
      %v1178 = vadd.f32 0.0, %v1177
      %1179 = vdwg.mxu0
      %v1180 = vadd.f32 %v1034, %v1105
      %v1181 = vadd.f32 %v1035, %v1107
      %v1182 = vadd.f32 %v1036, %v1176
      %v1183 = vadd.f32 %v1037, %v1178
      %v1184 = vxor.u32 %v1180, 2147483648
      %v1185 = vmul.f32 %v1184, 1.442695
      %v1186 = vpow.pop %v1185
      %v1187 = vadd.f32 %v1186, 1.0
      %v1188 = vrcp.pop %v1187
      %v1189 = vmul.f32 1.0, %v1188
      %v1190 = vxor.u32 %v1181, 2147483648
      %v1191 = vmul.f32 %v1190, 1.442695
      %v1192 = vpow.pop %v1191
      %v1193 = vadd.f32 %v1192, 1.0
      %v1194 = vrcp.pop %v1193
      %v1195 = vmul.f32 1.0, %v1194
      %v1196 = vtanh.pop %v1182
      %v1197 = vxor.u32 %v1183, 2147483648
      %v1198 = vmul.f32 %v1197, 1.442695
      %v1199 = vpow.pop %v1198
      %v1200 = vadd.f32 %v1199, 1.0
      %v1201 = vrcp.pop %v1200
      %v1202 = vmul.f32 1.0, %v1201
      %v1203 = vmul.f32 %v1195, %v855
      %v1204 = vmul.f32 %v1189, %v1196
      %v1205 = vadd.f32 %v1203, %v1204
      %v1206 = vtanh.pop %v1205
      %v1207 = vmul.f32 %v1202, %v1206
      %s1208 = scalar_lea.vmem %s190, 160
      %v1209 = vld [vmem:[%s1208] sm:$0xff]
      %v1210 = vld [vmem:[%s1208 + $0x8] sm:$0xff]
      %v1211 = vld [vmem:[%s1208 + $0x10] sm:$0xff]
      %v1212 = vld [vmem:[%s1208 + $0x18] sm:$0xff]
      %1213 = vmatprep.subr.mxu0 %v327
      %1214 = vmatpush1.msra.mxu0 %v326
      %1215 = vmatprep.subr.mxu0 %v323
      %1216 = vmatpush1.msra.mxu0 %v322
      %1217 = vmatprep.subr.mxu0 %v319
      %1218 = vmatpush1.msra.mxu0 %v318
      %1219 = vmatprep.subr.mxu0 %v315
      %1220 = vmatpush1.msra.mxu0 %v314
      %1221 = vmatprep.subr.mxu0 %v311
      %1222 = vmatpush1.msra.mxu0 %v310
      %1223 = vmatprep.subr.mxu0 %v307
      %1224 = vmatpush1.msra.mxu0 %v306
      %1225 = vmatprep.subr.mxu0 %v303
      %1226 = vmatpush1.msra.mxu0 %v302
      %1227 = vmatprep.subr.mxu0 %v299
      %1228 = vmatpush1.msra.mxu0 %v298
      %1229 = vmatprep.subr.mxu0 %v295
      %1230 = vmatpush1.msra.mxu0 %v294
      %1231 = vmatprep.subr.mxu0 %v291
      %1232 = vmatpush1.msra.mxu0 %v290
      %1233 = vmatprep.subr.mxu0 %v287
      %1234 = vmatpush1.msra.mxu0 %v286
      %1235 = vmatprep.subr.mxu0 %v283
      %1236 = vmatpush1.msra.mxu0 %v282
      %1237 = vmatprep.subr.mxu0 %v279
      %1238 = vmatpush1.msra.mxu0 %v278
      %1239 = vmatprep.subr.mxu0 %v275
      %1240 = vmatpush1.msra.mxu0 %v274
      %1241 = vmatprep.subr.mxu0 %v271
      %1242 = vmatpush1.msra.mxu0 %v270
      %1243 = vmatprep.subr.mxu0 %v267
      %1244 = vmatpush1.msra.mxu0 %v266
      %1245 = vmatprep.subr.mxu0 0.0
      %1246 = vmatpush2.msra.mxu0 0.0
      %1247 = vmatprep.subr.mxu0 0.0
      %1248 = vmatpush2.msra.mxu0 0.0
      %1249 = vmatprep.subr.mxu0 0.0
      %1250 = vmatpush2.msra.mxu0 0.0
      %1251 = vmatprep.subr.mxu0 0.0
      %1252 = vmatpush2.msra.mxu0 0.0
      %1253 = vmatprep.subr.mxu0 0.0
      %1254 = vmatpush2.msra.mxu0 0.0
      %1255 = vmatprep.subr.mxu0 0.0
      %1256 = vmatpush2.msra.mxu0 0.0
      %1257 = vmatprep.subr.mxu0 0.0
      %1258 = vmatpush2.msra.mxu0 0.0
      %1259 = vmatprep.subr.mxu0 0.0
      %1260 = vmatpush2.msra.mxu0 0.0
      %1261 = vmatprep.subr.mxu0 0.0
      %1262 = vmatpush2.msra.mxu0 0.0
      %1263 = vmatprep.subr.mxu0 0.0
      %1264 = vmatpush2.msra.mxu0 0.0
      %1265 = vmatprep.subr.mxu0 0.0
      %1266 = vmatpush2.msra.mxu0 0.0
      %1267 = vmatprep.subr.mxu0 0.0
      %1268 = vmatpush2.msra.mxu0 0.0
      %1269 = vmatprep.subr.mxu0 0.0
      %1270 = vmatpush2.msra.mxu0 0.0
      %1271 = vmatprep.subr.mxu0 0.0
      %1272 = vmatpush2.msra.mxu0 0.0
      %1273 = vmatprep.subr.mxu0 0.0
      %1274 = vmatpush2.msra.mxu0 0.0
      %1275 = vmatprep.subr.mxu0 0.0
      %1276 = vmatpush2.msra.mxu0 0.0
      %1277 = vmatprep.mubr.f32.mxu0 0.0
      %1278 = vmatmul.mubr.f32.gmra.mxu0 %v1032
      %v1279 = vpop.f32.mrf.mxu0
      %v1280 = vadd.f32 0.0, %v1279
      %v1281 = vpop.f32.mrf.mxu0
      %v1282 = vadd.f32 0.0, %v1281
      %1283 = vdwg.mxu0
      %1284 = vmatprep.subr.mxu0 %v329
      %1285 = vmatpush1.msra.mxu0 %v328
      %1286 = vmatprep.subr.mxu0 %v325
      %1287 = vmatpush1.msra.mxu0 %v324
      %1288 = vmatprep.subr.mxu0 %v321
      %1289 = vmatpush1.msra.mxu0 %v320
      %1290 = vmatprep.subr.mxu0 %v317
      %1291 = vmatpush1.msra.mxu0 %v316
      %1292 = vmatprep.subr.mxu0 %v313
      %1293 = vmatpush1.msra.mxu0 %v312
      %1294 = vmatprep.subr.mxu0 %v309
      %1295 = vmatpush1.msra.mxu0 %v308
      %1296 = vmatprep.subr.mxu0 %v305
      %1297 = vmatpush1.msra.mxu0 %v304
      %1298 = vmatprep.subr.mxu0 %v301
      %1299 = vmatpush1.msra.mxu0 %v300
      %1300 = vmatprep.subr.mxu0 %v297
      %1301 = vmatpush1.msra.mxu0 %v296
      %1302 = vmatprep.subr.mxu0 %v293
      %1303 = vmatpush1.msra.mxu0 %v292
      %1304 = vmatprep.subr.mxu0 %v289
      %1305 = vmatpush1.msra.mxu0 %v288
      %1306 = vmatprep.subr.mxu0 %v285
      %1307 = vmatpush1.msra.mxu0 %v284
      %1308 = vmatprep.subr.mxu0 %v281
      %1309 = vmatpush1.msra.mxu0 %v280
      %1310 = vmatprep.subr.mxu0 %v277
      %1311 = vmatpush1.msra.mxu0 %v276
      %1312 = vmatprep.subr.mxu0 %v273
      %1313 = vmatpush1.msra.mxu0 %v272
      %1314 = vmatprep.subr.mxu0 %v269
      %1315 = vmatpush1.msra.mxu0 %v268
      %1316 = vmatprep.subr.mxu0 0.0
      %1317 = vmatpush2.msra.mxu0 0.0
      %1318 = vmatprep.subr.mxu0 0.0
      %1319 = vmatpush2.msra.mxu0 0.0
      %1320 = vmatprep.subr.mxu0 0.0
      %1321 = vmatpush2.msra.mxu0 0.0
      %1322 = vmatprep.subr.mxu0 0.0
      %1323 = vmatpush2.msra.mxu0 0.0
      %1324 = vmatprep.subr.mxu0 0.0
      %1325 = vmatpush2.msra.mxu0 0.0
      %1326 = vmatprep.subr.mxu0 0.0
      %1327 = vmatpush2.msra.mxu0 0.0
      %1328 = vmatprep.subr.mxu0 0.0
      %1329 = vmatpush2.msra.mxu0 0.0
      %1330 = vmatprep.subr.mxu0 0.0
      %1331 = vmatpush2.msra.mxu0 0.0
      %1332 = vmatprep.subr.mxu0 0.0
      %1333 = vmatpush2.msra.mxu0 0.0
      %1334 = vmatprep.subr.mxu0 0.0
      %1335 = vmatpush2.msra.mxu0 0.0
      %1336 = vmatprep.subr.mxu0 0.0
      %1337 = vmatpush2.msra.mxu0 0.0
      %1338 = vmatprep.subr.mxu0 0.0
      %1339 = vmatpush2.msra.mxu0 0.0
      %1340 = vmatprep.subr.mxu0 0.0
      %1341 = vmatpush2.msra.mxu0 0.0
      %1342 = vmatprep.subr.mxu0 0.0
      %1343 = vmatpush2.msra.mxu0 0.0
      %1344 = vmatprep.subr.mxu0 0.0
      %1345 = vmatpush2.msra.mxu0 0.0
      %1346 = vmatprep.subr.mxu0 0.0
      %1347 = vmatpush2.msra.mxu0 0.0
      %1348 = vmatprep.mubr.f32.mxu0 0.0
      %1349 = vmatmul.mubr.f32.gmra.mxu0 %v1032
      %v1350 = vpop.f32.mrf.mxu0
      %v1351 = vadd.f32 0.0, %v1350
      %v1352 = vpop.f32.mrf.mxu0
      %v1353 = vadd.f32 0.0, %v1352
      %1354 = vdwg.mxu0
      %v1355 = vadd.f32 %v1209, %v1280
      %v1356 = vadd.f32 %v1210, %v1282
      %v1357 = vadd.f32 %v1211, %v1351
      %v1358 = vadd.f32 %v1212, %v1353
      %v1359 = vxor.u32 %v1355, 2147483648
      %v1360 = vmul.f32 %v1359, 1.442695
      %v1361 = vpow.pop %v1360
      %v1362 = vadd.f32 %v1361, 1.0
      %v1363 = vrcp.pop %v1362
      %v1364 = vmul.f32 1.0, %v1363
      %v1365 = vxor.u32 %v1356, 2147483648
      %v1366 = vmul.f32 %v1365, 1.442695
      %v1367 = vpow.pop %v1366
      %v1368 = vadd.f32 %v1367, 1.0
      %v1369 = vrcp.pop %v1368
      %v1370 = vmul.f32 1.0, %v1369
      %v1371 = vtanh.pop %v1357
      %v1372 = vxor.u32 %v1358, 2147483648
      %v1373 = vmul.f32 %v1372, 1.442695
      %v1374 = vpow.pop %v1373
      %v1375 = vadd.f32 %v1374, 1.0
      %v1376 = vrcp.pop %v1375
      %v1377 = vmul.f32 1.0, %v1376
      %v1378 = vmul.f32 %v1370, %v1030
      %v1379 = vmul.f32 %v1364, %v1371
      %v1380 = vadd.f32 %v1378, %v1379
      %v1381 = vtanh.pop %v1380
      %v1382 = vmul.f32 %v1377, %v1381
      %s1383 = scalar_lea.vmem %s182, 96
      %v1384 = vld [vmem:[%s1383] sm:$0xff]
      %v1385 = vld [vmem:[%s1383 + $0x8] sm:$0xff]
      %v1386 = vld [vmem:[%s1383 + $0x10] sm:$0xff]
      %v1387 = vld [vmem:[%s1383 + $0x18] sm:$0xff]
      %1388 = vmatprep.subr.mxu0 %v262
      %1389 = vmatpush1.msra.mxu0 %v261
      %1390 = vmatprep.subr.mxu0 %v258
      %1391 = vmatpush1.msra.mxu0 %v257
      %1392 = vmatprep.subr.mxu0 %v254
      %1393 = vmatpush1.msra.mxu0 %v253
      %1394 = vmatprep.subr.mxu0 %v250
      %1395 = vmatpush1.msra.mxu0 %v249
      %1396 = vmatprep.subr.mxu0 %v246
      %1397 = vmatpush1.msra.mxu0 %v245
      %1398 = vmatprep.subr.mxu0 %v242
      %1399 = vmatpush1.msra.mxu0 %v241
      %1400 = vmatprep.subr.mxu0 %v238
      %1401 = vmatpush1.msra.mxu0 %v237
      %1402 = vmatprep.subr.mxu0 %v234
      %1403 = vmatpush1.msra.mxu0 %v233
      %1404 = vmatprep.subr.mxu0 %v230
      %1405 = vmatpush1.msra.mxu0 %v229
      %1406 = vmatprep.subr.mxu0 %v226
      %1407 = vmatpush1.msra.mxu0 %v225
      %1408 = vmatprep.subr.mxu0 %v222
      %1409 = vmatpush1.msra.mxu0 %v221
      %1410 = vmatprep.subr.mxu0 %v218
      %1411 = vmatpush1.msra.mxu0 %v217
      %1412 = vmatprep.subr.mxu0 %v214
      %1413 = vmatpush1.msra.mxu0 %v213
      %1414 = vmatprep.subr.mxu0 %v210
      %1415 = vmatpush1.msra.mxu0 %v209
      %1416 = vmatprep.subr.mxu0 %v206
      %1417 = vmatpush1.msra.mxu0 %v205
      %1418 = vmatprep.subr.mxu0 %v202
      %1419 = vmatpush1.msra.mxu0 %v201
      %1420 = vmatprep.subr.mxu0 0.0
      %1421 = vmatpush2.msra.mxu0 0.0
      %1422 = vmatprep.subr.mxu0 0.0
      %1423 = vmatpush2.msra.mxu0 0.0
      %1424 = vmatprep.subr.mxu0 0.0
      %1425 = vmatpush2.msra.mxu0 0.0
      %1426 = vmatprep.subr.mxu0 0.0
      %1427 = vmatpush2.msra.mxu0 0.0
      %1428 = vmatprep.subr.mxu0 0.0
      %1429 = vmatpush2.msra.mxu0 0.0
      %1430 = vmatprep.subr.mxu0 0.0
      %1431 = vmatpush2.msra.mxu0 0.0
      %1432 = vmatprep.subr.mxu0 0.0
      %1433 = vmatpush2.msra.mxu0 0.0
      %1434 = vmatprep.subr.mxu0 0.0
      %1435 = vmatpush2.msra.mxu0 0.0
      %1436 = vmatprep.subr.mxu0 0.0
      %1437 = vmatpush2.msra.mxu0 0.0
      %1438 = vmatprep.subr.mxu0 0.0
      %1439 = vmatpush2.msra.mxu0 0.0
      %1440 = vmatprep.subr.mxu0 0.0
      %1441 = vmatpush2.msra.mxu0 0.0
      %1442 = vmatprep.subr.mxu0 0.0
      %1443 = vmatpush2.msra.mxu0 0.0
      %1444 = vmatprep.subr.mxu0 0.0
      %1445 = vmatpush2.msra.mxu0 0.0
      %1446 = vmatprep.subr.mxu0 0.0
      %1447 = vmatpush2.msra.mxu0 0.0
      %1448 = vmatprep.subr.mxu0 0.0
      %1449 = vmatpush2.msra.mxu0 0.0
      %1450 = vmatprep.subr.mxu0 0.0
      %1451 = vmatpush2.msra.mxu0 0.0
      %1452 = vmatprep.mubr.f32.mxu0 0.0
      %1453 = vmatmul.mubr.f32.gmra.mxu0 %v1207
      %v1454 = vpop.f32.mrf.mxu0
      %v1455 = vadd.f32 0.0, %v1454
      %v1456 = vpop.f32.mrf.mxu0
      %v1457 = vadd.f32 0.0, %v1456
      %1458 = vdwg.mxu0
      %1459 = vmatprep.subr.mxu0 %v264
      %1460 = vmatpush1.msra.mxu0 %v263
      %1461 = vmatprep.subr.mxu0 %v260
      %1462 = vmatpush1.msra.mxu0 %v259
      %1463 = vmatprep.subr.mxu0 %v256
      %1464 = vmatpush1.msra.mxu0 %v255
      %1465 = vmatprep.subr.mxu0 %v252
      %1466 = vmatpush1.msra.mxu0 %v251
      %1467 = vmatprep.subr.mxu0 %v248
      %1468 = vmatpush1.msra.mxu0 %v247
      %1469 = vmatprep.subr.mxu0 %v244
      %1470 = vmatpush1.msra.mxu0 %v243
      %1471 = vmatprep.subr.mxu0 %v240
      %1472 = vmatpush1.msra.mxu0 %v239
      %1473 = vmatprep.subr.mxu0 %v236
      %1474 = vmatpush1.msra.mxu0 %v235
      %1475 = vmatprep.subr.mxu0 %v232
      %1476 = vmatpush1.msra.mxu0 %v231
      %1477 = vmatprep.subr.mxu0 %v228
      %1478 = vmatpush1.msra.mxu0 %v227
      %1479 = vmatprep.subr.mxu0 %v224
      %1480 = vmatpush1.msra.mxu0 %v223
      %1481 = vmatprep.subr.mxu0 %v220
      %1482 = vmatpush1.msra.mxu0 %v219
      %1483 = vmatprep.subr.mxu0 %v216
      %1484 = vmatpush1.msra.mxu0 %v215
      %1485 = vmatprep.subr.mxu0 %v212
      %1486 = vmatpush1.msra.mxu0 %v211
      %1487 = vmatprep.subr.mxu0 %v208
      %1488 = vmatpush1.msra.mxu0 %v207
      %1489 = vmatprep.subr.mxu0 %v204
      %1490 = vmatpush1.msra.mxu0 %v203
      %1491 = vmatprep.subr.mxu0 0.0
      %1492 = vmatpush2.msra.mxu0 0.0
      %1493 = vmatprep.subr.mxu0 0.0
      %1494 = vmatpush2.msra.mxu0 0.0
      %1495 = vmatprep.subr.mxu0 0.0
      %1496 = vmatpush2.msra.mxu0 0.0
      %1497 = vmatprep.subr.mxu0 0.0
      %1498 = vmatpush2.msra.mxu0 0.0
      %1499 = vmatprep.subr.mxu0 0.0
      %1500 = vmatpush2.msra.mxu0 0.0
      %1501 = vmatprep.subr.mxu0 0.0
      %1502 = vmatpush2.msra.mxu0 0.0
      %1503 = vmatprep.subr.mxu0 0.0
      %1504 = vmatpush2.msra.mxu0 0.0
      %1505 = vmatprep.subr.mxu0 0.0
      %1506 = vmatpush2.msra.mxu0 0.0
      %1507 = vmatprep.subr.mxu0 0.0
      %1508 = vmatpush2.msra.mxu0 0.0
      %1509 = vmatprep.subr.mxu0 0.0
      %1510 = vmatpush2.msra.mxu0 0.0
      %1511 = vmatprep.subr.mxu0 0.0
      %1512 = vmatpush2.msra.mxu0 0.0
      %1513 = vmatprep.subr.mxu0 0.0
      %1514 = vmatpush2.msra.mxu0 0.0
      %1515 = vmatprep.subr.mxu0 0.0
      %1516 = vmatpush2.msra.mxu0 0.0
      %1517 = vmatprep.subr.mxu0 0.0
      %1518 = vmatpush2.msra.mxu0 0.0
      %1519 = vmatprep.subr.mxu0 0.0
      %1520 = vmatpush2.msra.mxu0 0.0
      %1521 = vmatprep.subr.mxu0 0.0
      %1522 = vmatpush2.msra.mxu0 0.0
      %1523 = vmatprep.mubr.f32.mxu0 0.0
      %1524 = vmatmul.mubr.f32.gmra.mxu0 %v1207
      %v1525 = vpop.f32.mrf.mxu0
      %v1526 = vadd.f32 0.0, %v1525
      %v1527 = vpop.f32.mrf.mxu0
      %v1528 = vadd.f32 0.0, %v1527
      %1529 = vdwg.mxu0
      %v1530 = vadd.f32 %v1384, %v1455
      %v1531 = vadd.f32 %v1385, %v1457
      %v1532 = vadd.f32 %v1386, %v1526
      %v1533 = vadd.f32 %v1387, %v1528
      %v1534 = vxor.u32 %v1530, 2147483648
      %v1535 = vmul.f32 %v1534, 1.442695
      %v1536 = vpow.pop %v1535
      %v1537 = vadd.f32 %v1536, 1.0
      %v1538 = vrcp.pop %v1537
      %v1539 = vmul.f32 1.0, %v1538
      %v1540 = vxor.u32 %v1531, 2147483648
      %v1541 = vmul.f32 %v1540, 1.442695
      %v1542 = vpow.pop %v1541
      %v1543 = vadd.f32 %v1542, 1.0
      %v1544 = vrcp.pop %v1543
      %v1545 = vmul.f32 1.0, %v1544
      %v1546 = vtanh.pop %v1532
      %v1547 = vxor.u32 %v1533, 2147483648
      %v1548 = vmul.f32 %v1547, 1.442695
      %v1549 = vpow.pop %v1548
      %v1550 = vadd.f32 %v1549, 1.0
      %v1551 = vrcp.pop %v1550
      %v1552 = vmul.f32 1.0, %v1551
      %v1553 = vmul.f32 %v1545, %v1205
      %v1554 = vmul.f32 %v1539, %v1546
      %v1555 = vadd.f32 %v1553, %v1554
      %v1556 = vtanh.pop %v1555
      %v1557 = vmul.f32 %v1552, %v1556
      %s1558 = scalar_lea.vmem %s190, 128
      %v1559 = vld [vmem:[%s1558] sm:$0xff]
      %v1560 = vld [vmem:[%s1558 + $0x8] sm:$0xff]
      %v1561 = vld [vmem:[%s1558 + $0x10] sm:$0xff]
      %v1562 = vld [vmem:[%s1558 + $0x18] sm:$0xff]
      %1563 = vmatprep.subr.mxu0 %v327
      %1564 = vmatpush1.msra.mxu0 %v326
      %1565 = vmatprep.subr.mxu0 %v323
      %1566 = vmatpush1.msra.mxu0 %v322
      %1567 = vmatprep.subr.mxu0 %v319
      %1568 = vmatpush1.msra.mxu0 %v318
      %1569 = vmatprep.subr.mxu0 %v315
      %1570 = vmatpush1.msra.mxu0 %v314
      %1571 = vmatprep.subr.mxu0 %v311
      %1572 = vmatpush1.msra.mxu0 %v310
      %1573 = vmatprep.subr.mxu0 %v307
      %1574 = vmatpush1.msra.mxu0 %v306
      %1575 = vmatprep.subr.mxu0 %v303
      %1576 = vmatpush1.msra.mxu0 %v302
      %1577 = vmatprep.subr.mxu0 %v299
      %1578 = vmatpush1.msra.mxu0 %v298
      %1579 = vmatprep.subr.mxu0 %v295
      %1580 = vmatpush1.msra.mxu0 %v294
      %1581 = vmatprep.subr.mxu0 %v291
      %1582 = vmatpush1.msra.mxu0 %v290
      %1583 = vmatprep.subr.mxu0 %v287
      %1584 = vmatpush1.msra.mxu0 %v286
      %1585 = vmatprep.subr.mxu0 %v283
      %1586 = vmatpush1.msra.mxu0 %v282
      %1587 = vmatprep.subr.mxu0 %v279
      %1588 = vmatpush1.msra.mxu0 %v278
      %1589 = vmatprep.subr.mxu0 %v275
      %1590 = vmatpush1.msra.mxu0 %v274
      %1591 = vmatprep.subr.mxu0 %v271
      %1592 = vmatpush1.msra.mxu0 %v270
      %1593 = vmatprep.subr.mxu0 %v267
      %1594 = vmatpush1.msra.mxu0 %v266
      %1595 = vmatprep.subr.mxu0 0.0
      %1596 = vmatpush2.msra.mxu0 0.0
      %1597 = vmatprep.subr.mxu0 0.0
      %1598 = vmatpush2.msra.mxu0 0.0
      %1599 = vmatprep.subr.mxu0 0.0
      %1600 = vmatpush2.msra.mxu0 0.0
      %1601 = vmatprep.subr.mxu0 0.0
      %1602 = vmatpush2.msra.mxu0 0.0
      %1603 = vmatprep.subr.mxu0 0.0
      %1604 = vmatpush2.msra.mxu0 0.0
      %1605 = vmatprep.subr.mxu0 0.0
      %1606 = vmatpush2.msra.mxu0 0.0
      %1607 = vmatprep.subr.mxu0 0.0
      %1608 = vmatpush2.msra.mxu0 0.0
      %1609 = vmatprep.subr.mxu0 0.0
      %1610 = vmatpush2.msra.mxu0 0.0
      %1611 = vmatprep.subr.mxu0 0.0
      %1612 = vmatpush2.msra.mxu0 0.0
      %1613 = vmatprep.subr.mxu0 0.0
      %1614 = vmatpush2.msra.mxu0 0.0
      %1615 = vmatprep.subr.mxu0 0.0
      %1616 = vmatpush2.msra.mxu0 0.0
      %1617 = vmatprep.subr.mxu0 0.0
      %1618 = vmatpush2.msra.mxu0 0.0
      %1619 = vmatprep.subr.mxu0 0.0
      %1620 = vmatpush2.msra.mxu0 0.0
      %1621 = vmatprep.subr.mxu0 0.0
      %1622 = vmatpush2.msra.mxu0 0.0
      %1623 = vmatprep.subr.mxu0 0.0
      %1624 = vmatpush2.msra.mxu0 0.0
      %1625 = vmatprep.subr.mxu0 0.0
      %1626 = vmatpush2.msra.mxu0 0.0
      %1627 = vmatprep.mubr.f32.mxu0 0.0
      %1628 = vmatmul.mubr.f32.gmra.mxu0 %v1382
      %v1629 = vpop.f32.mrf.mxu0
      %v1630 = vadd.f32 0.0, %v1629
      %v1631 = vpop.f32.mrf.mxu0
      %v1632 = vadd.f32 0.0, %v1631
      %1633 = vdwg.mxu0
      %1634 = vmatprep.subr.mxu0 %v329
      %1635 = vmatpush1.msra.mxu0 %v328
      %1636 = vmatprep.subr.mxu0 %v325
      %1637 = vmatpush1.msra.mxu0 %v324
      %1638 = vmatprep.subr.mxu0 %v321
      %1639 = vmatpush1.msra.mxu0 %v320
      %1640 = vmatprep.subr.mxu0 %v317
      %1641 = vmatpush1.msra.mxu0 %v316
      %1642 = vmatprep.subr.mxu0 %v313
      %1643 = vmatpush1.msra.mxu0 %v312
      %1644 = vmatprep.subr.mxu0 %v309
      %1645 = vmatpush1.msra.mxu0 %v308
      %1646 = vmatprep.subr.mxu0 %v305
      %1647 = vmatpush1.msra.mxu0 %v304
      %1648 = vmatprep.subr.mxu0 %v301
      %1649 = vmatpush1.msra.mxu0 %v300
      %1650 = vmatprep.subr.mxu0 %v297
      %1651 = vmatpush1.msra.mxu0 %v296
      %1652 = vmatprep.subr.mxu0 %v293
      %1653 = vmatpush1.msra.mxu0 %v292
      %1654 = vmatprep.subr.mxu0 %v289
      %1655 = vmatpush1.msra.mxu0 %v288
      %1656 = vmatprep.subr.mxu0 %v285
      %1657 = vmatpush1.msra.mxu0 %v284
      %1658 = vmatprep.subr.mxu0 %v281
      %1659 = vmatpush1.msra.mxu0 %v280
      %1660 = vmatprep.subr.mxu0 %v277
      %1661 = vmatpush1.msra.mxu0 %v276
      %1662 = vmatprep.subr.mxu0 %v273
      %1663 = vmatpush1.msra.mxu0 %v272
      %1664 = vmatprep.subr.mxu0 %v269
      %1665 = vmatpush1.msra.mxu0 %v268
      %1666 = vmatprep.subr.mxu0 0.0
      %1667 = vmatpush2.msra.mxu0 0.0
      %1668 = vmatprep.subr.mxu0 0.0
      %1669 = vmatpush2.msra.mxu0 0.0
      %1670 = vmatprep.subr.mxu0 0.0
      %1671 = vmatpush2.msra.mxu0 0.0
      %1672 = vmatprep.subr.mxu0 0.0
      %1673 = vmatpush2.msra.mxu0 0.0
      %1674 = vmatprep.subr.mxu0 0.0
      %1675 = vmatpush2.msra.mxu0 0.0
      %1676 = vmatprep.subr.mxu0 0.0
      %1677 = vmatpush2.msra.mxu0 0.0
      %1678 = vmatprep.subr.mxu0 0.0
      %1679 = vmatpush2.msra.mxu0 0.0
      %1680 = vmatprep.subr.mxu0 0.0
      %1681 = vmatpush2.msra.mxu0 0.0
      %1682 = vmatprep.subr.mxu0 0.0
      %1683 = vmatpush2.msra.mxu0 0.0
      %1684 = vmatprep.subr.mxu0 0.0
      %1685 = vmatpush2.msra.mxu0 0.0
      %1686 = vmatprep.subr.mxu0 0.0
      %1687 = vmatpush2.msra.mxu0 0.0
      %1688 = vmatprep.subr.mxu0 0.0
      %1689 = vmatpush2.msra.mxu0 0.0
      %1690 = vmatprep.subr.mxu0 0.0
      %1691 = vmatpush2.msra.mxu0 0.0
      %1692 = vmatprep.subr.mxu0 0.0
      %1693 = vmatpush2.msra.mxu0 0.0
      %1694 = vmatprep.subr.mxu0 0.0
      %1695 = vmatpush2.msra.mxu0 0.0
      %1696 = vmatprep.subr.mxu0 0.0
      %1697 = vmatpush2.msra.mxu0 0.0
      %1698 = vmatprep.mubr.f32.mxu0 0.0
      %1699 = vmatmul.mubr.f32.gmra.mxu0 %v1382
      %v1700 = vpop.f32.mrf.mxu0
      %v1701 = vadd.f32 0.0, %v1700
      %v1702 = vpop.f32.mrf.mxu0
      %v1703 = vadd.f32 0.0, %v1702
      %1704 = vdwg.mxu0
      %v1705 = vadd.f32 %v1559, %v1630
      %v1706 = vadd.f32 %v1560, %v1632
      %v1707 = vadd.f32 %v1561, %v1701
      %v1708 = vadd.f32 %v1562, %v1703
      %v1709 = vxor.u32 %v1705, 2147483648
      %v1710 = vmul.f32 %v1709, 1.442695
      %v1711 = vpow.pop %v1710
      %v1712 = vadd.f32 %v1711, 1.0
      %v1713 = vrcp.pop %v1712
      %v1714 = vmul.f32 1.0, %v1713
      %v1715 = vxor.u32 %v1706, 2147483648
      %v1716 = vmul.f32 %v1715, 1.442695
      %v1717 = vpow.pop %v1716
      %v1718 = vadd.f32 %v1717, 1.0
      %v1719 = vrcp.pop %v1718
      %v1720 = vmul.f32 1.0, %v1719
      %v1721 = vtanh.pop %v1707
      %v1722 = vxor.u32 %v1708, 2147483648
      %v1723 = vmul.f32 %v1722, 1.442695
      %v1724 = vpow.pop %v1723
      %v1725 = vadd.f32 %v1724, 1.0
      %v1726 = vrcp.pop %v1725
      %v1727 = vmul.f32 1.0, %v1726
      %v1728 = vmul.f32 %v1720, %v1380
      %v1729 = vmul.f32 %v1714, %v1721
      %v1730 = vadd.f32 %v1728, %v1729
      %v1731 = vtanh.pop %v1730
      %v1732 = vmul.f32 %v1727, %v1731
      %s1733 = scalar_lea.vmem %s182, 128
      %v1734 = vld [vmem:[%s1733] sm:$0xff]
      %v1735 = vld [vmem:[%s1733 + $0x8] sm:$0xff]
      %v1736 = vld [vmem:[%s1733 + $0x10] sm:$0xff]
      %v1737 = vld [vmem:[%s1733 + $0x18] sm:$0xff]
      %1738 = vmatprep.subr.mxu0 %v262
      %1739 = vmatpush1.msra.mxu0 %v261
      %1740 = vmatprep.subr.mxu0 %v258
      %1741 = vmatpush1.msra.mxu0 %v257
      %1742 = vmatprep.subr.mxu0 %v254
      %1743 = vmatpush1.msra.mxu0 %v253
      %1744 = vmatprep.subr.mxu0 %v250
      %1745 = vmatpush1.msra.mxu0 %v249
      %1746 = vmatprep.subr.mxu0 %v246
      %1747 = vmatpush1.msra.mxu0 %v245
      %1748 = vmatprep.subr.mxu0 %v242
      %1749 = vmatpush1.msra.mxu0 %v241
      %1750 = vmatprep.subr.mxu0 %v238
      %1751 = vmatpush1.msra.mxu0 %v237
      %1752 = vmatprep.subr.mxu0 %v234
      %1753 = vmatpush1.msra.mxu0 %v233
      %1754 = vmatprep.subr.mxu0 %v230
      %1755 = vmatpush1.msra.mxu0 %v229
      %1756 = vmatprep.subr.mxu0 %v226
      %1757 = vmatpush1.msra.mxu0 %v225
      %1758 = vmatprep.subr.mxu0 %v222
      %1759 = vmatpush1.msra.mxu0 %v221
      %1760 = vmatprep.subr.mxu0 %v218
      %1761 = vmatpush1.msra.mxu0 %v217
      %1762 = vmatprep.subr.mxu0 %v214
      %1763 = vmatpush1.msra.mxu0 %v213
      %1764 = vmatprep.subr.mxu0 %v210
      %1765 = vmatpush1.msra.mxu0 %v209
      %1766 = vmatprep.subr.mxu0 %v206
      %1767 = vmatpush1.msra.mxu0 %v205
      %1768 = vmatprep.subr.mxu0 %v202
      %1769 = vmatpush1.msra.mxu0 %v201
      %1770 = vmatprep.subr.mxu0 0.0
      %1771 = vmatpush2.msra.mxu0 0.0
      %1772 = vmatprep.subr.mxu0 0.0
      %1773 = vmatpush2.msra.mxu0 0.0
      %1774 = vmatprep.subr.mxu0 0.0
      %1775 = vmatpush2.msra.mxu0 0.0
      %1776 = vmatprep.subr.mxu0 0.0
      %1777 = vmatpush2.msra.mxu0 0.0
      %1778 = vmatprep.subr.mxu0 0.0
      %1779 = vmatpush2.msra.mxu0 0.0
      %1780 = vmatprep.subr.mxu0 0.0
      %1781 = vmatpush2.msra.mxu0 0.0
      %1782 = vmatprep.subr.mxu0 0.0
      %1783 = vmatpush2.msra.mxu0 0.0
      %1784 = vmatprep.subr.mxu0 0.0
      %1785 = vmatpush2.msra.mxu0 0.0
      %1786 = vmatprep.subr.mxu0 0.0
      %1787 = vmatpush2.msra.mxu0 0.0
      %1788 = vmatprep.subr.mxu0 0.0
      %1789 = vmatpush2.msra.mxu0 0.0
      %1790 = vmatprep.subr.mxu0 0.0
      %1791 = vmatpush2.msra.mxu0 0.0
      %1792 = vmatprep.subr.mxu0 0.0
      %1793 = vmatpush2.msra.mxu0 0.0
      %1794 = vmatprep.subr.mxu0 0.0
      %1795 = vmatpush2.msra.mxu0 0.0
      %1796 = vmatprep.subr.mxu0 0.0
      %1797 = vmatpush2.msra.mxu0 0.0
      %1798 = vmatprep.subr.mxu0 0.0
      %1799 = vmatpush2.msra.mxu0 0.0
      %1800 = vmatprep.subr.mxu0 0.0
      %1801 = vmatpush2.msra.mxu0 0.0
      %1802 = vmatprep.mubr.f32.mxu0 0.0
      %1803 = vmatmul.mubr.f32.gmra.mxu0 %v1557
      %v1804 = vpop.f32.mrf.mxu0
      %v1805 = vadd.f32 0.0, %v1804
      %v1806 = vpop.f32.mrf.mxu0
      %v1807 = vadd.f32 0.0, %v1806
      %1808 = vdwg.mxu0
      %1809 = vmatprep.subr.mxu0 %v264
      %1810 = vmatpush1.msra.mxu0 %v263
      %1811 = vmatprep.subr.mxu0 %v260
      %1812 = vmatpush1.msra.mxu0 %v259
      %1813 = vmatprep.subr.mxu0 %v256
      %1814 = vmatpush1.msra.mxu0 %v255
      %1815 = vmatprep.subr.mxu0 %v252
      %1816 = vmatpush1.msra.mxu0 %v251
      %1817 = vmatprep.subr.mxu0 %v248
      %1818 = vmatpush1.msra.mxu0 %v247
      %1819 = vmatprep.subr.mxu0 %v244
      %1820 = vmatpush1.msra.mxu0 %v243
      %1821 = vmatprep.subr.mxu0 %v240
      %1822 = vmatpush1.msra.mxu0 %v239
      %1823 = vmatprep.subr.mxu0 %v236
      %1824 = vmatpush1.msra.mxu0 %v235
      %1825 = vmatprep.subr.mxu0 %v232
      %1826 = vmatpush1.msra.mxu0 %v231
      %1827 = vmatprep.subr.mxu0 %v228
      %1828 = vmatpush1.msra.mxu0 %v227
      %1829 = vmatprep.subr.mxu0 %v224
      %1830 = vmatpush1.msra.mxu0 %v223
      %1831 = vmatprep.subr.mxu0 %v220
      %1832 = vmatpush1.msra.mxu0 %v219
      %1833 = vmatprep.subr.mxu0 %v216
      %1834 = vmatpush1.msra.mxu0 %v215
      %1835 = vmatprep.subr.mxu0 %v212
      %1836 = vmatpush1.msra.mxu0 %v211
      %1837 = vmatprep.subr.mxu0 %v208
      %1838 = vmatpush1.msra.mxu0 %v207
      %1839 = vmatprep.subr.mxu0 %v204
      %1840 = vmatpush1.msra.mxu0 %v203
      %1841 = vmatprep.subr.mxu0 0.0
      %1842 = vmatpush2.msra.mxu0 0.0
      %1843 = vmatprep.subr.mxu0 0.0
      %1844 = vmatpush2.msra.mxu0 0.0
      %1845 = vmatprep.subr.mxu0 0.0
      %1846 = vmatpush2.msra.mxu0 0.0
      %1847 = vmatprep.subr.mxu0 0.0
      %1848 = vmatpush2.msra.mxu0 0.0
      %1849 = vmatprep.subr.mxu0 0.0
      %1850 = vmatpush2.msra.mxu0 0.0
      %1851 = vmatprep.subr.mxu0 0.0
      %1852 = vmatpush2.msra.mxu0 0.0
      %1853 = vmatprep.subr.mxu0 0.0
      %1854 = vmatpush2.msra.mxu0 0.0
      %1855 = vmatprep.subr.mxu0 0.0
      %1856 = vmatpush2.msra.mxu0 0.0
      %1857 = vmatprep.subr.mxu0 0.0
      %1858 = vmatpush2.msra.mxu0 0.0
      %1859 = vmatprep.subr.mxu0 0.0
      %1860 = vmatpush2.msra.mxu0 0.0
      %1861 = vmatprep.subr.mxu0 0.0
      %1862 = vmatpush2.msra.mxu0 0.0
      %1863 = vmatprep.subr.mxu0 0.0
      %1864 = vmatpush2.msra.mxu0 0.0
      %1865 = vmatprep.subr.mxu0 0.0
      %1866 = vmatpush2.msra.mxu0 0.0
      %1867 = vmatprep.subr.mxu0 0.0
      %1868 = vmatpush2.msra.mxu0 0.0
      %1869 = vmatprep.subr.mxu0 0.0
      %1870 = vmatpush2.msra.mxu0 0.0
      %1871 = vmatprep.subr.mxu0 0.0
      %1872 = vmatpush2.msra.mxu0 0.0
      %1873 = vmatprep.mubr.f32.mxu0 0.0
      %1874 = vmatmul.mubr.f32.gmra.mxu0 %v1557
      %v1875 = vpop.f32.mrf.mxu0
      %v1876 = vadd.f32 0.0, %v1875
      %v1877 = vpop.f32.mrf.mxu0
      %v1878 = vadd.f32 0.0, %v1877
      %1879 = vdwg.mxu0
      %v1880 = vadd.f32 %v1734, %v1805
      %v1881 = vadd.f32 %v1735, %v1807
      %v1882 = vadd.f32 %v1736, %v1876
      %v1883 = vadd.f32 %v1737, %v1878
      %v1884 = vxor.u32 %v1880, 2147483648
      %v1885 = vmul.f32 %v1884, 1.442695
      %v1886 = vpow.pop %v1885
      %v1887 = vadd.f32 %v1886, 1.0
      %v1888 = vrcp.pop %v1887
      %v1889 = vmul.f32 1.0, %v1888
      %v1890 = vxor.u32 %v1881, 2147483648
      %v1891 = vmul.f32 %v1890, 1.442695
      %v1892 = vpow.pop %v1891
      %v1893 = vadd.f32 %v1892, 1.0
      %v1894 = vrcp.pop %v1893
      %v1895 = vmul.f32 1.0, %v1894
      %v1896 = vtanh.pop %v1882
      %v1897 = vxor.u32 %v1883, 2147483648
      %v1898 = vmul.f32 %v1897, 1.442695
      %v1899 = vpow.pop %v1898
      %v1900 = vadd.f32 %v1899, 1.0
      %v1901 = vrcp.pop %v1900
      %v1902 = vmul.f32 1.0, %v1901
      %v1903 = vmul.f32 %v1895, %v1555
      %v1904 = vmul.f32 %v1889, %v1896
      %v1905 = vadd.f32 %v1903, %v1904
      %v1906 = vtanh.pop %v1905
      %v1907 = vmul.f32 %v1902, %v1906
      %s1908 = scalar_lea.vmem %s190, 96
      %v1909 = vld [vmem:[%s1908] sm:$0xff]
      %v1910 = vld [vmem:[%s1908 + $0x8] sm:$0xff]
      %v1911 = vld [vmem:[%s1908 + $0x10] sm:$0xff]
      %v1912 = vld [vmem:[%s1908 + $0x18] sm:$0xff]
      %1913 = vmatprep.subr.mxu0 %v327
      %1914 = vmatpush1.msra.mxu0 %v326
      %1915 = vmatprep.subr.mxu0 %v323
      %1916 = vmatpush1.msra.mxu0 %v322
      %1917 = vmatprep.subr.mxu0 %v319
      %1918 = vmatpush1.msra.mxu0 %v318
      %1919 = vmatprep.subr.mxu0 %v315
      %1920 = vmatpush1.msra.mxu0 %v314
      %1921 = vmatprep.subr.mxu0 %v311
      %1922 = vmatpush1.msra.mxu0 %v310
      %1923 = vmatprep.subr.mxu0 %v307
      %1924 = vmatpush1.msra.mxu0 %v306
      %1925 = vmatprep.subr.mxu0 %v303
      %1926 = vmatpush1.msra.mxu0 %v302
      %1927 = vmatprep.subr.mxu0 %v299
      %1928 = vmatpush1.msra.mxu0 %v298
      %1929 = vmatprep.subr.mxu0 %v295
      %1930 = vmatpush1.msra.mxu0 %v294
      %1931 = vmatprep.subr.mxu0 %v291
      %1932 = vmatpush1.msra.mxu0 %v290
      %1933 = vmatprep.subr.mxu0 %v287
      %1934 = vmatpush1.msra.mxu0 %v286
      %1935 = vmatprep.subr.mxu0 %v283
      %1936 = vmatpush1.msra.mxu0 %v282
      %1937 = vmatprep.subr.mxu0 %v279
      %1938 = vmatpush1.msra.mxu0 %v278
      %1939 = vmatprep.subr.mxu0 %v275
      %1940 = vmatpush1.msra.mxu0 %v274
      %1941 = vmatprep.subr.mxu0 %v271
      %1942 = vmatpush1.msra.mxu0 %v270
      %1943 = vmatprep.subr.mxu0 %v267
      %1944 = vmatpush1.msra.mxu0 %v266
      %1945 = vmatprep.subr.mxu0 0.0
      %1946 = vmatpush2.msra.mxu0 0.0
      %1947 = vmatprep.subr.mxu0 0.0
      %1948 = vmatpush2.msra.mxu0 0.0
      %1949 = vmatprep.subr.mxu0 0.0
      %1950 = vmatpush2.msra.mxu0 0.0
      %1951 = vmatprep.subr.mxu0 0.0
      %1952 = vmatpush2.msra.mxu0 0.0
      %1953 = vmatprep.subr.mxu0 0.0
      %1954 = vmatpush2.msra.mxu0 0.0
      %1955 = vmatprep.subr.mxu0 0.0
      %1956 = vmatpush2.msra.mxu0 0.0
      %1957 = vmatprep.subr.mxu0 0.0
      %1958 = vmatpush2.msra.mxu0 0.0
      %1959 = vmatprep.subr.mxu0 0.0
      %1960 = vmatpush2.msra.mxu0 0.0
      %1961 = vmatprep.subr.mxu0 0.0
      %1962 = vmatpush2.msra.mxu0 0.0
      %1963 = vmatprep.subr.mxu0 0.0
      %1964 = vmatpush2.msra.mxu0 0.0
      %1965 = vmatprep.subr.mxu0 0.0
      %1966 = vmatpush2.msra.mxu0 0.0
      %1967 = vmatprep.subr.mxu0 0.0
      %1968 = vmatpush2.msra.mxu0 0.0
      %1969 = vmatprep.subr.mxu0 0.0
      %1970 = vmatpush2.msra.mxu0 0.0
      %1971 = vmatprep.subr.mxu0 0.0
      %1972 = vmatpush2.msra.mxu0 0.0
      %1973 = vmatprep.subr.mxu0 0.0
      %1974 = vmatpush2.msra.mxu0 0.0
      %1975 = vmatprep.subr.mxu0 0.0
      %1976 = vmatpush2.msra.mxu0 0.0
      %1977 = vmatprep.mubr.f32.mxu0 0.0
      %1978 = vmatmul.mubr.f32.gmra.mxu0 %v1732
      %v1979 = vpop.f32.mrf.mxu0
      %v1980 = vadd.f32 0.0, %v1979
      %v1981 = vpop.f32.mrf.mxu0
      %v1982 = vadd.f32 0.0, %v1981
      %1983 = vdwg.mxu0
      %1984 = vmatprep.subr.mxu0 %v329
      %1985 = vmatpush1.msra.mxu0 %v328
      %1986 = vmatprep.subr.mxu0 %v325
      %1987 = vmatpush1.msra.mxu0 %v324
      %1988 = vmatprep.subr.mxu0 %v321
      %1989 = vmatpush1.msra.mxu0 %v320
      %1990 = vmatprep.subr.mxu0 %v317
      %1991 = vmatpush1.msra.mxu0 %v316
      %1992 = vmatprep.subr.mxu0 %v313
      %1993 = vmatpush1.msra.mxu0 %v312
      %1994 = vmatprep.subr.mxu0 %v309
      %1995 = vmatpush1.msra.mxu0 %v308
      %1996 = vmatprep.subr.mxu0 %v305
      %1997 = vmatpush1.msra.mxu0 %v304
      %1998 = vmatprep.subr.mxu0 %v301
      %1999 = vmatpush1.msra.mxu0 %v300
      %2000 = vmatprep.subr.mxu0 %v297
      %2001 = vmatpush1.msra.mxu0 %v296
      %2002 = vmatprep.subr.mxu0 %v293
      %2003 = vmatpush1.msra.mxu0 %v292
      %2004 = vmatprep.subr.mxu0 %v289
      %2005 = vmatpush1.msra.mxu0 %v288
      %2006 = vmatprep.subr.mxu0 %v285
      %2007 = vmatpush1.msra.mxu0 %v284
      %2008 = vmatprep.subr.mxu0 %v281
      %2009 = vmatpush1.msra.mxu0 %v280
      %2010 = vmatprep.subr.mxu0 %v277
      %2011 = vmatpush1.msra.mxu0 %v276
      %2012 = vmatprep.subr.mxu0 %v273
      %2013 = vmatpush1.msra.mxu0 %v272
      %2014 = vmatprep.subr.mxu0 %v269
      %2015 = vmatpush1.msra.mxu0 %v268
      %2016 = vmatprep.subr.mxu0 0.0
      %2017 = vmatpush2.msra.mxu0 0.0
      %2018 = vmatprep.subr.mxu0 0.0
      %2019 = vmatpush2.msra.mxu0 0.0
      %2020 = vmatprep.subr.mxu0 0.0
      %2021 = vmatpush2.msra.mxu0 0.0
      %2022 = vmatprep.subr.mxu0 0.0
      %2023 = vmatpush2.msra.mxu0 0.0
      %2024 = vmatprep.subr.mxu0 0.0
      %2025 = vmatpush2.msra.mxu0 0.0
      %2026 = vmatprep.subr.mxu0 0.0
      %2027 = vmatpush2.msra.mxu0 0.0
      %2028 = vmatprep.subr.mxu0 0.0
      %2029 = vmatpush2.msra.mxu0 0.0
      %2030 = vmatprep.subr.mxu0 0.0
      %2031 = vmatpush2.msra.mxu0 0.0
      %2032 = vmatprep.subr.mxu0 0.0
      %2033 = vmatpush2.msra.mxu0 0.0
      %2034 = vmatprep.subr.mxu0 0.0
      %2035 = vmatpush2.msra.mxu0 0.0
      %2036 = vmatprep.subr.mxu0 0.0
      %2037 = vmatpush2.msra.mxu0 0.0
      %2038 = vmatprep.subr.mxu0 0.0
      %2039 = vmatpush2.msra.mxu0 0.0
      %2040 = vmatprep.subr.mxu0 0.0
      %2041 = vmatpush2.msra.mxu0 0.0
      %2042 = vmatprep.subr.mxu0 0.0
      %2043 = vmatpush2.msra.mxu0 0.0
      %2044 = vmatprep.subr.mxu0 0.0
      %2045 = vmatpush2.msra.mxu0 0.0
      %2046 = vmatprep.subr.mxu0 0.0
      %2047 = vmatpush2.msra.mxu0 0.0
      %2048 = vmatprep.mubr.f32.mxu0 0.0
      %2049 = vmatmul.mubr.f32.gmra.mxu0 %v1732
      %v2050 = vpop.f32.mrf.mxu0
      %v2051 = vadd.f32 0.0, %v2050
      %v2052 = vpop.f32.mrf.mxu0
      %v2053 = vadd.f32 0.0, %v2052
      %2054 = vdwg.mxu0
      %v2055 = vadd.f32 %v1909, %v1980
      %v2056 = vadd.f32 %v1910, %v1982
      %v2057 = vadd.f32 %v1911, %v2051
      %v2058 = vadd.f32 %v1912, %v2053
      %v2059 = vxor.u32 %v2055, 2147483648
      %v2060 = vmul.f32 %v2059, 1.442695
      %v2061 = vpow.pop %v2060
      %v2062 = vadd.f32 %v2061, 1.0
      %v2063 = vrcp.pop %v2062
      %v2064 = vmul.f32 1.0, %v2063
      %v2065 = vxor.u32 %v2056, 2147483648
      %v2066 = vmul.f32 %v2065, 1.442695
      %v2067 = vpow.pop %v2066
      %v2068 = vadd.f32 %v2067, 1.0
      %v2069 = vrcp.pop %v2068
      %v2070 = vmul.f32 1.0, %v2069
      %v2071 = vtanh.pop %v2057
      %v2072 = vxor.u32 %v2058, 2147483648
      %v2073 = vmul.f32 %v2072, 1.442695
      %v2074 = vpow.pop %v2073
      %v2075 = vadd.f32 %v2074, 1.0
      %v2076 = vrcp.pop %v2075
      %v2077 = vmul.f32 1.0, %v2076
      %v2078 = vmul.f32 %v2070, %v1730
      %v2079 = vmul.f32 %v2064, %v2071
      %v2080 = vadd.f32 %v2078, %v2079
      %v2081 = vtanh.pop %v2080
      %v2082 = vmul.f32 %v2077, %v2081
      %s2083 = scalar_lea.vmem %s182, 160
      %v2084 = vld [vmem:[%s2083] sm:$0xff]
      %v2085 = vld [vmem:[%s2083 + $0x8] sm:$0xff]
      %v2086 = vld [vmem:[%s2083 + $0x10] sm:$0xff]
      %v2087 = vld [vmem:[%s2083 + $0x18] sm:$0xff]
      %2088 = vmatprep.subr.mxu0 %v262
      %2089 = vmatpush1.msra.mxu0 %v261
      %2090 = vmatprep.subr.mxu0 %v258
      %2091 = vmatpush1.msra.mxu0 %v257
      %2092 = vmatprep.subr.mxu0 %v254
      %2093 = vmatpush1.msra.mxu0 %v253
      %2094 = vmatprep.subr.mxu0 %v250
      %2095 = vmatpush1.msra.mxu0 %v249
      %2096 = vmatprep.subr.mxu0 %v246
      %2097 = vmatpush1.msra.mxu0 %v245
      %2098 = vmatprep.subr.mxu0 %v242
      %2099 = vmatpush1.msra.mxu0 %v241
      %2100 = vmatprep.subr.mxu0 %v238
      %2101 = vmatpush1.msra.mxu0 %v237
      %2102 = vmatprep.subr.mxu0 %v234
      %2103 = vmatpush1.msra.mxu0 %v233
      %2104 = vmatprep.subr.mxu0 %v230
      %2105 = vmatpush1.msra.mxu0 %v229
      %2106 = vmatprep.subr.mxu0 %v226
      %2107 = vmatpush1.msra.mxu0 %v225
      %2108 = vmatprep.subr.mxu0 %v222
      %2109 = vmatpush1.msra.mxu0 %v221
      %2110 = vmatprep.subr.mxu0 %v218
      %2111 = vmatpush1.msra.mxu0 %v217
      %2112 = vmatprep.subr.mxu0 %v214
      %2113 = vmatpush1.msra.mxu0 %v213
      %2114 = vmatprep.subr.mxu0 %v210
      %2115 = vmatpush1.msra.mxu0 %v209
      %2116 = vmatprep.subr.mxu0 %v206
      %2117 = vmatpush1.msra.mxu0 %v205
      %2118 = vmatprep.subr.mxu0 %v202
      %2119 = vmatpush1.msra.mxu0 %v201
      %2120 = vmatprep.subr.mxu0 0.0
      %2121 = vmatpush2.msra.mxu0 0.0
      %2122 = vmatprep.subr.mxu0 0.0
      %2123 = vmatpush2.msra.mxu0 0.0
      %2124 = vmatprep.subr.mxu0 0.0
      %2125 = vmatpush2.msra.mxu0 0.0
      %2126 = vmatprep.subr.mxu0 0.0
      %2127 = vmatpush2.msra.mxu0 0.0
      %2128 = vmatprep.subr.mxu0 0.0
      %2129 = vmatpush2.msra.mxu0 0.0
      %2130 = vmatprep.subr.mxu0 0.0
      %2131 = vmatpush2.msra.mxu0 0.0
      %2132 = vmatprep.subr.mxu0 0.0
      %2133 = vmatpush2.msra.mxu0 0.0
      %2134 = vmatprep.subr.mxu0 0.0
      %2135 = vmatpush2.msra.mxu0 0.0
      %2136 = vmatprep.subr.mxu0 0.0
      %2137 = vmatpush2.msra.mxu0 0.0
      %2138 = vmatprep.subr.mxu0 0.0
      %2139 = vmatpush2.msra.mxu0 0.0
      %2140 = vmatprep.subr.mxu0 0.0
      %2141 = vmatpush2.msra.mxu0 0.0
      %2142 = vmatprep.subr.mxu0 0.0
      %2143 = vmatpush2.msra.mxu0 0.0
      %2144 = vmatprep.subr.mxu0 0.0
      %2145 = vmatpush2.msra.mxu0 0.0
      %2146 = vmatprep.subr.mxu0 0.0
      %2147 = vmatpush2.msra.mxu0 0.0
      %2148 = vmatprep.subr.mxu0 0.0
      %2149 = vmatpush2.msra.mxu0 0.0
      %2150 = vmatprep.subr.mxu0 0.0
      %2151 = vmatpush2.msra.mxu0 0.0
      %2152 = vmatprep.mubr.f32.mxu0 0.0
      %2153 = vmatmul.mubr.f32.gmra.mxu0 %v1907
      %v2154 = vpop.f32.mrf.mxu0
      %v2155 = vadd.f32 0.0, %v2154
      %v2156 = vpop.f32.mrf.mxu0
      %v2157 = vadd.f32 0.0, %v2156
      %2158 = vdwg.mxu0
      %2159 = vmatprep.subr.mxu0 %v264
      %2160 = vmatpush1.msra.mxu0 %v263
      %2161 = vmatprep.subr.mxu0 %v260
      %2162 = vmatpush1.msra.mxu0 %v259
      %2163 = vmatprep.subr.mxu0 %v256
      %2164 = vmatpush1.msra.mxu0 %v255
      %2165 = vmatprep.subr.mxu0 %v252
      %2166 = vmatpush1.msra.mxu0 %v251
      %2167 = vmatprep.subr.mxu0 %v248
      %2168 = vmatpush1.msra.mxu0 %v247
      %2169 = vmatprep.subr.mxu0 %v244
      %2170 = vmatpush1.msra.mxu0 %v243
      %2171 = vmatprep.subr.mxu0 %v240
      %2172 = vmatpush1.msra.mxu0 %v239
      %2173 = vmatprep.subr.mxu0 %v236
      %2174 = vmatpush1.msra.mxu0 %v235
      %2175 = vmatprep.subr.mxu0 %v232
      %2176 = vmatpush1.msra.mxu0 %v231
      %2177 = vmatprep.subr.mxu0 %v228
      %2178 = vmatpush1.msra.mxu0 %v227
      %2179 = vmatprep.subr.mxu0 %v224
      %2180 = vmatpush1.msra.mxu0 %v223
      %2181 = vmatprep.subr.mxu0 %v220
      %2182 = vmatpush1.msra.mxu0 %v219
      %2183 = vmatprep.subr.mxu0 %v216
      %2184 = vmatpush1.msra.mxu0 %v215
      %2185 = vmatprep.subr.mxu0 %v212
      %2186 = vmatpush1.msra.mxu0 %v211
      %2187 = vmatprep.subr.mxu0 %v208
      %2188 = vmatpush1.msra.mxu0 %v207
      %2189 = vmatprep.subr.mxu0 %v204
      %2190 = vmatpush1.msra.mxu0 %v203
      %2191 = vmatprep.subr.mxu0 0.0
      %2192 = vmatpush2.msra.mxu0 0.0
      %2193 = vmatprep.subr.mxu0 0.0
      %2194 = vmatpush2.msra.mxu0 0.0
      %2195 = vmatprep.subr.mxu0 0.0
      %2196 = vmatpush2.msra.mxu0 0.0
      %2197 = vmatprep.subr.mxu0 0.0
      %2198 = vmatpush2.msra.mxu0 0.0
      %2199 = vmatprep.subr.mxu0 0.0
      %2200 = vmatpush2.msra.mxu0 0.0
      %2201 = vmatprep.subr.mxu0 0.0
      %2202 = vmatpush2.msra.mxu0 0.0
      %2203 = vmatprep.subr.mxu0 0.0
      %2204 = vmatpush2.msra.mxu0 0.0
      %2205 = vmatprep.subr.mxu0 0.0
      %2206 = vmatpush2.msra.mxu0 0.0
      %2207 = vmatprep.subr.mxu0 0.0
      %2208 = vmatpush2.msra.mxu0 0.0
      %2209 = vmatprep.subr.mxu0 0.0
      %2210 = vmatpush2.msra.mxu0 0.0
      %2211 = vmatprep.subr.mxu0 0.0
      %2212 = vmatpush2.msra.mxu0 0.0
      %2213 = vmatprep.subr.mxu0 0.0
      %2214 = vmatpush2.msra.mxu0 0.0
      %2215 = vmatprep.subr.mxu0 0.0
      %2216 = vmatpush2.msra.mxu0 0.0
      %2217 = vmatprep.subr.mxu0 0.0
      %2218 = vmatpush2.msra.mxu0 0.0
      %2219 = vmatprep.subr.mxu0 0.0
      %2220 = vmatpush2.msra.mxu0 0.0
      %2221 = vmatprep.subr.mxu0 0.0
      %2222 = vmatpush2.msra.mxu0 0.0
      %2223 = vmatprep.mubr.f32.mxu0 0.0
      %2224 = vmatmul.mubr.f32.gmra.mxu0 %v1907
      %v2225 = vpop.f32.mrf.mxu0
      %v2226 = vadd.f32 0.0, %v2225
      %v2227 = vpop.f32.mrf.mxu0
      %v2228 = vadd.f32 0.0, %v2227
      %2229 = vdwg.mxu0
      %v2230 = vadd.f32 %v2084, %v2155
      %v2231 = vadd.f32 %v2085, %v2157
      %v2232 = vadd.f32 %v2086, %v2226
      %v2233 = vadd.f32 %v2087, %v2228
      %v2234 = vxor.u32 %v2230, 2147483648
      %v2235 = vmul.f32 %v2234, 1.442695
      %v2236 = vpow.pop %v2235
      %v2237 = vadd.f32 %v2236, 1.0
      %v2238 = vrcp.pop %v2237
      %v2239 = vmul.f32 1.0, %v2238
      %v2240 = vxor.u32 %v2231, 2147483648
      %v2241 = vmul.f32 %v2240, 1.442695
      %v2242 = vpow.pop %v2241
      %v2243 = vadd.f32 %v2242, 1.0
      %v2244 = vrcp.pop %v2243
      %v2245 = vmul.f32 1.0, %v2244
      %v2246 = vtanh.pop %v2232
      %v2247 = vxor.u32 %v2233, 2147483648
      %v2248 = vmul.f32 %v2247, 1.442695
      %v2249 = vpow.pop %v2248
      %v2250 = vadd.f32 %v2249, 1.0
      %v2251 = vrcp.pop %v2250
      %v2252 = vmul.f32 1.0, %v2251
      %v2253 = vmul.f32 %v2245, %v1905
      %v2254 = vmul.f32 %v2239, %v2246
      %v2255 = vadd.f32 %v2253, %v2254
      %v2256 = vtanh.pop %v2255
      %v2257 = vmul.f32 %v2252, %v2256
      %s2258 = scalar_lea.vmem %s190, 64
      %v2259 = vld [vmem:[%s2258] sm:$0xff]
      %v2260 = vld [vmem:[%s2258 + $0x8] sm:$0xff]
      %v2261 = vld [vmem:[%s2258 + $0x10] sm:$0xff]
      %v2262 = vld [vmem:[%s2258 + $0x18] sm:$0xff]
      %2263 = vmatprep.subr.mxu0 %v327
      %2264 = vmatpush1.msra.mxu0 %v326
      %2265 = vmatprep.subr.mxu0 %v323
      %2266 = vmatpush1.msra.mxu0 %v322
      %2267 = vmatprep.subr.mxu0 %v319
      %2268 = vmatpush1.msra.mxu0 %v318
      %2269 = vmatprep.subr.mxu0 %v315
      %2270 = vmatpush1.msra.mxu0 %v314
      %2271 = vmatprep.subr.mxu0 %v311
      %2272 = vmatpush1.msra.mxu0 %v310
      %2273 = vmatprep.subr.mxu0 %v307
      %2274 = vmatpush1.msra.mxu0 %v306
      %2275 = vmatprep.subr.mxu0 %v303
      %2276 = vmatpush1.msra.mxu0 %v302
      %2277 = vmatprep.subr.mxu0 %v299
      %2278 = vmatpush1.msra.mxu0 %v298
      %2279 = vmatprep.subr.mxu0 %v295
      %2280 = vmatpush1.msra.mxu0 %v294
      %2281 = vmatprep.subr.mxu0 %v291
      %2282 = vmatpush1.msra.mxu0 %v290
      %2283 = vmatprep.subr.mxu0 %v287
      %2284 = vmatpush1.msra.mxu0 %v286
      %2285 = vmatprep.subr.mxu0 %v283
      %2286 = vmatpush1.msra.mxu0 %v282
      %2287 = vmatprep.subr.mxu0 %v279
      %2288 = vmatpush1.msra.mxu0 %v278
      %2289 = vmatprep.subr.mxu0 %v275
      %2290 = vmatpush1.msra.mxu0 %v274
      %2291 = vmatprep.subr.mxu0 %v271
      %2292 = vmatpush1.msra.mxu0 %v270
      %2293 = vmatprep.subr.mxu0 %v267
      %2294 = vmatpush1.msra.mxu0 %v266
      %2295 = vmatprep.subr.mxu0 0.0
      %2296 = vmatpush2.msra.mxu0 0.0
      %2297 = vmatprep.subr.mxu0 0.0
      %2298 = vmatpush2.msra.mxu0 0.0
      %2299 = vmatprep.subr.mxu0 0.0
      %2300 = vmatpush2.msra.mxu0 0.0
      %2301 = vmatprep.subr.mxu0 0.0
      %2302 = vmatpush2.msra.mxu0 0.0
      %2303 = vmatprep.subr.mxu0 0.0
      %2304 = vmatpush2.msra.mxu0 0.0
      %2305 = vmatprep.subr.mxu0 0.0
      %2306 = vmatpush2.msra.mxu0 0.0
      %2307 = vmatprep.subr.mxu0 0.0
      %2308 = vmatpush2.msra.mxu0 0.0
      %2309 = vmatprep.subr.mxu0 0.0
      %2310 = vmatpush2.msra.mxu0 0.0
      %2311 = vmatprep.subr.mxu0 0.0
      %2312 = vmatpush2.msra.mxu0 0.0
      %2313 = vmatprep.subr.mxu0 0.0
      %2314 = vmatpush2.msra.mxu0 0.0
      %2315 = vmatprep.subr.mxu0 0.0
      %2316 = vmatpush2.msra.mxu0 0.0
      %2317 = vmatprep.subr.mxu0 0.0
      %2318 = vmatpush2.msra.mxu0 0.0
      %2319 = vmatprep.subr.mxu0 0.0
      %2320 = vmatpush2.msra.mxu0 0.0
      %2321 = vmatprep.subr.mxu0 0.0
      %2322 = vmatpush2.msra.mxu0 0.0
      %2323 = vmatprep.subr.mxu0 0.0
      %2324 = vmatpush2.msra.mxu0 0.0
      %2325 = vmatprep.subr.mxu0 0.0
      %2326 = vmatpush2.msra.mxu0 0.0
      %2327 = vmatprep.mubr.f32.mxu0 0.0
      %2328 = vmatmul.mubr.f32.gmra.mxu0 %v2082
      %v2329 = vpop.f32.mrf.mxu0
      %v2330 = vadd.f32 0.0, %v2329
      %v2331 = vpop.f32.mrf.mxu0
      %v2332 = vadd.f32 0.0, %v2331
      %2333 = vdwg.mxu0
      %2334 = vmatprep.subr.mxu0 %v329
      %2335 = vmatpush1.msra.mxu0 %v328
      %2336 = vmatprep.subr.mxu0 %v325
      %2337 = vmatpush1.msra.mxu0 %v324
      %2338 = vmatprep.subr.mxu0 %v321
      %2339 = vmatpush1.msra.mxu0 %v320
      %2340 = vmatprep.subr.mxu0 %v317
      %2341 = vmatpush1.msra.mxu0 %v316
      %2342 = vmatprep.subr.mxu0 %v313
      %2343 = vmatpush1.msra.mxu0 %v312
      %2344 = vmatprep.subr.mxu0 %v309
      %2345 = vmatpush1.msra.mxu0 %v308
      %2346 = vmatprep.subr.mxu0 %v305
      %2347 = vmatpush1.msra.mxu0 %v304
      %2348 = vmatprep.subr.mxu0 %v301
      %2349 = vmatpush1.msra.mxu0 %v300
      %2350 = vmatprep.subr.mxu0 %v297
      %2351 = vmatpush1.msra.mxu0 %v296
      %2352 = vmatprep.subr.mxu0 %v293
      %2353 = vmatpush1.msra.mxu0 %v292
      %2354 = vmatprep.subr.mxu0 %v289
      %2355 = vmatpush1.msra.mxu0 %v288
      %2356 = vmatprep.subr.mxu0 %v285
      %2357 = vmatpush1.msra.mxu0 %v284
      %2358 = vmatprep.subr.mxu0 %v281
      %2359 = vmatpush1.msra.mxu0 %v280
      %2360 = vmatprep.subr.mxu0 %v277
      %2361 = vmatpush1.msra.mxu0 %v276
      %2362 = vmatprep.subr.mxu0 %v273
      %2363 = vmatpush1.msra.mxu0 %v272
      %2364 = vmatprep.subr.mxu0 %v269
      %2365 = vmatpush1.msra.mxu0 %v268
      %2366 = vmatprep.subr.mxu0 0.0
      %2367 = vmatpush2.msra.mxu0 0.0
      %2368 = vmatprep.subr.mxu0 0.0
      %2369 = vmatpush2.msra.mxu0 0.0
      %2370 = vmatprep.subr.mxu0 0.0
      %2371 = vmatpush2.msra.mxu0 0.0
      %2372 = vmatprep.subr.mxu0 0.0
      %2373 = vmatpush2.msra.mxu0 0.0
      %2374 = vmatprep.subr.mxu0 0.0
      %2375 = vmatpush2.msra.mxu0 0.0
      %2376 = vmatprep.subr.mxu0 0.0
      %2377 = vmatpush2.msra.mxu0 0.0
      %2378 = vmatprep.subr.mxu0 0.0
      %2379 = vmatpush2.msra.mxu0 0.0
      %2380 = vmatprep.subr.mxu0 0.0
      %2381 = vmatpush2.msra.mxu0 0.0
      %2382 = vmatprep.subr.mxu0 0.0
      %2383 = vmatpush2.msra.mxu0 0.0
      %2384 = vmatprep.subr.mxu0 0.0
      %2385 = vmatpush2.msra.mxu0 0.0
      %2386 = vmatprep.subr.mxu0 0.0
      %2387 = vmatpush2.msra.mxu0 0.0
      %2388 = vmatprep.subr.mxu0 0.0
      %2389 = vmatpush2.msra.mxu0 0.0
      %2390 = vmatprep.subr.mxu0 0.0
      %2391 = vmatpush2.msra.mxu0 0.0
      %2392 = vmatprep.subr.mxu0 0.0
      %2393 = vmatpush2.msra.mxu0 0.0
      %2394 = vmatprep.subr.mxu0 0.0
      %2395 = vmatpush2.msra.mxu0 0.0
      %2396 = vmatprep.subr.mxu0 0.0
      %2397 = vmatpush2.msra.mxu0 0.0
      %2398 = vmatprep.mubr.f32.mxu0 0.0
      %2399 = vmatmul.mubr.f32.gmra.mxu0 %v2082
      %v2400 = vpop.f32.mrf.mxu0
      %v2401 = vadd.f32 0.0, %v2400
      %v2402 = vpop.f32.mrf.mxu0
      %v2403 = vadd.f32 0.0, %v2402
      %2404 = vdwg.mxu0
      %v2405 = vadd.f32 %v2259, %v2330
      %v2406 = vadd.f32 %v2260, %v2332
      %v2407 = vadd.f32 %v2261, %v2401
      %v2408 = vadd.f32 %v2262, %v2403
      %v2409 = vxor.u32 %v2405, 2147483648
      %v2410 = vmul.f32 %v2409, 1.442695
      %v2411 = vpow.pop %v2410
      %v2412 = vadd.f32 %v2411, 1.0
      %v2413 = vrcp.pop %v2412
      %v2414 = vmul.f32 1.0, %v2413
      %v2415 = vxor.u32 %v2406, 2147483648
      %v2416 = vmul.f32 %v2415, 1.442695
      %v2417 = vpow.pop %v2416
      %v2418 = vadd.f32 %v2417, 1.0
      %v2419 = vrcp.pop %v2418
      %v2420 = vmul.f32 1.0, %v2419
      %v2421 = vtanh.pop %v2407
      %v2422 = vxor.u32 %v2408, 2147483648
      %v2423 = vmul.f32 %v2422, 1.442695
      %v2424 = vpow.pop %v2423
      %v2425 = vadd.f32 %v2424, 1.0
      %v2426 = vrcp.pop %v2425
      %v2427 = vmul.f32 1.0, %v2426
      %v2428 = vmul.f32 %v2420, %v2080
      %v2429 = vmul.f32 %v2414, %v2421
      %v2430 = vadd.f32 %v2428, %v2429
      %v2431 = vtanh.pop %v2430
      %v2432 = vmul.f32 %v2427, %v2431
      %s2433 = scalar_lea.vmem %s182, 192
      %v2434 = vld [vmem:[%s2433] sm:$0xff]
      %v2435 = vld [vmem:[%s2433 + $0x8] sm:$0xff]
      %v2436 = vld [vmem:[%s2433 + $0x10] sm:$0xff]
      %v2437 = vld [vmem:[%s2433 + $0x18] sm:$0xff]
      %2438 = vmatprep.subr.mxu0 %v262
      %2439 = vmatpush1.msra.mxu0 %v261
      %2440 = vmatprep.subr.mxu0 %v258
      %2441 = vmatpush1.msra.mxu0 %v257
      %2442 = vmatprep.subr.mxu0 %v254
      %2443 = vmatpush1.msra.mxu0 %v253
      %2444 = vmatprep.subr.mxu0 %v250
      %2445 = vmatpush1.msra.mxu0 %v249
      %2446 = vmatprep.subr.mxu0 %v246
      %2447 = vmatpush1.msra.mxu0 %v245
      %2448 = vmatprep.subr.mxu0 %v242
      %2449 = vmatpush1.msra.mxu0 %v241
      %2450 = vmatprep.subr.mxu0 %v238
      %2451 = vmatpush1.msra.mxu0 %v237
      %2452 = vmatprep.subr.mxu0 %v234
      %2453 = vmatpush1.msra.mxu0 %v233
      %2454 = vmatprep.subr.mxu0 %v230
      %2455 = vmatpush1.msra.mxu0 %v229
      %2456 = vmatprep.subr.mxu0 %v226
      %2457 = vmatpush1.msra.mxu0 %v225
      %2458 = vmatprep.subr.mxu0 %v222
      %2459 = vmatpush1.msra.mxu0 %v221
      %2460 = vmatprep.subr.mxu0 %v218
      %2461 = vmatpush1.msra.mxu0 %v217
      %2462 = vmatprep.subr.mxu0 %v214
      %2463 = vmatpush1.msra.mxu0 %v213
      %2464 = vmatprep.subr.mxu0 %v210
      %2465 = vmatpush1.msra.mxu0 %v209
      %2466 = vmatprep.subr.mxu0 %v206
      %2467 = vmatpush1.msra.mxu0 %v205
      %2468 = vmatprep.subr.mxu0 %v202
      %2469 = vmatpush1.msra.mxu0 %v201
      %2470 = vmatprep.subr.mxu0 0.0
      %2471 = vmatpush2.msra.mxu0 0.0
      %2472 = vmatprep.subr.mxu0 0.0
      %2473 = vmatpush2.msra.mxu0 0.0
      %2474 = vmatprep.subr.mxu0 0.0
      %2475 = vmatpush2.msra.mxu0 0.0
      %2476 = vmatprep.subr.mxu0 0.0
      %2477 = vmatpush2.msra.mxu0 0.0
      %2478 = vmatprep.subr.mxu0 0.0
      %2479 = vmatpush2.msra.mxu0 0.0
      %2480 = vmatprep.subr.mxu0 0.0
      %2481 = vmatpush2.msra.mxu0 0.0
      %2482 = vmatprep.subr.mxu0 0.0
      %2483 = vmatpush2.msra.mxu0 0.0
      %2484 = vmatprep.subr.mxu0 0.0
      %2485 = vmatpush2.msra.mxu0 0.0
      %2486 = vmatprep.subr.mxu0 0.0
      %2487 = vmatpush2.msra.mxu0 0.0
      %2488 = vmatprep.subr.mxu0 0.0
      %2489 = vmatpush2.msra.mxu0 0.0
      %2490 = vmatprep.subr.mxu0 0.0
      %2491 = vmatpush2.msra.mxu0 0.0
      %2492 = vmatprep.subr.mxu0 0.0
      %2493 = vmatpush2.msra.mxu0 0.0
      %2494 = vmatprep.subr.mxu0 0.0
      %2495 = vmatpush2.msra.mxu0 0.0
      %2496 = vmatprep.subr.mxu0 0.0
      %2497 = vmatpush2.msra.mxu0 0.0
      %2498 = vmatprep.subr.mxu0 0.0
      %2499 = vmatpush2.msra.mxu0 0.0
      %2500 = vmatprep.subr.mxu0 0.0
      %2501 = vmatpush2.msra.mxu0 0.0
      %2502 = vmatprep.mubr.f32.mxu0 0.0
      %2503 = vmatmul.mubr.f32.gmra.mxu0 %v2257
      %v2504 = vpop.f32.mrf.mxu0
      %v2505 = vadd.f32 0.0, %v2504
      %v2506 = vpop.f32.mrf.mxu0
      %v2507 = vadd.f32 0.0, %v2506
      %2508 = vdwg.mxu0
      %2509 = vmatprep.subr.mxu0 %v264
      %2510 = vmatpush1.msra.mxu0 %v263
      %2511 = vmatprep.subr.mxu0 %v260
      %2512 = vmatpush1.msra.mxu0 %v259
      %2513 = vmatprep.subr.mxu0 %v256
      %2514 = vmatpush1.msra.mxu0 %v255
      %2515 = vmatprep.subr.mxu0 %v252
      %2516 = vmatpush1.msra.mxu0 %v251
      %2517 = vmatprep.subr.mxu0 %v248
      %2518 = vmatpush1.msra.mxu0 %v247
      %2519 = vmatprep.subr.mxu0 %v244
      %2520 = vmatpush1.msra.mxu0 %v243
      %2521 = vmatprep.subr.mxu0 %v240
      %2522 = vmatpush1.msra.mxu0 %v239
      %2523 = vmatprep.subr.mxu0 %v236
      %2524 = vmatpush1.msra.mxu0 %v235
      %2525 = vmatprep.subr.mxu0 %v232
      %2526 = vmatpush1.msra.mxu0 %v231
      %2527 = vmatprep.subr.mxu0 %v228
      %2528 = vmatpush1.msra.mxu0 %v227
      %2529 = vmatprep.subr.mxu0 %v224
      %2530 = vmatpush1.msra.mxu0 %v223
      %2531 = vmatprep.subr.mxu0 %v220
      %2532 = vmatpush1.msra.mxu0 %v219
      %2533 = vmatprep.subr.mxu0 %v216
      %2534 = vmatpush1.msra.mxu0 %v215
      %2535 = vmatprep.subr.mxu0 %v212
      %2536 = vmatpush1.msra.mxu0 %v211
      %2537 = vmatprep.subr.mxu0 %v208
      %2538 = vmatpush1.msra.mxu0 %v207
      %2539 = vmatprep.subr.mxu0 %v204
      %2540 = vmatpush1.msra.mxu0 %v203
      %2541 = vmatprep.subr.mxu0 0.0
      %2542 = vmatpush2.msra.mxu0 0.0
      %2543 = vmatprep.subr.mxu0 0.0
      %2544 = vmatpush2.msra.mxu0 0.0
      %2545 = vmatprep.subr.mxu0 0.0
      %2546 = vmatpush2.msra.mxu0 0.0
      %2547 = vmatprep.subr.mxu0 0.0
      %2548 = vmatpush2.msra.mxu0 0.0
      %2549 = vmatprep.subr.mxu0 0.0
      %2550 = vmatpush2.msra.mxu0 0.0
      %2551 = vmatprep.subr.mxu0 0.0
      %2552 = vmatpush2.msra.mxu0 0.0
      %2553 = vmatprep.subr.mxu0 0.0
      %2554 = vmatpush2.msra.mxu0 0.0
      %2555 = vmatprep.subr.mxu0 0.0
      %2556 = vmatpush2.msra.mxu0 0.0
      %2557 = vmatprep.subr.mxu0 0.0
      %2558 = vmatpush2.msra.mxu0 0.0
      %2559 = vmatprep.subr.mxu0 0.0
      %2560 = vmatpush2.msra.mxu0 0.0
      %2561 = vmatprep.subr.mxu0 0.0
      %2562 = vmatpush2.msra.mxu0 0.0
      %2563 = vmatprep.subr.mxu0 0.0
      %2564 = vmatpush2.msra.mxu0 0.0
      %2565 = vmatprep.subr.mxu0 0.0
      %2566 = vmatpush2.msra.mxu0 0.0
      %2567 = vmatprep.subr.mxu0 0.0
      %2568 = vmatpush2.msra.mxu0 0.0
      %2569 = vmatprep.subr.mxu0 0.0
      %2570 = vmatpush2.msra.mxu0 0.0
      %2571 = vmatprep.subr.mxu0 0.0
      %2572 = vmatpush2.msra.mxu0 0.0
      %2573 = vmatprep.mubr.f32.mxu0 0.0
      %2574 = vmatmul.mubr.f32.gmra.mxu0 %v2257
      %v2575 = vpop.f32.mrf.mxu0
      %v2576 = vadd.f32 0.0, %v2575
      %v2577 = vpop.f32.mrf.mxu0
      %v2578 = vadd.f32 0.0, %v2577
      %2579 = vdwg.mxu0
      %v2580 = vadd.f32 %v2434, %v2505
      %v2581 = vadd.f32 %v2435, %v2507
      %v2582 = vadd.f32 %v2436, %v2576
      %v2583 = vadd.f32 %v2437, %v2578
      %v2584 = vxor.u32 %v2580, 2147483648
      %v2585 = vmul.f32 %v2584, 1.442695
      %v2586 = vpow.pop %v2585
      %v2587 = vadd.f32 %v2586, 1.0
      %v2588 = vrcp.pop %v2587
      %v2589 = vmul.f32 1.0, %v2588
      %v2590 = vxor.u32 %v2581, 2147483648
      %v2591 = vmul.f32 %v2590, 1.442695
      %v2592 = vpow.pop %v2591
      %v2593 = vadd.f32 %v2592, 1.0
      %v2594 = vrcp.pop %v2593
      %v2595 = vmul.f32 1.0, %v2594
      %v2596 = vtanh.pop %v2582
      %v2597 = vxor.u32 %v2583, 2147483648
      %v2598 = vmul.f32 %v2597, 1.442695
      %v2599 = vpow.pop %v2598
      %v2600 = vadd.f32 %v2599, 1.0
      %v2601 = vrcp.pop %v2600
      %v2602 = vmul.f32 1.0, %v2601
      %v2603 = vmul.f32 %v2595, %v2255
      %v2604 = vmul.f32 %v2589, %v2596
      %v2605 = vadd.f32 %v2603, %v2604
      %v2606 = vtanh.pop %v2605
      %v2607 = vmul.f32 %v2602, %v2606
      %s2608 = scalar_lea.vmem %s190, 32
      %v2609 = vld [vmem:[%s2608] sm:$0xff]
      %v2610 = vld [vmem:[%s2608 + $0x8] sm:$0xff]
      %v2611 = vld [vmem:[%s2608 + $0x10] sm:$0xff]
      %v2612 = vld [vmem:[%s2608 + $0x18] sm:$0xff]
      %2613 = vmatprep.subr.mxu0 %v327
      %2614 = vmatpush1.msra.mxu0 %v326
      %2615 = vmatprep.subr.mxu0 %v323
      %2616 = vmatpush1.msra.mxu0 %v322
      %2617 = vmatprep.subr.mxu0 %v319
      %2618 = vmatpush1.msra.mxu0 %v318
      %2619 = vmatprep.subr.mxu0 %v315
      %2620 = vmatpush1.msra.mxu0 %v314
      %2621 = vmatprep.subr.mxu0 %v311
      %2622 = vmatpush1.msra.mxu0 %v310
      %2623 = vmatprep.subr.mxu0 %v307
      %2624 = vmatpush1.msra.mxu0 %v306
      %2625 = vmatprep.subr.mxu0 %v303
      %2626 = vmatpush1.msra.mxu0 %v302
      %2627 = vmatprep.subr.mxu0 %v299
      %2628 = vmatpush1.msra.mxu0 %v298
      %2629 = vmatprep.subr.mxu0 %v295
      %2630 = vmatpush1.msra.mxu0 %v294
      %2631 = vmatprep.subr.mxu0 %v291
      %2632 = vmatpush1.msra.mxu0 %v290
      %2633 = vmatprep.subr.mxu0 %v287
      %2634 = vmatpush1.msra.mxu0 %v286
      %2635 = vmatprep.subr.mxu0 %v283
      %2636 = vmatpush1.msra.mxu0 %v282
      %2637 = vmatprep.subr.mxu0 %v279
      %2638 = vmatpush1.msra.mxu0 %v278
      %2639 = vmatprep.subr.mxu0 %v275
      %2640 = vmatpush1.msra.mxu0 %v274
      %2641 = vmatprep.subr.mxu0 %v271
      %2642 = vmatpush1.msra.mxu0 %v270
      %2643 = vmatprep.subr.mxu0 %v267
      %2644 = vmatpush1.msra.mxu0 %v266
      %2645 = vmatprep.subr.mxu0 0.0
      %2646 = vmatpush2.msra.mxu0 0.0
      %2647 = vmatprep.subr.mxu0 0.0
      %2648 = vmatpush2.msra.mxu0 0.0
      %2649 = vmatprep.subr.mxu0 0.0
      %2650 = vmatpush2.msra.mxu0 0.0
      %2651 = vmatprep.subr.mxu0 0.0
      %2652 = vmatpush2.msra.mxu0 0.0
      %2653 = vmatprep.subr.mxu0 0.0
      %2654 = vmatpush2.msra.mxu0 0.0
      %2655 = vmatprep.subr.mxu0 0.0
      %2656 = vmatpush2.msra.mxu0 0.0
      %2657 = vmatprep.subr.mxu0 0.0
      %2658 = vmatpush2.msra.mxu0 0.0
      %2659 = vmatprep.subr.mxu0 0.0
      %2660 = vmatpush2.msra.mxu0 0.0
      %2661 = vmatprep.subr.mxu0 0.0
      %2662 = vmatpush2.msra.mxu0 0.0
      %2663 = vmatprep.subr.mxu0 0.0
      %2664 = vmatpush2.msra.mxu0 0.0
      %2665 = vmatprep.subr.mxu0 0.0
      %2666 = vmatpush2.msra.mxu0 0.0
      %2667 = vmatprep.subr.mxu0 0.0
      %2668 = vmatpush2.msra.mxu0 0.0
      %2669 = vmatprep.subr.mxu0 0.0
      %2670 = vmatpush2.msra.mxu0 0.0
      %2671 = vmatprep.subr.mxu0 0.0
      %2672 = vmatpush2.msra.mxu0 0.0
      %2673 = vmatprep.subr.mxu0 0.0
      %2674 = vmatpush2.msra.mxu0 0.0
      %2675 = vmatprep.subr.mxu0 0.0
      %2676 = vmatpush2.msra.mxu0 0.0
      %2677 = vmatprep.mubr.f32.mxu0 0.0
      %2678 = vmatmul.mubr.f32.gmra.mxu0 %v2432
      %v2679 = vpop.f32.mrf.mxu0
      %v2680 = vadd.f32 0.0, %v2679
      %v2681 = vpop.f32.mrf.mxu0
      %v2682 = vadd.f32 0.0, %v2681
      %2683 = vdwg.mxu0
      %2684 = vmatprep.subr.mxu0 %v329
      %2685 = vmatpush1.msra.mxu0 %v328
      %2686 = vmatprep.subr.mxu0 %v325
      %2687 = vmatpush1.msra.mxu0 %v324
      %2688 = vmatprep.subr.mxu0 %v321
      %2689 = vmatpush1.msra.mxu0 %v320
      %2690 = vmatprep.subr.mxu0 %v317
      %2691 = vmatpush1.msra.mxu0 %v316
      %2692 = vmatprep.subr.mxu0 %v313
      %2693 = vmatpush1.msra.mxu0 %v312
      %2694 = vmatprep.subr.mxu0 %v309
      %2695 = vmatpush1.msra.mxu0 %v308
      %2696 = vmatprep.subr.mxu0 %v305
      %2697 = vmatpush1.msra.mxu0 %v304
      %2698 = vmatprep.subr.mxu0 %v301
      %2699 = vmatpush1.msra.mxu0 %v300
      %2700 = vmatprep.subr.mxu0 %v297
      %2701 = vmatpush1.msra.mxu0 %v296
      %2702 = vmatprep.subr.mxu0 %v293
      %2703 = vmatpush1.msra.mxu0 %v292
      %2704 = vmatprep.subr.mxu0 %v289
      %2705 = vmatpush1.msra.mxu0 %v288
      %2706 = vmatprep.subr.mxu0 %v285
      %2707 = vmatpush1.msra.mxu0 %v284
      %2708 = vmatprep.subr.mxu0 %v281
      %2709 = vmatpush1.msra.mxu0 %v280
      %2710 = vmatprep.subr.mxu0 %v277
      %2711 = vmatpush1.msra.mxu0 %v276
      %2712 = vmatprep.subr.mxu0 %v273
      %2713 = vmatpush1.msra.mxu0 %v272
      %2714 = vmatprep.subr.mxu0 %v269
      %2715 = vmatpush1.msra.mxu0 %v268
      %2716 = vmatprep.subr.mxu0 0.0
      %2717 = vmatpush2.msra.mxu0 0.0
      %2718 = vmatprep.subr.mxu0 0.0
      %2719 = vmatpush2.msra.mxu0 0.0
      %2720 = vmatprep.subr.mxu0 0.0
      %2721 = vmatpush2.msra.mxu0 0.0
      %2722 = vmatprep.subr.mxu0 0.0
      %2723 = vmatpush2.msra.mxu0 0.0
      %2724 = vmatprep.subr.mxu0 0.0
      %2725 = vmatpush2.msra.mxu0 0.0
      %2726 = vmatprep.subr.mxu0 0.0
      %2727 = vmatpush2.msra.mxu0 0.0
      %2728 = vmatprep.subr.mxu0 0.0
      %2729 = vmatpush2.msra.mxu0 0.0
      %2730 = vmatprep.subr.mxu0 0.0
      %2731 = vmatpush2.msra.mxu0 0.0
      %2732 = vmatprep.subr.mxu0 0.0
      %2733 = vmatpush2.msra.mxu0 0.0
      %2734 = vmatprep.subr.mxu0 0.0
      %2735 = vmatpush2.msra.mxu0 0.0
      %2736 = vmatprep.subr.mxu0 0.0
      %2737 = vmatpush2.msra.mxu0 0.0
      %2738 = vmatprep.subr.mxu0 0.0
      %2739 = vmatpush2.msra.mxu0 0.0
      %2740 = vmatprep.subr.mxu0 0.0
      %2741 = vmatpush2.msra.mxu0 0.0
      %2742 = vmatprep.subr.mxu0 0.0
      %2743 = vmatpush2.msra.mxu0 0.0
      %2744 = vmatprep.subr.mxu0 0.0
      %2745 = vmatpush2.msra.mxu0 0.0
      %2746 = vmatprep.subr.mxu0 0.0
      %2747 = vmatpush2.msra.mxu0 0.0
      %2748 = vmatprep.mubr.f32.mxu0 0.0
      %2749 = vmatmul.mubr.f32.gmra.mxu0 %v2432
      %v2750 = vpop.f32.mrf.mxu0
      %v2751 = vadd.f32 0.0, %v2750
      %v2752 = vpop.f32.mrf.mxu0
      %v2753 = vadd.f32 0.0, %v2752
      %2754 = vdwg.mxu0
      %v2755 = vadd.f32 %v2609, %v2680
      %v2756 = vadd.f32 %v2610, %v2682
      %v2757 = vadd.f32 %v2611, %v2751
      %v2758 = vadd.f32 %v2612, %v2753
      %v2759 = vxor.u32 %v2755, 2147483648
      %v2760 = vmul.f32 %v2759, 1.442695
      %v2761 = vpow.pop %v2760
      %v2762 = vadd.f32 %v2761, 1.0
      %v2763 = vrcp.pop %v2762
      %v2764 = vmul.f32 1.0, %v2763
      %v2765 = vxor.u32 %v2756, 2147483648
      %v2766 = vmul.f32 %v2765, 1.442695
      %v2767 = vpow.pop %v2766
      %v2768 = vadd.f32 %v2767, 1.0
      %v2769 = vrcp.pop %v2768
      %v2770 = vmul.f32 1.0, %v2769
      %v2771 = vtanh.pop %v2757
      %v2772 = vxor.u32 %v2758, 2147483648
      %v2773 = vmul.f32 %v2772, 1.442695
      %v2774 = vpow.pop %v2773
      %v2775 = vadd.f32 %v2774, 1.0
      %v2776 = vrcp.pop %v2775
      %v2777 = vmul.f32 1.0, %v2776
      %v2778 = vmul.f32 %v2770, %v2430
      %v2779 = vmul.f32 %v2764, %v2771
      %v2780 = vadd.f32 %v2778, %v2779
      %v2781 = vtanh.pop %v2780
      %v2782 = vmul.f32 %v2777, %v2781
      %s2783 = scalar_lea.vmem %s182, 224
      %v2784 = vld [vmem:[%s2783] sm:$0xff]
      %v2785 = vld [vmem:[%s2783 + $0x8] sm:$0xff]
      %v2786 = vld [vmem:[%s2783 + $0x10] sm:$0xff]
      %v2787 = vld [vmem:[%s2783 + $0x18] sm:$0xff]
      %2788 = vmatprep.subr.mxu0 %v262
      %2789 = vmatpush1.msra.mxu0 %v261
      %2790 = vmatprep.subr.mxu0 %v258
      %2791 = vmatpush1.msra.mxu0 %v257
      %2792 = vmatprep.subr.mxu0 %v254
      %2793 = vmatpush1.msra.mxu0 %v253
      %2794 = vmatprep.subr.mxu0 %v250
      %2795 = vmatpush1.msra.mxu0 %v249
      %2796 = vmatprep.subr.mxu0 %v246
      %2797 = vmatpush1.msra.mxu0 %v245
      %2798 = vmatprep.subr.mxu0 %v242
      %2799 = vmatpush1.msra.mxu0 %v241
      %2800 = vmatprep.subr.mxu0 %v238
      %2801 = vmatpush1.msra.mxu0 %v237
      %2802 = vmatprep.subr.mxu0 %v234
      %2803 = vmatpush1.msra.mxu0 %v233
      %2804 = vmatprep.subr.mxu0 %v230
      %2805 = vmatpush1.msra.mxu0 %v229
      %2806 = vmatprep.subr.mxu0 %v226
      %2807 = vmatpush1.msra.mxu0 %v225
      %2808 = vmatprep.subr.mxu0 %v222
      %2809 = vmatpush1.msra.mxu0 %v221
      %2810 = vmatprep.subr.mxu0 %v218
      %2811 = vmatpush1.msra.mxu0 %v217
      %2812 = vmatprep.subr.mxu0 %v214
      %2813 = vmatpush1.msra.mxu0 %v213
      %2814 = vmatprep.subr.mxu0 %v210
      %2815 = vmatpush1.msra.mxu0 %v209
      %2816 = vmatprep.subr.mxu0 %v206
      %2817 = vmatpush1.msra.mxu0 %v205
      %2818 = vmatprep.subr.mxu0 %v202
      %2819 = vmatpush1.msra.mxu0 %v201
      %2820 = vmatprep.subr.mxu0 0.0
      %2821 = vmatpush2.msra.mxu0 0.0
      %2822 = vmatprep.subr.mxu0 0.0
      %2823 = vmatpush2.msra.mxu0 0.0
      %2824 = vmatprep.subr.mxu0 0.0
      %2825 = vmatpush2.msra.mxu0 0.0
      %2826 = vmatprep.subr.mxu0 0.0
      %2827 = vmatpush2.msra.mxu0 0.0
      %2828 = vmatprep.subr.mxu0 0.0
      %2829 = vmatpush2.msra.mxu0 0.0
      %2830 = vmatprep.subr.mxu0 0.0
      %2831 = vmatpush2.msra.mxu0 0.0
      %2832 = vmatprep.subr.mxu0 0.0
      %2833 = vmatpush2.msra.mxu0 0.0
      %2834 = vmatprep.subr.mxu0 0.0
      %2835 = vmatpush2.msra.mxu0 0.0
      %2836 = vmatprep.subr.mxu0 0.0
      %2837 = vmatpush2.msra.mxu0 0.0
      %2838 = vmatprep.subr.mxu0 0.0
      %2839 = vmatpush2.msra.mxu0 0.0
      %2840 = vmatprep.subr.mxu0 0.0
      %2841 = vmatpush2.msra.mxu0 0.0
      %2842 = vmatprep.subr.mxu0 0.0
      %2843 = vmatpush2.msra.mxu0 0.0
      %2844 = vmatprep.subr.mxu0 0.0
      %2845 = vmatpush2.msra.mxu0 0.0
      %2846 = vmatprep.subr.mxu0 0.0
      %2847 = vmatpush2.msra.mxu0 0.0
      %2848 = vmatprep.subr.mxu0 0.0
      %2849 = vmatpush2.msra.mxu0 0.0
      %2850 = vmatprep.subr.mxu0 0.0
      %2851 = vmatpush2.msra.mxu0 0.0
      %2852 = vmatprep.mubr.f32.mxu0 0.0
      %2853 = vmatmul.mubr.f32.gmra.mxu0 %v2607
      %v2854 = vpop.f32.mrf.mxu0
      %v2855 = vadd.f32 0.0, %v2854
      %v2856 = vpop.f32.mrf.mxu0
      %v2857 = vadd.f32 0.0, %v2856
      %2858 = vdwg.mxu0
      %2859 = vmatprep.subr.mxu0 %v264
      %2860 = vmatpush1.msra.mxu0 %v263
      %2861 = vmatprep.subr.mxu0 %v260
      %2862 = vmatpush1.msra.mxu0 %v259
      %2863 = vmatprep.subr.mxu0 %v256
      %2864 = vmatpush1.msra.mxu0 %v255
      %2865 = vmatprep.subr.mxu0 %v252
      %2866 = vmatpush1.msra.mxu0 %v251
      %2867 = vmatprep.subr.mxu0 %v248
      %2868 = vmatpush1.msra.mxu0 %v247
      %2869 = vmatprep.subr.mxu0 %v244
      %2870 = vmatpush1.msra.mxu0 %v243
      %2871 = vmatprep.subr.mxu0 %v240
      %2872 = vmatpush1.msra.mxu0 %v239
      %2873 = vmatprep.subr.mxu0 %v236
      %2874 = vmatpush1.msra.mxu0 %v235
      %2875 = vmatprep.subr.mxu0 %v232
      %2876 = vmatpush1.msra.mxu0 %v231
      %2877 = vmatprep.subr.mxu0 %v228
      %2878 = vmatpush1.msra.mxu0 %v227
      %2879 = vmatprep.subr.mxu0 %v224
      %2880 = vmatpush1.msra.mxu0 %v223
      %2881 = vmatprep.subr.mxu0 %v220
      %2882 = vmatpush1.msra.mxu0 %v219
      %2883 = vmatprep.subr.mxu0 %v216
      %2884 = vmatpush1.msra.mxu0 %v215
      %2885 = vmatprep.subr.mxu0 %v212
      %2886 = vmatpush1.msra.mxu0 %v211
      %2887 = vmatprep.subr.mxu0 %v208
      %2888 = vmatpush1.msra.mxu0 %v207
      %2889 = vmatprep.subr.mxu0 %v204
      %2890 = vmatpush1.msra.mxu0 %v203
      %2891 = vmatprep.subr.mxu0 0.0
      %2892 = vmatpush2.msra.mxu0 0.0
      %2893 = vmatprep.subr.mxu0 0.0
      %2894 = vmatpush2.msra.mxu0 0.0
      %2895 = vmatprep.subr.mxu0 0.0
      %2896 = vmatpush2.msra.mxu0 0.0
      %2897 = vmatprep.subr.mxu0 0.0
      %2898 = vmatpush2.msra.mxu0 0.0
      %2899 = vmatprep.subr.mxu0 0.0
      %2900 = vmatpush2.msra.mxu0 0.0
      %2901 = vmatprep.subr.mxu0 0.0
      %2902 = vmatpush2.msra.mxu0 0.0
      %2903 = vmatprep.subr.mxu0 0.0
      %2904 = vmatpush2.msra.mxu0 0.0
      %2905 = vmatprep.subr.mxu0 0.0
      %2906 = vmatpush2.msra.mxu0 0.0
      %2907 = vmatprep.subr.mxu0 0.0
      %2908 = vmatpush2.msra.mxu0 0.0
      %2909 = vmatprep.subr.mxu0 0.0
      %2910 = vmatpush2.msra.mxu0 0.0
      %2911 = vmatprep.subr.mxu0 0.0
      %2912 = vmatpush2.msra.mxu0 0.0
      %2913 = vmatprep.subr.mxu0 0.0
      %2914 = vmatpush2.msra.mxu0 0.0
      %2915 = vmatprep.subr.mxu0 0.0
      %2916 = vmatpush2.msra.mxu0 0.0
      %2917 = vmatprep.subr.mxu0 0.0
      %2918 = vmatpush2.msra.mxu0 0.0
      %2919 = vmatprep.subr.mxu0 0.0
      %2920 = vmatpush2.msra.mxu0 0.0
      %2921 = vmatprep.subr.mxu0 0.0
      %2922 = vmatpush2.msra.mxu0 0.0
      %2923 = vmatprep.mubr.f32.mxu0 0.0
      %2924 = vmatmul.mubr.f32.gmra.mxu0 %v2607
      %v2925 = vpop.f32.mrf.mxu0
      %v2926 = vadd.f32 0.0, %v2925
      %v2927 = vpop.f32.mrf.mxu0
      %v2928 = vadd.f32 0.0, %v2927
      %2929 = vdwg.mxu0
      %v2930 = vadd.f32 %v2784, %v2855
      %v2931 = vadd.f32 %v2785, %v2857
      %v2932 = vadd.f32 %v2786, %v2926
      %v2933 = vadd.f32 %v2787, %v2928
      %v2934 = vxor.u32 %v2930, 2147483648
      %v2935 = vmul.f32 %v2934, 1.442695
      %v2936 = vpow.pop %v2935
      %v2937 = vadd.f32 %v2936, 1.0
      %v2938 = vrcp.pop %v2937
      %v2939 = vmul.f32 1.0, %v2938
      %v2940 = vxor.u32 %v2931, 2147483648
      %v2941 = vmul.f32 %v2940, 1.442695
      %v2942 = vpow.pop %v2941
      %v2943 = vadd.f32 %v2942, 1.0
      %v2944 = vrcp.pop %v2943
      %v2945 = vmul.f32 1.0, %v2944
      %v2946 = vtanh.pop %v2932
      %v2947 = vxor.u32 %v2933, 2147483648
      %v2948 = vmul.f32 %v2947, 1.442695
      %v2949 = vpow.pop %v2948
      %v2950 = vadd.f32 %v2949, 1.0
      %v2951 = vrcp.pop %v2950
      %v2952 = vmul.f32 1.0, %v2951
      %v2953 = vmul.f32 %v2945, %v2605
      %v2954 = vmul.f32 %v2939, %v2946
      %v2955 = vadd.f32 %v2953, %v2954
      %v2956 = vtanh.pop %v2955
      %v2957 = vmul.f32 %v2952, %v2956
      %v2958 = vld [vmem:[%s190] sm:$0xff]
      %v2959 = vld [vmem:[%s190 + $0x8] sm:$0xff]
      %v2960 = vld [vmem:[%s190 + $0x10] sm:$0xff]
      %v2961 = vld [vmem:[%s190 + $0x18] sm:$0xff]
      %2962 = vmatprep.subr.mxu0 %v327
      %2963 = vmatpush1.msra.mxu0 %v326
      %2964 = vmatprep.subr.mxu0 %v323
      %2965 = vmatpush1.msra.mxu0 %v322
      %2966 = vmatprep.subr.mxu0 %v319
      %2967 = vmatpush1.msra.mxu0 %v318
      %2968 = vmatprep.subr.mxu0 %v315
      %2969 = vmatpush1.msra.mxu0 %v314
      %2970 = vmatprep.subr.mxu0 %v311
      %2971 = vmatpush1.msra.mxu0 %v310
      %2972 = vmatprep.subr.mxu0 %v307
      %2973 = vmatpush1.msra.mxu0 %v306
      %2974 = vmatprep.subr.mxu0 %v303
      %2975 = vmatpush1.msra.mxu0 %v302
      %2976 = vmatprep.subr.mxu0 %v299
      %2977 = vmatpush1.msra.mxu0 %v298
      %2978 = vmatprep.subr.mxu0 %v295
      %2979 = vmatpush1.msra.mxu0 %v294
      %2980 = vmatprep.subr.mxu0 %v291
      %2981 = vmatpush1.msra.mxu0 %v290
      %2982 = vmatprep.subr.mxu0 %v287
      %2983 = vmatpush1.msra.mxu0 %v286
      %2984 = vmatprep.subr.mxu0 %v283
      %2985 = vmatpush1.msra.mxu0 %v282
      %2986 = vmatprep.subr.mxu0 %v279
      %2987 = vmatpush1.msra.mxu0 %v278
      %2988 = vmatprep.subr.mxu0 %v275
      %2989 = vmatpush1.msra.mxu0 %v274
      %2990 = vmatprep.subr.mxu0 %v271
      %2991 = vmatpush1.msra.mxu0 %v270
      %2992 = vmatprep.subr.mxu0 %v267
      %2993 = vmatpush1.msra.mxu0 %v266
      %2994 = vmatprep.subr.mxu0 0.0
      %2995 = vmatpush2.msra.mxu0 0.0
      %2996 = vmatprep.subr.mxu0 0.0
      %2997 = vmatpush2.msra.mxu0 0.0
      %2998 = vmatprep.subr.mxu0 0.0
      %2999 = vmatpush2.msra.mxu0 0.0
      %3000 = vmatprep.subr.mxu0 0.0
      %3001 = vmatpush2.msra.mxu0 0.0
      %3002 = vmatprep.subr.mxu0 0.0
      %3003 = vmatpush2.msra.mxu0 0.0
      %3004 = vmatprep.subr.mxu0 0.0
      %3005 = vmatpush2.msra.mxu0 0.0
      %3006 = vmatprep.subr.mxu0 0.0
      %3007 = vmatpush2.msra.mxu0 0.0
      %3008 = vmatprep.subr.mxu0 0.0
      %3009 = vmatpush2.msra.mxu0 0.0
      %3010 = vmatprep.subr.mxu0 0.0
      %3011 = vmatpush2.msra.mxu0 0.0
      %3012 = vmatprep.subr.mxu0 0.0
      %3013 = vmatpush2.msra.mxu0 0.0
      %3014 = vmatprep.subr.mxu0 0.0
      %3015 = vmatpush2.msra.mxu0 0.0
      %3016 = vmatprep.subr.mxu0 0.0
      %3017 = vmatpush2.msra.mxu0 0.0
      %3018 = vmatprep.subr.mxu0 0.0
      %3019 = vmatpush2.msra.mxu0 0.0
      %3020 = vmatprep.subr.mxu0 0.0
      %3021 = vmatpush2.msra.mxu0 0.0
      %3022 = vmatprep.subr.mxu0 0.0
      %3023 = vmatpush2.msra.mxu0 0.0
      %3024 = vmatprep.subr.mxu0 0.0
      %3025 = vmatpush2.msra.mxu0 0.0
      %3026 = vmatprep.mubr.f32.mxu0 0.0
      %3027 = vmatmul.mubr.f32.gmra.mxu0 %v2782
      %v3028 = vpop.f32.mrf.mxu0
      %v3029 = vadd.f32 0.0, %v3028
      %v3030 = vpop.f32.mrf.mxu0
      %v3031 = vadd.f32 0.0, %v3030
      %3032 = vdwg.mxu0
      %3033 = vmatprep.subr.mxu0 %v329
      %3034 = vmatpush1.msra.mxu0 %v328
      %3035 = vmatprep.subr.mxu0 %v325
      %3036 = vmatpush1.msra.mxu0 %v324
      %3037 = vmatprep.subr.mxu0 %v321
      %3038 = vmatpush1.msra.mxu0 %v320
      %3039 = vmatprep.subr.mxu0 %v317
      %3040 = vmatpush1.msra.mxu0 %v316
      %3041 = vmatprep.subr.mxu0 %v313
      %3042 = vmatpush1.msra.mxu0 %v312
      %3043 = vmatprep.subr.mxu0 %v309
      %3044 = vmatpush1.msra.mxu0 %v308
      %3045 = vmatprep.subr.mxu0 %v305
      %3046 = vmatpush1.msra.mxu0 %v304
      %3047 = vmatprep.subr.mxu0 %v301
      %3048 = vmatpush1.msra.mxu0 %v300
      %3049 = vmatprep.subr.mxu0 %v297
      %3050 = vmatpush1.msra.mxu0 %v296
      %3051 = vmatprep.subr.mxu0 %v293
      %3052 = vmatpush1.msra.mxu0 %v292
      %3053 = vmatprep.subr.mxu0 %v289
      %3054 = vmatpush1.msra.mxu0 %v288
      %3055 = vmatprep.subr.mxu0 %v285
      %3056 = vmatpush1.msra.mxu0 %v284
      %3057 = vmatprep.subr.mxu0 %v281
      %3058 = vmatpush1.msra.mxu0 %v280
      %3059 = vmatprep.subr.mxu0 %v277
      %3060 = vmatpush1.msra.mxu0 %v276
      %3061 = vmatprep.subr.mxu0 %v273
      %3062 = vmatpush1.msra.mxu0 %v272
      %3063 = vmatprep.subr.mxu0 %v269
      %3064 = vmatpush1.msra.mxu0 %v268
      %3065 = vmatprep.subr.mxu0 0.0
      %3066 = vmatpush2.msra.mxu0 0.0
      %3067 = vmatprep.subr.mxu0 0.0
      %3068 = vmatpush2.msra.mxu0 0.0
      %3069 = vmatprep.subr.mxu0 0.0
      %3070 = vmatpush2.msra.mxu0 0.0
      %3071 = vmatprep.subr.mxu0 0.0
      %3072 = vmatpush2.msra.mxu0 0.0
      %3073 = vmatprep.subr.mxu0 0.0
      %3074 = vmatpush2.msra.mxu0 0.0
      %3075 = vmatprep.subr.mxu0 0.0
      %3076 = vmatpush2.msra.mxu0 0.0
      %3077 = vmatprep.subr.mxu0 0.0
      %3078 = vmatpush2.msra.mxu0 0.0
      %3079 = vmatprep.subr.mxu0 0.0
      %3080 = vmatpush2.msra.mxu0 0.0
      %3081 = vmatprep.subr.mxu0 0.0
      %3082 = vmatpush2.msra.mxu0 0.0
      %3083 = vmatprep.subr.mxu0 0.0
      %3084 = vmatpush2.msra.mxu0 0.0
      %3085 = vmatprep.subr.mxu0 0.0
      %3086 = vmatpush2.msra.mxu0 0.0
      %3087 = vmatprep.subr.mxu0 0.0
      %3088 = vmatpush2.msra.mxu0 0.0
      %3089 = vmatprep.subr.mxu0 0.0
      %3090 = vmatpush2.msra.mxu0 0.0
      %3091 = vmatprep.subr.mxu0 0.0
      %3092 = vmatpush2.msra.mxu0 0.0
      %3093 = vmatprep.subr.mxu0 0.0
      %3094 = vmatpush2.msra.mxu0 0.0
      %3095 = vmatprep.subr.mxu0 0.0
      %3096 = vmatpush2.msra.mxu0 0.0
      %3097 = vmatprep.mubr.f32.mxu0 0.0
      %3098 = vmatmul.mubr.f32.gmra.mxu0 %v2782
      %v3099 = vpop.f32.mrf.mxu0
      %v3100 = vadd.f32 0.0, %v3099
      %v3101 = vpop.f32.mrf.mxu0
      %v3102 = vadd.f32 0.0, %v3101
      %3103 = vdwg.mxu0
      %v3104 = vadd.f32 %v2958, %v3029
      %v3105 = vadd.f32 %v2959, %v3031
      %v3106 = vadd.f32 %v2960, %v3100
      %v3107 = vadd.f32 %v2961, %v3102
      %v3108 = vxor.u32 %v3104, 2147483648
      %v3109 = vmul.f32 %v3108, 1.442695
      %v3110 = vpow.pop %v3109
      %v3111 = vadd.f32 %v3110, 1.0
      %v3112 = vrcp.pop %v3111
      %v3113 = vmul.f32 1.0, %v3112
      %v3114 = vxor.u32 %v3105, 2147483648
      %v3115 = vmul.f32 %v3114, 1.442695
      %v3116 = vpow.pop %v3115
      %v3117 = vadd.f32 %v3116, 1.0
      %v3118 = vrcp.pop %v3117
      %v3119 = vmul.f32 1.0, %v3118
      %v3120 = vtanh.pop %v3106
      %v3121 = vxor.u32 %v3107, 2147483648
      %v3122 = vmul.f32 %v3121, 1.442695
      %v3123 = vpow.pop %v3122
      %v3124 = vadd.f32 %v3123, 1.0
      %v3125 = vrcp.pop %v3124
      %v3126 = vmul.f32 1.0, %v3125
      %v3127 = vmul.f32 %v3119, %v2780
      %v3128 = vmul.f32 %v3113, %v3120
      %v3129 = vadd.f32 %v3127, %v3128
      %v3130 = vtanh.pop %v3129
      %v3131 = vmul.f32 %v3126, %v3130
      %3132 = vst [vmem:[#allocation2] sm:$0xff] %v2957
      %3133 = vst [vmem:[#allocation3] sm:$0xff] %v2955
      %3134 = vst [vmem:[#allocation4] sm:$0xff] %v3131
      %3135 = vst [vmem:[#allocation5] sm:$0xff] %v3129
      %p3136 = scmp.eq.s32.totalorder %s14, 1
      // Predicated region
      $region37: #{seq_to_emb_forward.3} parent=31 // pred_check
        %p3137 = pneg %p3136
      $region38: #{seq_to_emb_forward.3} parent=31 // pred_check_branch
        %3139 = sbr.rel (%p3137) target = $region40
      $region39: #{seq_to_emb_forward.3} parent=31 // pred_region
        %3140 = vst [vmem:[%s3] sm:$0xff] %v2957
        %3141 = vst [vmem:[%s3 + $0x8] sm:$0xff] %v3131
      $region40: #{seq_to_emb_forward.3} parent=31 // pred_fallthru
        _
      // Predicated region
      $region41: #{seq_to_emb_forward.3} parent=31 // pred_check
        %p3142 = pneg %p102
      $region42: #{seq_to_emb_forward.3} parent=31 // pred_check_branch
        %3144 = sbr.rel (%p3142) target = $region44
      $region43: #{seq_to_emb_forward.3} parent=31 // pred_region
        _
      $region44: #{seq_to_emb_forward.3} parent=31 // pred_fallthru
        _
      // Predicated region
      $region45: #{seq_to_emb_forward.3} parent=31 // pred_check
        %p3145 = pneg %p102
      $region46: #{seq_to_emb_forward.3} parent=31 // pred_check_branch
        %3147 = sbr.rel (%p3145) target = $region48
      $region47: #{seq_to_emb_forward.3} parent=31 // pred_region
        _
      $region48: #{seq_to_emb_forward.3} parent=31 // pred_fallthru
        _
    $region32: #{seq_to_emb_forward.3} parent=5 // pred_fallthru
      _
    %p3148 = scmp.le.s32.totalorder 2, %s9
    // Predicated region
    $region49: #{seq_to_emb_forward.3} parent=5 // pred_check
      %p3149 = pneg %p3148
    $region50: #{seq_to_emb_forward.3} parent=5 // pred_check_branch
      %3151 = sbr.rel (%p3149) target = $region52
    $region51: #{seq_to_emb_forward.3} parent=5 // pred_region
      %s3152 = ssub.s32 %s9, 2
    $region52: #{seq_to_emb_forward.3} parent=5 // pred_fallthru
      _
  $region6: #{seq_to_emb_forward.3} parent=0 // loop_footer
    %s13 = sadd.s32 1, %s9
  $region7: #{seq_to_emb_forward.3} parent=0 // loop_footer_branch
    %8 = sbr.rel target = $region3
  $region8: #{seq_to_emb_forward.3} parent=0 // loop_exit
    _

</llo_original>
